<compile_context>
chip_gen: v5e
topology: v5e:2x2
jax: 0.10.0
libtpu: 0.0.40
codegen_flags: <defaults>
</compile_context>

<pallas_src>
import jax
import jax.numpy as jnp
import numpy as np
from jax.experimental import pallas as pl
from jax.experimental.pallas import tpu as pltpu

LANE = 128       # TPU lane width; channel axis padded to a multiple of this
_MID_PAD = 8     # sublane-aligned left/right column pad of the conv2 staging buffer
_EPS = 1e-5


def _residual_block_kernel(xp_ref, w1_ref, g1_ref, b1_ref, w2_ref, g2_ref, b2_ref,
                           o_ref, mid_ref):
    """Whole residual block in one invocation (small shapes: fully VMEM resident).

    xp_ref : (N, H+2, W+2, Cp)          bf16  zero-padded input (NHWC, Cp = round_up(C,128))
    w*_ref : (9, Cp, Cp)                bf16  3x3 conv weights, tap t = ky*3 + kx
    g*/b*  : (1, Cp)                    f32   BN affine (gamma padded with 1, beta with 0)
    o_ref  : (N, H, W, Cp)                    output (lane-dense last dim)
    mid_ref: (N, H+2, W+2*_MID_PAD, Cp) bf16  scratch: zero-padded conv2 input (h1),
                                              interior starts at column _MID_PAD (aligned).
    """
    N, Hp, Wp, Cp = xp_ref.shape
    H, W = Hp - 2, Wp - 2
    M = N * H * W
    inv_m = 1.0 / M

    def conv3x3(src_ref, w_ref, x0):
        # 'same' 3x3 conv; the unpadded image sits at rows [1, 1+H) and columns
        # [x0, x0+W) of src_ref, surrounded by >=1 zero row/column.
        # One sublane-shifted bf16 slab load per dx; each slab feeds 3 dy taps
        # via tile-aligned slices along H.  9 (M,Cp)x(Cp,Cp) bf16 dots, f32 acc.
        acc = None
        for dx in range(3):
            c0 = x0 - 1 + dx
            slab = src_ref[:, :, c0:c0 + W, :]                 # (N, Hp, W, Cp) bf16
            for dy in range(3):
                patch = slab[:, dy:dy + H].reshape(M, Cp)      # free when W%8==0
                r = jnp.dot(patch, w_ref[dy * 3 + dx],
                            preferred_element_type=jnp.float32)
                acc = r if acc is None else acc + r
        return acc                                             # (M, Cp) f32

    def batchnorm(y, g, b):
        # Training-mode BN, two-pass (robust) variance, biased (divide by M).
        mean = jnp.sum(y, axis=0, keepdims=True) * inv_m
        d = y - mean
        var = jnp.sum(d * d, axis=0, keepdims=True) * inv_m
        return d * jax.lax.rsqrt(var + _EPS) * g + b

    # ---- conv1 -> bn1 -> relu ----
    y1 = conv3x3(xp_ref, w1_ref, 1)
    h1 = jnp.maximum(batchnorm(y1, g1_ref[...], b1_ref[...]), 0.0)

    # ---- stage h1 (bf16) into the padded conv2 buffer ----
    # Single aligned memset zeroes all borders; interior store starts at the
    # sublane-aligned column _MID_PAD -> unmasked full-tile stores.
    mid_ref[...] = jnp.zeros(mid_ref.shape, mid_ref.dtype)
    mid_ref[:, 1:1 + H, _MID_PAD:_MID_PAD + W, :] = (
        h1.astype(mid_ref.dtype).reshape(N, H, W, Cp))

    # ---- conv2 -> bn2 -> +identity -> relu ----
    y2 = conv3x3(mid_ref, w2_ref, _MID_PAD)
    h2 = batchnorm(y2, g2_ref[...], b2_ref[...])
    # Identity re-read late (short live range); bf16-rounded, within tolerance.
    identity = xp_ref[:, 1:1 + H, 1:1 + W, :].reshape(M, Cp).astype(jnp.float32)
    out = jnp.maximum(h2 + identity, 0.0)
    o_ref[...] = out.reshape(N, H, W, Cp).astype(o_ref.dtype)


def _round_up(x, m):
    return (x + m - 1) // m * m


def residual_block_forward(x_nchw, params):
    """PyTorch-compatible wrapper: NCHW in, NCHW out (training-mode BatchNorm)."""
    w1, g1, b1, w2, g2, b2 = params
    N, C, H, W = x_nchw.shape
    Cp = _round_up(max(C, LANE), LANE)          # lane-dense channel axis

    # NHWC, spatial pad=1, channel pad to Cp, bf16 (MXU operand dtype).
    x_nhwc = jnp.transpose(x_nchw, (0, 2, 3, 1))
    x_pad = jnp.pad(x_nhwc, ((0, 0), (1, 1), (1, 1), (0, Cp - C))).astype(jnp.bfloat16)

    def prep_w(w):
        # PyTorch (Cout, Cin, 3, 3) -> (9 taps, Cin, Cout), channel-padded, bf16.
        wt = jnp.transpose(w, (2, 3, 1, 0)).reshape(9, C, C)
        wt = jnp.pad(wt, ((0, 0), (0, Cp - C), (0, Cp - C)))
        return wt.astype(jnp.bfloat16)

    def prep_gamma(g):
        return jnp.pad(g.reshape(1, C).astype(jnp.float32),
                       ((0, 0), (0, Cp - C)), constant_values=1.0)

    def prep_beta(b):
        return jnp.pad(b.reshape(1, C).astype(jnp.float32),
                       ((0, 0), (0, Cp - C)))

    M = N * H * W
    flops = 2 * 9 * 2 * M * Cp * Cp                       # 2 convs x 9 taps
    bytes_accessed = (N * (H + 2) * (W + 2) * Cp * 2      # xp (bf16)
                      + N * H * W * Cp * 4                # out (f32)
                      + 2 * 9 * Cp * Cp * 2               # weights (bf16)
                      + 4 * Cp * 4)                       # BN affine

    vmem = pl.BlockSpec(memory_space=pltpu.MemorySpace.VMEM)
    out_nhwc = pl.pallas_call(
        _residual_block_kernel,
        out_shape=jax.ShapeDtypeStruct((N, H, W, Cp), x_nchw.dtype),
        in_specs=[vmem] * 7,
        out_specs=vmem,
        scratch_shapes=[pltpu.VMEM((N, H + 2, W + 2 * _MID_PAD, Cp), jnp.bfloat16)],
        # Actual footprint here is only a few MiB; 32 MiB leaves headroom under
        # v7x's 64 MiB physical VMEM (and is <= the default scoped limit on v6e).
        compiler_params=pltpu.CompilerParams(vmem_limit_bytes=32 * 1024 * 1024),
        cost_estimate=pl.CostEstimate(flops=flops, transcendentals=2 * Cp,
                                      bytes_accessed=bytes_accessed),
    )(x_pad, prep_w(w1), prep_gamma(g1), prep_beta(b1),
      prep_w(w2), prep_gamma(g2), prep_beta(b2))

    # drop channel padding, back to NCHW
    return jnp.transpose(out_nhwc[..., :C], (0, 3, 1, 2))


def residual_block_ref(x, params):
    """Pure-JAX f32 reference (NCHW) mirroring the PyTorch forward."""
    w1, g1, b1, w2, g2, b2 = params

    def conv(y, w):
        return jax.lax.conv_general_dilated(
            y, w, window_strides=(1, 1), padding=((1, 1), (1, 1)),
            dimension_numbers=("NCHW", "OIHW", "NCHW"))

    def bn(y, g, b):
        mean = jnp.mean(y, axis=(0, 2, 3), keepdims=True)
        var = jnp.mean(jnp.square(y - mean), axis=(0, 2, 3), keepdims=True)
        return ((y - mean) * jax.lax.rsqrt(var + _EPS)
                * g.reshape(1, -1, 1, 1) + b.reshape(1, -1, 1, 1))

    out = jax.nn.relu(bn(conv(x, w1), g1, b1))
    out = bn(conv(out, w2), g2, b2) + x
    return jax.nn.relu(out)


if __name__ == "__main__":
    key = jax.random.PRNGKey(0)
    kx, k1, k2, kg1, kb1, kg2, kb2 = jax.random.split(key, 7)

    N, C, H, W = 2, 8, 16, 16                       # in_channels == out_channels
    x = jax.random.normal(kx, (N, C, H, W), jnp.float32)
    w1 = 0.1 * jax.random.normal(k1, (C, C, 3, 3), jnp.float32)
    w2 = 0.1 * jax.random.normal(k2, (C, C, 3, 3), jnp.float32)
    g1 = 1.0 + 0.1 * jax.random.normal(kg1, (C,), jnp.float32)
    b1 = 0.1 * jax.random.normal(kb1, (C,), jnp.float32)
    g2 = 1.0 + 0.1 * jax.random.normal(kg2, (C,), jnp.float32)
    b2 = 0.1 * jax.random.normal(kb2, (C,), jnp.float32)
    params = (w1, g1, b1, w2, g2, b2)

    out = jax.block_until_ready(residual_block_forward(x, params))
    ref = jax.block_until_ready(residual_block_ref(x, params))
    # tolerance accounts for bf16 MXU operands / bf16 identity (f32 accumulation, f32 BN)
    np.testing.assert_allclose(np.asarray(out), np.asarray(ref), rtol=2e-2, atol=2e-2)
    print("KERNEL_OK")
</pallas_src>

<mosaic_0001>
module attributes {stable_mosaic.version = 11 : i64} {
  func.func @_residual_block_kernel(%arg0: memref<2x18x18x128xbf16, #tpu.memory_space<vmem>>, %arg1: memref<9x128x128xbf16, #tpu.memory_space<vmem>>, %arg2: memref<1x128xf32, #tpu.memory_space<vmem>>, %arg3: memref<1x128xf32, #tpu.memory_space<vmem>>, %arg4: memref<9x128x128xbf16, #tpu.memory_space<vmem>>, %arg5: memref<1x128xf32, #tpu.memory_space<vmem>>, %arg6: memref<1x128xf32, #tpu.memory_space<vmem>>, %arg7: memref<2x16x16x128xf32, #tpu.memory_space<vmem>>, %arg8: memref<2x18x32x128xbf16, #tpu.memory_space<vmem>>) attributes {dimension_semantics = [], scalar_prefetch = 0 : i64, scratch_operands = 1 : i64, tpu.core_type = #tpu.core_type<tc>} {
    %c0 = arith.constant 0 : index
    %c0_0 = arith.constant 0 : index
    %c0_1 = arith.constant 0 : index
    %c0_2 = arith.constant 0 : index
    %0 = vector.load %arg0[%c0, %c0_0, %c0_1, %c0_2] : memref<2x18x18x128xbf16, #tpu.memory_space<vmem>>, vector<2x18x16x128xbf16>
    %1 = vector.extract_strided_slice %0 {offsets = [0, 0, 0, 0], sizes = [2, 16, 16, 128], strides = [1, 1, 1, 1]} : vector<2x18x16x128xbf16> to vector<2x16x16x128xbf16>
    %2 = vector.shape_cast %1 : vector<2x16x16x128xbf16> to vector<512x128xbf16>
    %c0_3 = arith.constant 0 : index
    %c0_4 = arith.constant 0 : index
    %c0_5 = arith.constant 0 : index
    %3 = vector.load %arg1[%c0_3, %c0_4, %c0_5] : memref<9x128x128xbf16, #tpu.memory_space<vmem>>, vector<1x128x128xbf16>
    %4 = vector.shape_cast %3 : vector<1x128x128xbf16> to vector<128x128xbf16>
    %cst = arith.constant dense<0.000000e+00> : vector<512x128xf32>
    %5 = tpu.matmul %2, %4, %cst {dimension_numbers = #tpu.dot_dimension_numbers<[1], [0], [0], [1], [0, 0, 1, 1], [], []>} : vector<512x128xbf16>, vector<128x128xbf16>, vector<512x128xf32> -> vector<512x128xf32>
    %6 = vector.extract_strided_slice %0 {offsets = [0, 1, 0, 0], sizes = [2, 16, 16, 128], strides = [1, 1, 1, 1]} : vector<2x18x16x128xbf16> to vector<2x16x16x128xbf16>
    %7 = vector.shape_cast %6 : vector<2x16x16x128xbf16> to vector<512x128xbf16>
    %c3 = arith.constant 3 : index
    %c0_6 = arith.constant 0 : index
    %c0_7 = arith.constant 0 : index
    %8 = vector.load %arg1[%c3, %c0_6, %c0_7] : memref<9x128x128xbf16, #tpu.memory_space<vmem>>, vector<1x128x128xbf16>
    %9 = vector.shape_cast %8 : vector<1x128x128xbf16> to vector<128x128xbf16>
    %cst_8 = arith.constant dense<0.000000e+00> : vector<512x128xf32>
    %10 = tpu.matmul %7, %9, %cst_8 {dimension_numbers = #tpu.dot_dimension_numbers<[1], [0], [0], [1], [0, 0, 1, 1], [], []>} : vector<512x128xbf16>, vector<128x128xbf16>, vector<512x128xf32> -> vector<512x128xf32>
    %11 = arith.addf %5, %10 : vector<512x128xf32>
    %12 = vector.extract_strided_slice %0 {offsets = [0, 2, 0, 0], sizes = [2, 16, 16, 128], strides = [1, 1, 1, 1]} : vector<2x18x16x128xbf16> to vector<2x16x16x128xbf16>
    %13 = vector.shape_cast %12 : vector<2x16x16x128xbf16> to vector<512x128xbf16>
    %c6 = arith.constant 6 : index
    %c0_9 = arith.constant 0 : index
    %c0_10 = arith.constant 0 : index
    %14 = vector.load %arg1[%c6, %c0_9, %c0_10] : memref<9x128x128xbf16, #tpu.memory_space<vmem>>, vector<1x128x128xbf16>
    %15 = vector.shape_cast %14 : vector<1x128x128xbf16> to vector<128x128xbf16>
    %cst_11 = arith.constant dense<0.000000e+00> : vector<512x128xf32>
    %16 = tpu.matmul %13, %15, %cst_11 {dimension_numbers = #tpu.dot_dimension_numbers<[1], [0], [0], [1], [0, 0, 1, 1], [], []>} : vector<512x128xbf16>, vector<128x128xbf16>, vector<512x128xf32> -> vector<512x128xf32>
    %17 = arith.addf %11, %16 : vector<512x128xf32>
    %c0_12 = arith.constant 0 : index
    %c0_13 = arith.constant 0 : index
    %c1 = arith.constant 1 : index
    %c0_14 = arith.constant 0 : index
    %18 = vector.load %arg0[%c0_12, %c0_13, %c1, %c0_14] : memref<2x18x18x128xbf16, #tpu.memory_space<vmem>>, vector<2x18x16x128xbf16>
    %19 = vector.extract_strided_slice %18 {offsets = [0, 0, 0, 0], sizes = [2, 16, 16, 128], strides = [1, 1, 1, 1]} : vector<2x18x16x128xbf16> to vector<2x16x16x128xbf16>
    %20 = vector.shape_cast %19 : vector<2x16x16x128xbf16> to vector<512x128xbf16>
    %c1_15 = arith.constant 1 : index
    %c0_16 = arith.constant 0 : index
    %c0_17 = arith.constant 0 : index
    %21 = vector.load %arg1[%c1_15, %c0_16, %c0_17] : memref<9x128x128xbf16, #tpu.memory_space<vmem>>, vector<1x128x128xbf16>
    %22 = vector.shape_cast %21 : vector<1x128x128xbf16> to vector<128x128xbf16>
    %cst_18 = arith.constant dense<0.000000e+00> : vector<512x128xf32>
    %23 = tpu.matmul %20, %22, %cst_18 {dimension_numbers = #tpu.dot_dimension_numbers<[1], [0], [0], [1], [0, 0, 1, 1], [], []>} : vector<512x128xbf16>, vector<128x128xbf16>, vector<512x128xf32> -> vector<512x128xf32>
    %24 = arith.addf %17, %23 : vector<512x128xf32>
    %25 = vector.extract_strided_slice %18 {offsets = [0, 1, 0, 0], sizes = [2, 16, 16, 128], strides = [1, 1, 1, 1]} : vector<2x18x16x128xbf16> to vector<2x16x16x128xbf16>
    %26 = vector.shape_cast %25 : vector<2x16x16x128xbf16> to vector<512x128xbf16>
    %c4 = arith.constant 4 : index
    %c0_19 = arith.constant 0 : index
    %c0_20 = arith.constant 0 : index
    %27 = vector.load %arg1[%c4, %c0_19, %c0_20] : memref<9x128x128xbf16, #tpu.memory_space<vmem>>, vector<1x128x128xbf16>
    %28 = vector.shape_cast %27 : vector<1x128x128xbf16> to vector<128x128xbf16>
    %cst_21 = arith.constant dense<0.000000e+00> : vector<512x128xf32>
    %29 = tpu.matmul %26, %28, %cst_21 {dimension_numbers = #tpu.dot_dimension_numbers<[1], [0], [0], [1], [0, 0, 1, 1], [], []>} : vector<512x128xbf16>, vector<128x128xbf16>, vector<512x128xf32> -> vector<512x128xf32>
    %30 = arith.addf %24, %29 : vector<512x128xf32>
    %31 = vector.extract_strided_slice %18 {offsets = [0, 2, 0, 0], sizes = [2, 16, 16, 128], strides = [1, 1, 1, 1]} : vector<2x18x16x128xbf16> to vector<2x16x16x128xbf16>
    %32 = vector.shape_cast %31 : vector<2x16x16x128xbf16> to vector<512x128xbf16>
    %c7 = arith.constant 7 : index
    %c0_22 = arith.constant 0 : index
    %c0_23 = arith.constant 0 : index
    %33 = vector.load %arg1[%c7, %c0_22, %c0_23] : memref<9x128x128xbf16, #tpu.memory_space<vmem>>, vector<1x128x128xbf16>
    %34 = vector.shape_cast %33 : vector<1x128x128xbf16> to vector<128x128xbf16>
    %cst_24 = arith.constant dense<0.000000e+00> : vector<512x128xf32>
    %35 = tpu.matmul %32, %34, %cst_24 {dimension_numbers = #tpu.dot_dimension_numbers<[1], [0], [0], [1], [0, 0, 1, 1], [], []>} : vector<512x128xbf16>, vector<128x128xbf16>, vector<512x128xf32> -> vector<512x128xf32>
    %36 = arith.addf %30, %35 : vector<512x128xf32>
    %c0_25 = arith.constant 0 : index
    %c0_26 = arith.constant 0 : index
    %c2 = arith.constant 2 : index
    %c0_27 = arith.constant 0 : index
    %37 = vector.load %arg0[%c0_25, %c0_26, %c2, %c0_27] : memref<2x18x18x128xbf16, #tpu.memory_space<vmem>>, vector<2x18x16x128xbf16>
    %38 = vector.extract_strided_slice %37 {offsets = [0, 0, 0, 0], sizes = [2, 16, 16, 128], strides = [1, 1, 1, 1]} : vector<2x18x16x128xbf16> to vector<2x16x16x128xbf16>
    %39 = vector.shape_cast %38 : vector<2x16x16x128xbf16> to vector<512x128xbf16>
    %c2_28 = arith.constant 2 : index
    %c0_29 = arith.constant 0 : index
    %c0_30 = arith.constant 0 : index
    %40 = vector.load %arg1[%c2_28, %c0_29, %c0_30] : memref<9x128x128xbf16, #tpu.memory_space<vmem>>, vector<1x128x128xbf16>
    %41 = vector.shape_cast %40 : vector<1x128x128xbf16> to vector<128x128xbf16>
    %cst_31 = arith.constant dense<0.000000e+00> : vector<512x128xf32>
    %42 = tpu.matmul %39, %41, %cst_31 {dimension_numbers = #tpu.dot_dimension_numbers<[1], [0], [0], [1], [0, 0, 1, 1], [], []>} : vector<512x128xbf16>, vector<128x128xbf16>, vector<512x128xf32> -> vector<512x128xf32>
    %43 = arith.addf %36, %42 : vector<512x128xf32>
    %44 = vector.extract_strided_slice %37 {offsets = [0, 1, 0, 0], sizes = [2, 16, 16, 128], strides = [1, 1, 1, 1]} : vector<2x18x16x128xbf16> to vector<2x16x16x128xbf16>
    %45 = vector.shape_cast %44 : vector<2x16x16x128xbf16> to vector<512x128xbf16>
    %c5 = arith.constant 5 : index
    %c0_32 = arith.constant 0 : index
    %c0_33 = arith.constant 0 : index
    %46 = vector.load %arg1[%c5, %c0_32, %c0_33] : memref<9x128x128xbf16, #tpu.memory_space<vmem>>, vector<1x128x128xbf16>
    %47 = vector.shape_cast %46 : vector<1x128x128xbf16> to vector<128x128xbf16>
    %cst_34 = arith.constant dense<0.000000e+00> : vector<512x128xf32>
    %48 = tpu.matmul %45, %47, %cst_34 {dimension_numbers = #tpu.dot_dimension_numbers<[1], [0], [0], [1], [0, 0, 1, 1], [], []>} : vector<512x128xbf16>, vector<128x128xbf16>, vector<512x128xf32> -> vector<512x128xf32>
    %49 = arith.addf %43, %48 : vector<512x128xf32>
    %50 = vector.extract_strided_slice %37 {offsets = [0, 2, 0, 0], sizes = [2, 16, 16, 128], strides = [1, 1, 1, 1]} : vector<2x18x16x128xbf16> to vector<2x16x16x128xbf16>
    %51 = vector.shape_cast %50 : vector<2x16x16x128xbf16> to vector<512x128xbf16>
    %c8 = arith.constant 8 : index
    %c0_35 = arith.constant 0 : index
    %c0_36 = arith.constant 0 : index
    %52 = vector.load %arg1[%c8, %c0_35, %c0_36] : memref<9x128x128xbf16, #tpu.memory_space<vmem>>, vector<1x128x128xbf16>
    %53 = vector.shape_cast %52 : vector<1x128x128xbf16> to vector<128x128xbf16>
    %cst_37 = arith.constant dense<0.000000e+00> : vector<512x128xf32>
    %54 = tpu.matmul %51, %53, %cst_37 {dimension_numbers = #tpu.dot_dimension_numbers<[1], [0], [0], [1], [0, 0, 1, 1], [], []>} : vector<512x128xbf16>, vector<128x128xbf16>, vector<512x128xf32> -> vector<512x128xf32>
    %55 = arith.addf %49, %54 : vector<512x128xf32>
    %c0_38 = arith.constant 0 : index
    %c0_39 = arith.constant 0 : index
    %56 = vector.load %arg2[%c0_38, %c0_39] : memref<1x128xf32, #tpu.memory_space<vmem>>, vector<1x128xf32>
    %c0_40 = arith.constant 0 : index
    %c0_41 = arith.constant 0 : index
    %57 = vector.load %arg3[%c0_40, %c0_41] : memref<1x128xf32, #tpu.memory_space<vmem>>, vector<1x128xf32>
    %cst_42 = arith.constant dense<0.000000e+00> : vector<128xf32>
    %58 = vector.multi_reduction <add>, %55, %cst_42 [0] : vector<512x128xf32> to vector<128xf32>
    %59 = vector.shape_cast %58 : vector<128xf32> to vector<1x128xf32>
    %cst_43 = arith.constant 0.001953125 : f32
    %60 = vector.broadcast %cst_43 : f32 to vector<1x128xf32>
    %61 = arith.mulf %59, %60 : vector<1x128xf32>
    %62 = vector.broadcast %61 : vector<1x128xf32> to vector<512x128xf32>
    %63 = arith.subf %55, %62 : vector<512x128xf32>
    %64 = arith.mulf %63, %63 : vector<512x128xf32>
    %cst_44 = arith.constant dense<0.000000e+00> : vector<128xf32>
    %65 = vector.multi_reduction <add>, %64, %cst_44 [0] : vector<512x128xf32> to vector<128xf32>
    %66 = vector.shape_cast %65 : vector<128xf32> to vector<1x128xf32>
    %cst_45 = arith.constant 0.001953125 : f32
    %67 = vector.broadcast %cst_45 : f32 to vector<1x128xf32>
    %68 = arith.mulf %66, %67 : vector<1x128xf32>
    %cst_46 = arith.constant 9.99999974E-6 : f32
    %69 = vector.broadcast %cst_46 : f32 to vector<1x128xf32>
    %70 = arith.addf %68, %69 : vector<1x128xf32>
    %71 = math.rsqrt %70 : vector<1x128xf32>
    %72 = vector.broadcast %71 : vector<1x128xf32> to vector<512x128xf32>
    %73 = arith.mulf %63, %72 : vector<512x128xf32>
    %74 = vector.broadcast %56 : vector<1x128xf32> to vector<512x128xf32>
    %75 = arith.mulf %73, %74 : vector<512x128xf32>
    %76 = vector.broadcast %57 : vector<1x128xf32> to vector<512x128xf32>
    %77 = arith.addf %75, %76 : vector<512x128xf32>
    %cst_47 = arith.constant 0.000000e+00 : f32
    %78 = vector.broadcast %cst_47 : f32 to vector<512x128xf32>
    %79 = arith.maximumf %77, %78 : vector<512x128xf32>
    %cst_48 = arith.constant 0.000000e+00 : bf16
    %80 = vector.broadcast %cst_48 : bf16 to vector<2x18x32x128xbf16>
    %c0_49 = arith.constant 0 : index
    %c0_50 = arith.constant 0 : index
    %c0_51 = arith.constant 0 : index
    %c0_52 = arith.constant 0 : index
    %81 = vector.load %arg8[%c0_49, %c0_50, %c0_51, %c0_52] : memref<2x18x32x128xbf16, #tpu.memory_space<vmem>>, vector<2x18x32x128xbf16>
    tpu.vector_store %arg8[%c0_49, %c0_50, %c0_51, %c0_52], %80 {strides = array<i32>} : memref<2x18x32x128xbf16, #tpu.memory_space<vmem>>, vector<2x18x32x128xbf16>,
    %82 = arith.truncf %79 : vector<512x128xf32> to vector<512x128xbf16>
    %83 = vector.shape_cast %82 : vector<512x128xbf16> to vector<2x16x16x128xbf16>
    %c0_53 = arith.constant 0 : index
    %c1_54 = arith.constant 1 : index
    %c8_55 = arith.constant 8 : index
    %c0_56 = arith.constant 0 : index
    %84 = vector.load %arg8[%c0_53, %c1_54, %c8_55, %c0_56] : memref<2x18x32x128xbf16, #tpu.memory_space<vmem>>, vector<2x16x16x128xbf16>
    tpu.vector_store %arg8[%c0_53, %c1_54, %c8_55, %c0_56], %83 {strides = array<i32>} : memref<2x18x32x128xbf16, #tpu.memory_space<vmem>>, vector<2x16x16x128xbf16>,
    %c0_57 = arith.constant 0 : index
    %c0_58 = arith.constant 0 : index
    %c7_59 = arith.constant 7 : index
    %c0_60 = arith.constant 0 : index
    %85 = vector.load %arg8[%c0_57, %c0_58, %c7_59, %c0_60] : memref<2x18x32x128xbf16, #tpu.memory_space<vmem>>, vector<2x18x16x128xbf16>
    %86 = vector.extract_strided_slice %85 {offsets = [0, 0, 0, 0], sizes = [2, 16, 16, 128], strides = [1, 1, 1, 1]} : vector<2x18x16x128xbf16> to vector<2x16x16x128xbf16>
    %87 = vector.shape_cast %86 : vector<2x16x16x128xbf16> to vector<512x128xbf16>
    %c0_61 = arith.constant 0 : index
    %c0_62 = arith.constant 0 : index
    %c0_63 = arith.constant 0 : index
    %88 = vector.load %arg4[%c0_61, %c0_62, %c0_63] : memref<9x128x128xbf16, #tpu.memory_space<vmem>>, vector<1x128x128xbf16>
    %89 = vector.shape_cast %88 : vector<1x128x128xbf16> to vector<128x128xbf16>
    %cst_64 = arith.constant dense<0.000000e+00> : vector<512x128xf32>
    %90 = tpu.matmul %87, %89, %cst_64 {dimension_numbers = #tpu.dot_dimension_numbers<[1], [0], [0], [1], [0, 0, 1, 1], [], []>} : vector<512x128xbf16>, vector<128x128xbf16>, vector<512x128xf32> -> vector<512x128xf32>
    %91 = vector.extract_strided_slice %85 {offsets = [0, 1, 0, 0], sizes = [2, 16, 16, 128], strides = [1, 1, 1, 1]} : vector<2x18x16x128xbf16> to vector<2x16x16x128xbf16>
    %92 = vector.shape_cast %91 : vector<2x16x16x128xbf16> to vector<512x128xbf16>
    %c3_65 = arith.constant 3 : index
    %c0_66 = arith.constant 0 : index
    %c0_67 = arith.constant 0 : index
    %93 = vector.load %arg4[%c3_65, %c0_66, %c0_67] : memref<9x128x128xbf16, #tpu.memory_space<vmem>>, vector<1x128x128xbf16>
    %94 = vector.shape_cast %93 : vector<1x128x128xbf16> to vector<128x128xbf16>
    %cst_68 = arith.constant dense<0.000000e+00> : vector<512x128xf32>
    %95 = tpu.matmul %92, %94, %cst_68 {dimension_numbers = #tpu.dot_dimension_numbers<[1], [0], [0], [1], [0, 0, 1, 1], [], []>} : vector<512x128xbf16>, vector<128x128xbf16>, vector<512x128xf32> -> vector<512x128xf32>
    %96 = arith.addf %90, %95 : vector<512x128xf32>
    %97 = vector.extract_strided_slice %85 {offsets = [0, 2, 0, 0], sizes = [2, 16, 16, 128], strides = [1, 1, 1, 1]} : vector<2x18x16x128xbf16> to vector<2x16x16x128xbf16>
    %98 = vector.shape_cast %97 : vector<2x16x16x128xbf16> to vector<512x128xbf16>
    %c6_69 = arith.constant 6 : index
    %c0_70 = arith.constant 0 : index
    %c0_71 = arith.constant 0 : index
    %99 = vector.load %arg4[%c6_69, %c0_70, %c0_71] : memref<9x128x128xbf16, #tpu.memory_space<vmem>>, vector<1x128x128xbf16>
    %100 = vector.shape_cast %99 : vector<1x128x128xbf16> to vector<128x128xbf16>
    %cst_72 = arith.constant dense<0.000000e+00> : vector<512x128xf32>
    %101 = tpu.matmul %98, %100, %cst_72 {dimension_numbers = #tpu.dot_dimension_numbers<[1], [0], [0], [1], [0, 0, 1, 1], [], []>} : vector<512x128xbf16>, vector<128x128xbf16>, vector<512x128xf32> -> vector<512x128xf32>
    %102 = arith.addf %96, %101 : vector<512x128xf32>
    %c0_73 = arith.constant 0 : index
    %c0_74 = arith.constant 0 : index
    %c8_75 = arith.constant 8 : index
    %c0_76 = arith.constant 0 : index
    %103 = vector.load %arg8[%c0_73, %c0_74, %c8_75, %c0_76] : memref<2x18x32x128xbf16, #tpu.memory_space<vmem>>, vector<2x18x16x128xbf16>
    %104 = vector.extract_strided_slice %103 {offsets = [0, 0, 0, 0], sizes = [2, 16, 16, 128], strides = [1, 1, 1, 1]} : vector<2x18x16x128xbf16> to vector<2x16x16x128xbf16>
    %105 = vector.shape_cast %104 : vector<2x16x16x128xbf16> to vector<512x128xbf16>
    %c1_77 = arith.constant 1 : index
    %c0_78 = arith.constant 0 : index
    %c0_79 = arith.constant 0 : index
    %106 = vector.load %arg4[%c1_77, %c0_78, %c0_79] : memref<9x128x128xbf16, #tpu.memory_space<vmem>>, vector<1x128x128xbf16>
    %107 = vector.shape_cast %106 : vector<1x128x128xbf16> to vector<128x128xbf16>
    %cst_80 = arith.constant dense<0.000000e+00> : vector<512x128xf32>
    %108 = tpu.matmul %105, %107, %cst_80 {dimension_numbers = #tpu.dot_dimension_numbers<[1], [0], [0], [1], [0, 0, 1, 1], [], []>} : vector<512x128xbf16>, vector<128x128xbf16>, vector<512x128xf32> -> vector<512x128xf32>
    %109 = arith.addf %102, %108 : vector<512x128xf32>
    %110 = vector.extract_strided_slice %103 {offsets = [0, 1, 0, 0], sizes = [2, 16, 16, 128], strides = [1, 1, 1, 1]} : vector<2x18x16x128xbf16> to vector<2x16x16x128xbf16>
    %111 = vector.shape_cast %110 : vector<2x16x16x128xbf16> to vector<512x128xbf16>
    %c4_81 = arith.constant 4 : index
    %c0_82 = arith.constant 0 : index
    %c0_83 = arith.constant 0 : index
    %112 = vector.load %arg4[%c4_81, %c0_82, %c0_83] : memref<9x128x128xbf16, #tpu.memory_space<vmem>>, vector<1x128x128xbf16>
    %113 = vector.shape_cast %112 : vector<1x128x128xbf16> to vector<128x128xbf16>
    %cst_84 = arith.constant dense<0.000000e+00> : vector<512x128xf32>
    %114 = tpu.matmul %111, %113, %cst_84 {dimension_numbers = #tpu.dot_dimension_numbers<[1], [0], [0], [1], [0, 0, 1, 1], [], []>} : vector<512x128xbf16>, vector<128x128xbf16>, vector<512x128xf32> -> vector<512x128xf32>
    %115 = arith.addf %109, %114 : vector<512x128xf32>
    %116 = vector.extract_strided_slice %103 {offsets = [0, 2, 0, 0], sizes = [2, 16, 16, 128], strides = [1, 1, 1, 1]} : vector<2x18x16x128xbf16> to vector<2x16x16x128xbf16>
    %117 = vector.shape_cast %116 : vector<2x16x16x128xbf16> to vector<512x128xbf16>
    %c7_85 = arith.constant 7 : index
    %c0_86 = arith.constant 0 : index
    %c0_87 = arith.constant 0 : index
    %118 = vector.load %arg4[%c7_85, %c0_86, %c0_87] : memref<9x128x128xbf16, #tpu.memory_space<vmem>>, vector<1x128x128xbf16>
    %119 = vector.shape_cast %118 : vector<1x128x128xbf16> to vector<128x128xbf16>
    %cst_88 = arith.constant dense<0.000000e+00> : vector<512x128xf32>
    %120 = tpu.matmul %117, %119, %cst_88 {dimension_numbers = #tpu.dot_dimension_numbers<[1], [0], [0], [1], [0, 0, 1, 1], [], []>} : vector<512x128xbf16>, vector<128x128xbf16>, vector<512x128xf32> -> vector<512x128xf32>
    %121 = arith.addf %115, %120 : vector<512x128xf32>
    %c0_89 = arith.constant 0 : index
    %c0_90 = arith.constant 0 : index
    %c9 = arith.constant 9 : index
    %c0_91 = arith.constant 0 : index
    %122 = vector.load %arg8[%c0_89, %c0_90, %c9, %c0_91] : memref<2x18x32x128xbf16, #tpu.memory_space<vmem>>, vector<2x18x16x128xbf16>
    %123 = vector.extract_strided_slice %122 {offsets = [0, 0, 0, 0], sizes = [2, 16, 16, 128], strides = [1, 1, 1, 1]} : vector<2x18x16x128xbf16> to vector<2x16x16x128xbf16>
    %124 = vector.shape_cast %123 : vector<2x16x16x128xbf16> to vector<512x128xbf16>
    %c2_92 = arith.constant 2 : index
    %c0_93 = arith.constant 0 : index
    %c0_94 = arith.constant 0 : index
    %125 = vector.load %arg4[%c2_92, %c0_93, %c0_94] : memref<9x128x128xbf16, #tpu.memory_space<vmem>>, vector<1x128x128xbf16>
    %126 = vector.shape_cast %125 : vector<1x128x128xbf16> to vector<128x128xbf16>
    %cst_95 = arith.constant dense<0.000000e+00> : vector<512x128xf32>
    %127 = tpu.matmul %124, %126, %cst_95 {dimension_numbers = #tpu.dot_dimension_numbers<[1], [0], [0], [1], [0, 0, 1, 1], [], []>} : vector<512x128xbf16>, vector<128x128xbf16>, vector<512x128xf32> -> vector<512x128xf32>
    %128 = arith.addf %121, %127 : vector<512x128xf32>
    %129 = vector.extract_strided_slice %122 {offsets = [0, 1, 0, 0], sizes = [2, 16, 16, 128], strides = [1, 1, 1, 1]} : vector<2x18x16x128xbf16> to vector<2x16x16x128xbf16>
    %130 = vector.shape_cast %129 : vector<2x16x16x128xbf16> to vector<512x128xbf16>
    %c5_96 = arith.constant 5 : index
    %c0_97 = arith.constant 0 : index
    %c0_98 = arith.constant 0 : index
    %131 = vector.load %arg4[%c5_96, %c0_97, %c0_98] : memref<9x128x128xbf16, #tpu.memory_space<vmem>>, vector<1x128x128xbf16>
    %132 = vector.shape_cast %131 : vector<1x128x128xbf16> to vector<128x128xbf16>
    %cst_99 = arith.constant dense<0.000000e+00> : vector<512x128xf32>
    %133 = tpu.matmul %130, %132, %cst_99 {dimension_numbers = #tpu.dot_dimension_numbers<[1], [0], [0], [1], [0, 0, 1, 1], [], []>} : vector<512x128xbf16>, vector<128x128xbf16>, vector<512x128xf32> -> vector<512x128xf32>
    %134 = arith.addf %128, %133 : vector<512x128xf32>
    %135 = vector.extract_strided_slice %122 {offsets = [0, 2, 0, 0], sizes = [2, 16, 16, 128], strides = [1, 1, 1, 1]} : vector<2x18x16x128xbf16> to vector<2x16x16x128xbf16>
    %136 = vector.shape_cast %135 : vector<2x16x16x128xbf16> to vector<512x128xbf16>
    %c8_100 = arith.constant 8 : index
    %c0_101 = arith.constant 0 : index
    %c0_102 = arith.constant 0 : index
    %137 = vector.load %arg4[%c8_100, %c0_101, %c0_102] : memref<9x128x128xbf16, #tpu.memory_space<vmem>>, vector<1x128x128xbf16>
    %138 = vector.shape_cast %137 : vector<1x128x128xbf16> to vector<128x128xbf16>
    %cst_103 = arith.constant dense<0.000000e+00> : vector<512x128xf32>
    %139 = tpu.matmul %136, %138, %cst_103 {dimension_numbers = #tpu.dot_dimension_numbers<[1], [0], [0], [1], [0, 0, 1, 1], [], []>} : vector<512x128xbf16>, vector<128x128xbf16>, vector<512x128xf32> -> vector<512x128xf32>
    %140 = arith.addf %134, %139 : vector<512x128xf32>
    %c0_104 = arith.constant 0 : index
    %c0_105 = arith.constant 0 : index
    %141 = vector.load %arg5[%c0_104, %c0_105] : memref<1x128xf32, #tpu.memory_space<vmem>>, vector<1x128xf32>
    %c0_106 = arith.constant 0 : index
    %c0_107 = arith.constant 0 : index
    %142 = vector.load %arg6[%c0_106, %c0_107] : memref<1x128xf32, #tpu.memory_space<vmem>>, vector<1x128xf32>
    %cst_108 = arith.constant dense<0.000000e+00> : vector<128xf32>
    %143 = vector.multi_reduction <add>, %140, %cst_108 [0] : vector<512x128xf32> to vector<128xf32>
    %144 = vector.shape_cast %143 : vector<128xf32> to vector<1x128xf32>
    %cst_109 = arith.constant 0.001953125 : f32
    %145 = vector.broadcast %cst_109 : f32 to vector<1x128xf32>
    %146 = arith.mulf %144, %145 : vector<1x128xf32>
    %147 = vector.broadcast %146 : vector<1x128xf32> to vector<512x128xf32>
    %148 = arith.subf %140, %147 : vector<512x128xf32>
    %149 = arith.mulf %148, %148 : vector<512x128xf32>
    %cst_110 = arith.constant dense<0.000000e+00> : vector<128xf32>
    %150 = vector.multi_reduction <add>, %149, %cst_110 [0] : vector<512x128xf32> to vector<128xf32>
    %151 = vector.shape_cast %150 : vector<128xf32> to vector<1x128xf32>
    %cst_111 = arith.constant 0.001953125 : f32
    %152 = vector.broadcast %cst_111 : f32 to vector<1x128xf32>
    %153 = arith.mulf %151, %152 : vector<1x128xf32>
    %cst_112 = arith.constant 9.99999974E-6 : f32
    %154 = vector.broadcast %cst_112 : f32 to vector<1x128xf32>
    %155 = arith.addf %153, %154 : vector<1x128xf32>
    %156 = math.rsqrt %155 : vector<1x128xf32>
    %157 = vector.broadcast %156 : vector<1x128xf32> to vector<512x128xf32>
    %158 = arith.mulf %148, %157 : vector<512x128xf32>
    %159 = vector.broadcast %141 : vector<1x128xf32> to vector<512x128xf32>
    %160 = arith.mulf %158, %159 : vector<512x128xf32>
    %161 = vector.broadcast %142 : vector<1x128xf32> to vector<512x128xf32>
    %162 = arith.addf %160, %161 : vector<512x128xf32>
    %c0_113 = arith.constant 0 : index
    %c1_114 = arith.constant 1 : index
    %c1_115 = arith.constant 1 : index
    %c0_116 = arith.constant 0 : index
    %163 = vector.load %arg0[%c0_113, %c1_114, %c1_115, %c0_116] : memref<2x18x18x128xbf16, #tpu.memory_space<vmem>>, vector<2x16x16x128xbf16>
    %164 = vector.shape_cast %163 : vector<2x16x16x128xbf16> to vector<512x128xbf16>
    %165 = arith.extf %164 : vector<512x128xbf16> to vector<512x128xf32>
    %166 = arith.addf %162, %165 : vector<512x128xf32>
    %cst_117 = arith.constant 0.000000e+00 : f32
    %167 = vector.broadcast %cst_117 : f32 to vector<512x128xf32>
    %168 = arith.maximumf %166, %167 : vector<512x128xf32>
    %169 = vector.shape_cast %168 : vector<512x128xf32> to vector<2x16x16x128xf32>
    %c0_118 = arith.constant 0 : index
    %c0_119 = arith.constant 0 : index
    %c0_120 = arith.constant 0 : index
    %c0_121 = arith.constant 0 : index
    %170 = vector.load %arg7[%c0_118, %c0_119, %c0_120, %c0_121] : memref<2x16x16x128xf32, #tpu.memory_space<vmem>>, vector<2x16x16x128xf32>
    tpu.vector_store %arg7[%c0_118, %c0_119, %c0_120, %c0_121], %169 {strides = array<i32>} : memref<2x16x16x128xf32, #tpu.memory_space<vmem>>, vector<2x16x16x128xf32>,
    return
  }
}

</mosaic_0001>

<llo_original>
// kernel: tpu_custom_call.1
$region0: #{tpu_custom_call.1}
  #allocation0 [shape = 'u32[]', space=smem, size = 0x4, offset = 0x4, fixed_abs, tag = 'smem constant byte address 0x4 - core index']
  #allocation1 [shape = 'u32[72,128]{1,0:T(1,128)}', space=vmem, size = 0x9000, scoped, tag = 'internal scratch']
  #allocation2 [shape = 'bf16[2,18,32,128]{3,2,1,0:T(8,128)(2,1)}', space=vmem, size = 0x48000, scoped, tag = 'scratch operand']
  %s0 = inlined_call_operand.vmem [shape: bf16[2,18,18,128], index: 0, kind: input, shape index: {}]
  %s1 = inlined_call_operand.vmem [shape: bf16[9,128,128], index: 1, kind: input, shape index: {}]
  %s2 = inlined_call_operand.vmem [shape: f32[1,128], index: 2, kind: input, shape index: {}]
  %s3 = inlined_call_operand.vmem [shape: f32[1,128], index: 3, kind: input, shape index: {}]
  %s4 = inlined_call_operand.hbm [shape: bf16[9,128,128], index: 4, kind: input, shape index: {}]
  %s5 = inlined_call_operand.vmem [shape: f32[1,128], index: 5, kind: input, shape index: {}]
  %s6 = inlined_call_operand.vmem [shape: f32[1,128], index: 6, kind: input, shape index: {}]
  %s7 = inlined_call_operand.hbm [shape: f32[2,16,16,128], index: 7, kind: output, shape index: {}]
  %s8 = sld [smem:[#allocation0]]
  $region42: #{tpu_custom_call.1} parent=0
    _
  %s10 = ssub.s32 1, %s8
  %s11 = scalar_select 0, %s10, %s8
  $region1: #{tpu_custom_call.1} parent=0
    #allocation3 [shape = 'u8[294912]{0}', space=vmem, size = 0x48000, scoped, tag = 'input window, operand 4, single buffered']
    #allocation4 [shape = 's32[1]{0}', space=sflag, size = 0x4, scoped, tag = 'scoped memory for tpu_custom_call.1']
    #allocation5 [shape = 's32[1]{0}', space=sflag, size = 0x4, scoped, tag = 'scoped memory for tpu_custom_call.1']
    #allocation6 [shape = 'u8[262144]{0}', space=vmem, size = 0x40000, scoped, tag = 'output window, operand 0, single buffered']
    %12 = vsyncpa [#allocation4], 0
    %13 = vsyncpa [#allocation5], 0
    // Predicated region
    $region2: #{tpu_custom_call.1} parent=1 // pred_check
      _
    $region3: #{tpu_custom_call.1} parent=1 // pred_check_branch
      %15 = sbr.rel (0) target = $region5
    $region4: #{tpu_custom_call.1} parent=1 // pred_region
      _
    $region5: #{tpu_custom_call.1} parent=1 // pred_fallthru
      _
    // Predicated region
    $region6: #{tpu_custom_call.1} parent=1 // pred_check
      _
    $region7: #{tpu_custom_call.1} parent=1 // pred_check_branch
      %17 = sbr.rel (0) target = $region9
    $region8: #{tpu_custom_call.1} parent=1 // pred_region
      _
    $region9: #{tpu_custom_call.1} parent=1 // pred_fallthru
      _
    // Predicated region
    $region10: #{tpu_custom_call.1} parent=1 // pred_check
      _
    $region11: #{tpu_custom_call.1} parent=1 // pred_check_branch
      %19 = sbr.rel (0) target = $region13
    $region12: #{tpu_custom_call.1} parent=1 // pred_region
      _
    $region13: #{tpu_custom_call.1} parent=1 // pred_fallthru
      _
    // Predicated region
    $region14: #{tpu_custom_call.1} parent=1 // pred_check
      _
    $region15: #{tpu_custom_call.1} parent=1 // pred_check_branch
      %21 = sbr.rel (0) target = $region17
    $region16: #{tpu_custom_call.1} parent=1 // pred_region
      _
    $region17: #{tpu_custom_call.1} parent=1 // pred_fallthru
      _
    // Predicated region
    $region18: #{tpu_custom_call.1} parent=1 // pred_check
      _
    $region19: #{tpu_custom_call.1} parent=1 // pred_check_branch
      %23 = sbr.rel (0) target = $region21
    $region20: #{tpu_custom_call.1} parent=1 // pred_region
      %25 = vsyncadd [#allocation4], 0
      %s26 = sshll.u32 %s4, 4
      %s27 = int_to_ptr.hbm [resolvable:$true] %s26
      %s28 = sshll.u32 [#allocation3], 4
      %s29 = int_to_ptr.vmem [resolvable:$true] %s28
      %34 = dma.hbm_to_vmem [thread:$0]  %s27, 9216, %s29, [#allocation4], 64, 64, 4
    $region21: #{tpu_custom_call.1} parent=1 // pred_fallthru
      _
    // Predicated region
    $region22: #{tpu_custom_call.1} parent=1 // pred_check
      _
    $region23: #{tpu_custom_call.1} parent=1 // pred_check_branch
      %36 = sbr.rel (0) target = $region25
    $region24: #{tpu_custom_call.1} parent=1 // pred_region
      _
    $region25: #{tpu_custom_call.1} parent=1 // pred_fallthru
      _
    // Predicated region
    $region26: #{tpu_custom_call.1} parent=1 // pred_check
      _
    $region27: #{tpu_custom_call.1} parent=1 // pred_check_branch
      %38 = sbr.rel (0) target = $region29
    $region28: #{tpu_custom_call.1} parent=1 // pred_region
      _
    $region29: #{tpu_custom_call.1} parent=1 // pred_fallthru
      _
    // Predicated region
    $region30: #{tpu_custom_call.1} parent=1 // pred_check
      _
    $region31: #{tpu_custom_call.1} parent=1 // pred_check_branch
      %40 = sbr.rel (0) target = $region33
    $region32: #{tpu_custom_call.1} parent=1 // pred_region
      %42 = dma.done [#allocation4], 9216
    $region33: #{tpu_custom_call.1} parent=1 // pred_fallthru
      _
    %v44 = vld [vmem:[%s0] sm:$0xf]
    %v45 = vld [vmem:[%s0 + $0x4] sm:$0xf]
    %v46 = vld [vmem:[%s0 + $0xc] sm:$0xf]
    %v47 = vld [vmem:[%s0 + $0x10] sm:$0xf]
    %v48 = vld [vmem:[%s0 + $0x18] sm:$0xf]
    %v49 = vld [vmem:[%s0 + $0x1c] sm:$0xf]
    %v50 = vld [vmem:[%s0 + $0x24] sm:$0xf]
    %v51 = vld [vmem:[%s0 + $0x28] sm:$0xf]
    %v52 = vld [vmem:[%s0 + $0x30] sm:$0xf]
    %v53 = vld [vmem:[%s0 + $0x34] sm:$0xf]
    %v54 = vld [vmem:[%s0 + $0x3c] sm:$0xf]
    %v55 = vld [vmem:[%s0 + $0x40] sm:$0xf]
    %v56 = vld [vmem:[%s0 + $0x48] sm:$0xf]
    %v57 = vld [vmem:[%s0 + $0x4c] sm:$0xf]
    %v58 = vld [vmem:[%s0 + $0x54] sm:$0xf]
    %v59 = vld [vmem:[%s0 + $0x58] sm:$0xf]
    %v60 = vld [vmem:[%s0 + $0x60] sm:$0xf]
    %v61 = vld [vmem:[%s0 + $0x64] sm:$0xf]
    %v62 = vld [vmem:[%s0 + $0x6c] sm:$0xf]
    %v63 = vld [vmem:[%s0 + $0x70] sm:$0xf]
    %v64 = vld [vmem:[%s0 + $0x78] sm:$0xf]
    %v65 = vld [vmem:[%s0 + $0x7c] sm:$0xf]
    %v66 = vld [vmem:[%s0 + $0x84] sm:$0xf]
    %v67 = vld [vmem:[%s0 + $0x88] sm:$0xf]
    %v68 = vld [vmem:[%s0 + $0x90] sm:$0xf]
    %v69 = vld [vmem:[%s0 + $0x94] sm:$0xf]
    %v70 = vld [vmem:[%s0 + $0x9c] sm:$0xf]
    %v71 = vld [vmem:[%s0 + $0xa0] sm:$0xf]
    %v72 = vld [vmem:[%s0 + $0xa8] sm:$0xf]
    %v73 = vld [vmem:[%s0 + $0xac] sm:$0xf]
    %v74 = vld [vmem:[%s0 + $0xb4] sm:$0xf]
    %v75 = vld [vmem:[%s0 + $0xb8] sm:$0xf]
    %v76 = vld [vmem:[%s0 + $0xc0] sm:$0xf]
    %v77 = vld [vmem:[%s0 + $0xc4] sm:$0xf]
    %v78 = vld [vmem:[%s0 + $0xcc] sm:$0xf]
    %v79 = vld [vmem:[%s0 + $0xd0] sm:$0xf]
    %v80 = vld [vmem:[%s0 + $0xd8] sm:$0xf]
    %v81 = vld [vmem:[%s0 + $0xdc] sm:$0xf]
    %v82 = vld [vmem:[%s0 + $0xe4] sm:$0xf]
    %v83 = vld [vmem:[%s0 + $0xe8] sm:$0xf]
    %v84 = vld [vmem:[%s0 + $0xf0] sm:$0xf]
    %v85 = vld [vmem:[%s0 + $0xf4] sm:$0xf]
    %v86 = vld [vmem:[%s0 + $0xfc] sm:$0xf]
    %v87 = vld [vmem:[%s0 + $0x100] sm:$0xf]
    %v88 = vld [vmem:[%s0 + $0x108] sm:$0xf]
    %v89 = vld [vmem:[%s0 + $0x10c] sm:$0xf]
    %v90 = vld [vmem:[%s0 + $0x114] sm:$0xf]
    %v91 = vld [vmem:[%s0 + $0x118] sm:$0xf]
    %v92 = vld [vmem:[%s0 + $0x120] sm:$0xf]
    %v93 = vld [vmem:[%s0 + $0x124] sm:$0xf]
    %v94 = vld [vmem:[%s0 + $0x12c] sm:$0xf]
    %v95 = vld [vmem:[%s0 + $0x130] sm:$0xf]
    %v96 = vld [vmem:[%s0 + $0x138] sm:$0xf]
    %v97 = vld [vmem:[%s0 + $0x13c] sm:$0xf]
    %v98 = vld [vmem:[%s0 + $0x144] sm:$0xf]
    %v99 = vld [vmem:[%s0 + $0x148] sm:$0xf]
    %v100 = vld [vmem:[%s0 + $0x150] sm:$0xf]
    %v101 = vld [vmem:[%s0 + $0x154] sm:$0xf]
    %v102 = vld [vmem:[%s0 + $0x15c] sm:$0xf]
    %v103 = vld [vmem:[%s0 + $0x160] sm:$0xf]
    %v104 = vld [vmem:[%s0 + $0x168] sm:$0xf]
    %v105 = vld [vmem:[%s0 + $0x16c] sm:$0xf]
    %v106 = vld [vmem:[%s0 + $0x174] sm:$0xf]
    %v107 = vld [vmem:[%s0 + $0x178] sm:$0xf]
    %v108 = vld [vmem:[%s0 + $0x180] sm:$0xf]
    %v109 = vld [vmem:[%s0 + $0x184] sm:$0xf]
    %v110 = vld [vmem:[%s0 + $0x18c] sm:$0xf]
    %v111 = vld [vmem:[%s0 + $0x190] sm:$0xf]
    %v112 = vld [vmem:[%s0 + $0x198] sm:$0xf]
    %v113 = vld [vmem:[%s0 + $0x19c] sm:$0xf]
    %v114 = vld [vmem:[%s0 + $0x1a4] sm:$0xf]
    %v115 = vld [vmem:[%s0 + $0x1a8] sm:$0xf]
    %v116 = vld [vmem:[%s1] sm:$0xf]
    %v117 = vld [vmem:[%s1 + $0x4] sm:$0xf]
    %v118 = vld [vmem:[%s1 + $0x8] sm:$0xf]
    %v119 = vld [vmem:[%s1 + $0xc] sm:$0xf]
    %v120 = vld [vmem:[%s1 + $0x10] sm:$0xf]
    %v121 = vld [vmem:[%s1 + $0x14] sm:$0xf]
    %v122 = vld [vmem:[%s1 + $0x18] sm:$0xf]
    %v123 = vld [vmem:[%s1 + $0x1c] sm:$0xf]
    %v124 = vld [vmem:[%s1 + $0x20] sm:$0xf]
    %v125 = vld [vmem:[%s1 + $0x24] sm:$0xf]
    %v126 = vld [vmem:[%s1 + $0x28] sm:$0xf]
    %v127 = vld [vmem:[%s1 + $0x2c] sm:$0xf]
    %v128 = vld [vmem:[%s1 + $0x30] sm:$0xf]
    %v129 = vld [vmem:[%s1 + $0x34] sm:$0xf]
    %v130 = vld [vmem:[%s1 + $0x38] sm:$0xf]
    %v131 = vld [vmem:[%s1 + $0x3c] sm:$0xf]
    %s132 = scalar_lea.vmem %s1, 192
    %v133 = vld [vmem:[%s132] sm:$0xf]
    %v134 = vld [vmem:[%s132 + $0x4] sm:$0xf]
    %v135 = vld [vmem:[%s132 + $0x8] sm:$0xf]
    %v136 = vld [vmem:[%s132 + $0xc] sm:$0xf]
    %v137 = vld [vmem:[%s132 + $0x10] sm:$0xf]
    %v138 = vld [vmem:[%s132 + $0x14] sm:$0xf]
    %v139 = vld [vmem:[%s132 + $0x18] sm:$0xf]
    %v140 = vld [vmem:[%s132 + $0x1c] sm:$0xf]
    %v141 = vld [vmem:[%s132 + $0x20] sm:$0xf]
    %v142 = vld [vmem:[%s132 + $0x24] sm:$0xf]
    %v143 = vld [vmem:[%s132 + $0x28] sm:$0xf]
    %v144 = vld [vmem:[%s132 + $0x2c] sm:$0xf]
    %v145 = vld [vmem:[%s132 + $0x30] sm:$0xf]
    %v146 = vld [vmem:[%s132 + $0x34] sm:$0xf]
    %v147 = vld [vmem:[%s132 + $0x38] sm:$0xf]
    %v148 = vld [vmem:[%s132 + $0x3c] sm:$0xf]
    %v213 = vunpack.c.l.b16 %v46
    %v214 = vunpack.c.l.b16 %v47
    %v215 = vunpack.c.l.b16 %v48
    %v216 = vunpack.c.l.b16 %v49
    %v217 = vunpack.c.l.b16 %v50
    %v218 = vunpack.c.l.b16 %v51
    %v219 = vunpack.c.l.b16 %v52
    %v220 = vunpack.c.l.b16 %v53
    %v221 = vunpack.c.l.b16 %v54
    %v222 = vunpack.c.l.b16 %v55
    %v223 = vunpack.c.l.b16 %v56
    %v224 = vunpack.c.l.b16 %v57
    %v225 = vunpack.c.l.b16 %v58
    %v226 = vunpack.c.l.b16 %v59
    %v227 = vunpack.c.l.b16 %v60
    %v228 = vunpack.c.l.b16 %v61
    %v229 = vunpack.c.l.b16 %v62
    %v230 = vunpack.c.l.b16 %v63
    %v231 = vunpack.c.l.b16 %v64
    %v232 = vunpack.c.l.b16 %v65
    %v233 = vunpack.c.l.b16 %v66
    %v234 = vunpack.c.l.b16 %v67
    %v235 = vunpack.c.l.b16 %v68
    %v236 = vunpack.c.l.b16 %v69
    %v237 = vunpack.c.l.b16 %v70
    %v238 = vunpack.c.l.b16 %v71
    %v239 = vunpack.c.l.b16 %v72
    %v240 = vunpack.c.l.b16 %v73
    %v241 = vunpack.c.l.b16 %v74
    %v242 = vunpack.c.l.b16 %v75
    %v243 = vunpack.c.l.b16 %v76
    %v244 = vunpack.c.l.b16 %v77
    %v245 = vunpack.c.l.b16 %v82
    %v246 = vunpack.c.l.b16 %v83
    %v247 = vunpack.c.l.b16 %v84
    %v248 = vunpack.c.l.b16 %v85
    %v249 = vunpack.c.l.b16 %v86
    %v250 = vunpack.c.l.b16 %v87
    %v251 = vunpack.c.l.b16 %v88
    %v252 = vunpack.c.l.b16 %v89
    %v253 = vunpack.c.l.b16 %v90
    %v254 = vunpack.c.l.b16 %v91
    %v255 = vunpack.c.l.b16 %v92
    %v256 = vunpack.c.l.b16 %v93
    %v257 = vunpack.c.l.b16 %v94
    %v258 = vunpack.c.l.b16 %v95
    %v259 = vunpack.c.l.b16 %v96
    %v260 = vunpack.c.l.b16 %v97
    %v261 = vunpack.c.l.b16 %v98
    %v262 = vunpack.c.l.b16 %v99
    %v263 = vunpack.c.l.b16 %v100
    %v264 = vunpack.c.l.b16 %v101
    %v265 = vunpack.c.l.b16 %v102
    %v266 = vunpack.c.l.b16 %v103
    %v267 = vunpack.c.l.b16 %v104
    %v268 = vunpack.c.l.b16 %v105
    %v269 = vunpack.c.l.b16 %v106
    %v270 = vunpack.c.l.b16 %v107
    %v271 = vunpack.c.l.b16 %v108
    %v272 = vunpack.c.l.b16 %v109
    %v273 = vunpack.c.l.b16 %v110
    %v274 = vunpack.c.l.b16 %v111
    %v275 = vunpack.c.l.b16 %v112
    %v276 = vunpack.c.l.b16 %v113
    %v277 = vpack.c.b16 %v214, %v213
    %v278 = vpack.c.b16 %v216, %v215
    %v279 = vpack.c.b16 %v218, %v217
    %v280 = vpack.c.b16 %v220, %v219
    %v281 = vpack.c.b16 %v222, %v221
    %v282 = vpack.c.b16 %v224, %v223
    %v283 = vpack.c.b16 %v226, %v225
    %v284 = vpack.c.b16 %v228, %v227
    %v285 = vpack.c.b16 %v230, %v229
    %v286 = vpack.c.b16 %v232, %v231
    %v287 = vpack.c.b16 %v234, %v233
    %v288 = vpack.c.b16 %v236, %v235
    %v289 = vpack.c.b16 %v238, %v237
    %v290 = vpack.c.b16 %v240, %v239
    %v291 = vpack.c.b16 %v242, %v241
    %v292 = vpack.c.b16 %v244, %v243
    %v293 = vpack.c.b16 %v246, %v245
    %v294 = vpack.c.b16 %v248, %v247
    %v295 = vpack.c.b16 %v250, %v249
    %v296 = vpack.c.b16 %v252, %v251
    %v297 = vpack.c.b16 %v254, %v253
    %v298 = vpack.c.b16 %v256, %v255
    %v299 = vpack.c.b16 %v258, %v257
    %v300 = vpack.c.b16 %v260, %v259
    %v301 = vpack.c.b16 %v262, %v261
    %v302 = vpack.c.b16 %v264, %v263
    %v303 = vpack.c.b16 %v266, %v265
    %v304 = vpack.c.b16 %v268, %v267
    %v305 = vpack.c.b16 %v270, %v269
    %v306 = vpack.c.b16 %v272, %v271
    %v307 = vpack.c.b16 %v274, %v273
    %v308 = vpack.c.b16 %v276, %v275
    %v357 = vunpack.c.l.b16 %v133
    %v358 = vunpack.c.l.b16 %v134
    %v359 = vunpack.c.l.b16 %v135
    %v360 = vunpack.c.l.b16 %v136
    %v361 = vunpack.c.l.b16 %v137
    %v362 = vunpack.c.l.b16 %v138
    %v363 = vunpack.c.l.b16 %v139
    %v364 = vunpack.c.l.b16 %v140
    %v365 = vunpack.c.l.b16 %v141
    %v366 = vunpack.c.l.b16 %v142
    %v367 = vunpack.c.l.b16 %v143
    %v368 = vunpack.c.l.b16 %v144
    %v369 = vunpack.c.l.b16 %v145
    %v370 = vunpack.c.l.b16 %v146
    %v371 = vunpack.c.l.b16 %v147
    %v372 = vunpack.c.l.b16 %v148
    %v373 = vpack.c.b16 %v358, %v357
    %v374 = vpack.c.b16 %v360, %v359
    %v375 = vpack.c.b16 %v362, %v361
    %v376 = vpack.c.b16 %v364, %v363
    %v377 = vpack.c.b16 %v366, %v365
    %v378 = vpack.c.b16 %v368, %v367
    %v379 = vpack.c.b16 %v370, %v369
    %v380 = vpack.c.b16 %v372, %v371
    %389 = vmatpush.bf16.msra.mxu0 %v380
    %390 = vmatpush.bf16.msra.mxu0 %v379
    %391 = vmatpush.bf16.msra.mxu0 %v378
    %392 = vmatpush.bf16.msra.mxu0 %v377
    %393 = vmatpush.bf16.msra.mxu0 %v376
    %394 = vmatpush.bf16.msra.mxu0 %v375
    %395 = vmatpush.bf16.msra.mxu0 %v374
    %396 = vmatpush.bf16.msra.mxu0 %v373
    %397 = vmatmul.bf16.gmra.mxu0 %v277
    %v398 = vpop.f32.mrf.mxu0
    %v399 = vadd.f32 0.0, %v398
    %v400 = vpop.f32.mrf.mxu0
    %v401 = vadd.f32 0.0, %v400
    %402 = vmatmul.bf16.gmra.mxu0 %v278
    %v403 = vpop.f32.mrf.mxu0
    %v404 = vadd.f32 0.0, %v403
    %v405 = vpop.f32.mrf.mxu0
    %v406 = vadd.f32 0.0, %v405
    %407 = vmatmul.bf16.gmra.mxu0 %v279
    %v408 = vpop.f32.mrf.mxu0
    %v409 = vadd.f32 0.0, %v408
    %v410 = vpop.f32.mrf.mxu0
    %v411 = vadd.f32 0.0, %v410
    %412 = vmatmul.bf16.gmra.mxu0 %v280
    %v413 = vpop.f32.mrf.mxu0
    %v414 = vadd.f32 0.0, %v413
    %v415 = vpop.f32.mrf.mxu0
    %v416 = vadd.f32 0.0, %v415
    %417 = vmatmul.bf16.gmra.mxu0 %v281
    %v418 = vpop.f32.mrf.mxu0
    %v419 = vadd.f32 0.0, %v418
    %v420 = vpop.f32.mrf.mxu0
    %v421 = vadd.f32 0.0, %v420
    %422 = vmatmul.bf16.gmra.mxu0 %v282
    %v423 = vpop.f32.mrf.mxu0
    %v424 = vadd.f32 0.0, %v423
    %v425 = vpop.f32.mrf.mxu0
    %v426 = vadd.f32 0.0, %v425
    %427 = vmatmul.bf16.gmra.mxu0 %v283
    %v428 = vpop.f32.mrf.mxu0
    %v429 = vadd.f32 0.0, %v428
    %v430 = vpop.f32.mrf.mxu0
    %v431 = vadd.f32 0.0, %v430
    %432 = vmatmul.bf16.gmra.mxu0 %v284
    %v433 = vpop.f32.mrf.mxu0
    %v434 = vadd.f32 0.0, %v433
    %v435 = vpop.f32.mrf.mxu0
    %v436 = vadd.f32 0.0, %v435
    %437 = vmatmul.bf16.gmra.mxu0 %v285
    %v438 = vpop.f32.mrf.mxu0
    %v439 = vadd.f32 0.0, %v438
    %v440 = vpop.f32.mrf.mxu0
    %v441 = vadd.f32 0.0, %v440
    %442 = vmatmul.bf16.gmra.mxu0 %v286
    %v443 = vpop.f32.mrf.mxu0
    %v444 = vadd.f32 0.0, %v443
    %v445 = vpop.f32.mrf.mxu0
    %v446 = vadd.f32 0.0, %v445
    %447 = vmatmul.bf16.gmra.mxu0 %v287
    %v448 = vpop.f32.mrf.mxu0
    %v449 = vadd.f32 0.0, %v448
    %v450 = vpop.f32.mrf.mxu0
    %v451 = vadd.f32 0.0, %v450
    %452 = vmatmul.bf16.gmra.mxu0 %v288
    %v453 = vpop.f32.mrf.mxu0
    %v454 = vadd.f32 0.0, %v453
    %v455 = vpop.f32.mrf.mxu0
    %v456 = vadd.f32 0.0, %v455
    %457 = vmatmul.bf16.gmra.mxu0 %v289
    %v458 = vpop.f32.mrf.mxu0
    %v459 = vadd.f32 0.0, %v458
    %v460 = vpop.f32.mrf.mxu0
    %v461 = vadd.f32 0.0, %v460
    %462 = vmatmul.bf16.gmra.mxu0 %v290
    %v463 = vpop.f32.mrf.mxu0
    %v464 = vadd.f32 0.0, %v463
    %v465 = vpop.f32.mrf.mxu0
    %v466 = vadd.f32 0.0, %v465
    %467 = vmatmul.bf16.gmra.mxu0 %v291
    %v468 = vpop.f32.mrf.mxu0
    %v469 = vadd.f32 0.0, %v468
    %v470 = vpop.f32.mrf.mxu0
    %v471 = vadd.f32 0.0, %v470
    %472 = vmatmul.bf16.gmra.mxu0 %v292
    %v473 = vpop.f32.mrf.mxu0
    %v474 = vadd.f32 0.0, %v473
    %v475 = vpop.f32.mrf.mxu0
    %v476 = vadd.f32 0.0, %v475
    %477 = vmatmul.bf16.gmra.mxu0 %v293
    %v478 = vpop.f32.mrf.mxu0
    %v479 = vadd.f32 0.0, %v478
    %v480 = vpop.f32.mrf.mxu0
    %v481 = vadd.f32 0.0, %v480
    %482 = vmatmul.bf16.gmra.mxu0 %v294
    %v483 = vpop.f32.mrf.mxu0
    %v484 = vadd.f32 0.0, %v483
    %v485 = vpop.f32.mrf.mxu0
    %v486 = vadd.f32 0.0, %v485
    %487 = vmatmul.bf16.gmra.mxu0 %v295
    %v488 = vpop.f32.mrf.mxu0
    %v489 = vadd.f32 0.0, %v488
    %v490 = vpop.f32.mrf.mxu0
    %v491 = vadd.f32 0.0, %v490
    %492 = vmatmul.bf16.gmra.mxu0 %v296
    %v493 = vpop.f32.mrf.mxu0
    %v494 = vadd.f32 0.0, %v493
    %v495 = vpop.f32.mrf.mxu0
    %v496 = vadd.f32 0.0, %v495
    %497 = vmatmul.bf16.gmra.mxu0 %v297
    %v498 = vpop.f32.mrf.mxu0
    %v499 = vadd.f32 0.0, %v498
    %v500 = vpop.f32.mrf.mxu0
    %v501 = vadd.f32 0.0, %v500
    %502 = vmatmul.bf16.gmra.mxu0 %v298
    %v503 = vpop.f32.mrf.mxu0
    %v504 = vadd.f32 0.0, %v503
    %v505 = vpop.f32.mrf.mxu0
    %v506 = vadd.f32 0.0, %v505
    %507 = vmatmul.bf16.gmra.mxu0 %v299
    %v508 = vpop.f32.mrf.mxu0
    %v509 = vadd.f32 0.0, %v508
    %v510 = vpop.f32.mrf.mxu0
    %v511 = vadd.f32 0.0, %v510
    %512 = vmatmul.bf16.gmra.mxu0 %v300
    %v513 = vpop.f32.mrf.mxu0
    %v514 = vadd.f32 0.0, %v513
    %v515 = vpop.f32.mrf.mxu0
    %v516 = vadd.f32 0.0, %v515
    %517 = vmatmul.bf16.gmra.mxu0 %v301
    %v518 = vpop.f32.mrf.mxu0
    %v519 = vadd.f32 0.0, %v518
    %v520 = vpop.f32.mrf.mxu0
    %v521 = vadd.f32 0.0, %v520
    %522 = vmatmul.bf16.gmra.mxu0 %v302
    %v523 = vpop.f32.mrf.mxu0
    %v524 = vadd.f32 0.0, %v523
    %v525 = vpop.f32.mrf.mxu0
    %v526 = vadd.f32 0.0, %v525
    %527 = vmatmul.bf16.gmra.mxu0 %v303
    %v528 = vpop.f32.mrf.mxu0
    %v529 = vadd.f32 0.0, %v528
    %v530 = vpop.f32.mrf.mxu0
    %v531 = vadd.f32 0.0, %v530
    %532 = vmatmul.bf16.gmra.mxu0 %v304
    %v533 = vpop.f32.mrf.mxu0
    %v534 = vadd.f32 0.0, %v533
    %v535 = vpop.f32.mrf.mxu0
    %v536 = vadd.f32 0.0, %v535
    %537 = vmatmul.bf16.gmra.mxu0 %v305
    %v538 = vpop.f32.mrf.mxu0
    %v539 = vadd.f32 0.0, %v538
    %v540 = vpop.f32.mrf.mxu0
    %v541 = vadd.f32 0.0, %v540
    %542 = vmatmul.bf16.gmra.mxu0 %v306
    %v543 = vpop.f32.mrf.mxu0
    %v544 = vadd.f32 0.0, %v543
    %v545 = vpop.f32.mrf.mxu0
    %v546 = vadd.f32 0.0, %v545
    %547 = vmatmul.bf16.gmra.mxu0 %v307
    %v548 = vpop.f32.mrf.mxu0
    %v549 = vadd.f32 0.0, %v548
    %v550 = vpop.f32.mrf.mxu0
    %v551 = vadd.f32 0.0, %v550
    %552 = vmatmul.bf16.gmra.mxu0 %v308
    %v553 = vpop.f32.mrf.mxu0
    %v554 = vadd.f32 0.0, %v553
    %v555 = vpop.f32.mrf.mxu0
    %v556 = vadd.f32 0.0, %v555
    %557 = vdwg.mxu0
    %v562 = vunpack.c.l.b16 %v44
    %v563 = vunpack.c.l.b16 %v45
    %v564 = vunpack.c.l.b16 %v80
    %v565 = vunpack.c.l.b16 %v81
    %v566 = vpack.c.b16 %v563, %v562
    %v567 = vpack.c.b16 %v565, %v564
    %v586 = vunpack.c.l.b16 %v116
    %v587 = vunpack.c.l.b16 %v117
    %v588 = vunpack.c.l.b16 %v118
    %v589 = vunpack.c.l.b16 %v119
    %v590 = vunpack.c.l.b16 %v120
    %v591 = vunpack.c.l.b16 %v121
    %v592 = vunpack.c.l.b16 %v122
    %v593 = vunpack.c.l.b16 %v123
    %v594 = vunpack.c.l.b16 %v124
    %v595 = vunpack.c.l.b16 %v125
    %v596 = vunpack.c.l.b16 %v126
    %v597 = vunpack.c.l.b16 %v127
    %v598 = vunpack.c.l.b16 %v128
    %v599 = vunpack.c.l.b16 %v129
    %v600 = vunpack.c.l.b16 %v130
    %v601 = vunpack.c.l.b16 %v131
    %v602 = vpack.c.b16 %v587, %v586
    %v603 = vpack.c.b16 %v589, %v588
    %v604 = vpack.c.b16 %v591, %v590
    %v605 = vpack.c.b16 %v593, %v592
    %v606 = vpack.c.b16 %v595, %v594
    %v607 = vpack.c.b16 %v597, %v596
    %v608 = vpack.c.b16 %v599, %v598
    %v609 = vpack.c.b16 %v601, %v600
    %618 = vmatpush.bf16.msra.mxu0 %v609
    %619 = vmatpush.bf16.msra.mxu0 %v608
    %620 = vmatpush.bf16.msra.mxu0 %v607
    %621 = vmatpush.bf16.msra.mxu0 %v606
    %622 = vmatpush.bf16.msra.mxu0 %v605
    %623 = vmatpush.bf16.msra.mxu0 %v604
    %624 = vmatpush.bf16.msra.mxu0 %v603
    %625 = vmatpush.bf16.msra.mxu0 %v602
    %626 = vmatmul.bf16.gmra.mxu0 %v566
    %v627 = vpop.f32.mrf.mxu0
    %v628 = vadd.f32 %v399, %v627
    %v629 = vpop.f32.mrf.mxu0
    %v630 = vadd.f32 %v401, %v629
    %631 = vmatmul.bf16.gmra.mxu0 %v277
    %v632 = vpop.f32.mrf.mxu0
    %v633 = vadd.f32 %v404, %v632
    %v634 = vpop.f32.mrf.mxu0
    %v635 = vadd.f32 %v406, %v634
    %636 = vmatmul.bf16.gmra.mxu0 %v278
    %v637 = vpop.f32.mrf.mxu0
    %v638 = vadd.f32 %v409, %v637
    %v639 = vpop.f32.mrf.mxu0
    %v640 = vadd.f32 %v411, %v639
    %641 = vmatmul.bf16.gmra.mxu0 %v279
    %v642 = vpop.f32.mrf.mxu0
    %v643 = vadd.f32 %v414, %v642
    %v644 = vpop.f32.mrf.mxu0
    %v645 = vadd.f32 %v416, %v644
    %646 = vmatmul.bf16.gmra.mxu0 %v280
    %v647 = vpop.f32.mrf.mxu0
    %v648 = vadd.f32 %v419, %v647
    %v649 = vpop.f32.mrf.mxu0
    %v650 = vadd.f32 %v421, %v649
    %651 = vmatmul.bf16.gmra.mxu0 %v281
    %v652 = vpop.f32.mrf.mxu0
    %v653 = vadd.f32 %v424, %v652
    %v654 = vpop.f32.mrf.mxu0
    %v655 = vadd.f32 %v426, %v654
    %656 = vmatmul.bf16.gmra.mxu0 %v282
    %v657 = vpop.f32.mrf.mxu0
    %v658 = vadd.f32 %v429, %v657
    %v659 = vpop.f32.mrf.mxu0
    %v660 = vadd.f32 %v431, %v659
    %661 = vmatmul.bf16.gmra.mxu0 %v283
    %v662 = vpop.f32.mrf.mxu0
    %v663 = vadd.f32 %v434, %v662
    %v664 = vpop.f32.mrf.mxu0
    %v665 = vadd.f32 %v436, %v664
    %666 = vmatmul.bf16.gmra.mxu0 %v284
    %v667 = vpop.f32.mrf.mxu0
    %v668 = vadd.f32 %v439, %v667
    %v669 = vpop.f32.mrf.mxu0
    %v670 = vadd.f32 %v441, %v669
    %671 = vmatmul.bf16.gmra.mxu0 %v285
    %v672 = vpop.f32.mrf.mxu0
    %v673 = vadd.f32 %v444, %v672
    %v674 = vpop.f32.mrf.mxu0
    %v675 = vadd.f32 %v446, %v674
    %676 = vmatmul.bf16.gmra.mxu0 %v286
    %v677 = vpop.f32.mrf.mxu0
    %v678 = vadd.f32 %v449, %v677
    %v679 = vpop.f32.mrf.mxu0
    %v680 = vadd.f32 %v451, %v679
    %681 = vmatmul.bf16.gmra.mxu0 %v287
    %v682 = vpop.f32.mrf.mxu0
    %v683 = vadd.f32 %v454, %v682
    %v684 = vpop.f32.mrf.mxu0
    %v685 = vadd.f32 %v456, %v684
    %686 = vmatmul.bf16.gmra.mxu0 %v288
    %v687 = vpop.f32.mrf.mxu0
    %v688 = vadd.f32 %v459, %v687
    %v689 = vpop.f32.mrf.mxu0
    %v690 = vadd.f32 %v461, %v689
    %691 = vmatmul.bf16.gmra.mxu0 %v289
    %v692 = vpop.f32.mrf.mxu0
    %v693 = vadd.f32 %v464, %v692
    %v694 = vpop.f32.mrf.mxu0
    %v695 = vadd.f32 %v466, %v694
    %696 = vmatmul.bf16.gmra.mxu0 %v290
    %v697 = vpop.f32.mrf.mxu0
    %v698 = vadd.f32 %v469, %v697
    %v699 = vpop.f32.mrf.mxu0
    %v700 = vadd.f32 %v471, %v699
    %701 = vmatmul.bf16.gmra.mxu0 %v291
    %v702 = vpop.f32.mrf.mxu0
    %v703 = vadd.f32 %v474, %v702
    %v704 = vpop.f32.mrf.mxu0
    %v705 = vadd.f32 %v476, %v704
    %706 = vmatmul.bf16.gmra.mxu0 %v567
    %v707 = vpop.f32.mrf.mxu0
    %v708 = vadd.f32 %v479, %v707
    %v709 = vpop.f32.mrf.mxu0
    %v710 = vadd.f32 %v481, %v709
    %711 = vmatmul.bf16.gmra.mxu0 %v293
    %v712 = vpop.f32.mrf.mxu0
    %v713 = vadd.f32 %v484, %v712
    %v714 = vpop.f32.mrf.mxu0
    %v715 = vadd.f32 %v486, %v714
    %716 = vmatmul.bf16.gmra.mxu0 %v294
    %v717 = vpop.f32.mrf.mxu0
    %v718 = vadd.f32 %v489, %v717
    %v719 = vpop.f32.mrf.mxu0
    %v720 = vadd.f32 %v491, %v719
    %721 = vmatmul.bf16.gmra.mxu0 %v295
    %v722 = vpop.f32.mrf.mxu0
    %v723 = vadd.f32 %v494, %v722
    %v724 = vpop.f32.mrf.mxu0
    %v725 = vadd.f32 %v496, %v724
    %726 = vmatmul.bf16.gmra.mxu0 %v296
    %v727 = vpop.f32.mrf.mxu0
    %v728 = vadd.f32 %v499, %v727
    %v729 = vpop.f32.mrf.mxu0
    %v730 = vadd.f32 %v501, %v729
    %731 = vmatmul.bf16.gmra.mxu0 %v297
    %v732 = vpop.f32.mrf.mxu0
    %v733 = vadd.f32 %v504, %v732
    %v734 = vpop.f32.mrf.mxu0
    %v735 = vadd.f32 %v506, %v734
    %736 = vmatmul.bf16.gmra.mxu0 %v298
    %v737 = vpop.f32.mrf.mxu0
    %v738 = vadd.f32 %v509, %v737
    %v739 = vpop.f32.mrf.mxu0
    %v740 = vadd.f32 %v511, %v739
    %741 = vmatmul.bf16.gmra.mxu0 %v299
    %v742 = vpop.f32.mrf.mxu0
    %v743 = vadd.f32 %v514, %v742
    %v744 = vpop.f32.mrf.mxu0
    %v745 = vadd.f32 %v516, %v744
    %746 = vmatmul.bf16.gmra.mxu0 %v300
    %v747 = vpop.f32.mrf.mxu0
    %v748 = vadd.f32 %v519, %v747
    %v749 = vpop.f32.mrf.mxu0
    %v750 = vadd.f32 %v521, %v749
    %751 = vmatmul.bf16.gmra.mxu0 %v301
    %v752 = vpop.f32.mrf.mxu0
    %v753 = vadd.f32 %v524, %v752
    %v754 = vpop.f32.mrf.mxu0
    %v755 = vadd.f32 %v526, %v754
    %756 = vmatmul.bf16.gmra.mxu0 %v302
    %v757 = vpop.f32.mrf.mxu0
    %v758 = vadd.f32 %v529, %v757
    %v759 = vpop.f32.mrf.mxu0
    %v760 = vadd.f32 %v531, %v759
    %761 = vmatmul.bf16.gmra.mxu0 %v303
    %v762 = vpop.f32.mrf.mxu0
    %v763 = vadd.f32 %v534, %v762
    %v764 = vpop.f32.mrf.mxu0
    %v765 = vadd.f32 %v536, %v764
    %766 = vmatmul.bf16.gmra.mxu0 %v304
    %v767 = vpop.f32.mrf.mxu0
    %v768 = vadd.f32 %v539, %v767
    %v769 = vpop.f32.mrf.mxu0
    %v770 = vadd.f32 %v541, %v769
    %771 = vmatmul.bf16.gmra.mxu0 %v305
    %v772 = vpop.f32.mrf.mxu0
    %v773 = vadd.f32 %v544, %v772
    %v774 = vpop.f32.mrf.mxu0
    %v775 = vadd.f32 %v546, %v774
    %776 = vmatmul.bf16.gmra.mxu0 %v306
    %v777 = vpop.f32.mrf.mxu0
    %v778 = vadd.f32 %v549, %v777
    %v779 = vpop.f32.mrf.mxu0
    %v780 = vadd.f32 %v551, %v779
    %781 = vmatmul.bf16.gmra.mxu0 %v307
    %v782 = vpop.f32.mrf.mxu0
    %v783 = vadd.f32 %v554, %v782
    %v784 = vpop.f32.mrf.mxu0
    %v785 = vadd.f32 %v556, %v784
    %786 = vdwg.mxu0
    %s787 = scalar_lea.vmem %s1, 384
    %v788 = vld [vmem:[%s787] sm:$0xf]
    %v789 = vld [vmem:[%s787 + $0x4] sm:$0xf]
    %v790 = vld [vmem:[%s787 + $0x8] sm:$0xf]
    %v791 = vld [vmem:[%s787 + $0xc] sm:$0xf]
    %v792 = vld [vmem:[%s787 + $0x10] sm:$0xf]
    %v793 = vld [vmem:[%s787 + $0x14] sm:$0xf]
    %v794 = vld [vmem:[%s787 + $0x18] sm:$0xf]
    %v795 = vld [vmem:[%s787 + $0x1c] sm:$0xf]
    %v796 = vld [vmem:[%s787 + $0x20] sm:$0xf]
    %v797 = vld [vmem:[%s787 + $0x24] sm:$0xf]
    %v798 = vld [vmem:[%s787 + $0x28] sm:$0xf]
    %v799 = vld [vmem:[%s787 + $0x2c] sm:$0xf]
    %v800 = vld [vmem:[%s787 + $0x30] sm:$0xf]
    %v801 = vld [vmem:[%s787 + $0x34] sm:$0xf]
    %v802 = vld [vmem:[%s787 + $0x38] sm:$0xf]
    %v803 = vld [vmem:[%s787 + $0x3c] sm:$0xf]
    %v808 = vunpack.c.l.b16 %v78
    %v809 = vunpack.c.l.b16 %v79
    %v810 = vunpack.c.l.b16 %v114
    %v811 = vunpack.c.l.b16 %v115
    %v812 = vpack.c.b16 %v809, %v808
    %v813 = vpack.c.b16 %v811, %v810
    %v832 = vunpack.c.l.b16 %v788
    %v833 = vunpack.c.l.b16 %v789
    %v834 = vunpack.c.l.b16 %v790
    %v835 = vunpack.c.l.b16 %v791
    %v836 = vunpack.c.l.b16 %v792
    %v837 = vunpack.c.l.b16 %v793
    %v838 = vunpack.c.l.b16 %v794
    %v839 = vunpack.c.l.b16 %v795
    %v840 = vunpack.c.l.b16 %v796
    %v841 = vunpack.c.l.b16 %v797
    %v842 = vunpack.c.l.b16 %v798
    %v843 = vunpack.c.l.b16 %v799
    %v844 = vunpack.c.l.b16 %v800
    %v845 = vunpack.c.l.b16 %v801
    %v846 = vunpack.c.l.b16 %v802
    %v847 = vunpack.c.l.b16 %v803
    %v848 = vpack.c.b16 %v833, %v832
    %v849 = vpack.c.b16 %v835, %v834
    %v850 = vpack.c.b16 %v837, %v836
    %v851 = vpack.c.b16 %v839, %v838
    %v852 = vpack.c.b16 %v841, %v840
    %v853 = vpack.c.b16 %v843, %v842
    %v854 = vpack.c.b16 %v845, %v844
    %v855 = vpack.c.b16 %v847, %v846
    %864 = vmatpush.bf16.msra.mxu0 %v855
    %865 = vmatpush.bf16.msra.mxu0 %v854
    %866 = vmatpush.bf16.msra.mxu0 %v853
    %867 = vmatpush.bf16.msra.mxu0 %v852
    %868 = vmatpush.bf16.msra.mxu0 %v851
    %869 = vmatpush.bf16.msra.mxu0 %v850
    %870 = vmatpush.bf16.msra.mxu0 %v849
    %871 = vmatpush.bf16.msra.mxu0 %v848
    %872 = vmatmul.bf16.gmra.mxu0 %v278
    %v873 = vpop.f32.mrf.mxu0
    %v874 = vadd.f32 0.0, %v873
    %v875 = vpop.f32.mrf.mxu0
    %v876 = vadd.f32 0.0, %v875
    %877 = vmatmul.bf16.gmra.mxu0 %v279
    %v878 = vpop.f32.mrf.mxu0
    %v879 = vadd.f32 0.0, %v878
    %v880 = vpop.f32.mrf.mxu0
    %v881 = vadd.f32 0.0, %v880
    %882 = vmatmul.bf16.gmra.mxu0 %v280
    %v883 = vpop.f32.mrf.mxu0
    %v884 = vadd.f32 0.0, %v883
    %v885 = vpop.f32.mrf.mxu0
    %v886 = vadd.f32 0.0, %v885
    %887 = vmatmul.bf16.gmra.mxu0 %v281
    %v888 = vpop.f32.mrf.mxu0
    %v889 = vadd.f32 0.0, %v888
    %v890 = vpop.f32.mrf.mxu0
    %v891 = vadd.f32 0.0, %v890
    %892 = vmatmul.bf16.gmra.mxu0 %v282
    %v893 = vpop.f32.mrf.mxu0
    %v894 = vadd.f32 0.0, %v893
    %v895 = vpop.f32.mrf.mxu0
    %v896 = vadd.f32 0.0, %v895
    %897 = vmatmul.bf16.gmra.mxu0 %v283
    %v898 = vpop.f32.mrf.mxu0
    %v899 = vadd.f32 0.0, %v898
    %v900 = vpop.f32.mrf.mxu0
    %v901 = vadd.f32 0.0, %v900
    %902 = vmatmul.bf16.gmra.mxu0 %v284
    %v903 = vpop.f32.mrf.mxu0
    %v904 = vadd.f32 0.0, %v903
    %v905 = vpop.f32.mrf.mxu0
    %v906 = vadd.f32 0.0, %v905
    %907 = vmatmul.bf16.gmra.mxu0 %v285
    %v908 = vpop.f32.mrf.mxu0
    %v909 = vadd.f32 0.0, %v908
    %v910 = vpop.f32.mrf.mxu0
    %v911 = vadd.f32 0.0, %v910
    %912 = vmatmul.bf16.gmra.mxu0 %v286
    %v913 = vpop.f32.mrf.mxu0
    %v914 = vadd.f32 0.0, %v913
    %v915 = vpop.f32.mrf.mxu0
    %v916 = vadd.f32 0.0, %v915
    %917 = vmatmul.bf16.gmra.mxu0 %v287
    %v918 = vpop.f32.mrf.mxu0
    %v919 = vadd.f32 0.0, %v918
    %v920 = vpop.f32.mrf.mxu0
    %v921 = vadd.f32 0.0, %v920
    %922 = vmatmul.bf16.gmra.mxu0 %v288
    %v923 = vpop.f32.mrf.mxu0
    %v924 = vadd.f32 0.0, %v923
    %v925 = vpop.f32.mrf.mxu0
    %v926 = vadd.f32 0.0, %v925
    %927 = vmatmul.bf16.gmra.mxu0 %v289
    %v928 = vpop.f32.mrf.mxu0
    %v929 = vadd.f32 0.0, %v928
    %v930 = vpop.f32.mrf.mxu0
    %v931 = vadd.f32 0.0, %v930
    %932 = vmatmul.bf16.gmra.mxu0 %v290
    %v933 = vpop.f32.mrf.mxu0
    %v934 = vadd.f32 0.0, %v933
    %v935 = vpop.f32.mrf.mxu0
    %v936 = vadd.f32 0.0, %v935
    %937 = vmatmul.bf16.gmra.mxu0 %v291
    %v938 = vpop.f32.mrf.mxu0
    %v939 = vadd.f32 0.0, %v938
    %v940 = vpop.f32.mrf.mxu0
    %v941 = vadd.f32 0.0, %v940
    %942 = vmatmul.bf16.gmra.mxu0 %v292
    %v943 = vpop.f32.mrf.mxu0
    %v944 = vadd.f32 0.0, %v943
    %v945 = vpop.f32.mrf.mxu0
    %v946 = vadd.f32 0.0, %v945
    %947 = vmatmul.bf16.gmra.mxu0 %v812
    %v948 = vpop.f32.mrf.mxu0
    %v949 = vadd.f32 0.0, %v948
    %v950 = vpop.f32.mrf.mxu0
    %v951 = vadd.f32 0.0, %v950
    %952 = vmatmul.bf16.gmra.mxu0 %v294
    %v953 = vpop.f32.mrf.mxu0
    %v954 = vadd.f32 0.0, %v953
    %v955 = vpop.f32.mrf.mxu0
    %v956 = vadd.f32 0.0, %v955
    %957 = vmatmul.bf16.gmra.mxu0 %v295
    %v958 = vpop.f32.mrf.mxu0
    %v959 = vadd.f32 0.0, %v958
    %v960 = vpop.f32.mrf.mxu0
    %v961 = vadd.f32 0.0, %v960
    %962 = vmatmul.bf16.gmra.mxu0 %v296
    %v963 = vpop.f32.mrf.mxu0
    %v964 = vadd.f32 0.0, %v963
    %v965 = vpop.f32.mrf.mxu0
    %v966 = vadd.f32 0.0, %v965
    %967 = vmatmul.bf16.gmra.mxu0 %v297
    %v968 = vpop.f32.mrf.mxu0
    %v969 = vadd.f32 0.0, %v968
    %v970 = vpop.f32.mrf.mxu0
    %v971 = vadd.f32 0.0, %v970
    %972 = vmatmul.bf16.gmra.mxu0 %v298
    %v973 = vpop.f32.mrf.mxu0
    %v974 = vadd.f32 0.0, %v973
    %v975 = vpop.f32.mrf.mxu0
    %v976 = vadd.f32 0.0, %v975
    %977 = vmatmul.bf16.gmra.mxu0 %v299
    %v978 = vpop.f32.mrf.mxu0
    %v979 = vadd.f32 0.0, %v978
    %v980 = vpop.f32.mrf.mxu0
    %v981 = vadd.f32 0.0, %v980
    %982 = vmatmul.bf16.gmra.mxu0 %v300
    %v983 = vpop.f32.mrf.mxu0
    %v984 = vadd.f32 0.0, %v983
    %v985 = vpop.f32.mrf.mxu0
    %v986 = vadd.f32 0.0, %v985
    %987 = vmatmul.bf16.gmra.mxu0 %v301
    %v988 = vpop.f32.mrf.mxu0
    %v989 = vadd.f32 0.0, %v988
    %v990 = vpop.f32.mrf.mxu0
    %v991 = vadd.f32 0.0, %v990
    %992 = vmatmul.bf16.gmra.mxu0 %v302
    %v993 = vpop.f32.mrf.mxu0
    %v994 = vadd.f32 0.0, %v993
    %v995 = vpop.f32.mrf.mxu0
    %v996 = vadd.f32 0.0, %v995
    %997 = vmatmul.bf16.gmra.mxu0 %v303
    %v998 = vpop.f32.mrf.mxu0
    %v999 = vadd.f32 0.0, %v998
    %v1000 = vpop.f32.mrf.mxu0
    %v1001 = vadd.f32 0.0, %v1000
    %1002 = vmatmul.bf16.gmra.mxu0 %v304
    %v1003 = vpop.f32.mrf.mxu0
    %v1004 = vadd.f32 0.0, %v1003
    %v1005 = vpop.f32.mrf.mxu0
    %v1006 = vadd.f32 0.0, %v1005
    %1007 = vmatmul.bf16.gmra.mxu0 %v305
    %v1008 = vpop.f32.mrf.mxu0
    %v1009 = vadd.f32 0.0, %v1008
    %v1010 = vpop.f32.mrf.mxu0
    %v1011 = vadd.f32 0.0, %v1010
    %1012 = vmatmul.bf16.gmra.mxu0 %v306
    %v1013 = vpop.f32.mrf.mxu0
    %v1014 = vadd.f32 0.0, %v1013
    %v1015 = vpop.f32.mrf.mxu0
    %v1016 = vadd.f32 0.0, %v1015
    %1017 = vmatmul.bf16.gmra.mxu0 %v307
    %v1018 = vpop.f32.mrf.mxu0
    %v1019 = vadd.f32 0.0, %v1018
    %v1020 = vpop.f32.mrf.mxu0
    %v1021 = vadd.f32 0.0, %v1020
    %1022 = vmatmul.bf16.gmra.mxu0 %v308
    %v1023 = vpop.f32.mrf.mxu0
    %v1024 = vadd.f32 0.0, %v1023
    %v1025 = vpop.f32.mrf.mxu0
    %v1026 = vadd.f32 0.0, %v1025
    %1027 = vmatmul.bf16.gmra.mxu0 %v813
    %v1028 = vpop.f32.mrf.mxu0
    %v1029 = vadd.f32 0.0, %v1028
    %v1030 = vpop.f32.mrf.mxu0
    %v1031 = vadd.f32 0.0, %v1030
    %1032 = vdwg.mxu0
    %v1033 = vadd.f32 %v628, %v874
    %v1034 = vadd.f32 %v630, %v876
    %v1035 = vadd.f32 %v633, %v879
    %v1036 = vadd.f32 %v635, %v881
    %v1037 = vadd.f32 %v638, %v884
    %v1038 = vadd.f32 %v640, %v886
    %v1039 = vadd.f32 %v643, %v889
    %v1040 = vadd.f32 %v645, %v891
    %v1041 = vadd.f32 %v648, %v894
    %v1042 = vadd.f32 %v650, %v896
    %v1043 = vadd.f32 %v653, %v899
    %v1044 = vadd.f32 %v655, %v901
    %v1045 = vadd.f32 %v658, %v904
    %v1046 = vadd.f32 %v660, %v906
    %v1047 = vadd.f32 %v663, %v909
    %v1048 = vadd.f32 %v665, %v911
    %v1049 = vadd.f32 %v668, %v914
    %v1050 = vadd.f32 %v670, %v916
    %v1051 = vadd.f32 %v673, %v919
    %v1052 = vadd.f32 %v675, %v921
    %v1053 = vadd.f32 %v678, %v924
    %v1054 = vadd.f32 %v680, %v926
    %v1055 = vadd.f32 %v683, %v929
    %v1056 = vadd.f32 %v685, %v931
    %v1057 = vadd.f32 %v688, %v934
    %v1058 = vadd.f32 %v690, %v936
    %v1059 = vadd.f32 %v693, %v939
    %v1060 = vadd.f32 %v695, %v941
    %v1061 = vadd.f32 %v698, %v944
    %v1062 = vadd.f32 %v700, %v946
    %v1063 = vadd.f32 %v703, %v949
    %v1064 = vadd.f32 %v705, %v951
    %v1065 = vadd.f32 %v708, %v954
    %v1066 = vadd.f32 %v710, %v956
    %v1067 = vadd.f32 %v713, %v959
    %v1068 = vadd.f32 %v715, %v961
    %v1069 = vadd.f32 %v718, %v964
    %v1070 = vadd.f32 %v720, %v966
    %v1071 = vadd.f32 %v723, %v969
    %v1072 = vadd.f32 %v725, %v971
    %v1073 = vadd.f32 %v728, %v974
    %v1074 = vadd.f32 %v730, %v976
    %v1075 = vadd.f32 %v733, %v979
    %v1076 = vadd.f32 %v735, %v981
    %v1077 = vadd.f32 %v738, %v984
    %v1078 = vadd.f32 %v740, %v986
    %v1079 = vadd.f32 %v743, %v989
    %v1080 = vadd.f32 %v745, %v991
    %v1081 = vadd.f32 %v748, %v994
    %v1082 = vadd.f32 %v750, %v996
    %v1083 = vadd.f32 %v753, %v999
    %v1084 = vadd.f32 %v755, %v1001
    %v1085 = vadd.f32 %v758, %v1004
    %v1086 = vadd.f32 %v760, %v1006
    %v1087 = vadd.f32 %v763, %v1009
    %v1088 = vadd.f32 %v765, %v1011
    %v1089 = vadd.f32 %v768, %v1014
    %v1090 = vadd.f32 %v770, %v1016
    %v1091 = vadd.f32 %v773, %v1019
    %v1092 = vadd.f32 %v775, %v1021
    %v1093 = vadd.f32 %v778, %v1024
    %v1094 = vadd.f32 %v780, %v1026
    %v1095 = vadd.f32 %v783, %v1029
    %v1096 = vadd.f32 %v785, %v1031
    %v1097 = vld [vmem:[%s0] sm:$0xf]
    %v1098 = vld [vmem:[%s0 + $0x4] sm:$0xf]
    %v1099 = vld [vmem:[%s0 + $0x8] sm:$0x1]
    %v1100 = vld [vmem:[%s0 + $0xc] sm:$0xf]
    %v1101 = vld [vmem:[%s0 + $0x10] sm:$0xf]
    %v1102 = vld [vmem:[%s0 + $0x14] sm:$0x1]
    %v1103 = vld [vmem:[%s0 + $0x18] sm:$0xf]
    %v1104 = vld [vmem:[%s0 + $0x1c] sm:$0xf]
    %v1105 = vld [vmem:[%s0 + $0x20] sm:$0x1]
    %v1106 = vld [vmem:[%s0 + $0x24] sm:$0xf]
    %v1107 = vld [vmem:[%s0 + $0x28] sm:$0xf]
    %v1108 = vld [vmem:[%s0 + $0x2c] sm:$0x1]
    %v1109 = vld [vmem:[%s0 + $0x30] sm:$0xf]
    %v1110 = vld [vmem:[%s0 + $0x34] sm:$0xf]
    %v1111 = vld [vmem:[%s0 + $0x38] sm:$0x1]
    %v1112 = vld [vmem:[%s0 + $0x3c] sm:$0xf]
    %v1113 = vld [vmem:[%s0 + $0x40] sm:$0xf]
    %v1114 = vld [vmem:[%s0 + $0x44] sm:$0x1]
    %v1115 = vld [vmem:[%s0 + $0x48] sm:$0xf]
    %v1116 = vld [vmem:[%s0 + $0x4c] sm:$0xf]
    %v1117 = vld [vmem:[%s0 + $0x50] sm:$0x1]
    %v1118 = vld [vmem:[%s0 + $0x54] sm:$0xf]
    %v1119 = vld [vmem:[%s0 + $0x58] sm:$0xf]
    %v1120 = vld [vmem:[%s0 + $0x5c] sm:$0x1]
    %v1121 = vld [vmem:[%s0 + $0x60] sm:$0xf]
    %v1122 = vld [vmem:[%s0 + $0x64] sm:$0xf]
    %v1123 = vld [vmem:[%s0 + $0x68] sm:$0x1]
    %v1124 = vld [vmem:[%s0 + $0x6c] sm:$0xf]
    %v1125 = vld [vmem:[%s0 + $0x70] sm:$0xf]
    %v1126 = vld [vmem:[%s0 + $0x74] sm:$0x1]
    %v1127 = vld [vmem:[%s0 + $0x78] sm:$0xf]
    %v1128 = vld [vmem:[%s0 + $0x7c] sm:$0xf]
    %v1129 = vld [vmem:[%s0 + $0x80] sm:$0x1]
    %v1130 = vld [vmem:[%s0 + $0x84] sm:$0xf]
    %v1131 = vld [vmem:[%s0 + $0x88] sm:$0xf]
    %v1132 = vld [vmem:[%s0 + $0x8c] sm:$0x1]
    %v1133 = vld [vmem:[%s0 + $0x90] sm:$0xf]
    %v1134 = vld [vmem:[%s0 + $0x94] sm:$0xf]
    %v1135 = vld [vmem:[%s0 + $0x98] sm:$0x1]
    %v1136 = vld [vmem:[%s0 + $0x9c] sm:$0xf]
    %v1137 = vld [vmem:[%s0 + $0xa0] sm:$0xf]
    %v1138 = vld [vmem:[%s0 + $0xa4] sm:$0x1]
    %v1139 = vld [vmem:[%s0 + $0xa8] sm:$0xf]
    %v1140 = vld [vmem:[%s0 + $0xac] sm:$0xf]
    %v1141 = vld [vmem:[%s0 + $0xb0] sm:$0x1]
    %v1142 = vld [vmem:[%s0 + $0xb4] sm:$0xf]
    %v1143 = vld [vmem:[%s0 + $0xb8] sm:$0xf]
    %v1144 = vld [vmem:[%s0 + $0xbc] sm:$0x1]
    %v1145 = vld [vmem:[%s0 + $0xc0] sm:$0xf]
    %v1146 = vld [vmem:[%s0 + $0xc4] sm:$0xf]
    %v1147 = vld [vmem:[%s0 + $0xc8] sm:$0x1]
    %v1148 = vld [vmem:[%s0 + $0xcc] sm:$0xf]
    %v1149 = vld [vmem:[%s0 + $0xd0] sm:$0xf]
    %v1150 = vld [vmem:[%s0 + $0xd4] sm:$0x1]
    %v1151 = vld [vmem:[%s0 + $0xd8] sm:$0xf]
    %v1152 = vld [vmem:[%s0 + $0xdc] sm:$0xf]
    %v1153 = vld [vmem:[%s0 + $0xe0] sm:$0x1]
    %v1154 = vld [vmem:[%s0 + $0xe4] sm:$0xf]
    %v1155 = vld [vmem:[%s0 + $0xe8] sm:$0xf]
    %v1156 = vld [vmem:[%s0 + $0xec] sm:$0x1]
    %v1157 = vld [vmem:[%s0 + $0xf0] sm:$0xf]
    %v1158 = vld [vmem:[%s0 + $0xf4] sm:$0xf]
    %v1159 = vld [vmem:[%s0 + $0xf8] sm:$0x1]
    %v1160 = vld [vmem:[%s0 + $0xfc] sm:$0xf]
    %v1161 = vld [vmem:[%s0 + $0x100] sm:$0xf]
    %v1162 = vld [vmem:[%s0 + $0x104] sm:$0x1]
    %v1163 = vld [vmem:[%s0 + $0x108] sm:$0xf]
    %v1164 = vld [vmem:[%s0 + $0x10c] sm:$0xf]
    %v1165 = vld [vmem:[%s0 + $0x110] sm:$0x1]
    %v1166 = vld [vmem:[%s0 + $0x114] sm:$0xf]
    %v1167 = vld [vmem:[%s0 + $0x118] sm:$0xf]
    %v1168 = vld [vmem:[%s0 + $0x11c] sm:$0x1]
    %v1169 = vld [vmem:[%s0 + $0x120] sm:$0xf]
    %v1170 = vld [vmem:[%s0 + $0x124] sm:$0xf]
    %v1171 = vld [vmem:[%s0 + $0x128] sm:$0x1]
    %v1172 = vld [vmem:[%s0 + $0x12c] sm:$0xf]
    %v1173 = vld [vmem:[%s0 + $0x130] sm:$0xf]
    %v1174 = vld [vmem:[%s0 + $0x134] sm:$0x1]
    %v1175 = vld [vmem:[%s0 + $0x138] sm:$0xf]
    %v1176 = vld [vmem:[%s0 + $0x13c] sm:$0xf]
    %v1177 = vld [vmem:[%s0 + $0x140] sm:$0x1]
    %v1178 = vld [vmem:[%s0 + $0x144] sm:$0xf]
    %v1179 = vld [vmem:[%s0 + $0x148] sm:$0xf]
    %v1180 = vld [vmem:[%s0 + $0x14c] sm:$0x1]
    %v1181 = vld [vmem:[%s0 + $0x150] sm:$0xf]
    %v1182 = vld [vmem:[%s0 + $0x154] sm:$0xf]
    %v1183 = vld [vmem:[%s0 + $0x158] sm:$0x1]
    %v1184 = vld [vmem:[%s0 + $0x15c] sm:$0xf]
    %v1185 = vld [vmem:[%s0 + $0x160] sm:$0xf]
    %v1186 = vld [vmem:[%s0 + $0x164] sm:$0x1]
    %v1187 = vld [vmem:[%s0 + $0x168] sm:$0xf]
    %v1188 = vld [vmem:[%s0 + $0x16c] sm:$0xf]
    %v1189 = vld [vmem:[%s0 + $0x170] sm:$0x1]
    %v1190 = vld [vmem:[%s0 + $0x174] sm:$0xf]
    %v1191 = vld [vmem:[%s0 + $0x178] sm:$0xf]
    %v1192 = vld [vmem:[%s0 + $0x17c] sm:$0x1]
    %v1193 = vld [vmem:[%s0 + $0x180] sm:$0xf]
    %v1194 = vld [vmem:[%s0 + $0x184] sm:$0xf]
    %v1195 = vld [vmem:[%s0 + $0x188] sm:$0x1]
    %v1196 = vld [vmem:[%s0 + $0x18c] sm:$0xf]
    %v1197 = vld [vmem:[%s0 + $0x190] sm:$0xf]
    %v1198 = vld [vmem:[%s0 + $0x194] sm:$0x1]
    %v1199 = vld [vmem:[%s0 + $0x198] sm:$0xf]
    %v1200 = vld [vmem:[%s0 + $0x19c] sm:$0xf]
    %v1201 = vld [vmem:[%s0 + $0x1a0] sm:$0x1]
    %v1202 = vld [vmem:[%s0 + $0x1a4] sm:$0xf]
    %v1203 = vld [vmem:[%s0 + $0x1a8] sm:$0xf]
    %v1204 = vld [vmem:[%s0 + $0x1ac] sm:$0x1]
    %vm1205 = vsmask.f32 3328
    %vm1206 = vsmask.f32 7440
    %vm1207 = vmor %vm1205, %vm1206
    %v1209 = vshrl.u32 %v1097, 16
    %v1211 = vrot.slane %v1209, 4
    %v1212 = vshll.u32 %v1097, 16
    %v1214 = vrot.slane %v1212, 5
    %v1215 = vor.u32 %v1211, %v1214
    %v1216 = vrot.slane %v1215, 4
    %v1218 = vshll.u32 %v1098, 16
    %v1220 = vrot.slane %v1218, 5
    %v1221 = vsel %vm1207, %v1216, %v1220
    %v1222 = vshrl.u32 %v1098, 16
    %v1224 = vrot.slane %v1222, 4
    %v1225 = vor.u32 %v1224, %v1220
    %v1226 = vrot.slane %v1225, 4
    %v1228 = vshll.u32 %v1099, 16
    %v1230 = vrot.slane %v1228, 5
    %v1231 = vsel %vm1207, %v1226, %v1230
    %v1233 = vshrl.u32 %v1100, 16
    %v1235 = vrot.slane %v1233, 4
    %v1236 = vshll.u32 %v1100, 16
    %v1238 = vrot.slane %v1236, 5
    %v1239 = vor.u32 %v1235, %v1238
    %v1240 = vrot.slane %v1239, 4
    %v1242 = vshll.u32 %v1101, 16
    %v1244 = vrot.slane %v1242, 5
    %v1245 = vsel %vm1207, %v1240, %v1244
    %v1246 = vshrl.u32 %v1101, 16
    %v1248 = vrot.slane %v1246, 4
    %v1249 = vor.u32 %v1248, %v1244
    %v1250 = vrot.slane %v1249, 4
    %v1252 = vshll.u32 %v1102, 16
    %v1254 = vrot.slane %v1252, 5
    %v1255 = vsel %vm1207, %v1250, %v1254
    %v1257 = vshrl.u32 %v1103, 16
    %v1259 = vrot.slane %v1257, 4
    %v1260 = vshll.u32 %v1103, 16
    %v1262 = vrot.slane %v1260, 5
    %v1263 = vor.u32 %v1259, %v1262
    %v1264 = vrot.slane %v1263, 4
    %v1266 = vshll.u32 %v1104, 16
    %v1268 = vrot.slane %v1266, 5
    %v1269 = vsel %vm1207, %v1264, %v1268
    %v1270 = vshrl.u32 %v1104, 16
    %v1272 = vrot.slane %v1270, 4
    %v1273 = vor.u32 %v1272, %v1268
    %v1274 = vrot.slane %v1273, 4
    %v1276 = vshll.u32 %v1105, 16
    %v1278 = vrot.slane %v1276, 5
    %v1279 = vsel %vm1207, %v1274, %v1278
    %v1281 = vshrl.u32 %v1106, 16
    %v1283 = vrot.slane %v1281, 4
    %v1284 = vshll.u32 %v1106, 16
    %v1286 = vrot.slane %v1284, 5
    %v1287 = vor.u32 %v1283, %v1286
    %v1288 = vrot.slane %v1287, 4
    %v1290 = vshll.u32 %v1107, 16
    %v1292 = vrot.slane %v1290, 5
    %v1293 = vsel %vm1207, %v1288, %v1292
    %v1294 = vshrl.u32 %v1107, 16
    %v1296 = vrot.slane %v1294, 4
    %v1297 = vor.u32 %v1296, %v1292
    %v1298 = vrot.slane %v1297, 4
    %v1300 = vshll.u32 %v1108, 16
    %v1302 = vrot.slane %v1300, 5
    %v1303 = vsel %vm1207, %v1298, %v1302
    %v1305 = vshrl.u32 %v1109, 16
    %v1307 = vrot.slane %v1305, 4
    %v1308 = vshll.u32 %v1109, 16
    %v1310 = vrot.slane %v1308, 5
    %v1311 = vor.u32 %v1307, %v1310
    %v1312 = vrot.slane %v1311, 4
    %v1314 = vshll.u32 %v1110, 16
    %v1316 = vrot.slane %v1314, 5
    %v1317 = vsel %vm1207, %v1312, %v1316
    %v1318 = vshrl.u32 %v1110, 16
    %v1320 = vrot.slane %v1318, 4
    %v1321 = vor.u32 %v1320, %v1316
    %v1322 = vrot.slane %v1321, 4
    %v1324 = vshll.u32 %v1111, 16
    %v1326 = vrot.slane %v1324, 5
    %v1327 = vsel %vm1207, %v1322, %v1326
    %v1329 = vshrl.u32 %v1112, 16
    %v1331 = vrot.slane %v1329, 4
    %v1332 = vshll.u32 %v1112, 16
    %v1334 = vrot.slane %v1332, 5
    %v1335 = vor.u32 %v1331, %v1334
    %v1336 = vrot.slane %v1335, 4
    %v1338 = vshll.u32 %v1113, 16
    %v1340 = vrot.slane %v1338, 5
    %v1341 = vsel %vm1207, %v1336, %v1340
    %v1342 = vshrl.u32 %v1113, 16
    %v1344 = vrot.slane %v1342, 4
    %v1345 = vor.u32 %v1344, %v1340
    %v1346 = vrot.slane %v1345, 4
    %v1348 = vshll.u32 %v1114, 16
    %v1350 = vrot.slane %v1348, 5
    %v1351 = vsel %vm1207, %v1346, %v1350
    %v1353 = vshrl.u32 %v1115, 16
    %v1355 = vrot.slane %v1353, 4
    %v1356 = vshll.u32 %v1115, 16
    %v1358 = vrot.slane %v1356, 5
    %v1359 = vor.u32 %v1355, %v1358
    %v1360 = vrot.slane %v1359, 4
    %v1362 = vshll.u32 %v1116, 16
    %v1364 = vrot.slane %v1362, 5
    %v1365 = vsel %vm1207, %v1360, %v1364
    %v1366 = vshrl.u32 %v1116, 16
    %v1368 = vrot.slane %v1366, 4
    %v1369 = vor.u32 %v1368, %v1364
    %v1370 = vrot.slane %v1369, 4
    %v1372 = vshll.u32 %v1117, 16
    %v1374 = vrot.slane %v1372, 5
    %v1375 = vsel %vm1207, %v1370, %v1374
    %v1377 = vshrl.u32 %v1118, 16
    %v1379 = vrot.slane %v1377, 4
    %v1380 = vshll.u32 %v1118, 16
    %v1382 = vrot.slane %v1380, 5
    %v1383 = vor.u32 %v1379, %v1382
    %v1384 = vrot.slane %v1383, 4
    %v1386 = vshll.u32 %v1119, 16
    %v1388 = vrot.slane %v1386, 5
    %v1389 = vsel %vm1207, %v1384, %v1388
    %v1390 = vshrl.u32 %v1119, 16
    %v1392 = vrot.slane %v1390, 4
    %v1393 = vor.u32 %v1392, %v1388
    %v1394 = vrot.slane %v1393, 4
    %v1396 = vshll.u32 %v1120, 16
    %v1398 = vrot.slane %v1396, 5
    %v1399 = vsel %vm1207, %v1394, %v1398
    %v1401 = vshrl.u32 %v1121, 16
    %v1403 = vrot.slane %v1401, 4
    %v1404 = vshll.u32 %v1121, 16
    %v1406 = vrot.slane %v1404, 5
    %v1407 = vor.u32 %v1403, %v1406
    %v1408 = vrot.slane %v1407, 4
    %v1410 = vshll.u32 %v1122, 16
    %v1412 = vrot.slane %v1410, 5
    %v1413 = vsel %vm1207, %v1408, %v1412
    %v1414 = vshrl.u32 %v1122, 16
    %v1416 = vrot.slane %v1414, 4
    %v1417 = vor.u32 %v1416, %v1412
    %v1418 = vrot.slane %v1417, 4
    %v1420 = vshll.u32 %v1123, 16
    %v1422 = vrot.slane %v1420, 5
    %v1423 = vsel %vm1207, %v1418, %v1422
    %v1425 = vshrl.u32 %v1124, 16
    %v1427 = vrot.slane %v1425, 4
    %v1428 = vshll.u32 %v1124, 16
    %v1430 = vrot.slane %v1428, 5
    %v1431 = vor.u32 %v1427, %v1430
    %v1432 = vrot.slane %v1431, 4
    %v1434 = vshll.u32 %v1125, 16
    %v1436 = vrot.slane %v1434, 5
    %v1437 = vsel %vm1207, %v1432, %v1436
    %v1438 = vshrl.u32 %v1125, 16
    %v1440 = vrot.slane %v1438, 4
    %v1441 = vor.u32 %v1440, %v1436
    %v1442 = vrot.slane %v1441, 4
    %v1444 = vshll.u32 %v1126, 16
    %v1446 = vrot.slane %v1444, 5
    %v1447 = vsel %vm1207, %v1442, %v1446
    %v1449 = vshrl.u32 %v1127, 16
    %v1451 = vrot.slane %v1449, 4
    %v1452 = vshll.u32 %v1127, 16
    %v1454 = vrot.slane %v1452, 5
    %v1455 = vor.u32 %v1451, %v1454
    %v1456 = vrot.slane %v1455, 4
    %v1458 = vshll.u32 %v1128, 16
    %v1460 = vrot.slane %v1458, 5
    %v1461 = vsel %vm1207, %v1456, %v1460
    %v1462 = vshrl.u32 %v1128, 16
    %v1464 = vrot.slane %v1462, 4
    %v1465 = vor.u32 %v1464, %v1460
    %v1466 = vrot.slane %v1465, 4
    %v1468 = vshll.u32 %v1129, 16
    %v1470 = vrot.slane %v1468, 5
    %v1471 = vsel %vm1207, %v1466, %v1470
    %v1473 = vshrl.u32 %v1130, 16
    %v1475 = vrot.slane %v1473, 4
    %v1476 = vshll.u32 %v1130, 16
    %v1478 = vrot.slane %v1476, 5
    %v1479 = vor.u32 %v1475, %v1478
    %v1480 = vrot.slane %v1479, 4
    %v1482 = vshll.u32 %v1131, 16
    %v1484 = vrot.slane %v1482, 5
    %v1485 = vsel %vm1207, %v1480, %v1484
    %v1486 = vshrl.u32 %v1131, 16
    %v1488 = vrot.slane %v1486, 4
    %v1489 = vor.u32 %v1488, %v1484
    %v1490 = vrot.slane %v1489, 4
    %v1492 = vshll.u32 %v1132, 16
    %v1494 = vrot.slane %v1492, 5
    %v1495 = vsel %vm1207, %v1490, %v1494
    %v1497 = vshrl.u32 %v1133, 16
    %v1499 = vrot.slane %v1497, 4
    %v1500 = vshll.u32 %v1133, 16
    %v1502 = vrot.slane %v1500, 5
    %v1503 = vor.u32 %v1499, %v1502
    %v1504 = vrot.slane %v1503, 4
    %v1506 = vshll.u32 %v1134, 16
    %v1508 = vrot.slane %v1506, 5
    %v1509 = vsel %vm1207, %v1504, %v1508
    %v1510 = vshrl.u32 %v1134, 16
    %v1512 = vrot.slane %v1510, 4
    %v1513 = vor.u32 %v1512, %v1508
    %v1514 = vrot.slane %v1513, 4
    %v1516 = vshll.u32 %v1135, 16
    %v1518 = vrot.slane %v1516, 5
    %v1519 = vsel %vm1207, %v1514, %v1518
    %v1521 = vshrl.u32 %v1136, 16
    %v1523 = vrot.slane %v1521, 4
    %v1524 = vshll.u32 %v1136, 16
    %v1526 = vrot.slane %v1524, 5
    %v1527 = vor.u32 %v1523, %v1526
    %v1528 = vrot.slane %v1527, 4
    %v1530 = vshll.u32 %v1137, 16
    %v1532 = vrot.slane %v1530, 5
    %v1533 = vsel %vm1207, %v1528, %v1532
    %v1534 = vshrl.u32 %v1137, 16
    %v1536 = vrot.slane %v1534, 4
    %v1537 = vor.u32 %v1536, %v1532
    %v1538 = vrot.slane %v1537, 4
    %v1540 = vshll.u32 %v1138, 16
    %v1542 = vrot.slane %v1540, 5
    %v1543 = vsel %vm1207, %v1538, %v1542
    %v1545 = vshrl.u32 %v1139, 16
    %v1547 = vrot.slane %v1545, 4
    %v1548 = vshll.u32 %v1139, 16
    %v1550 = vrot.slane %v1548, 5
    %v1551 = vor.u32 %v1547, %v1550
    %v1552 = vrot.slane %v1551, 4
    %v1554 = vshll.u32 %v1140, 16
    %v1556 = vrot.slane %v1554, 5
    %v1557 = vsel %vm1207, %v1552, %v1556
    %v1558 = vshrl.u32 %v1140, 16
    %v1560 = vrot.slane %v1558, 4
    %v1561 = vor.u32 %v1560, %v1556
    %v1562 = vrot.slane %v1561, 4
    %v1564 = vshll.u32 %v1141, 16
    %v1566 = vrot.slane %v1564, 5
    %v1567 = vsel %vm1207, %v1562, %v1566
    %v1569 = vshrl.u32 %v1142, 16
    %v1571 = vrot.slane %v1569, 4
    %v1572 = vshll.u32 %v1142, 16
    %v1574 = vrot.slane %v1572, 5
    %v1575 = vor.u32 %v1571, %v1574
    %v1576 = vrot.slane %v1575, 4
    %v1578 = vshll.u32 %v1143, 16
    %v1580 = vrot.slane %v1578, 5
    %v1581 = vsel %vm1207, %v1576, %v1580
    %v1582 = vshrl.u32 %v1143, 16
    %v1584 = vrot.slane %v1582, 4
    %v1585 = vor.u32 %v1584, %v1580
    %v1586 = vrot.slane %v1585, 4
    %v1588 = vshll.u32 %v1144, 16
    %v1590 = vrot.slane %v1588, 5
    %v1591 = vsel %vm1207, %v1586, %v1590
    %v1593 = vshrl.u32 %v1151, 16
    %v1595 = vrot.slane %v1593, 4
    %v1596 = vshll.u32 %v1151, 16
    %v1598 = vrot.slane %v1596, 5
    %v1599 = vor.u32 %v1595, %v1598
    %v1600 = vrot.slane %v1599, 4
    %v1602 = vshll.u32 %v1152, 16
    %v1604 = vrot.slane %v1602, 5
    %v1605 = vsel %vm1207, %v1600, %v1604
    %v1606 = vshrl.u32 %v1152, 16
    %v1608 = vrot.slane %v1606, 4
    %v1609 = vor.u32 %v1608, %v1604
    %v1610 = vrot.slane %v1609, 4
    %v1612 = vshll.u32 %v1153, 16
    %v1614 = vrot.slane %v1612, 5
    %v1615 = vsel %vm1207, %v1610, %v1614
    %v1617 = vshrl.u32 %v1154, 16
    %v1619 = vrot.slane %v1617, 4
    %v1620 = vshll.u32 %v1154, 16
    %v1622 = vrot.slane %v1620, 5
    %v1623 = vor.u32 %v1619, %v1622
    %v1624 = vrot.slane %v1623, 4
    %v1626 = vshll.u32 %v1155, 16
    %v1628 = vrot.slane %v1626, 5
    %v1629 = vsel %vm1207, %v1624, %v1628
    %v1630 = vshrl.u32 %v1155, 16
    %v1632 = vrot.slane %v1630, 4
    %v1633 = vor.u32 %v1632, %v1628
    %v1634 = vrot.slane %v1633, 4
    %v1636 = vshll.u32 %v1156, 16
    %v1638 = vrot.slane %v1636, 5
    %v1639 = vsel %vm1207, %v1634, %v1638
    %v1641 = vshrl.u32 %v1157, 16
    %v1643 = vrot.slane %v1641, 4
    %v1644 = vshll.u32 %v1157, 16
    %v1646 = vrot.slane %v1644, 5
    %v1647 = vor.u32 %v1643, %v1646
    %v1648 = vrot.slane %v1647, 4
    %v1650 = vshll.u32 %v1158, 16
    %v1652 = vrot.slane %v1650, 5
    %v1653 = vsel %vm1207, %v1648, %v1652
    %v1654 = vshrl.u32 %v1158, 16
    %v1656 = vrot.slane %v1654, 4
    %v1657 = vor.u32 %v1656, %v1652
    %v1658 = vrot.slane %v1657, 4
    %v1660 = vshll.u32 %v1159, 16
    %v1662 = vrot.slane %v1660, 5
    %v1663 = vsel %vm1207, %v1658, %v1662
    %v1665 = vshrl.u32 %v1160, 16
    %v1667 = vrot.slane %v1665, 4
    %v1668 = vshll.u32 %v1160, 16
    %v1670 = vrot.slane %v1668, 5
    %v1671 = vor.u32 %v1667, %v1670
    %v1672 = vrot.slane %v1671, 4
    %v1674 = vshll.u32 %v1161, 16
    %v1676 = vrot.slane %v1674, 5
    %v1677 = vsel %vm1207, %v1672, %v1676
    %v1678 = vshrl.u32 %v1161, 16
    %v1680 = vrot.slane %v1678, 4
    %v1681 = vor.u32 %v1680, %v1676
    %v1682 = vrot.slane %v1681, 4
    %v1684 = vshll.u32 %v1162, 16
    %v1686 = vrot.slane %v1684, 5
    %v1687 = vsel %vm1207, %v1682, %v1686
    %v1689 = vshrl.u32 %v1163, 16
    %v1691 = vrot.slane %v1689, 4
    %v1692 = vshll.u32 %v1163, 16
    %v1694 = vrot.slane %v1692, 5
    %v1695 = vor.u32 %v1691, %v1694
    %v1696 = vrot.slane %v1695, 4
    %v1698 = vshll.u32 %v1164, 16
    %v1700 = vrot.slane %v1698, 5
    %v1701 = vsel %vm1207, %v1696, %v1700
    %v1702 = vshrl.u32 %v1164, 16
    %v1704 = vrot.slane %v1702, 4
    %v1705 = vor.u32 %v1704, %v1700
    %v1706 = vrot.slane %v1705, 4
    %v1708 = vshll.u32 %v1165, 16
    %v1710 = vrot.slane %v1708, 5
    %v1711 = vsel %vm1207, %v1706, %v1710
    %v1713 = vshrl.u32 %v1166, 16
    %v1715 = vrot.slane %v1713, 4
    %v1716 = vshll.u32 %v1166, 16
    %v1718 = vrot.slane %v1716, 5
    %v1719 = vor.u32 %v1715, %v1718
    %v1720 = vrot.slane %v1719, 4
    %v1722 = vshll.u32 %v1167, 16
    %v1724 = vrot.slane %v1722, 5
    %v1725 = vsel %vm1207, %v1720, %v1724
    %v1726 = vshrl.u32 %v1167, 16
    %v1728 = vrot.slane %v1726, 4
    %v1729 = vor.u32 %v1728, %v1724
    %v1730 = vrot.slane %v1729, 4
    %v1732 = vshll.u32 %v1168, 16
    %v1734 = vrot.slane %v1732, 5
    %v1735 = vsel %vm1207, %v1730, %v1734
    %v1737 = vshrl.u32 %v1169, 16
    %v1739 = vrot.slane %v1737, 4
    %v1740 = vshll.u32 %v1169, 16
    %v1742 = vrot.slane %v1740, 5
    %v1743 = vor.u32 %v1739, %v1742
    %v1744 = vrot.slane %v1743, 4
    %v1746 = vshll.u32 %v1170, 16
    %v1748 = vrot.slane %v1746, 5
    %v1749 = vsel %vm1207, %v1744, %v1748
    %v1750 = vshrl.u32 %v1170, 16
    %v1752 = vrot.slane %v1750, 4
    %v1753 = vor.u32 %v1752, %v1748
    %v1754 = vrot.slane %v1753, 4
    %v1756 = vshll.u32 %v1171, 16
    %v1758 = vrot.slane %v1756, 5
    %v1759 = vsel %vm1207, %v1754, %v1758
    %v1761 = vshrl.u32 %v1172, 16
    %v1763 = vrot.slane %v1761, 4
    %v1764 = vshll.u32 %v1172, 16
    %v1766 = vrot.slane %v1764, 5
    %v1767 = vor.u32 %v1763, %v1766
    %v1768 = vrot.slane %v1767, 4
    %v1770 = vshll.u32 %v1173, 16
    %v1772 = vrot.slane %v1770, 5
    %v1773 = vsel %vm1207, %v1768, %v1772
    %v1774 = vshrl.u32 %v1173, 16
    %v1776 = vrot.slane %v1774, 4
    %v1777 = vor.u32 %v1776, %v1772
    %v1778 = vrot.slane %v1777, 4
    %v1780 = vshll.u32 %v1174, 16
    %v1782 = vrot.slane %v1780, 5
    %v1783 = vsel %vm1207, %v1778, %v1782
    %v1785 = vshrl.u32 %v1175, 16
    %v1787 = vrot.slane %v1785, 4
    %v1788 = vshll.u32 %v1175, 16
    %v1790 = vrot.slane %v1788, 5
    %v1791 = vor.u32 %v1787, %v1790
    %v1792 = vrot.slane %v1791, 4
    %v1794 = vshll.u32 %v1176, 16
    %v1796 = vrot.slane %v1794, 5
    %v1797 = vsel %vm1207, %v1792, %v1796
    %v1798 = vshrl.u32 %v1176, 16
    %v1800 = vrot.slane %v1798, 4
    %v1801 = vor.u32 %v1800, %v1796
    %v1802 = vrot.slane %v1801, 4
    %v1804 = vshll.u32 %v1177, 16
    %v1806 = vrot.slane %v1804, 5
    %v1807 = vsel %vm1207, %v1802, %v1806
    %v1809 = vshrl.u32 %v1178, 16
    %v1811 = vrot.slane %v1809, 4
    %v1812 = vshll.u32 %v1178, 16
    %v1814 = vrot.slane %v1812, 5
    %v1815 = vor.u32 %v1811, %v1814
    %v1816 = vrot.slane %v1815, 4
    %v1818 = vshll.u32 %v1179, 16
    %v1820 = vrot.slane %v1818, 5
    %v1821 = vsel %vm1207, %v1816, %v1820
    %v1822 = vshrl.u32 %v1179, 16
    %v1824 = vrot.slane %v1822, 4
    %v1825 = vor.u32 %v1824, %v1820
    %v1826 = vrot.slane %v1825, 4
    %v1828 = vshll.u32 %v1180, 16
    %v1830 = vrot.slane %v1828, 5
    %v1831 = vsel %vm1207, %v1826, %v1830
    %v1833 = vshrl.u32 %v1181, 16
    %v1835 = vrot.slane %v1833, 4
    %v1836 = vshll.u32 %v1181, 16
    %v1838 = vrot.slane %v1836, 5
    %v1839 = vor.u32 %v1835, %v1838
    %v1840 = vrot.slane %v1839, 4
    %v1842 = vshll.u32 %v1182, 16
    %v1844 = vrot.slane %v1842, 5
    %v1845 = vsel %vm1207, %v1840, %v1844
    %v1846 = vshrl.u32 %v1182, 16
    %v1848 = vrot.slane %v1846, 4
    %v1849 = vor.u32 %v1848, %v1844
    %v1850 = vrot.slane %v1849, 4
    %v1852 = vshll.u32 %v1183, 16
    %v1854 = vrot.slane %v1852, 5
    %v1855 = vsel %vm1207, %v1850, %v1854
    %v1857 = vshrl.u32 %v1184, 16
    %v1859 = vrot.slane %v1857, 4
    %v1860 = vshll.u32 %v1184, 16
    %v1862 = vrot.slane %v1860, 5
    %v1863 = vor.u32 %v1859, %v1862
    %v1864 = vrot.slane %v1863, 4
    %v1866 = vshll.u32 %v1185, 16
    %v1868 = vrot.slane %v1866, 5
    %v1869 = vsel %vm1207, %v1864, %v1868
    %v1870 = vshrl.u32 %v1185, 16
    %v1872 = vrot.slane %v1870, 4
    %v1873 = vor.u32 %v1872, %v1868
    %v1874 = vrot.slane %v1873, 4
    %v1876 = vshll.u32 %v1186, 16
    %v1878 = vrot.slane %v1876, 5
    %v1879 = vsel %vm1207, %v1874, %v1878
    %v1881 = vshrl.u32 %v1187, 16
    %v1883 = vrot.slane %v1881, 4
    %v1884 = vshll.u32 %v1187, 16
    %v1886 = vrot.slane %v1884, 5
    %v1887 = vor.u32 %v1883, %v1886
    %v1888 = vrot.slane %v1887, 4
    %v1890 = vshll.u32 %v1188, 16
    %v1892 = vrot.slane %v1890, 5
    %v1893 = vsel %vm1207, %v1888, %v1892
    %v1894 = vshrl.u32 %v1188, 16
    %v1896 = vrot.slane %v1894, 4
    %v1897 = vor.u32 %v1896, %v1892
    %v1898 = vrot.slane %v1897, 4
    %v1900 = vshll.u32 %v1189, 16
    %v1902 = vrot.slane %v1900, 5
    %v1903 = vsel %vm1207, %v1898, %v1902
    %v1905 = vshrl.u32 %v1190, 16
    %v1907 = vrot.slane %v1905, 4
    %v1908 = vshll.u32 %v1190, 16
    %v1910 = vrot.slane %v1908, 5
    %v1911 = vor.u32 %v1907, %v1910
    %v1912 = vrot.slane %v1911, 4
    %v1914 = vshll.u32 %v1191, 16
    %v1916 = vrot.slane %v1914, 5
    %v1917 = vsel %vm1207, %v1912, %v1916
    %v1918 = vshrl.u32 %v1191, 16
    %v1920 = vrot.slane %v1918, 4
    %v1921 = vor.u32 %v1920, %v1916
    %v1922 = vrot.slane %v1921, 4
    %v1924 = vshll.u32 %v1192, 16
    %v1926 = vrot.slane %v1924, 5
    %v1927 = vsel %vm1207, %v1922, %v1926
    %v1929 = vshrl.u32 %v1193, 16
    %v1931 = vrot.slane %v1929, 4
    %v1932 = vshll.u32 %v1193, 16
    %v1934 = vrot.slane %v1932, 5
    %v1935 = vor.u32 %v1931, %v1934
    %v1936 = vrot.slane %v1935, 4
    %v1938 = vshll.u32 %v1194, 16
    %v1940 = vrot.slane %v1938, 5
    %v1941 = vsel %vm1207, %v1936, %v1940
    %v1942 = vshrl.u32 %v1194, 16
    %v1944 = vrot.slane %v1942, 4
    %v1945 = vor.u32 %v1944, %v1940
    %v1946 = vrot.slane %v1945, 4
    %v1948 = vshll.u32 %v1195, 16
    %v1950 = vrot.slane %v1948, 5
    %v1951 = vsel %vm1207, %v1946, %v1950
    %v1953 = vshrl.u32 %v1196, 16
    %v1955 = vrot.slane %v1953, 4
    %v1956 = vshll.u32 %v1196, 16
    %v1958 = vrot.slane %v1956, 5
    %v1959 = vor.u32 %v1955, %v1958
    %v1960 = vrot.slane %v1959, 4
    %v1962 = vshll.u32 %v1197, 16
    %v1964 = vrot.slane %v1962, 5
    %v1965 = vsel %vm1207, %v1960, %v1964
    %v1966 = vshrl.u32 %v1197, 16
    %v1968 = vrot.slane %v1966, 4
    %v1969 = vor.u32 %v1968, %v1964
    %v1970 = vrot.slane %v1969, 4
    %v1972 = vshll.u32 %v1198, 16
    %v1974 = vrot.slane %v1972, 5
    %v1975 = vsel %vm1207, %v1970, %v1974
    %s1976 = scalar_lea.vmem %s1, 64
    %v1977 = vld [vmem:[%s1976] sm:$0xf]
    %v1978 = vld [vmem:[%s1976 + $0x4] sm:$0xf]
    %v1979 = vld [vmem:[%s1976 + $0x8] sm:$0xf]
    %v1980 = vld [vmem:[%s1976 + $0xc] sm:$0xf]
    %v1981 = vld [vmem:[%s1976 + $0x10] sm:$0xf]
    %v1982 = vld [vmem:[%s1976 + $0x14] sm:$0xf]
    %v1983 = vld [vmem:[%s1976 + $0x18] sm:$0xf]
    %v1984 = vld [vmem:[%s1976 + $0x1c] sm:$0xf]
    %v1985 = vld [vmem:[%s1976 + $0x20] sm:$0xf]
    %v1986 = vld [vmem:[%s1976 + $0x24] sm:$0xf]
    %v1987 = vld [vmem:[%s1976 + $0x28] sm:$0xf]
    %v1988 = vld [vmem:[%s1976 + $0x2c] sm:$0xf]
    %v1989 = vld [vmem:[%s1976 + $0x30] sm:$0xf]
    %v1990 = vld [vmem:[%s1976 + $0x34] sm:$0xf]
    %v1991 = vld [vmem:[%s1976 + $0x38] sm:$0xf]
    %v1992 = vld [vmem:[%s1976 + $0x3c] sm:$0xf]
    %v1993 = vunpack.c.l.b16 %v1221
    %v1994 = vunpack.c.l.b16 %v1231
    %v1995 = vunpack.c.l.b16 %v1245
    %v1996 = vunpack.c.l.b16 %v1255
    %v1997 = vunpack.c.l.b16 %v1269
    %v1998 = vunpack.c.l.b16 %v1279
    %v1999 = vunpack.c.l.b16 %v1293
    %v2000 = vunpack.c.l.b16 %v1303
    %v2001 = vunpack.c.l.b16 %v1317
    %v2002 = vunpack.c.l.b16 %v1327
    %v2003 = vunpack.c.l.b16 %v1341
    %v2004 = vunpack.c.l.b16 %v1351
    %v2005 = vunpack.c.l.b16 %v1365
    %v2006 = vunpack.c.l.b16 %v1375
    %v2007 = vunpack.c.l.b16 %v1389
    %v2008 = vunpack.c.l.b16 %v1399
    %v2009 = vunpack.c.l.b16 %v1413
    %v2010 = vunpack.c.l.b16 %v1423
    %v2011 = vunpack.c.l.b16 %v1437
    %v2012 = vunpack.c.l.b16 %v1447
    %v2013 = vunpack.c.l.b16 %v1461
    %v2014 = vunpack.c.l.b16 %v1471
    %v2015 = vunpack.c.l.b16 %v1485
    %v2016 = vunpack.c.l.b16 %v1495
    %v2017 = vunpack.c.l.b16 %v1509
    %v2018 = vunpack.c.l.b16 %v1519
    %v2019 = vunpack.c.l.b16 %v1533
    %v2020 = vunpack.c.l.b16 %v1543
    %v2021 = vunpack.c.l.b16 %v1557
    %v2022 = vunpack.c.l.b16 %v1567
    %v2023 = vunpack.c.l.b16 %v1581
    %v2024 = vunpack.c.l.b16 %v1591
    %v2025 = vunpack.c.l.b16 %v1605
    %v2026 = vunpack.c.l.b16 %v1615
    %v2027 = vunpack.c.l.b16 %v1629
    %v2028 = vunpack.c.l.b16 %v1639
    %v2029 = vunpack.c.l.b16 %v1653
    %v2030 = vunpack.c.l.b16 %v1663
    %v2031 = vunpack.c.l.b16 %v1677
    %v2032 = vunpack.c.l.b16 %v1687
    %v2033 = vunpack.c.l.b16 %v1701
    %v2034 = vunpack.c.l.b16 %v1711
    %v2035 = vunpack.c.l.b16 %v1725
    %v2036 = vunpack.c.l.b16 %v1735
    %v2037 = vunpack.c.l.b16 %v1749
    %v2038 = vunpack.c.l.b16 %v1759
    %v2039 = vunpack.c.l.b16 %v1773
    %v2040 = vunpack.c.l.b16 %v1783
    %v2041 = vunpack.c.l.b16 %v1797
    %v2042 = vunpack.c.l.b16 %v1807
    %v2043 = vunpack.c.l.b16 %v1821
    %v2044 = vunpack.c.l.b16 %v1831
    %v2045 = vunpack.c.l.b16 %v1845
    %v2046 = vunpack.c.l.b16 %v1855
    %v2047 = vunpack.c.l.b16 %v1869
    %v2048 = vunpack.c.l.b16 %v1879
    %v2049 = vunpack.c.l.b16 %v1893
    %v2050 = vunpack.c.l.b16 %v1903
    %v2051 = vunpack.c.l.b16 %v1917
    %v2052 = vunpack.c.l.b16 %v1927
    %v2053 = vunpack.c.l.b16 %v1941
    %v2054 = vunpack.c.l.b16 %v1951
    %v2055 = vunpack.c.l.b16 %v1965
    %v2056 = vunpack.c.l.b16 %v1975
    %v2057 = vpack.c.b16 %v1994, %v1993
    %v2058 = vpack.c.b16 %v1996, %v1995
    %v2059 = vpack.c.b16 %v1998, %v1997
    %v2060 = vpack.c.b16 %v2000, %v1999
    %v2061 = vpack.c.b16 %v2002, %v2001
    %v2062 = vpack.c.b16 %v2004, %v2003
    %v2063 = vpack.c.b16 %v2006, %v2005
    %v2064 = vpack.c.b16 %v2008, %v2007
    %v2065 = vpack.c.b16 %v2010, %v2009
    %v2066 = vpack.c.b16 %v2012, %v2011
    %v2067 = vpack.c.b16 %v2014, %v2013
    %v2068 = vpack.c.b16 %v2016, %v2015
    %v2069 = vpack.c.b16 %v2018, %v2017
    %v2070 = vpack.c.b16 %v2020, %v2019
    %v2071 = vpack.c.b16 %v2022, %v2021
    %v2072 = vpack.c.b16 %v2024, %v2023
    %v2073 = vpack.c.b16 %v2026, %v2025
    %v2074 = vpack.c.b16 %v2028, %v2027
    %v2075 = vpack.c.b16 %v2030, %v2029
    %v2076 = vpack.c.b16 %v2032, %v2031
    %v2077 = vpack.c.b16 %v2034, %v2033
    %v2078 = vpack.c.b16 %v2036, %v2035
    %v2079 = vpack.c.b16 %v2038, %v2037
    %v2080 = vpack.c.b16 %v2040, %v2039
    %v2081 = vpack.c.b16 %v2042, %v2041
    %v2082 = vpack.c.b16 %v2044, %v2043
    %v2083 = vpack.c.b16 %v2046, %v2045
    %v2084 = vpack.c.b16 %v2048, %v2047
    %v2085 = vpack.c.b16 %v2050, %v2049
    %v2086 = vpack.c.b16 %v2052, %v2051
    %v2087 = vpack.c.b16 %v2054, %v2053
    %v2088 = vpack.c.b16 %v2056, %v2055
    %v2137 = vunpack.c.l.b16 %v1977
    %v2138 = vunpack.c.l.b16 %v1978
    %v2139 = vunpack.c.l.b16 %v1979
    %v2140 = vunpack.c.l.b16 %v1980
    %v2141 = vunpack.c.l.b16 %v1981
    %v2142 = vunpack.c.l.b16 %v1982
    %v2143 = vunpack.c.l.b16 %v1983
    %v2144 = vunpack.c.l.b16 %v1984
    %v2145 = vunpack.c.l.b16 %v1985
    %v2146 = vunpack.c.l.b16 %v1986
    %v2147 = vunpack.c.l.b16 %v1987
    %v2148 = vunpack.c.l.b16 %v1988
    %v2149 = vunpack.c.l.b16 %v1989
    %v2150 = vunpack.c.l.b16 %v1990
    %v2151 = vunpack.c.l.b16 %v1991
    %v2152 = vunpack.c.l.b16 %v1992
    %v2153 = vpack.c.b16 %v2138, %v2137
    %v2154 = vpack.c.b16 %v2140, %v2139
    %v2155 = vpack.c.b16 %v2142, %v2141
    %v2156 = vpack.c.b16 %v2144, %v2143
    %v2157 = vpack.c.b16 %v2146, %v2145
    %v2158 = vpack.c.b16 %v2148, %v2147
    %v2159 = vpack.c.b16 %v2150, %v2149
    %v2160 = vpack.c.b16 %v2152, %v2151
    %2169 = vmatpush.bf16.msra.mxu0 %v2160
    %2170 = vmatpush.bf16.msra.mxu0 %v2159
    %2171 = vmatpush.bf16.msra.mxu0 %v2158
    %2172 = vmatpush.bf16.msra.mxu0 %v2157
    %2173 = vmatpush.bf16.msra.mxu0 %v2156
    %2174 = vmatpush.bf16.msra.mxu0 %v2155
    %2175 = vmatpush.bf16.msra.mxu0 %v2154
    %2176 = vmatpush.bf16.msra.mxu0 %v2153
    %2177 = vmatmul.bf16.gmra.mxu0 %v2057
    %v2178 = vpop.f32.mrf.mxu0
    %v2179 = vadd.f32 0.0, %v2178
    %v2180 = vpop.f32.mrf.mxu0
    %v2181 = vadd.f32 0.0, %v2180
    %2182 = vmatmul.bf16.gmra.mxu0 %v2058
    %v2183 = vpop.f32.mrf.mxu0
    %v2184 = vadd.f32 0.0, %v2183
    %v2185 = vpop.f32.mrf.mxu0
    %v2186 = vadd.f32 0.0, %v2185
    %2187 = vmatmul.bf16.gmra.mxu0 %v2059
    %v2188 = vpop.f32.mrf.mxu0
    %v2189 = vadd.f32 0.0, %v2188
    %v2190 = vpop.f32.mrf.mxu0
    %v2191 = vadd.f32 0.0, %v2190
    %2192 = vmatmul.bf16.gmra.mxu0 %v2060
    %v2193 = vpop.f32.mrf.mxu0
    %v2194 = vadd.f32 0.0, %v2193
    %v2195 = vpop.f32.mrf.mxu0
    %v2196 = vadd.f32 0.0, %v2195
    %2197 = vmatmul.bf16.gmra.mxu0 %v2061
    %v2198 = vpop.f32.mrf.mxu0
    %v2199 = vadd.f32 0.0, %v2198
    %v2200 = vpop.f32.mrf.mxu0
    %v2201 = vadd.f32 0.0, %v2200
    %2202 = vmatmul.bf16.gmra.mxu0 %v2062
    %v2203 = vpop.f32.mrf.mxu0
    %v2204 = vadd.f32 0.0, %v2203
    %v2205 = vpop.f32.mrf.mxu0
    %v2206 = vadd.f32 0.0, %v2205
    %2207 = vmatmul.bf16.gmra.mxu0 %v2063
    %v2208 = vpop.f32.mrf.mxu0
    %v2209 = vadd.f32 0.0, %v2208
    %v2210 = vpop.f32.mrf.mxu0
    %v2211 = vadd.f32 0.0, %v2210
    %2212 = vmatmul.bf16.gmra.mxu0 %v2064
    %v2213 = vpop.f32.mrf.mxu0
    %v2214 = vadd.f32 0.0, %v2213
    %v2215 = vpop.f32.mrf.mxu0
    %v2216 = vadd.f32 0.0, %v2215
    %2217 = vmatmul.bf16.gmra.mxu0 %v2065
    %v2218 = vpop.f32.mrf.mxu0
    %v2219 = vadd.f32 0.0, %v2218
    %v2220 = vpop.f32.mrf.mxu0
    %v2221 = vadd.f32 0.0, %v2220
    %2222 = vmatmul.bf16.gmra.mxu0 %v2066
    %v2223 = vpop.f32.mrf.mxu0
    %v2224 = vadd.f32 0.0, %v2223
    %v2225 = vpop.f32.mrf.mxu0
    %v2226 = vadd.f32 0.0, %v2225
    %2227 = vmatmul.bf16.gmra.mxu0 %v2067
    %v2228 = vpop.f32.mrf.mxu0
    %v2229 = vadd.f32 0.0, %v2228
    %v2230 = vpop.f32.mrf.mxu0
    %v2231 = vadd.f32 0.0, %v2230
    %2232 = vmatmul.bf16.gmra.mxu0 %v2068
    %v2233 = vpop.f32.mrf.mxu0
    %v2234 = vadd.f32 0.0, %v2233
    %v2235 = vpop.f32.mrf.mxu0
    %v2236 = vadd.f32 0.0, %v2235
    %2237 = vmatmul.bf16.gmra.mxu0 %v2069
    %v2238 = vpop.f32.mrf.mxu0
    %v2239 = vadd.f32 0.0, %v2238
    %v2240 = vpop.f32.mrf.mxu0
    %v2241 = vadd.f32 0.0, %v2240
    %2242 = vmatmul.bf16.gmra.mxu0 %v2070
    %v2243 = vpop.f32.mrf.mxu0
    %v2244 = vadd.f32 0.0, %v2243
    %v2245 = vpop.f32.mrf.mxu0
    %v2246 = vadd.f32 0.0, %v2245
    %2247 = vmatmul.bf16.gmra.mxu0 %v2071
    %v2248 = vpop.f32.mrf.mxu0
    %v2249 = vadd.f32 0.0, %v2248
    %v2250 = vpop.f32.mrf.mxu0
    %v2251 = vadd.f32 0.0, %v2250
    %2252 = vmatmul.bf16.gmra.mxu0 %v2072
    %v2253 = vpop.f32.mrf.mxu0
    %v2254 = vadd.f32 0.0, %v2253
    %v2255 = vpop.f32.mrf.mxu0
    %v2256 = vadd.f32 0.0, %v2255
    %2257 = vmatmul.bf16.gmra.mxu0 %v2073
    %v2258 = vpop.f32.mrf.mxu0
    %v2259 = vadd.f32 0.0, %v2258
    %v2260 = vpop.f32.mrf.mxu0
    %v2261 = vadd.f32 0.0, %v2260
    %2262 = vmatmul.bf16.gmra.mxu0 %v2074
    %v2263 = vpop.f32.mrf.mxu0
    %v2264 = vadd.f32 0.0, %v2263
    %v2265 = vpop.f32.mrf.mxu0
    %v2266 = vadd.f32 0.0, %v2265
    %2267 = vmatmul.bf16.gmra.mxu0 %v2075
    %v2268 = vpop.f32.mrf.mxu0
    %v2269 = vadd.f32 0.0, %v2268
    %v2270 = vpop.f32.mrf.mxu0
    %v2271 = vadd.f32 0.0, %v2270
    %2272 = vmatmul.bf16.gmra.mxu0 %v2076
    %v2273 = vpop.f32.mrf.mxu0
    %v2274 = vadd.f32 0.0, %v2273
    %v2275 = vpop.f32.mrf.mxu0
    %v2276 = vadd.f32 0.0, %v2275
    %2277 = vmatmul.bf16.gmra.mxu0 %v2077
    %v2278 = vpop.f32.mrf.mxu0
    %v2279 = vadd.f32 0.0, %v2278
    %v2280 = vpop.f32.mrf.mxu0
    %v2281 = vadd.f32 0.0, %v2280
    %2282 = vmatmul.bf16.gmra.mxu0 %v2078
    %v2283 = vpop.f32.mrf.mxu0
    %v2284 = vadd.f32 0.0, %v2283
    %v2285 = vpop.f32.mrf.mxu0
    %v2286 = vadd.f32 0.0, %v2285
    %2287 = vmatmul.bf16.gmra.mxu0 %v2079
    %v2288 = vpop.f32.mrf.mxu0
    %v2289 = vadd.f32 0.0, %v2288
    %v2290 = vpop.f32.mrf.mxu0
    %v2291 = vadd.f32 0.0, %v2290
    %2292 = vmatmul.bf16.gmra.mxu0 %v2080
    %v2293 = vpop.f32.mrf.mxu0
    %v2294 = vadd.f32 0.0, %v2293
    %v2295 = vpop.f32.mrf.mxu0
    %v2296 = vadd.f32 0.0, %v2295
    %2297 = vmatmul.bf16.gmra.mxu0 %v2081
    %v2298 = vpop.f32.mrf.mxu0
    %v2299 = vadd.f32 0.0, %v2298
    %v2300 = vpop.f32.mrf.mxu0
    %v2301 = vadd.f32 0.0, %v2300
    %2302 = vmatmul.bf16.gmra.mxu0 %v2082
    %v2303 = vpop.f32.mrf.mxu0
    %v2304 = vadd.f32 0.0, %v2303
    %v2305 = vpop.f32.mrf.mxu0
    %v2306 = vadd.f32 0.0, %v2305
    %2307 = vmatmul.bf16.gmra.mxu0 %v2083
    %v2308 = vpop.f32.mrf.mxu0
    %v2309 = vadd.f32 0.0, %v2308
    %v2310 = vpop.f32.mrf.mxu0
    %v2311 = vadd.f32 0.0, %v2310
    %2312 = vmatmul.bf16.gmra.mxu0 %v2084
    %v2313 = vpop.f32.mrf.mxu0
    %v2314 = vadd.f32 0.0, %v2313
    %v2315 = vpop.f32.mrf.mxu0
    %v2316 = vadd.f32 0.0, %v2315
    %2317 = vmatmul.bf16.gmra.mxu0 %v2085
    %v2318 = vpop.f32.mrf.mxu0
    %v2319 = vadd.f32 0.0, %v2318
    %v2320 = vpop.f32.mrf.mxu0
    %v2321 = vadd.f32 0.0, %v2320
    %2322 = vmatmul.bf16.gmra.mxu0 %v2086
    %v2323 = vpop.f32.mrf.mxu0
    %v2324 = vadd.f32 0.0, %v2323
    %v2325 = vpop.f32.mrf.mxu0
    %v2326 = vadd.f32 0.0, %v2325
    %2327 = vmatmul.bf16.gmra.mxu0 %v2087
    %v2328 = vpop.f32.mrf.mxu0
    %v2329 = vadd.f32 0.0, %v2328
    %v2330 = vpop.f32.mrf.mxu0
    %v2331 = vadd.f32 0.0, %v2330
    %2332 = vmatmul.bf16.gmra.mxu0 %v2088
    %v2333 = vpop.f32.mrf.mxu0
    %v2334 = vadd.f32 0.0, %v2333
    %v2335 = vpop.f32.mrf.mxu0
    %v2336 = vadd.f32 0.0, %v2335
    %2337 = vdwg.mxu0
    %v2338 = vadd.f32 %v1033, %v2179
    %v2339 = vadd.f32 %v1034, %v2181
    %v2340 = vadd.f32 %v1035, %v2184
    %v2341 = vadd.f32 %v1036, %v2186
    %v2342 = vadd.f32 %v1037, %v2189
    %v2343 = vadd.f32 %v1038, %v2191
    %v2344 = vadd.f32 %v1039, %v2194
    %v2345 = vadd.f32 %v1040, %v2196
    %v2346 = vadd.f32 %v1041, %v2199
    %v2347 = vadd.f32 %v1042, %v2201
    %v2348 = vadd.f32 %v1043, %v2204
    %v2349 = vadd.f32 %v1044, %v2206
    %v2350 = vadd.f32 %v1045, %v2209
    %v2351 = vadd.f32 %v1046, %v2211
    %v2352 = vadd.f32 %v1047, %v2214
    %v2353 = vadd.f32 %v1048, %v2216
    %v2354 = vadd.f32 %v1049, %v2219
    %v2355 = vadd.f32 %v1050, %v2221
    %v2356 = vadd.f32 %v1051, %v2224
    %v2357 = vadd.f32 %v1052, %v2226
    %v2358 = vadd.f32 %v1053, %v2229
    %v2359 = vadd.f32 %v1054, %v2231
    %v2360 = vadd.f32 %v1055, %v2234
    %v2361 = vadd.f32 %v1056, %v2236
    %v2362 = vadd.f32 %v1057, %v2239
    %v2363 = vadd.f32 %v1058, %v2241
    %v2364 = vadd.f32 %v1059, %v2244
    %v2365 = vadd.f32 %v1060, %v2246
    %v2366 = vadd.f32 %v1061, %v2249
    %v2367 = vadd.f32 %v1062, %v2251
    %v2368 = vadd.f32 %v1063, %v2254
    %v2369 = vadd.f32 %v1064, %v2256
    %v2370 = vadd.f32 %v1065, %v2259
    %v2371 = vadd.f32 %v1066, %v2261
    %v2372 = vadd.f32 %v1067, %v2264
    %v2373 = vadd.f32 %v1068, %v2266
    %v2374 = vadd.f32 %v1069, %v2269
    %v2375 = vadd.f32 %v1070, %v2271
    %v2376 = vadd.f32 %v1071, %v2274
    %v2377 = vadd.f32 %v1072, %v2276
    %v2378 = vadd.f32 %v1073, %v2279
    %v2379 = vadd.f32 %v1074, %v2281
    %v2380 = vadd.f32 %v1075, %v2284
    %v2381 = vadd.f32 %v1076, %v2286
    %v2382 = vadd.f32 %v1077, %v2289
    %v2383 = vadd.f32 %v1078, %v2291
    %v2384 = vadd.f32 %v1079, %v2294
    %v2385 = vadd.f32 %v1080, %v2296
    %v2386 = vadd.f32 %v1081, %v2299
    %v2387 = vadd.f32 %v1082, %v2301
    %v2388 = vadd.f32 %v1083, %v2304
    %v2389 = vadd.f32 %v1084, %v2306
    %v2390 = vadd.f32 %v1085, %v2309
    %v2391 = vadd.f32 %v1086, %v2311
    %v2392 = vadd.f32 %v1087, %v2314
    %v2393 = vadd.f32 %v1088, %v2316
    %v2394 = vadd.f32 %v1089, %v2319
    %v2395 = vadd.f32 %v1090, %v2321
    %v2396 = vadd.f32 %v1091, %v2324
    %v2397 = vadd.f32 %v1092, %v2326
    %v2398 = vadd.f32 %v1093, %v2329
    %v2399 = vadd.f32 %v1094, %v2331
    %v2400 = vadd.f32 %v1095, %v2334
    %v2401 = vadd.f32 %v1096, %v2336
    %v2403 = vshrl.u32 %v1145, 16
    %v2405 = vrot.slane %v2403, 4
    %v2406 = vshll.u32 %v1145, 16
    %v2408 = vrot.slane %v2406, 5
    %v2409 = vor.u32 %v2405, %v2408
    %v2410 = vrot.slane %v2409, 4
    %v2412 = vshll.u32 %v1146, 16
    %v2414 = vrot.slane %v2412, 5
    %v2415 = vsel %vm1207, %v2410, %v2414
    %v2416 = vshrl.u32 %v1146, 16
    %v2418 = vrot.slane %v2416, 4
    %v2419 = vor.u32 %v2418, %v2414
    %v2420 = vrot.slane %v2419, 4
    %v2422 = vshll.u32 %v1147, 16
    %v2424 = vrot.slane %v2422, 5
    %v2425 = vsel %vm1207, %v2420, %v2424
    %v2427 = vshrl.u32 %v1199, 16
    %v2429 = vrot.slane %v2427, 4
    %v2430 = vshll.u32 %v1199, 16
    %v2432 = vrot.slane %v2430, 5
    %v2433 = vor.u32 %v2429, %v2432
    %v2434 = vrot.slane %v2433, 4
    %v2436 = vshll.u32 %v1200, 16
    %v2438 = vrot.slane %v2436, 5
    %v2439 = vsel %vm1207, %v2434, %v2438
    %v2440 = vshrl.u32 %v1200, 16
    %v2442 = vrot.slane %v2440, 4
    %v2443 = vor.u32 %v2442, %v2438
    %v2444 = vrot.slane %v2443, 4
    %v2446 = vshll.u32 %v1201, 16
    %v2448 = vrot.slane %v2446, 5
    %v2449 = vsel %vm1207, %v2444, %v2448
    %s2450 = scalar_lea.vmem %s1, 256
    %v2451 = vld [vmem:[%s2450] sm:$0xf]
    %v2452 = vld [vmem:[%s2450 + $0x4] sm:$0xf]
    %v2453 = vld [vmem:[%s2450 + $0x8] sm:$0xf]
    %v2454 = vld [vmem:[%s2450 + $0xc] sm:$0xf]
    %v2455 = vld [vmem:[%s2450 + $0x10] sm:$0xf]
    %v2456 = vld [vmem:[%s2450 + $0x14] sm:$0xf]
    %v2457 = vld [vmem:[%s2450 + $0x18] sm:$0xf]
    %v2458 = vld [vmem:[%s2450 + $0x1c] sm:$0xf]
    %v2459 = vld [vmem:[%s2450 + $0x20] sm:$0xf]
    %v2460 = vld [vmem:[%s2450 + $0x24] sm:$0xf]
    %v2461 = vld [vmem:[%s2450 + $0x28] sm:$0xf]
    %v2462 = vld [vmem:[%s2450 + $0x2c] sm:$0xf]
    %v2463 = vld [vmem:[%s2450 + $0x30] sm:$0xf]
    %v2464 = vld [vmem:[%s2450 + $0x34] sm:$0xf]
    %v2465 = vld [vmem:[%s2450 + $0x38] sm:$0xf]
    %v2466 = vld [vmem:[%s2450 + $0x3c] sm:$0xf]
    %v2467 = vunpack.c.l.b16 %v2415
    %v2468 = vunpack.c.l.b16 %v2425
    %v2469 = vunpack.c.l.b16 %v2439
    %v2470 = vunpack.c.l.b16 %v2449
    %v2471 = vpack.c.b16 %v2468, %v2467
    %v2472 = vpack.c.b16 %v2470, %v2469
    %v2491 = vunpack.c.l.b16 %v2451
    %v2492 = vunpack.c.l.b16 %v2452
    %v2493 = vunpack.c.l.b16 %v2453
    %v2494 = vunpack.c.l.b16 %v2454
    %v2495 = vunpack.c.l.b16 %v2455
    %v2496 = vunpack.c.l.b16 %v2456
    %v2497 = vunpack.c.l.b16 %v2457
    %v2498 = vunpack.c.l.b16 %v2458
    %v2499 = vunpack.c.l.b16 %v2459
    %v2500 = vunpack.c.l.b16 %v2460
    %v2501 = vunpack.c.l.b16 %v2461
    %v2502 = vunpack.c.l.b16 %v2462
    %v2503 = vunpack.c.l.b16 %v2463
    %v2504 = vunpack.c.l.b16 %v2464
    %v2505 = vunpack.c.l.b16 %v2465
    %v2506 = vunpack.c.l.b16 %v2466
    %v2507 = vpack.c.b16 %v2492, %v2491
    %v2508 = vpack.c.b16 %v2494, %v2493
    %v2509 = vpack.c.b16 %v2496, %v2495
    %v2510 = vpack.c.b16 %v2498, %v2497
    %v2511 = vpack.c.b16 %v2500, %v2499
    %v2512 = vpack.c.b16 %v2502, %v2501
    %v2513 = vpack.c.b16 %v2504, %v2503
    %v2514 = vpack.c.b16 %v2506, %v2505
    %2523 = vmatpush.bf16.msra.mxu0 %v2514
    %2524 = vmatpush.bf16.msra.mxu0 %v2513
    %2525 = vmatpush.bf16.msra.mxu0 %v2512
    %2526 = vmatpush.bf16.msra.mxu0 %v2511
    %2527 = vmatpush.bf16.msra.mxu0 %v2510
    %2528 = vmatpush.bf16.msra.mxu0 %v2509
    %2529 = vmatpush.bf16.msra.mxu0 %v2508
    %2530 = vmatpush.bf16.msra.mxu0 %v2507
    %2531 = vmatmul.bf16.gmra.mxu0 %v2058
    %v2532 = vpop.f32.mrf.mxu0
    %v2533 = vadd.f32 0.0, %v2532
    %v2534 = vpop.f32.mrf.mxu0
    %v2535 = vadd.f32 0.0, %v2534
    %2536 = vmatmul.bf16.gmra.mxu0 %v2059
    %v2537 = vpop.f32.mrf.mxu0
    %v2538 = vadd.f32 0.0, %v2537
    %v2539 = vpop.f32.mrf.mxu0
    %v2540 = vadd.f32 0.0, %v2539
    %2541 = vmatmul.bf16.gmra.mxu0 %v2060
    %v2542 = vpop.f32.mrf.mxu0
    %v2543 = vadd.f32 0.0, %v2542
    %v2544 = vpop.f32.mrf.mxu0
    %v2545 = vadd.f32 0.0, %v2544
    %2546 = vmatmul.bf16.gmra.mxu0 %v2061
    %v2547 = vpop.f32.mrf.mxu0
    %v2548 = vadd.f32 0.0, %v2547
    %v2549 = vpop.f32.mrf.mxu0
    %v2550 = vadd.f32 0.0, %v2549
    %2551 = vmatmul.bf16.gmra.mxu0 %v2062
    %v2552 = vpop.f32.mrf.mxu0
    %v2553 = vadd.f32 0.0, %v2552
    %v2554 = vpop.f32.mrf.mxu0
    %v2555 = vadd.f32 0.0, %v2554
    %2556 = vmatmul.bf16.gmra.mxu0 %v2063
    %v2557 = vpop.f32.mrf.mxu0
    %v2558 = vadd.f32 0.0, %v2557
    %v2559 = vpop.f32.mrf.mxu0
    %v2560 = vadd.f32 0.0, %v2559
    %2561 = vmatmul.bf16.gmra.mxu0 %v2064
    %v2562 = vpop.f32.mrf.mxu0
    %v2563 = vadd.f32 0.0, %v2562
    %v2564 = vpop.f32.mrf.mxu0
    %v2565 = vadd.f32 0.0, %v2564
    %2566 = vmatmul.bf16.gmra.mxu0 %v2065
    %v2567 = vpop.f32.mrf.mxu0
    %v2568 = vadd.f32 0.0, %v2567
    %v2569 = vpop.f32.mrf.mxu0
    %v2570 = vadd.f32 0.0, %v2569
    %2571 = vmatmul.bf16.gmra.mxu0 %v2066
    %v2572 = vpop.f32.mrf.mxu0
    %v2573 = vadd.f32 0.0, %v2572
    %v2574 = vpop.f32.mrf.mxu0
    %v2575 = vadd.f32 0.0, %v2574
    %2576 = vmatmul.bf16.gmra.mxu0 %v2067
    %v2577 = vpop.f32.mrf.mxu0
    %v2578 = vadd.f32 0.0, %v2577
    %v2579 = vpop.f32.mrf.mxu0
    %v2580 = vadd.f32 0.0, %v2579
    %2581 = vmatmul.bf16.gmra.mxu0 %v2068
    %v2582 = vpop.f32.mrf.mxu0
    %v2583 = vadd.f32 0.0, %v2582
    %v2584 = vpop.f32.mrf.mxu0
    %v2585 = vadd.f32 0.0, %v2584
    %2586 = vmatmul.bf16.gmra.mxu0 %v2069
    %v2587 = vpop.f32.mrf.mxu0
    %v2588 = vadd.f32 0.0, %v2587
    %v2589 = vpop.f32.mrf.mxu0
    %v2590 = vadd.f32 0.0, %v2589
    %2591 = vmatmul.bf16.gmra.mxu0 %v2070
    %v2592 = vpop.f32.mrf.mxu0
    %v2593 = vadd.f32 0.0, %v2592
    %v2594 = vpop.f32.mrf.mxu0
    %v2595 = vadd.f32 0.0, %v2594
    %2596 = vmatmul.bf16.gmra.mxu0 %v2071
    %v2597 = vpop.f32.mrf.mxu0
    %v2598 = vadd.f32 0.0, %v2597
    %v2599 = vpop.f32.mrf.mxu0
    %v2600 = vadd.f32 0.0, %v2599
    %2601 = vmatmul.bf16.gmra.mxu0 %v2072
    %v2602 = vpop.f32.mrf.mxu0
    %v2603 = vadd.f32 0.0, %v2602
    %v2604 = vpop.f32.mrf.mxu0
    %v2605 = vadd.f32 0.0, %v2604
    %2606 = vmatmul.bf16.gmra.mxu0 %v2471
    %v2607 = vpop.f32.mrf.mxu0
    %v2608 = vadd.f32 0.0, %v2607
    %v2609 = vpop.f32.mrf.mxu0
    %v2610 = vadd.f32 0.0, %v2609
    %2611 = vmatmul.bf16.gmra.mxu0 %v2074
    %v2612 = vpop.f32.mrf.mxu0
    %v2613 = vadd.f32 0.0, %v2612
    %v2614 = vpop.f32.mrf.mxu0
    %v2615 = vadd.f32 0.0, %v2614
    %2616 = vmatmul.bf16.gmra.mxu0 %v2075
    %v2617 = vpop.f32.mrf.mxu0
    %v2618 = vadd.f32 0.0, %v2617
    %v2619 = vpop.f32.mrf.mxu0
    %v2620 = vadd.f32 0.0, %v2619
    %2621 = vmatmul.bf16.gmra.mxu0 %v2076
    %v2622 = vpop.f32.mrf.mxu0
    %v2623 = vadd.f32 0.0, %v2622
    %v2624 = vpop.f32.mrf.mxu0
    %v2625 = vadd.f32 0.0, %v2624
    %2626 = vmatmul.bf16.gmra.mxu0 %v2077
    %v2627 = vpop.f32.mrf.mxu0
    %v2628 = vadd.f32 0.0, %v2627
    %v2629 = vpop.f32.mrf.mxu0
    %v2630 = vadd.f32 0.0, %v2629
    %2631 = vmatmul.bf16.gmra.mxu0 %v2078
    %v2632 = vpop.f32.mrf.mxu0
    %v2633 = vadd.f32 0.0, %v2632
    %v2634 = vpop.f32.mrf.mxu0
    %v2635 = vadd.f32 0.0, %v2634
    %2636 = vmatmul.bf16.gmra.mxu0 %v2079
    %v2637 = vpop.f32.mrf.mxu0
    %v2638 = vadd.f32 0.0, %v2637
    %v2639 = vpop.f32.mrf.mxu0
    %v2640 = vadd.f32 0.0, %v2639
    %2641 = vmatmul.bf16.gmra.mxu0 %v2080
    %v2642 = vpop.f32.mrf.mxu0
    %v2643 = vadd.f32 0.0, %v2642
    %v2644 = vpop.f32.mrf.mxu0
    %v2645 = vadd.f32 0.0, %v2644
    %2646 = vmatmul.bf16.gmra.mxu0 %v2081
    %v2647 = vpop.f32.mrf.mxu0
    %v2648 = vadd.f32 0.0, %v2647
    %v2649 = vpop.f32.mrf.mxu0
    %v2650 = vadd.f32 0.0, %v2649
    %2651 = vmatmul.bf16.gmra.mxu0 %v2082
    %v2652 = vpop.f32.mrf.mxu0
    %v2653 = vadd.f32 0.0, %v2652
    %v2654 = vpop.f32.mrf.mxu0
    %v2655 = vadd.f32 0.0, %v2654
    %2656 = vmatmul.bf16.gmra.mxu0 %v2083
    %v2657 = vpop.f32.mrf.mxu0
    %v2658 = vadd.f32 0.0, %v2657
    %v2659 = vpop.f32.mrf.mxu0
    %v2660 = vadd.f32 0.0, %v2659
    %2661 = vmatmul.bf16.gmra.mxu0 %v2084
    %v2662 = vpop.f32.mrf.mxu0
    %v2663 = vadd.f32 0.0, %v2662
    %v2664 = vpop.f32.mrf.mxu0
    %v2665 = vadd.f32 0.0, %v2664
    %2666 = vmatmul.bf16.gmra.mxu0 %v2085
    %v2667 = vpop.f32.mrf.mxu0
    %v2668 = vadd.f32 0.0, %v2667
    %v2669 = vpop.f32.mrf.mxu0
    %v2670 = vadd.f32 0.0, %v2669
    %2671 = vmatmul.bf16.gmra.mxu0 %v2086
    %v2672 = vpop.f32.mrf.mxu0
    %v2673 = vadd.f32 0.0, %v2672
    %v2674 = vpop.f32.mrf.mxu0
    %v2675 = vadd.f32 0.0, %v2674
    %2676 = vmatmul.bf16.gmra.mxu0 %v2087
    %v2677 = vpop.f32.mrf.mxu0
    %v2678 = vadd.f32 0.0, %v2677
    %v2679 = vpop.f32.mrf.mxu0
    %v2680 = vadd.f32 0.0, %v2679
    %2681 = vmatmul.bf16.gmra.mxu0 %v2088
    %v2682 = vpop.f32.mrf.mxu0
    %v2683 = vadd.f32 0.0, %v2682
    %v2684 = vpop.f32.mrf.mxu0
    %v2685 = vadd.f32 0.0, %v2684
    %2686 = vmatmul.bf16.gmra.mxu0 %v2472
    %v2687 = vpop.f32.mrf.mxu0
    %v2688 = vadd.f32 0.0, %v2687
    %v2689 = vpop.f32.mrf.mxu0
    %v2690 = vadd.f32 0.0, %v2689
    %2691 = vdwg.mxu0
    %v2692 = vadd.f32 %v2338, %v2533
    %v2693 = vadd.f32 %v2339, %v2535
    %v2694 = vadd.f32 %v2340, %v2538
    %v2695 = vadd.f32 %v2341, %v2540
    %v2696 = vadd.f32 %v2342, %v2543
    %v2697 = vadd.f32 %v2343, %v2545
    %v2698 = vadd.f32 %v2344, %v2548
    %v2699 = vadd.f32 %v2345, %v2550
    %v2700 = vadd.f32 %v2346, %v2553
    %v2701 = vadd.f32 %v2347, %v2555
    %v2702 = vadd.f32 %v2348, %v2558
    %v2703 = vadd.f32 %v2349, %v2560
    %v2704 = vadd.f32 %v2350, %v2563
    %v2705 = vadd.f32 %v2351, %v2565
    %v2706 = vadd.f32 %v2352, %v2568
    %v2707 = vadd.f32 %v2353, %v2570
    %v2708 = vadd.f32 %v2354, %v2573
    %v2709 = vadd.f32 %v2355, %v2575
    %v2710 = vadd.f32 %v2356, %v2578
    %v2711 = vadd.f32 %v2357, %v2580
    %v2712 = vadd.f32 %v2358, %v2583
    %v2713 = vadd.f32 %v2359, %v2585
    %v2714 = vadd.f32 %v2360, %v2588
    %v2715 = vadd.f32 %v2361, %v2590
    %v2716 = vadd.f32 %v2362, %v2593
    %v2717 = vadd.f32 %v2363, %v2595
    %v2718 = vadd.f32 %v2364, %v2598
    %v2719 = vadd.f32 %v2365, %v2600
    %v2720 = vadd.f32 %v2366, %v2603
    %v2721 = vadd.f32 %v2367, %v2605
    %v2722 = vadd.f32 %v2368, %v2608
    %v2723 = vadd.f32 %v2369, %v2610
    %v2724 = vadd.f32 %v2370, %v2613
    %v2725 = vadd.f32 %v2371, %v2615
    %v2726 = vadd.f32 %v2372, %v2618
    %v2727 = vadd.f32 %v2373, %v2620
    %v2728 = vadd.f32 %v2374, %v2623
    %v2729 = vadd.f32 %v2375, %v2625
    %v2730 = vadd.f32 %v2376, %v2628
    %v2731 = vadd.f32 %v2377, %v2630
    %v2732 = vadd.f32 %v2378, %v2633
    %v2733 = vadd.f32 %v2379, %v2635
    %v2734 = vadd.f32 %v2380, %v2638
    %v2735 = vadd.f32 %v2381, %v2640
    %v2736 = vadd.f32 %v2382, %v2643
    %v2737 = vadd.f32 %v2383, %v2645
    %v2738 = vadd.f32 %v2384, %v2648
    %v2739 = vadd.f32 %v2385, %v2650
    %v2740 = vadd.f32 %v2386, %v2653
    %v2741 = vadd.f32 %v2387, %v2655
    %v2742 = vadd.f32 %v2388, %v2658
    %v2743 = vadd.f32 %v2389, %v2660
    %v2744 = vadd.f32 %v2390, %v2663
    %v2745 = vadd.f32 %v2391, %v2665
    %v2746 = vadd.f32 %v2392, %v2668
    %v2747 = vadd.f32 %v2393, %v2670
    %v2748 = vadd.f32 %v2394, %v2673
    %v2749 = vadd.f32 %v2395, %v2675
    %v2750 = vadd.f32 %v2396, %v2678
    %v2751 = vadd.f32 %v2397, %v2680
    %v2752 = vadd.f32 %v2398, %v2683
    %v2753 = vadd.f32 %v2399, %v2685
    %v2754 = vadd.f32 %v2400, %v2688
    %v2755 = vadd.f32 %v2401, %v2690
    %v2757 = vshrl.u32 %v1148, 16
    %v2759 = vrot.slane %v2757, 4
    %v2760 = vshll.u32 %v1148, 16
    %v2762 = vrot.slane %v2760, 5
    %v2763 = vor.u32 %v2759, %v2762
    %v2764 = vrot.slane %v2763, 4
    %v2766 = vshll.u32 %v1149, 16
    %v2768 = vrot.slane %v2766, 5
    %v2769 = vsel %vm1207, %v2764, %v2768
    %v2770 = vshrl.u32 %v1149, 16
    %v2772 = vrot.slane %v2770, 4
    %v2773 = vor.u32 %v2772, %v2768
    %v2774 = vrot.slane %v2773, 4
    %v2776 = vshll.u32 %v1150, 16
    %v2778 = vrot.slane %v2776, 5
    %v2779 = vsel %vm1207, %v2774, %v2778
    %v2781 = vshrl.u32 %v1202, 16
    %v2783 = vrot.slane %v2781, 4
    %v2784 = vshll.u32 %v1202, 16
    %v2786 = vrot.slane %v2784, 5
    %v2787 = vor.u32 %v2783, %v2786
    %v2788 = vrot.slane %v2787, 4
    %v2790 = vshll.u32 %v1203, 16
    %v2792 = vrot.slane %v2790, 5
    %v2793 = vsel %vm1207, %v2788, %v2792
    %v2794 = vshrl.u32 %v1203, 16
    %v2796 = vrot.slane %v2794, 4
    %v2797 = vor.u32 %v2796, %v2792
    %v2798 = vrot.slane %v2797, 4
    %v2800 = vshll.u32 %v1204, 16
    %v2802 = vrot.slane %v2800, 5
    %v2803 = vsel %vm1207, %v2798, %v2802
    %s2804 = scalar_lea.vmem %s1, 448
    %v2805 = vld [vmem:[%s2804] sm:$0xf]
    %v2806 = vld [vmem:[%s2804 + $0x4] sm:$0xf]
    %v2807 = vld [vmem:[%s2804 + $0x8] sm:$0xf]
    %v2808 = vld [vmem:[%s2804 + $0xc] sm:$0xf]
    %v2809 = vld [vmem:[%s2804 + $0x10] sm:$0xf]
    %v2810 = vld [vmem:[%s2804 + $0x14] sm:$0xf]
    %v2811 = vld [vmem:[%s2804 + $0x18] sm:$0xf]
    %v2812 = vld [vmem:[%s2804 + $0x1c] sm:$0xf]
    %v2813 = vld [vmem:[%s2804 + $0x20] sm:$0xf]
    %v2814 = vld [vmem:[%s2804 + $0x24] sm:$0xf]
    %v2815 = vld [vmem:[%s2804 + $0x28] sm:$0xf]
    %v2816 = vld [vmem:[%s2804 + $0x2c] sm:$0xf]
    %v2817 = vld [vmem:[%s2804 + $0x30] sm:$0xf]
    %v2818 = vld [vmem:[%s2804 + $0x34] sm:$0xf]
    %v2819 = vld [vmem:[%s2804 + $0x38] sm:$0xf]
    %v2820 = vld [vmem:[%s2804 + $0x3c] sm:$0xf]
    %v2821 = vunpack.c.l.b16 %v2769
    %v2822 = vunpack.c.l.b16 %v2779
    %v2823 = vunpack.c.l.b16 %v2793
    %v2824 = vunpack.c.l.b16 %v2803
    %v2825 = vpack.c.b16 %v2822, %v2821
    %v2826 = vpack.c.b16 %v2824, %v2823
    %v2845 = vunpack.c.l.b16 %v2805
    %v2846 = vunpack.c.l.b16 %v2806
    %v2847 = vunpack.c.l.b16 %v2807
    %v2848 = vunpack.c.l.b16 %v2808
    %v2849 = vunpack.c.l.b16 %v2809
    %v2850 = vunpack.c.l.b16 %v2810
    %v2851 = vunpack.c.l.b16 %v2811
    %v2852 = vunpack.c.l.b16 %v2812
    %v2853 = vunpack.c.l.b16 %v2813
    %v2854 = vunpack.c.l.b16 %v2814
    %v2855 = vunpack.c.l.b16 %v2815
    %v2856 = vunpack.c.l.b16 %v2816
    %v2857 = vunpack.c.l.b16 %v2817
    %v2858 = vunpack.c.l.b16 %v2818
    %v2859 = vunpack.c.l.b16 %v2819
    %v2860 = vunpack.c.l.b16 %v2820
    %v2861 = vpack.c.b16 %v2846, %v2845
    %v2862 = vpack.c.b16 %v2848, %v2847
    %v2863 = vpack.c.b16 %v2850, %v2849
    %v2864 = vpack.c.b16 %v2852, %v2851
    %v2865 = vpack.c.b16 %v2854, %v2853
    %v2866 = vpack.c.b16 %v2856, %v2855
    %v2867 = vpack.c.b16 %v2858, %v2857
    %v2868 = vpack.c.b16 %v2860, %v2859
    %2877 = vmatpush.bf16.msra.mxu0 %v2868
    %2878 = vmatpush.bf16.msra.mxu0 %v2867
    %2879 = vmatpush.bf16.msra.mxu0 %v2866
    %2880 = vmatpush.bf16.msra.mxu0 %v2865
    %2881 = vmatpush.bf16.msra.mxu0 %v2864
    %2882 = vmatpush.bf16.msra.mxu0 %v2863
    %2883 = vmatpush.bf16.msra.mxu0 %v2862
    %2884 = vmatpush.bf16.msra.mxu0 %v2861
    %2885 = vmatmul.bf16.gmra.mxu0 %v2059
    %v2886 = vpop.f32.mrf.mxu0
    %v2887 = vadd.f32 0.0, %v2886
    %v2888 = vpop.f32.mrf.mxu0
    %v2889 = vadd.f32 0.0, %v2888
    %2890 = vmatmul.bf16.gmra.mxu0 %v2060
    %v2891 = vpop.f32.mrf.mxu0
    %v2892 = vadd.f32 0.0, %v2891
    %v2893 = vpop.f32.mrf.mxu0
    %v2894 = vadd.f32 0.0, %v2893
    %2895 = vmatmul.bf16.gmra.mxu0 %v2061
    %v2896 = vpop.f32.mrf.mxu0
    %v2897 = vadd.f32 0.0, %v2896
    %v2898 = vpop.f32.mrf.mxu0
    %v2899 = vadd.f32 0.0, %v2898
    %2900 = vmatmul.bf16.gmra.mxu0 %v2062
    %v2901 = vpop.f32.mrf.mxu0
    %v2902 = vadd.f32 0.0, %v2901
    %v2903 = vpop.f32.mrf.mxu0
    %v2904 = vadd.f32 0.0, %v2903
    %2905 = vmatmul.bf16.gmra.mxu0 %v2063
    %v2906 = vpop.f32.mrf.mxu0
    %v2907 = vadd.f32 0.0, %v2906
    %v2908 = vpop.f32.mrf.mxu0
    %v2909 = vadd.f32 0.0, %v2908
    %2910 = vmatmul.bf16.gmra.mxu0 %v2064
    %v2911 = vpop.f32.mrf.mxu0
    %v2912 = vadd.f32 0.0, %v2911
    %v2913 = vpop.f32.mrf.mxu0
    %v2914 = vadd.f32 0.0, %v2913
    %2915 = vmatmul.bf16.gmra.mxu0 %v2065
    %v2916 = vpop.f32.mrf.mxu0
    %v2917 = vadd.f32 0.0, %v2916
    %v2918 = vpop.f32.mrf.mxu0
    %v2919 = vadd.f32 0.0, %v2918
    %2920 = vmatmul.bf16.gmra.mxu0 %v2066
    %v2921 = vpop.f32.mrf.mxu0
    %v2922 = vadd.f32 0.0, %v2921
    %v2923 = vpop.f32.mrf.mxu0
    %v2924 = vadd.f32 0.0, %v2923
    %2925 = vmatmul.bf16.gmra.mxu0 %v2067
    %v2926 = vpop.f32.mrf.mxu0
    %v2927 = vadd.f32 0.0, %v2926
    %v2928 = vpop.f32.mrf.mxu0
    %v2929 = vadd.f32 0.0, %v2928
    %2930 = vmatmul.bf16.gmra.mxu0 %v2068
    %v2931 = vpop.f32.mrf.mxu0
    %v2932 = vadd.f32 0.0, %v2931
    %v2933 = vpop.f32.mrf.mxu0
    %v2934 = vadd.f32 0.0, %v2933
    %2935 = vmatmul.bf16.gmra.mxu0 %v2069
    %v2936 = vpop.f32.mrf.mxu0
    %v2937 = vadd.f32 0.0, %v2936
    %v2938 = vpop.f32.mrf.mxu0
    %v2939 = vadd.f32 0.0, %v2938
    %2940 = vmatmul.bf16.gmra.mxu0 %v2070
    %v2941 = vpop.f32.mrf.mxu0
    %v2942 = vadd.f32 0.0, %v2941
    %v2943 = vpop.f32.mrf.mxu0
    %v2944 = vadd.f32 0.0, %v2943
    %2945 = vmatmul.bf16.gmra.mxu0 %v2071
    %v2946 = vpop.f32.mrf.mxu0
    %v2947 = vadd.f32 0.0, %v2946
    %v2948 = vpop.f32.mrf.mxu0
    %v2949 = vadd.f32 0.0, %v2948
    %2950 = vmatmul.bf16.gmra.mxu0 %v2072
    %v2951 = vpop.f32.mrf.mxu0
    %v2952 = vadd.f32 0.0, %v2951
    %v2953 = vpop.f32.mrf.mxu0
    %v2954 = vadd.f32 0.0, %v2953
    %2955 = vmatmul.bf16.gmra.mxu0 %v2471
    %v2956 = vpop.f32.mrf.mxu0
    %v2957 = vadd.f32 0.0, %v2956
    %v2958 = vpop.f32.mrf.mxu0
    %v2959 = vadd.f32 0.0, %v2958
    %2960 = vmatmul.bf16.gmra.mxu0 %v2825
    %v2961 = vpop.f32.mrf.mxu0
    %v2962 = vadd.f32 0.0, %v2961
    %v2963 = vpop.f32.mrf.mxu0
    %v2964 = vadd.f32 0.0, %v2963
    %2965 = vmatmul.bf16.gmra.mxu0 %v2075
    %v2966 = vpop.f32.mrf.mxu0
    %v2967 = vadd.f32 0.0, %v2966
    %v2968 = vpop.f32.mrf.mxu0
    %v2969 = vadd.f32 0.0, %v2968
    %2970 = vmatmul.bf16.gmra.mxu0 %v2076
    %v2971 = vpop.f32.mrf.mxu0
    %v2972 = vadd.f32 0.0, %v2971
    %v2973 = vpop.f32.mrf.mxu0
    %v2974 = vadd.f32 0.0, %v2973
    %2975 = vmatmul.bf16.gmra.mxu0 %v2077
    %v2976 = vpop.f32.mrf.mxu0
    %v2977 = vadd.f32 0.0, %v2976
    %v2978 = vpop.f32.mrf.mxu0
    %v2979 = vadd.f32 0.0, %v2978
    %2980 = vmatmul.bf16.gmra.mxu0 %v2078
    %v2981 = vpop.f32.mrf.mxu0
    %v2982 = vadd.f32 0.0, %v2981
    %v2983 = vpop.f32.mrf.mxu0
    %v2984 = vadd.f32 0.0, %v2983
    %2985 = vmatmul.bf16.gmra.mxu0 %v2079
    %v2986 = vpop.f32.mrf.mxu0
    %v2987 = vadd.f32 0.0, %v2986
    %v2988 = vpop.f32.mrf.mxu0
    %v2989 = vadd.f32 0.0, %v2988
    %2990 = vmatmul.bf16.gmra.mxu0 %v2080
    %v2991 = vpop.f32.mrf.mxu0
    %v2992 = vadd.f32 0.0, %v2991
    %v2993 = vpop.f32.mrf.mxu0
    %v2994 = vadd.f32 0.0, %v2993
    %2995 = vmatmul.bf16.gmra.mxu0 %v2081
    %v2996 = vpop.f32.mrf.mxu0
    %v2997 = vadd.f32 0.0, %v2996
    %v2998 = vpop.f32.mrf.mxu0
    %v2999 = vadd.f32 0.0, %v2998
    %3000 = vmatmul.bf16.gmra.mxu0 %v2082
    %v3001 = vpop.f32.mrf.mxu0
    %v3002 = vadd.f32 0.0, %v3001
    %v3003 = vpop.f32.mrf.mxu0
    %v3004 = vadd.f32 0.0, %v3003
    %3005 = vmatmul.bf16.gmra.mxu0 %v2083
    %v3006 = vpop.f32.mrf.mxu0
    %v3007 = vadd.f32 0.0, %v3006
    %v3008 = vpop.f32.mrf.mxu0
    %v3009 = vadd.f32 0.0, %v3008
    %3010 = vmatmul.bf16.gmra.mxu0 %v2084
    %v3011 = vpop.f32.mrf.mxu0
    %v3012 = vadd.f32 0.0, %v3011
    %v3013 = vpop.f32.mrf.mxu0
    %v3014 = vadd.f32 0.0, %v3013
    %3015 = vmatmul.bf16.gmra.mxu0 %v2085
    %v3016 = vpop.f32.mrf.mxu0
    %v3017 = vadd.f32 0.0, %v3016
    %v3018 = vpop.f32.mrf.mxu0
    %v3019 = vadd.f32 0.0, %v3018
    %3020 = vmatmul.bf16.gmra.mxu0 %v2086
    %v3021 = vpop.f32.mrf.mxu0
    %v3022 = vadd.f32 0.0, %v3021
    %v3023 = vpop.f32.mrf.mxu0
    %v3024 = vadd.f32 0.0, %v3023
    %3025 = vmatmul.bf16.gmra.mxu0 %v2087
    %v3026 = vpop.f32.mrf.mxu0
    %v3027 = vadd.f32 0.0, %v3026
    %v3028 = vpop.f32.mrf.mxu0
    %v3029 = vadd.f32 0.0, %v3028
    %3030 = vmatmul.bf16.gmra.mxu0 %v2088
    %v3031 = vpop.f32.mrf.mxu0
    %v3032 = vadd.f32 0.0, %v3031
    %v3033 = vpop.f32.mrf.mxu0
    %v3034 = vadd.f32 0.0, %v3033
    %3035 = vmatmul.bf16.gmra.mxu0 %v2472
    %v3036 = vpop.f32.mrf.mxu0
    %v3037 = vadd.f32 0.0, %v3036
    %v3038 = vpop.f32.mrf.mxu0
    %v3039 = vadd.f32 0.0, %v3038
    %3040 = vmatmul.bf16.gmra.mxu0 %v2826
    %v3041 = vpop.f32.mrf.mxu0
    %v3042 = vadd.f32 0.0, %v3041
    %v3043 = vpop.f32.mrf.mxu0
    %v3044 = vadd.f32 0.0, %v3043
    %3045 = vdwg.mxu0
    %v3046 = vadd.f32 %v2692, %v2887
    %v3047 = vadd.f32 %v2693, %v2889
    %v3048 = vadd.f32 %v2694, %v2892
    %v3049 = vadd.f32 %v2695, %v2894
    %v3050 = vadd.f32 %v2696, %v2897
    %v3051 = vadd.f32 %v2697, %v2899
    %v3052 = vadd.f32 %v2698, %v2902
    %v3053 = vadd.f32 %v2699, %v2904
    %v3054 = vadd.f32 %v2700, %v2907
    %v3055 = vadd.f32 %v2701, %v2909
    %v3056 = vadd.f32 %v2702, %v2912
    %v3057 = vadd.f32 %v2703, %v2914
    %v3058 = vadd.f32 %v2704, %v2917
    %v3059 = vadd.f32 %v2705, %v2919
    %v3060 = vadd.f32 %v2706, %v2922
    %v3061 = vadd.f32 %v2707, %v2924
    %v3062 = vadd.f32 %v2708, %v2927
    %v3063 = vadd.f32 %v2709, %v2929
    %v3064 = vadd.f32 %v2710, %v2932
    %v3065 = vadd.f32 %v2711, %v2934
    %v3066 = vadd.f32 %v2712, %v2937
    %v3067 = vadd.f32 %v2713, %v2939
    %v3068 = vadd.f32 %v2714, %v2942
    %v3069 = vadd.f32 %v2715, %v2944
    %v3070 = vadd.f32 %v2716, %v2947
    %v3071 = vadd.f32 %v2717, %v2949
    %v3072 = vadd.f32 %v2718, %v2952
    %v3073 = vadd.f32 %v2719, %v2954
    %v3074 = vadd.f32 %v2720, %v2957
    %v3075 = vadd.f32 %v2721, %v2959
    %v3076 = vadd.f32 %v2722, %v2962
    %v3077 = vadd.f32 %v2723, %v2964
    %v3078 = vadd.f32 %v2724, %v2967
    %v3079 = vadd.f32 %v2725, %v2969
    %v3080 = vadd.f32 %v2726, %v2972
    %v3081 = vadd.f32 %v2727, %v2974
    %v3082 = vadd.f32 %v2728, %v2977
    %v3083 = vadd.f32 %v2729, %v2979
    %v3084 = vadd.f32 %v2730, %v2982
    %v3085 = vadd.f32 %v2731, %v2984
    %v3086 = vadd.f32 %v2732, %v2987
    %v3087 = vadd.f32 %v2733, %v2989
    %v3088 = vadd.f32 %v2734, %v2992
    %v3089 = vadd.f32 %v2735, %v2994
    %v3090 = vadd.f32 %v2736, %v2997
    %v3091 = vadd.f32 %v2737, %v2999
    %v3092 = vadd.f32 %v2738, %v3002
    %v3093 = vadd.f32 %v2739, %v3004
    %v3094 = vadd.f32 %v2740, %v3007
    %v3095 = vadd.f32 %v2741, %v3009
    %v3096 = vadd.f32 %v2742, %v3012
    %v3097 = vadd.f32 %v2743, %v3014
    %v3098 = vadd.f32 %v2744, %v3017
    %v3099 = vadd.f32 %v2745, %v3019
    %v3100 = vadd.f32 %v2746, %v3022
    %v3101 = vadd.f32 %v2747, %v3024
    %v3102 = vadd.f32 %v2748, %v3027
    %v3103 = vadd.f32 %v2749, %v3029
    %v3104 = vadd.f32 %v2750, %v3032
    %v3105 = vadd.f32 %v2751, %v3034
    %v3106 = vadd.f32 %v2752, %v3037
    %v3107 = vadd.f32 %v2753, %v3039
    %v3108 = vadd.f32 %v2754, %v3042
    %v3109 = vadd.f32 %v2755, %v3044
    %v3110 = vld [vmem:[%s0] sm:$0xe]
    %v3111 = vld [vmem:[%s0 + $0xc] sm:$0xe]
    %v3112 = vld [vmem:[%s0 + $0x18] sm:$0xe]
    %v3113 = vld [vmem:[%s0 + $0x24] sm:$0xe]
    %v3114 = vld [vmem:[%s0 + $0x30] sm:$0xe]
    %v3115 = vld [vmem:[%s0 + $0x3c] sm:$0xe]
    %v3116 = vld [vmem:[%s0 + $0x48] sm:$0xe]
    %v3117 = vld [vmem:[%s0 + $0x54] sm:$0xe]
    %v3118 = vld [vmem:[%s0 + $0x60] sm:$0xe]
    %v3119 = vld [vmem:[%s0 + $0x6c] sm:$0xe]
    %v3120 = vld [vmem:[%s0 + $0x78] sm:$0xe]
    %v3121 = vld [vmem:[%s0 + $0x84] sm:$0xe]
    %v3122 = vld [vmem:[%s0 + $0x90] sm:$0xe]
    %v3123 = vld [vmem:[%s0 + $0x9c] sm:$0xe]
    %v3124 = vld [vmem:[%s0 + $0xa8] sm:$0xe]
    %v3125 = vld [vmem:[%s0 + $0xb4] sm:$0xe]
    %v3126 = vld [vmem:[%s0 + $0xc0] sm:$0xe]
    %v3127 = vld [vmem:[%s0 + $0xcc] sm:$0xe]
    %v3128 = vld [vmem:[%s0 + $0xd8] sm:$0xe]
    %v3129 = vld [vmem:[%s0 + $0xe4] sm:$0xe]
    %v3130 = vld [vmem:[%s0 + $0xf0] sm:$0xe]
    %v3131 = vld [vmem:[%s0 + $0xfc] sm:$0xe]
    %v3132 = vld [vmem:[%s0 + $0x108] sm:$0xe]
    %v3133 = vld [vmem:[%s0 + $0x114] sm:$0xe]
    %v3134 = vld [vmem:[%s0 + $0x120] sm:$0xe]
    %v3135 = vld [vmem:[%s0 + $0x12c] sm:$0xe]
    %v3136 = vld [vmem:[%s0 + $0x138] sm:$0xe]
    %v3137 = vld [vmem:[%s0 + $0x144] sm:$0xe]
    %v3138 = vld [vmem:[%s0 + $0x150] sm:$0xe]
    %v3139 = vld [vmem:[%s0 + $0x15c] sm:$0xe]
    %v3140 = vld [vmem:[%s0 + $0x168] sm:$0xe]
    %v3141 = vld [vmem:[%s0 + $0x174] sm:$0xe]
    %v3142 = vld [vmem:[%s0 + $0x180] sm:$0xe]
    %v3143 = vld [vmem:[%s0 + $0x18c] sm:$0xe]
    %v3144 = vld [vmem:[%s0 + $0x198] sm:$0xe]
    %v3145 = vld [vmem:[%s0 + $0x1a4] sm:$0xe]
    %vm3242 = vcmask 1042432
    %vm3243 = vcmask 1046532
    %vm3244 = vmor %vm3242, %vm3243
    %v3245 = vrot.slane %v3110, 5
    %v3246 = vrot.slane %v3245, 4
    %v3247 = vrot.slane %v1098, 5
    %v3248 = vsel %vm3244, %v3246, %v3247
    %v3249 = vrot.slane %v3247, 4
    %v3250 = vrot.slane %v1099, 5
    %v3251 = vsel %vm3244, %v3249, %v3250
    %v3252 = vrot.slane %v3111, 5
    %v3253 = vrot.slane %v3252, 4
    %v3254 = vrot.slane %v1101, 5
    %v3255 = vsel %vm3244, %v3253, %v3254
    %v3256 = vrot.slane %v3254, 4
    %v3257 = vrot.slane %v1102, 5
    %v3258 = vsel %vm3244, %v3256, %v3257
    %v3259 = vrot.slane %v3112, 5
    %v3260 = vrot.slane %v3259, 4
    %v3261 = vrot.slane %v1104, 5
    %v3262 = vsel %vm3244, %v3260, %v3261
    %v3263 = vrot.slane %v3261, 4
    %v3264 = vrot.slane %v1105, 5
    %v3265 = vsel %vm3244, %v3263, %v3264
    %v3266 = vrot.slane %v3113, 5
    %v3267 = vrot.slane %v3266, 4
    %v3268 = vrot.slane %v1107, 5
    %v3269 = vsel %vm3244, %v3267, %v3268
    %v3270 = vrot.slane %v3268, 4
    %v3271 = vrot.slane %v1108, 5
    %v3272 = vsel %vm3244, %v3270, %v3271
    %v3273 = vrot.slane %v3114, 5
    %v3274 = vrot.slane %v3273, 4
    %v3275 = vrot.slane %v1110, 5
    %v3276 = vsel %vm3244, %v3274, %v3275
    %v3277 = vrot.slane %v3275, 4
    %v3278 = vrot.slane %v1111, 5
    %v3279 = vsel %vm3244, %v3277, %v3278
    %v3280 = vrot.slane %v3115, 5
    %v3281 = vrot.slane %v3280, 4
    %v3282 = vrot.slane %v1113, 5
    %v3283 = vsel %vm3244, %v3281, %v3282
    %v3284 = vrot.slane %v3282, 4
    %v3285 = vrot.slane %v1114, 5
    %v3286 = vsel %vm3244, %v3284, %v3285
    %v3287 = vrot.slane %v3116, 5
    %v3288 = vrot.slane %v3287, 4
    %v3289 = vrot.slane %v1116, 5
    %v3290 = vsel %vm3244, %v3288, %v3289
    %v3291 = vrot.slane %v3289, 4
    %v3292 = vrot.slane %v1117, 5
    %v3293 = vsel %vm3244, %v3291, %v3292
    %v3294 = vrot.slane %v3117, 5
    %v3295 = vrot.slane %v3294, 4
    %v3296 = vrot.slane %v1119, 5
    %v3297 = vsel %vm3244, %v3295, %v3296
    %v3298 = vrot.slane %v3296, 4
    %v3299 = vrot.slane %v1120, 5
    %v3300 = vsel %vm3244, %v3298, %v3299
    %v3301 = vrot.slane %v3118, 5
    %v3302 = vrot.slane %v3301, 4
    %v3303 = vrot.slane %v1122, 5
    %v3304 = vsel %vm3244, %v3302, %v3303
    %v3305 = vrot.slane %v3303, 4
    %v3306 = vrot.slane %v1123, 5
    %v3307 = vsel %vm3244, %v3305, %v3306
    %v3308 = vrot.slane %v3119, 5
    %v3309 = vrot.slane %v3308, 4
    %v3310 = vrot.slane %v1125, 5
    %v3311 = vsel %vm3244, %v3309, %v3310
    %v3312 = vrot.slane %v3310, 4
    %v3313 = vrot.slane %v1126, 5
    %v3314 = vsel %vm3244, %v3312, %v3313
    %v3315 = vrot.slane %v3120, 5
    %v3316 = vrot.slane %v3315, 4
    %v3317 = vrot.slane %v1128, 5
    %v3318 = vsel %vm3244, %v3316, %v3317
    %v3319 = vrot.slane %v3317, 4
    %v3320 = vrot.slane %v1129, 5
    %v3321 = vsel %vm3244, %v3319, %v3320
    %v3322 = vrot.slane %v3121, 5
    %v3323 = vrot.slane %v3322, 4
    %v3324 = vrot.slane %v1131, 5
    %v3325 = vsel %vm3244, %v3323, %v3324
    %v3326 = vrot.slane %v3324, 4
    %v3327 = vrot.slane %v1132, 5
    %v3328 = vsel %vm3244, %v3326, %v3327
    %v3329 = vrot.slane %v3122, 5
    %v3330 = vrot.slane %v3329, 4
    %v3331 = vrot.slane %v1134, 5
    %v3332 = vsel %vm3244, %v3330, %v3331
    %v3333 = vrot.slane %v3331, 4
    %v3334 = vrot.slane %v1135, 5
    %v3335 = vsel %vm3244, %v3333, %v3334
    %v3336 = vrot.slane %v3123, 5
    %v3337 = vrot.slane %v3336, 4
    %v3338 = vrot.slane %v1137, 5
    %v3339 = vsel %vm3244, %v3337, %v3338
    %v3340 = vrot.slane %v3338, 4
    %v3341 = vrot.slane %v1138, 5
    %v3342 = vsel %vm3244, %v3340, %v3341
    %v3343 = vrot.slane %v3124, 5
    %v3344 = vrot.slane %v3343, 4
    %v3345 = vrot.slane %v1140, 5
    %v3346 = vsel %vm3244, %v3344, %v3345
    %v3347 = vrot.slane %v3345, 4
    %v3348 = vrot.slane %v1141, 5
    %v3349 = vsel %vm3244, %v3347, %v3348
    %v3350 = vrot.slane %v3125, 5
    %v3351 = vrot.slane %v3350, 4
    %v3352 = vrot.slane %v1143, 5
    %v3353 = vsel %vm3244, %v3351, %v3352
    %v3354 = vrot.slane %v3352, 4
    %v3355 = vrot.slane %v1144, 5
    %v3356 = vsel %vm3244, %v3354, %v3355
    %v3357 = vrot.slane %v3128, 5
    %v3358 = vrot.slane %v3357, 4
    %v3359 = vrot.slane %v1152, 5
    %v3360 = vsel %vm3244, %v3358, %v3359
    %v3361 = vrot.slane %v3359, 4
    %v3362 = vrot.slane %v1153, 5
    %v3363 = vsel %vm3244, %v3361, %v3362
    %v3364 = vrot.slane %v3129, 5
    %v3365 = vrot.slane %v3364, 4
    %v3366 = vrot.slane %v1155, 5
    %v3367 = vsel %vm3244, %v3365, %v3366
    %v3368 = vrot.slane %v3366, 4
    %v3369 = vrot.slane %v1156, 5
    %v3370 = vsel %vm3244, %v3368, %v3369
    %v3371 = vrot.slane %v3130, 5
    %v3372 = vrot.slane %v3371, 4
    %v3373 = vrot.slane %v1158, 5
    %v3374 = vsel %vm3244, %v3372, %v3373
    %v3375 = vrot.slane %v3373, 4
    %v3376 = vrot.slane %v1159, 5
    %v3377 = vsel %vm3244, %v3375, %v3376
    %v3378 = vrot.slane %v3131, 5
    %v3379 = vrot.slane %v3378, 4
    %v3380 = vrot.slane %v1161, 5
    %v3381 = vsel %vm3244, %v3379, %v3380
    %v3382 = vrot.slane %v3380, 4
    %v3383 = vrot.slane %v1162, 5
    %v3384 = vsel %vm3244, %v3382, %v3383
    %v3385 = vrot.slane %v3132, 5
    %v3386 = vrot.slane %v3385, 4
    %v3387 = vrot.slane %v1164, 5
    %v3388 = vsel %vm3244, %v3386, %v3387
    %v3389 = vrot.slane %v3387, 4
    %v3390 = vrot.slane %v1165, 5
    %v3391 = vsel %vm3244, %v3389, %v3390
    %v3392 = vrot.slane %v3133, 5
    %v3393 = vrot.slane %v3392, 4
    %v3394 = vrot.slane %v1167, 5
    %v3395 = vsel %vm3244, %v3393, %v3394
    %v3396 = vrot.slane %v3394, 4
    %v3397 = vrot.slane %v1168, 5
    %v3398 = vsel %vm3244, %v3396, %v3397
    %v3399 = vrot.slane %v3134, 5
    %v3400 = vrot.slane %v3399, 4
    %v3401 = vrot.slane %v1170, 5
    %v3402 = vsel %vm3244, %v3400, %v3401
    %v3403 = vrot.slane %v3401, 4
    %v3404 = vrot.slane %v1171, 5
    %v3405 = vsel %vm3244, %v3403, %v3404
    %v3406 = vrot.slane %v3135, 5
    %v3407 = vrot.slane %v3406, 4
    %v3408 = vrot.slane %v1173, 5
    %v3409 = vsel %vm3244, %v3407, %v3408
    %v3410 = vrot.slane %v3408, 4
    %v3411 = vrot.slane %v1174, 5
    %v3412 = vsel %vm3244, %v3410, %v3411
    %v3413 = vrot.slane %v3136, 5
    %v3414 = vrot.slane %v3413, 4
    %v3415 = vrot.slane %v1176, 5
    %v3416 = vsel %vm3244, %v3414, %v3415
    %v3417 = vrot.slane %v3415, 4
    %v3418 = vrot.slane %v1177, 5
    %v3419 = vsel %vm3244, %v3417, %v3418
    %v3420 = vrot.slane %v3137, 5
    %v3421 = vrot.slane %v3420, 4
    %v3422 = vrot.slane %v1179, 5
    %v3423 = vsel %vm3244, %v3421, %v3422
    %v3424 = vrot.slane %v3422, 4
    %v3425 = vrot.slane %v1180, 5
    %v3426 = vsel %vm3244, %v3424, %v3425
    %v3427 = vrot.slane %v3138, 5
    %v3428 = vrot.slane %v3427, 4
    %v3429 = vrot.slane %v1182, 5
    %v3430 = vsel %vm3244, %v3428, %v3429
    %v3431 = vrot.slane %v3429, 4
    %v3432 = vrot.slane %v1183, 5
    %v3433 = vsel %vm3244, %v3431, %v3432
    %v3434 = vrot.slane %v3139, 5
    %v3435 = vrot.slane %v3434, 4
    %v3436 = vrot.slane %v1185, 5
    %v3437 = vsel %vm3244, %v3435, %v3436
    %v3438 = vrot.slane %v3436, 4
    %v3439 = vrot.slane %v1186, 5
    %v3440 = vsel %vm3244, %v3438, %v3439
    %v3441 = vrot.slane %v3140, 5
    %v3442 = vrot.slane %v3441, 4
    %v3443 = vrot.slane %v1188, 5
    %v3444 = vsel %vm3244, %v3442, %v3443
    %v3445 = vrot.slane %v3443, 4
    %v3446 = vrot.slane %v1189, 5
    %v3447 = vsel %vm3244, %v3445, %v3446
    %v3448 = vrot.slane %v3141, 5
    %v3449 = vrot.slane %v3448, 4
    %v3450 = vrot.slane %v1191, 5
    %v3451 = vsel %vm3244, %v3449, %v3450
    %v3452 = vrot.slane %v3450, 4
    %v3453 = vrot.slane %v1192, 5
    %v3454 = vsel %vm3244, %v3452, %v3453
    %v3455 = vrot.slane %v3142, 5
    %v3456 = vrot.slane %v3455, 4
    %v3457 = vrot.slane %v1194, 5
    %v3458 = vsel %vm3244, %v3456, %v3457
    %v3459 = vrot.slane %v3457, 4
    %v3460 = vrot.slane %v1195, 5
    %v3461 = vsel %vm3244, %v3459, %v3460
    %v3462 = vrot.slane %v3143, 5
    %v3463 = vrot.slane %v3462, 4
    %v3464 = vrot.slane %v1197, 5
    %v3465 = vsel %vm3244, %v3463, %v3464
    %v3466 = vrot.slane %v3464, 4
    %v3467 = vrot.slane %v1198, 5
    %v3468 = vsel %vm3244, %v3466, %v3467
    %s3469 = scalar_lea.vmem %s1, 128
    %v3470 = vld [vmem:[%s3469] sm:$0xf]
    %v3471 = vld [vmem:[%s3469 + $0x4] sm:$0xf]
    %v3472 = vld [vmem:[%s3469 + $0x8] sm:$0xf]
    %v3473 = vld [vmem:[%s3469 + $0xc] sm:$0xf]
    %v3474 = vld [vmem:[%s3469 + $0x10] sm:$0xf]
    %v3475 = vld [vmem:[%s3469 + $0x14] sm:$0xf]
    %v3476 = vld [vmem:[%s3469 + $0x18] sm:$0xf]
    %v3477 = vld [vmem:[%s3469 + $0x1c] sm:$0xf]
    %v3478 = vld [vmem:[%s3469 + $0x20] sm:$0xf]
    %v3479 = vld [vmem:[%s3469 + $0x24] sm:$0xf]
    %v3480 = vld [vmem:[%s3469 + $0x28] sm:$0xf]
    %v3481 = vld [vmem:[%s3469 + $0x2c] sm:$0xf]
    %v3482 = vld [vmem:[%s3469 + $0x30] sm:$0xf]
    %v3483 = vld [vmem:[%s3469 + $0x34] sm:$0xf]
    %v3484 = vld [vmem:[%s3469 + $0x38] sm:$0xf]
    %v3485 = vld [vmem:[%s3469 + $0x3c] sm:$0xf]
    %v3486 = vunpack.c.l.b16 %v3248
    %v3487 = vunpack.c.l.b16 %v3251
    %v3488 = vunpack.c.l.b16 %v3255
    %v3489 = vunpack.c.l.b16 %v3258
    %v3490 = vunpack.c.l.b16 %v3262
    %v3491 = vunpack.c.l.b16 %v3265
    %v3492 = vunpack.c.l.b16 %v3269
    %v3493 = vunpack.c.l.b16 %v3272
    %v3494 = vunpack.c.l.b16 %v3276
    %v3495 = vunpack.c.l.b16 %v3279
    %v3496 = vunpack.c.l.b16 %v3283
    %v3497 = vunpack.c.l.b16 %v3286
    %v3498 = vunpack.c.l.b16 %v3290
    %v3499 = vunpack.c.l.b16 %v3293
    %v3500 = vunpack.c.l.b16 %v3297
    %v3501 = vunpack.c.l.b16 %v3300
    %v3502 = vunpack.c.l.b16 %v3304
    %v3503 = vunpack.c.l.b16 %v3307
    %v3504 = vunpack.c.l.b16 %v3311
    %v3505 = vunpack.c.l.b16 %v3314
    %v3506 = vunpack.c.l.b16 %v3318
    %v3507 = vunpack.c.l.b16 %v3321
    %v3508 = vunpack.c.l.b16 %v3325
    %v3509 = vunpack.c.l.b16 %v3328
    %v3510 = vunpack.c.l.b16 %v3332
    %v3511 = vunpack.c.l.b16 %v3335
    %v3512 = vunpack.c.l.b16 %v3339
    %v3513 = vunpack.c.l.b16 %v3342
    %v3514 = vunpack.c.l.b16 %v3346
    %v3515 = vunpack.c.l.b16 %v3349
    %v3516 = vunpack.c.l.b16 %v3353
    %v3517 = vunpack.c.l.b16 %v3356
    %v3518 = vunpack.c.l.b16 %v3360
    %v3519 = vunpack.c.l.b16 %v3363
    %v3520 = vunpack.c.l.b16 %v3367
    %v3521 = vunpack.c.l.b16 %v3370
    %v3522 = vunpack.c.l.b16 %v3374
    %v3523 = vunpack.c.l.b16 %v3377
    %v3524 = vunpack.c.l.b16 %v3381
    %v3525 = vunpack.c.l.b16 %v3384
    %v3526 = vunpack.c.l.b16 %v3388
    %v3527 = vunpack.c.l.b16 %v3391
    %v3528 = vunpack.c.l.b16 %v3395
    %v3529 = vunpack.c.l.b16 %v3398
    %v3530 = vunpack.c.l.b16 %v3402
    %v3531 = vunpack.c.l.b16 %v3405
    %v3532 = vunpack.c.l.b16 %v3409
    %v3533 = vunpack.c.l.b16 %v3412
    %v3534 = vunpack.c.l.b16 %v3416
    %v3535 = vunpack.c.l.b16 %v3419
    %v3536 = vunpack.c.l.b16 %v3423
    %v3537 = vunpack.c.l.b16 %v3426
    %v3538 = vunpack.c.l.b16 %v3430
    %v3539 = vunpack.c.l.b16 %v3433
    %v3540 = vunpack.c.l.b16 %v3437
    %v3541 = vunpack.c.l.b16 %v3440
    %v3542 = vunpack.c.l.b16 %v3444
    %v3543 = vunpack.c.l.b16 %v3447
    %v3544 = vunpack.c.l.b16 %v3451
    %v3545 = vunpack.c.l.b16 %v3454
    %v3546 = vunpack.c.l.b16 %v3458
    %v3547 = vunpack.c.l.b16 %v3461
    %v3548 = vunpack.c.l.b16 %v3465
    %v3549 = vunpack.c.l.b16 %v3468
    %v3550 = vpack.c.b16 %v3487, %v3486
    %v3551 = vpack.c.b16 %v3489, %v3488
    %v3552 = vpack.c.b16 %v3491, %v3490
    %v3553 = vpack.c.b16 %v3493, %v3492
    %v3554 = vpack.c.b16 %v3495, %v3494
    %v3555 = vpack.c.b16 %v3497, %v3496
    %v3556 = vpack.c.b16 %v3499, %v3498
    %v3557 = vpack.c.b16 %v3501, %v3500
    %v3558 = vpack.c.b16 %v3503, %v3502
    %v3559 = vpack.c.b16 %v3505, %v3504
    %v3560 = vpack.c.b16 %v3507, %v3506
    %v3561 = vpack.c.b16 %v3509, %v3508
    %v3562 = vpack.c.b16 %v3511, %v3510
    %v3563 = vpack.c.b16 %v3513, %v3512
    %v3564 = vpack.c.b16 %v3515, %v3514
    %v3565 = vpack.c.b16 %v3517, %v3516
    %v3566 = vpack.c.b16 %v3519, %v3518
    %v3567 = vpack.c.b16 %v3521, %v3520
    %v3568 = vpack.c.b16 %v3523, %v3522
    %v3569 = vpack.c.b16 %v3525, %v3524
    %v3570 = vpack.c.b16 %v3527, %v3526
    %v3571 = vpack.c.b16 %v3529, %v3528
    %v3572 = vpack.c.b16 %v3531, %v3530
    %v3573 = vpack.c.b16 %v3533, %v3532
    %v3574 = vpack.c.b16 %v3535, %v3534
    %v3575 = vpack.c.b16 %v3537, %v3536
    %v3576 = vpack.c.b16 %v3539, %v3538
    %v3577 = vpack.c.b16 %v3541, %v3540
    %v3578 = vpack.c.b16 %v3543, %v3542
    %v3579 = vpack.c.b16 %v3545, %v3544
    %v3580 = vpack.c.b16 %v3547, %v3546
    %v3581 = vpack.c.b16 %v3549, %v3548
    %v3630 = vunpack.c.l.b16 %v3470
    %v3631 = vunpack.c.l.b16 %v3471
    %v3632 = vunpack.c.l.b16 %v3472
    %v3633 = vunpack.c.l.b16 %v3473
    %v3634 = vunpack.c.l.b16 %v3474
    %v3635 = vunpack.c.l.b16 %v3475
    %v3636 = vunpack.c.l.b16 %v3476
    %v3637 = vunpack.c.l.b16 %v3477
    %v3638 = vunpack.c.l.b16 %v3478
    %v3639 = vunpack.c.l.b16 %v3479
    %v3640 = vunpack.c.l.b16 %v3480
    %v3641 = vunpack.c.l.b16 %v3481
    %v3642 = vunpack.c.l.b16 %v3482
    %v3643 = vunpack.c.l.b16 %v3483
    %v3644 = vunpack.c.l.b16 %v3484
    %v3645 = vunpack.c.l.b16 %v3485
    %v3646 = vpack.c.b16 %v3631, %v3630
    %v3647 = vpack.c.b16 %v3633, %v3632
    %v3648 = vpack.c.b16 %v3635, %v3634
    %v3649 = vpack.c.b16 %v3637, %v3636
    %v3650 = vpack.c.b16 %v3639, %v3638
    %v3651 = vpack.c.b16 %v3641, %v3640
    %v3652 = vpack.c.b16 %v3643, %v3642
    %v3653 = vpack.c.b16 %v3645, %v3644
    %3662 = vmatpush.bf16.msra.mxu0 %v3653
    %3663 = vmatpush.bf16.msra.mxu0 %v3652
    %3664 = vmatpush.bf16.msra.mxu0 %v3651
    %3665 = vmatpush.bf16.msra.mxu0 %v3650
    %3666 = vmatpush.bf16.msra.mxu0 %v3649
    %3667 = vmatpush.bf16.msra.mxu0 %v3648
    %3668 = vmatpush.bf16.msra.mxu0 %v3647
    %3669 = vmatpush.bf16.msra.mxu0 %v3646
    %3670 = vmatmul.bf16.gmra.mxu0 %v3550
    %v3671 = vpop.f32.mrf.mxu0
    %v3672 = vadd.f32 0.0, %v3671
    %v3673 = vpop.f32.mrf.mxu0
    %v3674 = vadd.f32 0.0, %v3673
    %3675 = vmatmul.bf16.gmra.mxu0 %v3551
    %v3676 = vpop.f32.mrf.mxu0
    %v3677 = vadd.f32 0.0, %v3676
    %v3678 = vpop.f32.mrf.mxu0
    %v3679 = vadd.f32 0.0, %v3678
    %3680 = vmatmul.bf16.gmra.mxu0 %v3552
    %v3681 = vpop.f32.mrf.mxu0
    %v3682 = vadd.f32 0.0, %v3681
    %v3683 = vpop.f32.mrf.mxu0
    %v3684 = vadd.f32 0.0, %v3683
    %3685 = vmatmul.bf16.gmra.mxu0 %v3553
    %v3686 = vpop.f32.mrf.mxu0
    %v3687 = vadd.f32 0.0, %v3686
    %v3688 = vpop.f32.mrf.mxu0
    %v3689 = vadd.f32 0.0, %v3688
    %3690 = vmatmul.bf16.gmra.mxu0 %v3554
    %v3691 = vpop.f32.mrf.mxu0
    %v3692 = vadd.f32 0.0, %v3691
    %v3693 = vpop.f32.mrf.mxu0
    %v3694 = vadd.f32 0.0, %v3693
    %3695 = vmatmul.bf16.gmra.mxu0 %v3555
    %v3696 = vpop.f32.mrf.mxu0
    %v3697 = vadd.f32 0.0, %v3696
    %v3698 = vpop.f32.mrf.mxu0
    %v3699 = vadd.f32 0.0, %v3698
    %3700 = vmatmul.bf16.gmra.mxu0 %v3556
    %v3701 = vpop.f32.mrf.mxu0
    %v3702 = vadd.f32 0.0, %v3701
    %v3703 = vpop.f32.mrf.mxu0
    %v3704 = vadd.f32 0.0, %v3703
    %3705 = vmatmul.bf16.gmra.mxu0 %v3557
    %v3706 = vpop.f32.mrf.mxu0
    %v3707 = vadd.f32 0.0, %v3706
    %v3708 = vpop.f32.mrf.mxu0
    %v3709 = vadd.f32 0.0, %v3708
    %3710 = vmatmul.bf16.gmra.mxu0 %v3558
    %v3711 = vpop.f32.mrf.mxu0
    %v3712 = vadd.f32 0.0, %v3711
    %v3713 = vpop.f32.mrf.mxu0
    %v3714 = vadd.f32 0.0, %v3713
    %3715 = vmatmul.bf16.gmra.mxu0 %v3559
    %v3716 = vpop.f32.mrf.mxu0
    %v3717 = vadd.f32 0.0, %v3716
    %v3718 = vpop.f32.mrf.mxu0
    %v3719 = vadd.f32 0.0, %v3718
    %3720 = vmatmul.bf16.gmra.mxu0 %v3560
    %v3721 = vpop.f32.mrf.mxu0
    %v3722 = vadd.f32 0.0, %v3721
    %v3723 = vpop.f32.mrf.mxu0
    %v3724 = vadd.f32 0.0, %v3723
    %3725 = vmatmul.bf16.gmra.mxu0 %v3561
    %v3726 = vpop.f32.mrf.mxu0
    %v3727 = vadd.f32 0.0, %v3726
    %v3728 = vpop.f32.mrf.mxu0
    %v3729 = vadd.f32 0.0, %v3728
    %3730 = vmatmul.bf16.gmra.mxu0 %v3562
    %v3731 = vpop.f32.mrf.mxu0
    %v3732 = vadd.f32 0.0, %v3731
    %v3733 = vpop.f32.mrf.mxu0
    %v3734 = vadd.f32 0.0, %v3733
    %3735 = vmatmul.bf16.gmra.mxu0 %v3563
    %v3736 = vpop.f32.mrf.mxu0
    %v3737 = vadd.f32 0.0, %v3736
    %v3738 = vpop.f32.mrf.mxu0
    %v3739 = vadd.f32 0.0, %v3738
    %3740 = vmatmul.bf16.gmra.mxu0 %v3564
    %v3741 = vpop.f32.mrf.mxu0
    %v3742 = vadd.f32 0.0, %v3741
    %v3743 = vpop.f32.mrf.mxu0
    %v3744 = vadd.f32 0.0, %v3743
    %3745 = vmatmul.bf16.gmra.mxu0 %v3565
    %v3746 = vpop.f32.mrf.mxu0
    %v3747 = vadd.f32 0.0, %v3746
    %v3748 = vpop.f32.mrf.mxu0
    %v3749 = vadd.f32 0.0, %v3748
    %3750 = vmatmul.bf16.gmra.mxu0 %v3566
    %v3751 = vpop.f32.mrf.mxu0
    %v3752 = vadd.f32 0.0, %v3751
    %v3753 = vpop.f32.mrf.mxu0
    %v3754 = vadd.f32 0.0, %v3753
    %3755 = vmatmul.bf16.gmra.mxu0 %v3567
    %v3756 = vpop.f32.mrf.mxu0
    %v3757 = vadd.f32 0.0, %v3756
    %v3758 = vpop.f32.mrf.mxu0
    %v3759 = vadd.f32 0.0, %v3758
    %3760 = vmatmul.bf16.gmra.mxu0 %v3568
    %v3761 = vpop.f32.mrf.mxu0
    %v3762 = vadd.f32 0.0, %v3761
    %v3763 = vpop.f32.mrf.mxu0
    %v3764 = vadd.f32 0.0, %v3763
    %3765 = vmatmul.bf16.gmra.mxu0 %v3569
    %v3766 = vpop.f32.mrf.mxu0
    %v3767 = vadd.f32 0.0, %v3766
    %v3768 = vpop.f32.mrf.mxu0
    %v3769 = vadd.f32 0.0, %v3768
    %3770 = vmatmul.bf16.gmra.mxu0 %v3570
    %v3771 = vpop.f32.mrf.mxu0
    %v3772 = vadd.f32 0.0, %v3771
    %v3773 = vpop.f32.mrf.mxu0
    %v3774 = vadd.f32 0.0, %v3773
    %3775 = vmatmul.bf16.gmra.mxu0 %v3571
    %v3776 = vpop.f32.mrf.mxu0
    %v3777 = vadd.f32 0.0, %v3776
    %v3778 = vpop.f32.mrf.mxu0
    %v3779 = vadd.f32 0.0, %v3778
    %3780 = vmatmul.bf16.gmra.mxu0 %v3572
    %v3781 = vpop.f32.mrf.mxu0
    %v3782 = vadd.f32 0.0, %v3781
    %v3783 = vpop.f32.mrf.mxu0
    %v3784 = vadd.f32 0.0, %v3783
    %3785 = vmatmul.bf16.gmra.mxu0 %v3573
    %v3786 = vpop.f32.mrf.mxu0
    %v3787 = vadd.f32 0.0, %v3786
    %v3788 = vpop.f32.mrf.mxu0
    %v3789 = vadd.f32 0.0, %v3788
    %3790 = vmatmul.bf16.gmra.mxu0 %v3574
    %v3791 = vpop.f32.mrf.mxu0
    %v3792 = vadd.f32 0.0, %v3791
    %v3793 = vpop.f32.mrf.mxu0
    %v3794 = vadd.f32 0.0, %v3793
    %3795 = vmatmul.bf16.gmra.mxu0 %v3575
    %v3796 = vpop.f32.mrf.mxu0
    %v3797 = vadd.f32 0.0, %v3796
    %v3798 = vpop.f32.mrf.mxu0
    %v3799 = vadd.f32 0.0, %v3798
    %3800 = vmatmul.bf16.gmra.mxu0 %v3576
    %v3801 = vpop.f32.mrf.mxu0
    %v3802 = vadd.f32 0.0, %v3801
    %v3803 = vpop.f32.mrf.mxu0
    %v3804 = vadd.f32 0.0, %v3803
    %3805 = vmatmul.bf16.gmra.mxu0 %v3577
    %v3806 = vpop.f32.mrf.mxu0
    %v3807 = vadd.f32 0.0, %v3806
    %v3808 = vpop.f32.mrf.mxu0
    %v3809 = vadd.f32 0.0, %v3808
    %3810 = vmatmul.bf16.gmra.mxu0 %v3578
    %v3811 = vpop.f32.mrf.mxu0
    %v3812 = vadd.f32 0.0, %v3811
    %v3813 = vpop.f32.mrf.mxu0
    %v3814 = vadd.f32 0.0, %v3813
    %3815 = vmatmul.bf16.gmra.mxu0 %v3579
    %v3816 = vpop.f32.mrf.mxu0
    %v3817 = vadd.f32 0.0, %v3816
    %v3818 = vpop.f32.mrf.mxu0
    %v3819 = vadd.f32 0.0, %v3818
    %3820 = vmatmul.bf16.gmra.mxu0 %v3580
    %v3821 = vpop.f32.mrf.mxu0
    %v3822 = vadd.f32 0.0, %v3821
    %v3823 = vpop.f32.mrf.mxu0
    %v3824 = vadd.f32 0.0, %v3823
    %3825 = vmatmul.bf16.gmra.mxu0 %v3581
    %v3826 = vpop.f32.mrf.mxu0
    %v3827 = vadd.f32 0.0, %v3826
    %v3828 = vpop.f32.mrf.mxu0
    %v3829 = vadd.f32 0.0, %v3828
    %3830 = vdwg.mxu0
    %v3831 = vadd.f32 %v3046, %v3672
    %v3832 = vadd.f32 %v3047, %v3674
    %v3833 = vadd.f32 %v3048, %v3677
    %v3834 = vadd.f32 %v3049, %v3679
    %v3835 = vadd.f32 %v3050, %v3682
    %v3836 = vadd.f32 %v3051, %v3684
    %v3837 = vadd.f32 %v3052, %v3687
    %v3838 = vadd.f32 %v3053, %v3689
    %v3839 = vadd.f32 %v3054, %v3692
    %v3840 = vadd.f32 %v3055, %v3694
    %v3841 = vadd.f32 %v3056, %v3697
    %v3842 = vadd.f32 %v3057, %v3699
    %v3843 = vadd.f32 %v3058, %v3702
    %v3844 = vadd.f32 %v3059, %v3704
    %v3845 = vadd.f32 %v3060, %v3707
    %v3846 = vadd.f32 %v3061, %v3709
    %v3847 = vadd.f32 %v3062, %v3712
    %v3848 = vadd.f32 %v3063, %v3714
    %v3849 = vadd.f32 %v3064, %v3717
    %v3850 = vadd.f32 %v3065, %v3719
    %v3851 = vadd.f32 %v3066, %v3722
    %v3852 = vadd.f32 %v3067, %v3724
    %v3853 = vadd.f32 %v3068, %v3727
    %v3854 = vadd.f32 %v3069, %v3729
    %v3855 = vadd.f32 %v3070, %v3732
    %v3856 = vadd.f32 %v3071, %v3734
    %v3857 = vadd.f32 %v3072, %v3737
    %v3858 = vadd.f32 %v3073, %v3739
    %v3859 = vadd.f32 %v3074, %v3742
    %v3860 = vadd.f32 %v3075, %v3744
    %v3861 = vadd.f32 %v3076, %v3747
    %v3862 = vadd.f32 %v3077, %v3749
    %v3863 = vadd.f32 %v3078, %v3752
    %v3864 = vadd.f32 %v3079, %v3754
    %v3865 = vadd.f32 %v3080, %v3757
    %v3866 = vadd.f32 %v3081, %v3759
    %v3867 = vadd.f32 %v3082, %v3762
    %v3868 = vadd.f32 %v3083, %v3764
    %v3869 = vadd.f32 %v3084, %v3767
    %v3870 = vadd.f32 %v3085, %v3769
    %v3871 = vadd.f32 %v3086, %v3772
    %v3872 = vadd.f32 %v3087, %v3774
    %v3873 = vadd.f32 %v3088, %v3777
    %v3874 = vadd.f32 %v3089, %v3779
    %v3875 = vadd.f32 %v3090, %v3782
    %v3876 = vadd.f32 %v3091, %v3784
    %v3877 = vadd.f32 %v3092, %v3787
    %v3878 = vadd.f32 %v3093, %v3789
    %v3879 = vadd.f32 %v3094, %v3792
    %v3880 = vadd.f32 %v3095, %v3794
    %v3881 = vadd.f32 %v3096, %v3797
    %v3882 = vadd.f32 %v3097, %v3799
    %v3883 = vadd.f32 %v3098, %v3802
    %v3884 = vadd.f32 %v3099, %v3804
    %v3885 = vadd.f32 %v3100, %v3807
    %v3886 = vadd.f32 %v3101, %v3809
    %v3887 = vadd.f32 %v3102, %v3812
    %v3888 = vadd.f32 %v3103, %v3814
    %v3889 = vadd.f32 %v3104, %v3817
    %v3890 = vadd.f32 %v3105, %v3819
    %v3891 = vadd.f32 %v3106, %v3822
    %v3892 = vadd.f32 %v3107, %v3824
    %v3893 = vadd.f32 %v3108, %v3827
    %v3894 = vadd.f32 %v3109, %v3829
    %v3901 = vrot.slane %v3126, 5
    %v3902 = vrot.slane %v3901, 4
    %v3903 = vrot.slane %v1146, 5
    %v3904 = vsel %vm3244, %v3902, %v3903
    %v3905 = vrot.slane %v3903, 4
    %v3906 = vrot.slane %v1147, 5
    %v3907 = vsel %vm3244, %v3905, %v3906
    %v3908 = vrot.slane %v3144, 5
    %v3909 = vrot.slane %v3908, 4
    %v3910 = vrot.slane %v1200, 5
    %v3911 = vsel %vm3244, %v3909, %v3910
    %v3912 = vrot.slane %v3910, 4
    %v3913 = vrot.slane %v1201, 5
    %v3914 = vsel %vm3244, %v3912, %v3913
    %s3915 = scalar_lea.vmem %s1, 320
    %v3916 = vld [vmem:[%s3915] sm:$0xf]
    %v3917 = vld [vmem:[%s3915 + $0x4] sm:$0xf]
    %v3918 = vld [vmem:[%s3915 + $0x8] sm:$0xf]
    %v3919 = vld [vmem:[%s3915 + $0xc] sm:$0xf]
    %v3920 = vld [vmem:[%s3915 + $0x10] sm:$0xf]
    %v3921 = vld [vmem:[%s3915 + $0x14] sm:$0xf]
    %v3922 = vld [vmem:[%s3915 + $0x18] sm:$0xf]
    %v3923 = vld [vmem:[%s3915 + $0x1c] sm:$0xf]
    %v3924 = vld [vmem:[%s3915 + $0x20] sm:$0xf]
    %v3925 = vld [vmem:[%s3915 + $0x24] sm:$0xf]
    %v3926 = vld [vmem:[%s3915 + $0x28] sm:$0xf]
    %v3927 = vld [vmem:[%s3915 + $0x2c] sm:$0xf]
    %v3928 = vld [vmem:[%s3915 + $0x30] sm:$0xf]
    %v3929 = vld [vmem:[%s3915 + $0x34] sm:$0xf]
    %v3930 = vld [vmem:[%s3915 + $0x38] sm:$0xf]
    %v3931 = vld [vmem:[%s3915 + $0x3c] sm:$0xf]
    %v3932 = vunpack.c.l.b16 %v3904
    %v3933 = vunpack.c.l.b16 %v3907
    %v3934 = vunpack.c.l.b16 %v3911
    %v3935 = vunpack.c.l.b16 %v3914
    %v3936 = vpack.c.b16 %v3933, %v3932
    %v3937 = vpack.c.b16 %v3935, %v3934
    %v3956 = vunpack.c.l.b16 %v3916
    %v3957 = vunpack.c.l.b16 %v3917
    %v3958 = vunpack.c.l.b16 %v3918
    %v3959 = vunpack.c.l.b16 %v3919
    %v3960 = vunpack.c.l.b16 %v3920
    %v3961 = vunpack.c.l.b16 %v3921
    %v3962 = vunpack.c.l.b16 %v3922
    %v3963 = vunpack.c.l.b16 %v3923
    %v3964 = vunpack.c.l.b16 %v3924
    %v3965 = vunpack.c.l.b16 %v3925
    %v3966 = vunpack.c.l.b16 %v3926
    %v3967 = vunpack.c.l.b16 %v3927
    %v3968 = vunpack.c.l.b16 %v3928
    %v3969 = vunpack.c.l.b16 %v3929
    %v3970 = vunpack.c.l.b16 %v3930
    %v3971 = vunpack.c.l.b16 %v3931
    %v3972 = vpack.c.b16 %v3957, %v3956
    %v3973 = vpack.c.b16 %v3959, %v3958
    %v3974 = vpack.c.b16 %v3961, %v3960
    %v3975 = vpack.c.b16 %v3963, %v3962
    %v3976 = vpack.c.b16 %v3965, %v3964
    %v3977 = vpack.c.b16 %v3967, %v3966
    %v3978 = vpack.c.b16 %v3969, %v3968
    %v3979 = vpack.c.b16 %v3971, %v3970
    %3988 = vmatpush.bf16.msra.mxu0 %v3979
    %3989 = vmatpush.bf16.msra.mxu0 %v3978
    %3990 = vmatpush.bf16.msra.mxu0 %v3977
    %3991 = vmatpush.bf16.msra.mxu0 %v3976
    %3992 = vmatpush.bf16.msra.mxu0 %v3975
    %3993 = vmatpush.bf16.msra.mxu0 %v3974
    %3994 = vmatpush.bf16.msra.mxu0 %v3973
    %3995 = vmatpush.bf16.msra.mxu0 %v3972
    %3996 = vmatmul.bf16.gmra.mxu0 %v3551
    %v3997 = vpop.f32.mrf.mxu0
    %v3998 = vadd.f32 0.0, %v3997
    %v3999 = vpop.f32.mrf.mxu0
    %v4000 = vadd.f32 0.0, %v3999
    %4001 = vmatmul.bf16.gmra.mxu0 %v3552
    %v4002 = vpop.f32.mrf.mxu0
    %v4003 = vadd.f32 0.0, %v4002
    %v4004 = vpop.f32.mrf.mxu0
    %v4005 = vadd.f32 0.0, %v4004
    %4006 = vmatmul.bf16.gmra.mxu0 %v3553
    %v4007 = vpop.f32.mrf.mxu0
    %v4008 = vadd.f32 0.0, %v4007
    %v4009 = vpop.f32.mrf.mxu0
    %v4010 = vadd.f32 0.0, %v4009
    %4011 = vmatmul.bf16.gmra.mxu0 %v3554
    %v4012 = vpop.f32.mrf.mxu0
    %v4013 = vadd.f32 0.0, %v4012
    %v4014 = vpop.f32.mrf.mxu0
    %v4015 = vadd.f32 0.0, %v4014
    %4016 = vmatmul.bf16.gmra.mxu0 %v3555
    %v4017 = vpop.f32.mrf.mxu0
    %v4018 = vadd.f32 0.0, %v4017
    %v4019 = vpop.f32.mrf.mxu0
    %v4020 = vadd.f32 0.0, %v4019
    %4021 = vmatmul.bf16.gmra.mxu0 %v3556
    %v4022 = vpop.f32.mrf.mxu0
    %v4023 = vadd.f32 0.0, %v4022
    %v4024 = vpop.f32.mrf.mxu0
    %v4025 = vadd.f32 0.0, %v4024
    %4026 = vmatmul.bf16.gmra.mxu0 %v3557
    %v4027 = vpop.f32.mrf.mxu0
    %v4028 = vadd.f32 0.0, %v4027
    %v4029 = vpop.f32.mrf.mxu0
    %v4030 = vadd.f32 0.0, %v4029
    %4031 = vmatmul.bf16.gmra.mxu0 %v3558
    %v4032 = vpop.f32.mrf.mxu0
    %v4033 = vadd.f32 0.0, %v4032
    %v4034 = vpop.f32.mrf.mxu0
    %v4035 = vadd.f32 0.0, %v4034
    %4036 = vmatmul.bf16.gmra.mxu0 %v3559
    %v4037 = vpop.f32.mrf.mxu0
    %v4038 = vadd.f32 0.0, %v4037
    %v4039 = vpop.f32.mrf.mxu0
    %v4040 = vadd.f32 0.0, %v4039
    %4041 = vmatmul.bf16.gmra.mxu0 %v3560
    %v4042 = vpop.f32.mrf.mxu0
    %v4043 = vadd.f32 0.0, %v4042
    %v4044 = vpop.f32.mrf.mxu0
    %v4045 = vadd.f32 0.0, %v4044
    %4046 = vmatmul.bf16.gmra.mxu0 %v3561
    %v4047 = vpop.f32.mrf.mxu0
    %v4048 = vadd.f32 0.0, %v4047
    %v4049 = vpop.f32.mrf.mxu0
    %v4050 = vadd.f32 0.0, %v4049
    %4051 = vmatmul.bf16.gmra.mxu0 %v3562
    %v4052 = vpop.f32.mrf.mxu0
    %v4053 = vadd.f32 0.0, %v4052
    %v4054 = vpop.f32.mrf.mxu0
    %v4055 = vadd.f32 0.0, %v4054
    %4056 = vmatmul.bf16.gmra.mxu0 %v3563
    %v4057 = vpop.f32.mrf.mxu0
    %v4058 = vadd.f32 0.0, %v4057
    %v4059 = vpop.f32.mrf.mxu0
    %v4060 = vadd.f32 0.0, %v4059
    %4061 = vmatmul.bf16.gmra.mxu0 %v3564
    %v4062 = vpop.f32.mrf.mxu0
    %v4063 = vadd.f32 0.0, %v4062
    %v4064 = vpop.f32.mrf.mxu0
    %v4065 = vadd.f32 0.0, %v4064
    %4066 = vmatmul.bf16.gmra.mxu0 %v3565
    %v4067 = vpop.f32.mrf.mxu0
    %v4068 = vadd.f32 0.0, %v4067
    %v4069 = vpop.f32.mrf.mxu0
    %v4070 = vadd.f32 0.0, %v4069
    %4071 = vmatmul.bf16.gmra.mxu0 %v3936
    %v4072 = vpop.f32.mrf.mxu0
    %v4073 = vadd.f32 0.0, %v4072
    %v4074 = vpop.f32.mrf.mxu0
    %v4075 = vadd.f32 0.0, %v4074
    %4076 = vmatmul.bf16.gmra.mxu0 %v3567
    %v4077 = vpop.f32.mrf.mxu0
    %v4078 = vadd.f32 0.0, %v4077
    %v4079 = vpop.f32.mrf.mxu0
    %v4080 = vadd.f32 0.0, %v4079
    %4081 = vmatmul.bf16.gmra.mxu0 %v3568
    %v4082 = vpop.f32.mrf.mxu0
    %v4083 = vadd.f32 0.0, %v4082
    %v4084 = vpop.f32.mrf.mxu0
    %v4085 = vadd.f32 0.0, %v4084
    %4086 = vmatmul.bf16.gmra.mxu0 %v3569
    %v4087 = vpop.f32.mrf.mxu0
    %v4088 = vadd.f32 0.0, %v4087
    %v4089 = vpop.f32.mrf.mxu0
    %v4090 = vadd.f32 0.0, %v4089
    %4091 = vmatmul.bf16.gmra.mxu0 %v3570
    %v4092 = vpop.f32.mrf.mxu0
    %v4093 = vadd.f32 0.0, %v4092
    %v4094 = vpop.f32.mrf.mxu0
    %v4095 = vadd.f32 0.0, %v4094
    %4096 = vmatmul.bf16.gmra.mxu0 %v3571
    %v4097 = vpop.f32.mrf.mxu0
    %v4098 = vadd.f32 0.0, %v4097
    %v4099 = vpop.f32.mrf.mxu0
    %v4100 = vadd.f32 0.0, %v4099
    %4101 = vmatmul.bf16.gmra.mxu0 %v3572
    %v4102 = vpop.f32.mrf.mxu0
    %v4103 = vadd.f32 0.0, %v4102
    %v4104 = vpop.f32.mrf.mxu0
    %v4105 = vadd.f32 0.0, %v4104
    %4106 = vmatmul.bf16.gmra.mxu0 %v3573
    %v4107 = vpop.f32.mrf.mxu0
    %v4108 = vadd.f32 0.0, %v4107
    %v4109 = vpop.f32.mrf.mxu0
    %v4110 = vadd.f32 0.0, %v4109
    %4111 = vmatmul.bf16.gmra.mxu0 %v3574
    %v4112 = vpop.f32.mrf.mxu0
    %v4113 = vadd.f32 0.0, %v4112
    %v4114 = vpop.f32.mrf.mxu0
    %v4115 = vadd.f32 0.0, %v4114
    %4116 = vmatmul.bf16.gmra.mxu0 %v3575
    %v4117 = vpop.f32.mrf.mxu0
    %v4118 = vadd.f32 0.0, %v4117
    %v4119 = vpop.f32.mrf.mxu0
    %v4120 = vadd.f32 0.0, %v4119
    %4121 = vmatmul.bf16.gmra.mxu0 %v3576
    %v4122 = vpop.f32.mrf.mxu0
    %v4123 = vadd.f32 0.0, %v4122
    %v4124 = vpop.f32.mrf.mxu0
    %v4125 = vadd.f32 0.0, %v4124
    %4126 = vmatmul.bf16.gmra.mxu0 %v3577
    %v4127 = vpop.f32.mrf.mxu0
    %v4128 = vadd.f32 0.0, %v4127
    %v4129 = vpop.f32.mrf.mxu0
    %v4130 = vadd.f32 0.0, %v4129
    %4131 = vmatmul.bf16.gmra.mxu0 %v3578
    %v4132 = vpop.f32.mrf.mxu0
    %v4133 = vadd.f32 0.0, %v4132
    %v4134 = vpop.f32.mrf.mxu0
    %v4135 = vadd.f32 0.0, %v4134
    %4136 = vmatmul.bf16.gmra.mxu0 %v3579
    %v4137 = vpop.f32.mrf.mxu0
    %v4138 = vadd.f32 0.0, %v4137
    %v4139 = vpop.f32.mrf.mxu0
    %v4140 = vadd.f32 0.0, %v4139
    %4141 = vmatmul.bf16.gmra.mxu0 %v3580
    %v4142 = vpop.f32.mrf.mxu0
    %v4143 = vadd.f32 0.0, %v4142
    %v4144 = vpop.f32.mrf.mxu0
    %v4145 = vadd.f32 0.0, %v4144
    %4146 = vmatmul.bf16.gmra.mxu0 %v3581
    %v4147 = vpop.f32.mrf.mxu0
    %v4148 = vadd.f32 0.0, %v4147
    %v4149 = vpop.f32.mrf.mxu0
    %v4150 = vadd.f32 0.0, %v4149
    %4151 = vmatmul.bf16.gmra.mxu0 %v3937
    %v4152 = vpop.f32.mrf.mxu0
    %v4153 = vadd.f32 0.0, %v4152
    %v4154 = vpop.f32.mrf.mxu0
    %v4155 = vadd.f32 0.0, %v4154
    %4156 = vdwg.mxu0
    %v4157 = vadd.f32 %v3831, %v3998
    %v4158 = vadd.f32 %v3832, %v4000
    %v4159 = vadd.f32 %v3833, %v4003
    %v4160 = vadd.f32 %v3834, %v4005
    %v4161 = vadd.f32 %v3835, %v4008
    %v4162 = vadd.f32 %v3836, %v4010
    %v4163 = vadd.f32 %v3837, %v4013
    %v4164 = vadd.f32 %v3838, %v4015
    %v4165 = vadd.f32 %v3839, %v4018
    %v4166 = vadd.f32 %v3840, %v4020
    %v4167 = vadd.f32 %v3841, %v4023
    %v4168 = vadd.f32 %v3842, %v4025
    %v4169 = vadd.f32 %v3843, %v4028
    %v4170 = vadd.f32 %v3844, %v4030
    %v4171 = vadd.f32 %v3845, %v4033
    %v4172 = vadd.f32 %v3846, %v4035
    %v4173 = vadd.f32 %v3847, %v4038
    %v4174 = vadd.f32 %v3848, %v4040
    %v4175 = vadd.f32 %v3849, %v4043
    %v4176 = vadd.f32 %v3850, %v4045
    %v4177 = vadd.f32 %v3851, %v4048
    %v4178 = vadd.f32 %v3852, %v4050
    %v4179 = vadd.f32 %v3853, %v4053
    %v4180 = vadd.f32 %v3854, %v4055
    %v4181 = vadd.f32 %v3855, %v4058
    %v4182 = vadd.f32 %v3856, %v4060
    %v4183 = vadd.f32 %v3857, %v4063
    %v4184 = vadd.f32 %v3858, %v4065
    %v4185 = vadd.f32 %v3859, %v4068
    %v4186 = vadd.f32 %v3860, %v4070
    %v4187 = vadd.f32 %v3861, %v4073
    %v4188 = vadd.f32 %v3862, %v4075
    %v4189 = vadd.f32 %v3863, %v4078
    %v4190 = vadd.f32 %v3864, %v4080
    %v4191 = vadd.f32 %v3865, %v4083
    %v4192 = vadd.f32 %v3866, %v4085
    %v4193 = vadd.f32 %v3867, %v4088
    %v4194 = vadd.f32 %v3868, %v4090
    %v4195 = vadd.f32 %v3869, %v4093
    %v4196 = vadd.f32 %v3870, %v4095
    %v4197 = vadd.f32 %v3871, %v4098
    %v4198 = vadd.f32 %v3872, %v4100
    %v4199 = vadd.f32 %v3873, %v4103
    %v4200 = vadd.f32 %v3874, %v4105
    %v4201 = vadd.f32 %v3875, %v4108
    %v4202 = vadd.f32 %v3876, %v4110
    %v4203 = vadd.f32 %v3877, %v4113
    %v4204 = vadd.f32 %v3878, %v4115
    %v4205 = vadd.f32 %v3879, %v4118
    %v4206 = vadd.f32 %v3880, %v4120
    %v4207 = vadd.f32 %v3881, %v4123
    %v4208 = vadd.f32 %v3882, %v4125
    %v4209 = vadd.f32 %v3883, %v4128
    %v4210 = vadd.f32 %v3884, %v4130
    %v4211 = vadd.f32 %v3885, %v4133
    %v4212 = vadd.f32 %v3886, %v4135
    %v4213 = vadd.f32 %v3887, %v4138
    %v4214 = vadd.f32 %v3888, %v4140
    %v4215 = vadd.f32 %v3889, %v4143
    %v4216 = vadd.f32 %v3890, %v4145
    %v4217 = vadd.f32 %v3891, %v4148
    %v4218 = vadd.f32 %v3892, %v4150
    %v4219 = vadd.f32 %v3893, %v4153
    %v4220 = vadd.f32 %v3894, %v4155
    %v4227 = vrot.slane %v3127, 5
    %v4228 = vrot.slane %v4227, 4
    %v4229 = vrot.slane %v1149, 5
    %v4230 = vsel %vm3244, %v4228, %v4229
    %v4231 = vrot.slane %v4229, 4
    %v4232 = vrot.slane %v1150, 5
    %v4233 = vsel %vm3244, %v4231, %v4232
    %v4234 = vrot.slane %v3145, 5
    %v4235 = vrot.slane %v4234, 4
    %v4236 = vrot.slane %v1203, 5
    %v4237 = vsel %vm3244, %v4235, %v4236
    %v4238 = vrot.slane %v4236, 4
    %v4239 = vrot.slane %v1204, 5
    %v4240 = vsel %vm3244, %v4238, %v4239
    %s4241 = scalar_lea.vmem %s1, 512
    %v4242 = vld [vmem:[%s4241] sm:$0xf]
    %v4243 = vld [vmem:[%s4241 + $0x4] sm:$0xf]
    %v4244 = vld [vmem:[%s4241 + $0x8] sm:$0xf]
    %v4245 = vld [vmem:[%s4241 + $0xc] sm:$0xf]
    %v4246 = vld [vmem:[%s4241 + $0x10] sm:$0xf]
    %v4247 = vld [vmem:[%s4241 + $0x14] sm:$0xf]
    %v4248 = vld [vmem:[%s4241 + $0x18] sm:$0xf]
    %v4249 = vld [vmem:[%s4241 + $0x1c] sm:$0xf]
    %v4250 = vld [vmem:[%s4241 + $0x20] sm:$0xf]
    %v4251 = vld [vmem:[%s4241 + $0x24] sm:$0xf]
    %v4252 = vld [vmem:[%s4241 + $0x28] sm:$0xf]
    %v4253 = vld [vmem:[%s4241 + $0x2c] sm:$0xf]
    %v4254 = vld [vmem:[%s4241 + $0x30] sm:$0xf]
    %v4255 = vld [vmem:[%s4241 + $0x34] sm:$0xf]
    %v4256 = vld [vmem:[%s4241 + $0x38] sm:$0xf]
    %v4257 = vld [vmem:[%s4241 + $0x3c] sm:$0xf]
    %v4258 = vunpack.c.l.b16 %v4230
    %v4259 = vunpack.c.l.b16 %v4233
    %v4260 = vunpack.c.l.b16 %v4237
    %v4261 = vunpack.c.l.b16 %v4240
    %v4262 = vpack.c.b16 %v4259, %v4258
    %v4263 = vpack.c.b16 %v4261, %v4260
    %v4282 = vunpack.c.l.b16 %v4242
    %v4283 = vunpack.c.l.b16 %v4243
    %v4284 = vunpack.c.l.b16 %v4244
    %v4285 = vunpack.c.l.b16 %v4245
    %v4286 = vunpack.c.l.b16 %v4246
    %v4287 = vunpack.c.l.b16 %v4247
    %v4288 = vunpack.c.l.b16 %v4248
    %v4289 = vunpack.c.l.b16 %v4249
    %v4290 = vunpack.c.l.b16 %v4250
    %v4291 = vunpack.c.l.b16 %v4251
    %v4292 = vunpack.c.l.b16 %v4252
    %v4293 = vunpack.c.l.b16 %v4253
    %v4294 = vunpack.c.l.b16 %v4254
    %v4295 = vunpack.c.l.b16 %v4255
    %v4296 = vunpack.c.l.b16 %v4256
    %v4297 = vunpack.c.l.b16 %v4257
    %v4298 = vpack.c.b16 %v4283, %v4282
    %v4299 = vpack.c.b16 %v4285, %v4284
    %v4300 = vpack.c.b16 %v4287, %v4286
    %v4301 = vpack.c.b16 %v4289, %v4288
    %v4302 = vpack.c.b16 %v4291, %v4290
    %v4303 = vpack.c.b16 %v4293, %v4292
    %v4304 = vpack.c.b16 %v4295, %v4294
    %v4305 = vpack.c.b16 %v4297, %v4296
    %4314 = vmatpush.bf16.msra.mxu0 %v4305
    %4315 = vmatpush.bf16.msra.mxu0 %v4304
    %4316 = vmatpush.bf16.msra.mxu0 %v4303
    %4317 = vmatpush.bf16.msra.mxu0 %v4302
    %4318 = vmatpush.bf16.msra.mxu0 %v4301
    %4319 = vmatpush.bf16.msra.mxu0 %v4300
    %4320 = vmatpush.bf16.msra.mxu0 %v4299
    %4321 = vmatpush.bf16.msra.mxu0 %v4298
    %4322 = vmatmul.bf16.gmra.mxu0 %v3552
    %v4323 = vpop.f32.mrf.mxu0
    %v4324 = vadd.f32 0.0, %v4323
    %v4325 = vpop.f32.mrf.mxu0
    %v4326 = vadd.f32 0.0, %v4325
    %4327 = vmatmul.bf16.gmra.mxu0 %v3553
    %v4328 = vpop.f32.mrf.mxu0
    %v4329 = vadd.f32 0.0, %v4328
    %v4330 = vpop.f32.mrf.mxu0
    %v4331 = vadd.f32 0.0, %v4330
    %4332 = vmatmul.bf16.gmra.mxu0 %v3554
    %v4333 = vpop.f32.mrf.mxu0
    %v4334 = vadd.f32 0.0, %v4333
    %v4335 = vpop.f32.mrf.mxu0
    %v4336 = vadd.f32 0.0, %v4335
    %4337 = vmatmul.bf16.gmra.mxu0 %v3555
    %v4338 = vpop.f32.mrf.mxu0
    %v4339 = vadd.f32 0.0, %v4338
    %v4340 = vpop.f32.mrf.mxu0
    %v4341 = vadd.f32 0.0, %v4340
    %4342 = vmatmul.bf16.gmra.mxu0 %v3556
    %v4343 = vpop.f32.mrf.mxu0
    %v4344 = vadd.f32 0.0, %v4343
    %v4345 = vpop.f32.mrf.mxu0
    %v4346 = vadd.f32 0.0, %v4345
    %4347 = vmatmul.bf16.gmra.mxu0 %v3557
    %v4348 = vpop.f32.mrf.mxu0
    %v4349 = vadd.f32 0.0, %v4348
    %v4350 = vpop.f32.mrf.mxu0
    %v4351 = vadd.f32 0.0, %v4350
    %4352 = vmatmul.bf16.gmra.mxu0 %v3558
    %v4353 = vpop.f32.mrf.mxu0
    %v4354 = vadd.f32 0.0, %v4353
    %v4355 = vpop.f32.mrf.mxu0
    %v4356 = vadd.f32 0.0, %v4355
    %4357 = vmatmul.bf16.gmra.mxu0 %v3559
    %v4358 = vpop.f32.mrf.mxu0
    %v4359 = vadd.f32 0.0, %v4358
    %v4360 = vpop.f32.mrf.mxu0
    %v4361 = vadd.f32 0.0, %v4360
    %4362 = vmatmul.bf16.gmra.mxu0 %v3560
    %v4363 = vpop.f32.mrf.mxu0
    %v4364 = vadd.f32 0.0, %v4363
    %v4365 = vpop.f32.mrf.mxu0
    %v4366 = vadd.f32 0.0, %v4365
    %4367 = vmatmul.bf16.gmra.mxu0 %v3561
    %v4368 = vpop.f32.mrf.mxu0
    %v4369 = vadd.f32 0.0, %v4368
    %v4370 = vpop.f32.mrf.mxu0
    %v4371 = vadd.f32 0.0, %v4370
    %4372 = vmatmul.bf16.gmra.mxu0 %v3562
    %v4373 = vpop.f32.mrf.mxu0
    %v4374 = vadd.f32 0.0, %v4373
    %v4375 = vpop.f32.mrf.mxu0
    %v4376 = vadd.f32 0.0, %v4375
    %4377 = vmatmul.bf16.gmra.mxu0 %v3563
    %v4378 = vpop.f32.mrf.mxu0
    %v4379 = vadd.f32 0.0, %v4378
    %v4380 = vpop.f32.mrf.mxu0
    %v4381 = vadd.f32 0.0, %v4380
    %4382 = vmatmul.bf16.gmra.mxu0 %v3564
    %v4383 = vpop.f32.mrf.mxu0
    %v4384 = vadd.f32 0.0, %v4383
    %v4385 = vpop.f32.mrf.mxu0
    %v4386 = vadd.f32 0.0, %v4385
    %4387 = vmatmul.bf16.gmra.mxu0 %v3565
    %v4388 = vpop.f32.mrf.mxu0
    %v4389 = vadd.f32 0.0, %v4388
    %v4390 = vpop.f32.mrf.mxu0
    %v4391 = vadd.f32 0.0, %v4390
    %4392 = vmatmul.bf16.gmra.mxu0 %v3936
    %v4393 = vpop.f32.mrf.mxu0
    %v4394 = vadd.f32 0.0, %v4393
    %v4395 = vpop.f32.mrf.mxu0
    %v4396 = vadd.f32 0.0, %v4395
    %4397 = vmatmul.bf16.gmra.mxu0 %v4262
    %v4398 = vpop.f32.mrf.mxu0
    %v4399 = vadd.f32 0.0, %v4398
    %v4400 = vpop.f32.mrf.mxu0
    %v4401 = vadd.f32 0.0, %v4400
    %4402 = vmatmul.bf16.gmra.mxu0 %v3568
    %v4403 = vpop.f32.mrf.mxu0
    %v4404 = vadd.f32 0.0, %v4403
    %v4405 = vpop.f32.mrf.mxu0
    %v4406 = vadd.f32 0.0, %v4405
    %4407 = vmatmul.bf16.gmra.mxu0 %v3569
    %v4408 = vpop.f32.mrf.mxu0
    %v4409 = vadd.f32 0.0, %v4408
    %v4410 = vpop.f32.mrf.mxu0
    %v4411 = vadd.f32 0.0, %v4410
    %4412 = vmatmul.bf16.gmra.mxu0 %v3570
    %v4413 = vpop.f32.mrf.mxu0
    %v4414 = vadd.f32 0.0, %v4413
    %v4415 = vpop.f32.mrf.mxu0
    %v4416 = vadd.f32 0.0, %v4415
    %4417 = vmatmul.bf16.gmra.mxu0 %v3571
    %v4418 = vpop.f32.mrf.mxu0
    %v4419 = vadd.f32 0.0, %v4418
    %v4420 = vpop.f32.mrf.mxu0
    %v4421 = vadd.f32 0.0, %v4420
    %4422 = vmatmul.bf16.gmra.mxu0 %v3572
    %v4423 = vpop.f32.mrf.mxu0
    %v4424 = vadd.f32 0.0, %v4423
    %v4425 = vpop.f32.mrf.mxu0
    %v4426 = vadd.f32 0.0, %v4425
    %4427 = vmatmul.bf16.gmra.mxu0 %v3573
    %v4428 = vpop.f32.mrf.mxu0
    %v4429 = vadd.f32 0.0, %v4428
    %v4430 = vpop.f32.mrf.mxu0
    %v4431 = vadd.f32 0.0, %v4430
    %4432 = vmatmul.bf16.gmra.mxu0 %v3574
    %v4433 = vpop.f32.mrf.mxu0
    %v4434 = vadd.f32 0.0, %v4433
    %v4435 = vpop.f32.mrf.mxu0
    %v4436 = vadd.f32 0.0, %v4435
    %4437 = vmatmul.bf16.gmra.mxu0 %v3575
    %v4438 = vpop.f32.mrf.mxu0
    %v4439 = vadd.f32 0.0, %v4438
    %v4440 = vpop.f32.mrf.mxu0
    %v4441 = vadd.f32 0.0, %v4440
    %4442 = vmatmul.bf16.gmra.mxu0 %v3576
    %v4443 = vpop.f32.mrf.mxu0
    %v4444 = vadd.f32 0.0, %v4443
    %v4445 = vpop.f32.mrf.mxu0
    %v4446 = vadd.f32 0.0, %v4445
    %4447 = vmatmul.bf16.gmra.mxu0 %v3577
    %v4448 = vpop.f32.mrf.mxu0
    %v4449 = vadd.f32 0.0, %v4448
    %v4450 = vpop.f32.mrf.mxu0
    %v4451 = vadd.f32 0.0, %v4450
    %4452 = vmatmul.bf16.gmra.mxu0 %v3578
    %v4453 = vpop.f32.mrf.mxu0
    %v4454 = vadd.f32 0.0, %v4453
    %v4455 = vpop.f32.mrf.mxu0
    %v4456 = vadd.f32 0.0, %v4455
    %4457 = vmatmul.bf16.gmra.mxu0 %v3579
    %v4458 = vpop.f32.mrf.mxu0
    %v4459 = vadd.f32 0.0, %v4458
    %v4460 = vpop.f32.mrf.mxu0
    %v4461 = vadd.f32 0.0, %v4460
    %4462 = vmatmul.bf16.gmra.mxu0 %v3580
    %v4463 = vpop.f32.mrf.mxu0
    %v4464 = vadd.f32 0.0, %v4463
    %v4465 = vpop.f32.mrf.mxu0
    %v4466 = vadd.f32 0.0, %v4465
    %4467 = vmatmul.bf16.gmra.mxu0 %v3581
    %v4468 = vpop.f32.mrf.mxu0
    %v4469 = vadd.f32 0.0, %v4468
    %v4470 = vpop.f32.mrf.mxu0
    %v4471 = vadd.f32 0.0, %v4470
    %4472 = vmatmul.bf16.gmra.mxu0 %v3937
    %v4473 = vpop.f32.mrf.mxu0
    %v4474 = vadd.f32 0.0, %v4473
    %v4475 = vpop.f32.mrf.mxu0
    %v4476 = vadd.f32 0.0, %v4475
    %4477 = vmatmul.bf16.gmra.mxu0 %v4263
    %v4478 = vpop.f32.mrf.mxu0
    %v4479 = vadd.f32 0.0, %v4478
    %v4480 = vpop.f32.mrf.mxu0
    %v4481 = vadd.f32 0.0, %v4480
    %4482 = vdwg.mxu0
    %v4483 = vadd.f32 %v4157, %v4324
    %v4484 = vadd.f32 %v4158, %v4326
    %v4485 = vadd.f32 %v4159, %v4329
    %v4486 = vadd.f32 %v4160, %v4331
    %v4487 = vadd.f32 %v4161, %v4334
    %v4488 = vadd.f32 %v4162, %v4336
    %v4489 = vadd.f32 %v4163, %v4339
    %v4490 = vadd.f32 %v4164, %v4341
    %v4491 = vadd.f32 %v4165, %v4344
    %v4492 = vadd.f32 %v4166, %v4346
    %v4493 = vadd.f32 %v4167, %v4349
    %v4494 = vadd.f32 %v4168, %v4351
    %v4495 = vadd.f32 %v4169, %v4354
    %v4496 = vadd.f32 %v4170, %v4356
    %v4497 = vadd.f32 %v4171, %v4359
    %v4498 = vadd.f32 %v4172, %v4361
    %v4499 = vadd.f32 %v4173, %v4364
    %v4500 = vadd.f32 %v4174, %v4366
    %v4501 = vadd.f32 %v4175, %v4369
    %v4502 = vadd.f32 %v4176, %v4371
    %v4503 = vadd.f32 %v4177, %v4374
    %v4504 = vadd.f32 %v4178, %v4376
    %v4505 = vadd.f32 %v4179, %v4379
    %v4506 = vadd.f32 %v4180, %v4381
    %v4507 = vadd.f32 %v4181, %v4384
    %v4508 = vadd.f32 %v4182, %v4386
    %v4509 = vadd.f32 %v4183, %v4389
    %v4510 = vadd.f32 %v4184, %v4391
    %v4511 = vadd.f32 %v4185, %v4394
    %v4512 = vadd.f32 %v4186, %v4396
    %v4513 = vadd.f32 %v4187, %v4399
    %v4514 = vadd.f32 %v4188, %v4401
    %v4515 = vadd.f32 %v4189, %v4404
    %v4516 = vadd.f32 %v4190, %v4406
    %v4517 = vadd.f32 %v4191, %v4409
    %v4518 = vadd.f32 %v4192, %v4411
    %v4519 = vadd.f32 %v4193, %v4414
    %v4520 = vadd.f32 %v4194, %v4416
    %v4521 = vadd.f32 %v4195, %v4419
    %v4522 = vadd.f32 %v4196, %v4421
    %v4523 = vadd.f32 %v4197, %v4424
    %v4524 = vadd.f32 %v4198, %v4426
    %v4525 = vadd.f32 %v4199, %v4429
    %v4526 = vadd.f32 %v4200, %v4431
    %v4527 = vadd.f32 %v4201, %v4434
    %v4528 = vadd.f32 %v4202, %v4436
    %v4529 = vadd.f32 %v4203, %v4439
    %v4530 = vadd.f32 %v4204, %v4441
    %v4531 = vadd.f32 %v4205, %v4444
    %v4532 = vadd.f32 %v4206, %v4446
    %v4533 = vadd.f32 %v4207, %v4449
    %v4534 = vadd.f32 %v4208, %v4451
    %v4535 = vadd.f32 %v4209, %v4454
    %v4536 = vadd.f32 %v4210, %v4456
    %v4537 = vadd.f32 %v4211, %v4459
    %v4538 = vadd.f32 %v4212, %v4461
    %v4539 = vadd.f32 %v4213, %v4464
    %v4540 = vadd.f32 %v4214, %v4466
    %v4541 = vadd.f32 %v4215, %v4469
    %v4542 = vadd.f32 %v4216, %v4471
    %v4543 = vadd.f32 %v4217, %v4474
    %v4544 = vadd.f32 %v4218, %v4476
    %v4545 = vadd.f32 %v4219, %v4479
    %v4546 = vadd.f32 %v4220, %v4481
    %v4547 = vld [vmem:[%s2] sm:$0x1]
    %v4548 = vld [vmem:[%s3] sm:$0x1]
    %v4549 = vadd.f32 %v4483, %v4484
    %v4550 = vadd.f32 %v4549, %v4485
    %v4551 = vadd.f32 %v4550, %v4486
    %v4552 = vadd.f32 %v4551, %v4487
    %v4553 = vadd.f32 %v4552, %v4488
    %v4554 = vadd.f32 %v4553, %v4489
    %v4555 = vadd.f32 %v4554, %v4490
    %v4556 = vadd.f32 %v4555, %v4491
    %v4557 = vadd.f32 %v4556, %v4492
    %v4558 = vadd.f32 %v4557, %v4493
    %v4559 = vadd.f32 %v4558, %v4494
    %v4560 = vadd.f32 %v4559, %v4495
    %v4561 = vadd.f32 %v4560, %v4496
    %v4562 = vadd.f32 %v4561, %v4497
    %v4563 = vadd.f32 %v4562, %v4498
    %v4564 = vadd.f32 %v4563, %v4499
    %v4565 = vadd.f32 %v4564, %v4500
    %v4566 = vadd.f32 %v4565, %v4501
    %v4567 = vadd.f32 %v4566, %v4502
    %v4568 = vadd.f32 %v4567, %v4503
    %v4569 = vadd.f32 %v4568, %v4504
    %v4570 = vadd.f32 %v4569, %v4505
    %v4571 = vadd.f32 %v4570, %v4506
    %v4572 = vadd.f32 %v4571, %v4507
    %v4573 = vadd.f32 %v4572, %v4508
    %v4574 = vadd.f32 %v4573, %v4509
    %v4575 = vadd.f32 %v4574, %v4510
    %v4576 = vadd.f32 %v4575, %v4511
    %v4577 = vadd.f32 %v4576, %v4512
    %v4578 = vadd.f32 %v4577, %v4513
    %v4579 = vadd.f32 %v4578, %v4514
    %v4580 = vadd.f32 %v4579, %v4515
    %v4581 = vadd.f32 %v4580, %v4516
    %v4582 = vadd.f32 %v4581, %v4517
    %v4583 = vadd.f32 %v4582, %v4518
    %v4584 = vadd.f32 %v4583, %v4519
    %v4585 = vadd.f32 %v4584, %v4520
    %v4586 = vadd.f32 %v4585, %v4521
    %v4587 = vadd.f32 %v4586, %v4522
    %v4588 = vadd.f32 %v4587, %v4523
    %v4589 = vadd.f32 %v4588, %v4524
    %v4590 = vadd.f32 %v4589, %v4525
    %v4591 = vadd.f32 %v4590, %v4526
    %v4592 = vadd.f32 %v4591, %v4527
    %v4593 = vadd.f32 %v4592, %v4528
    %v4594 = vadd.f32 %v4593, %v4529
    %v4595 = vadd.f32 %v4594, %v4530
    %v4596 = vadd.f32 %v4595, %v4531
    %v4597 = vadd.f32 %v4596, %v4532
    %v4598 = vadd.f32 %v4597, %v4533
    %v4599 = vadd.f32 %v4598, %v4534
    %v4600 = vadd.f32 %v4599, %v4535
    %v4601 = vadd.f32 %v4600, %v4536
    %v4602 = vadd.f32 %v4601, %v4537
    %v4603 = vadd.f32 %v4602, %v4538
    %v4604 = vadd.f32 %v4603, %v4539
    %v4605 = vadd.f32 %v4604, %v4540
    %v4606 = vadd.f32 %v4605, %v4541
    %v4607 = vadd.f32 %v4606, %v4542
    %v4608 = vadd.f32 %v4607, %v4543
    %v4609 = vadd.f32 %v4608, %v4544
    %v4610 = vadd.f32 %v4609, %v4545
    %v4611 = vadd.f32 %v4610, %v4546
    %v4612 = vrot.slane %v4611, 4
    %v4613 = vadd.f32 %v4611, %v4612
    %v4614 = vrot.slane %v4613, 2
    %v4615 = vadd.f32 %v4613, %v4614
    %v4616 = vrot.slane %v4615, 1
    %v4617 = vadd.f32 %v4615, %v4616
    %v4618 = vmul.f32 %v4617, 0.001953125
    %v4619 = vsub.f32 %v4483, %v4618
    %v4620 = vsub.f32 %v4484, %v4618
    %v4621 = vsub.f32 %v4485, %v4618
    %v4622 = vsub.f32 %v4486, %v4618
    %v4623 = vsub.f32 %v4487, %v4618
    %v4624 = vsub.f32 %v4488, %v4618
    %v4625 = vsub.f32 %v4489, %v4618
    %v4626 = vsub.f32 %v4490, %v4618
    %v4627 = vsub.f32 %v4491, %v4618
    %v4628 = vsub.f32 %v4492, %v4618
    %v4629 = vsub.f32 %v4493, %v4618
    %v4630 = vsub.f32 %v4494, %v4618
    %v4631 = vsub.f32 %v4495, %v4618
    %v4632 = vsub.f32 %v4496, %v4618
    %v4633 = vsub.f32 %v4497, %v4618
    %v4634 = vsub.f32 %v4498, %v4618
    %v4635 = vsub.f32 %v4499, %v4618
    %v4636 = vsub.f32 %v4500, %v4618
    %v4637 = vsub.f32 %v4501, %v4618
    %v4638 = vsub.f32 %v4502, %v4618
    %v4639 = vsub.f32 %v4503, %v4618
    %v4640 = vsub.f32 %v4504, %v4618
    %v4641 = vsub.f32 %v4505, %v4618
    %v4642 = vsub.f32 %v4506, %v4618
    %v4643 = vsub.f32 %v4507, %v4618
    %v4644 = vsub.f32 %v4508, %v4618
    %v4645 = vsub.f32 %v4509, %v4618
    %v4646 = vsub.f32 %v4510, %v4618
    %v4647 = vsub.f32 %v4511, %v4618
    %v4648 = vsub.f32 %v4512, %v4618
    %v4649 = vsub.f32 %v4513, %v4618
    %v4650 = vsub.f32 %v4514, %v4618
    %v4651 = vsub.f32 %v4515, %v4618
    %v4652 = vsub.f32 %v4516, %v4618
    %v4653 = vsub.f32 %v4517, %v4618
    %v4654 = vsub.f32 %v4518, %v4618
    %v4655 = vsub.f32 %v4519, %v4618
    %v4656 = vsub.f32 %v4520, %v4618
    %v4657 = vsub.f32 %v4521, %v4618
    %v4658 = vsub.f32 %v4522, %v4618
    %v4659 = vsub.f32 %v4523, %v4618
    %v4660 = vsub.f32 %v4524, %v4618
    %v4661 = vsub.f32 %v4525, %v4618
    %v4662 = vsub.f32 %v4526, %v4618
    %v4663 = vsub.f32 %v4527, %v4618
    %v4664 = vsub.f32 %v4528, %v4618
    %v4665 = vsub.f32 %v4529, %v4618
    %v4666 = vsub.f32 %v4530, %v4618
    %v4667 = vsub.f32 %v4531, %v4618
    %v4668 = vsub.f32 %v4532, %v4618
    %v4669 = vsub.f32 %v4533, %v4618
    %v4670 = vsub.f32 %v4534, %v4618
    %v4671 = vsub.f32 %v4535, %v4618
    %v4672 = vsub.f32 %v4536, %v4618
    %v4673 = vsub.f32 %v4537, %v4618
    %v4674 = vsub.f32 %v4538, %v4618
    %v4675 = vsub.f32 %v4539, %v4618
    %v4676 = vsub.f32 %v4540, %v4618
    %v4677 = vsub.f32 %v4541, %v4618
    %v4678 = vsub.f32 %v4542, %v4618
    %v4679 = vsub.f32 %v4543, %v4618
    %v4680 = vsub.f32 %v4544, %v4618
    %v4681 = vsub.f32 %v4545, %v4618
    %v4682 = vsub.f32 %v4546, %v4618
    %v4683 = vmul.f32 %v4619, %v4619
    %v4684 = vmul.f32 %v4620, %v4620
    %v4685 = vmul.f32 %v4621, %v4621
    %v4686 = vmul.f32 %v4622, %v4622
    %v4687 = vmul.f32 %v4623, %v4623
    %v4688 = vmul.f32 %v4624, %v4624
    %v4689 = vmul.f32 %v4625, %v4625
    %v4690 = vmul.f32 %v4626, %v4626
    %v4691 = vmul.f32 %v4627, %v4627
    %v4692 = vmul.f32 %v4628, %v4628
    %v4693 = vmul.f32 %v4629, %v4629
    %v4694 = vmul.f32 %v4630, %v4630
    %v4695 = vmul.f32 %v4631, %v4631
    %v4696 = vmul.f32 %v4632, %v4632
    %v4697 = vmul.f32 %v4633, %v4633
    %v4698 = vmul.f32 %v4634, %v4634
    %v4699 = vmul.f32 %v4635, %v4635
    %v4700 = vmul.f32 %v4636, %v4636
    %v4701 = vmul.f32 %v4637, %v4637
    %v4702 = vmul.f32 %v4638, %v4638
    %v4703 = vmul.f32 %v4639, %v4639
    %v4704 = vmul.f32 %v4640, %v4640
    %v4705 = vmul.f32 %v4641, %v4641
    %v4706 = vmul.f32 %v4642, %v4642
    %v4707 = vmul.f32 %v4643, %v4643
    %v4708 = vmul.f32 %v4644, %v4644
    %v4709 = vmul.f32 %v4645, %v4645
    %v4710 = vmul.f32 %v4646, %v4646
    %v4711 = vmul.f32 %v4647, %v4647
    %v4712 = vmul.f32 %v4648, %v4648
    %v4713 = vmul.f32 %v4649, %v4649
    %v4714 = vmul.f32 %v4650, %v4650
    %v4715 = vmul.f32 %v4651, %v4651
    %v4716 = vmul.f32 %v4652, %v4652
    %v4717 = vmul.f32 %v4653, %v4653
    %v4718 = vmul.f32 %v4654, %v4654
    %v4719 = vmul.f32 %v4655, %v4655
    %v4720 = vmul.f32 %v4656, %v4656
    %v4721 = vmul.f32 %v4657, %v4657
    %v4722 = vmul.f32 %v4658, %v4658
    %v4723 = vmul.f32 %v4659, %v4659
    %v4724 = vmul.f32 %v4660, %v4660
    %v4725 = vmul.f32 %v4661, %v4661
    %v4726 = vmul.f32 %v4662, %v4662
    %v4727 = vmul.f32 %v4663, %v4663
    %v4728 = vmul.f32 %v4664, %v4664
    %v4729 = vmul.f32 %v4665, %v4665
    %v4730 = vmul.f32 %v4666, %v4666
    %v4731 = vmul.f32 %v4667, %v4667
    %v4732 = vmul.f32 %v4668, %v4668
    %v4733 = vmul.f32 %v4669, %v4669
    %v4734 = vmul.f32 %v4670, %v4670
    %v4735 = vmul.f32 %v4671, %v4671
    %v4736 = vmul.f32 %v4672, %v4672
    %v4737 = vmul.f32 %v4673, %v4673
    %v4738 = vmul.f32 %v4674, %v4674
    %v4739 = vmul.f32 %v4675, %v4675
    %v4740 = vmul.f32 %v4676, %v4676
    %v4741 = vmul.f32 %v4677, %v4677
    %v4742 = vmul.f32 %v4678, %v4678
    %v4743 = vmul.f32 %v4679, %v4679
    %v4744 = vmul.f32 %v4680, %v4680
    %v4745 = vmul.f32 %v4681, %v4681
    %v4746 = vmul.f32 %v4682, %v4682
    %v4747 = vadd.f32 %v4683, %v4684
    %v4748 = vadd.f32 %v4747, %v4685
    %v4749 = vadd.f32 %v4748, %v4686
    %v4750 = vadd.f32 %v4749, %v4687
    %v4751 = vadd.f32 %v4750, %v4688
    %v4752 = vadd.f32 %v4751, %v4689
    %v4753 = vadd.f32 %v4752, %v4690
    %v4754 = vadd.f32 %v4753, %v4691
    %v4755 = vadd.f32 %v4754, %v4692
    %v4756 = vadd.f32 %v4755, %v4693
    %v4757 = vadd.f32 %v4756, %v4694
    %v4758 = vadd.f32 %v4757, %v4695
    %v4759 = vadd.f32 %v4758, %v4696
    %v4760 = vadd.f32 %v4759, %v4697
    %v4761 = vadd.f32 %v4760, %v4698
    %v4762 = vadd.f32 %v4761, %v4699
    %v4763 = vadd.f32 %v4762, %v4700
    %v4764 = vadd.f32 %v4763, %v4701
    %v4765 = vadd.f32 %v4764, %v4702
    %v4766 = vadd.f32 %v4765, %v4703
    %v4767 = vadd.f32 %v4766, %v4704
    %v4768 = vadd.f32 %v4767, %v4705
    %v4769 = vadd.f32 %v4768, %v4706
    %v4770 = vadd.f32 %v4769, %v4707
    %v4771 = vadd.f32 %v4770, %v4708
    %v4772 = vadd.f32 %v4771, %v4709
    %v4773 = vadd.f32 %v4772, %v4710
    %v4774 = vadd.f32 %v4773, %v4711
    %v4775 = vadd.f32 %v4774, %v4712
    %v4776 = vadd.f32 %v4775, %v4713
    %v4777 = vadd.f32 %v4776, %v4714
    %v4778 = vadd.f32 %v4777, %v4715
    %v4779 = vadd.f32 %v4778, %v4716
    %v4780 = vadd.f32 %v4779, %v4717
    %v4781 = vadd.f32 %v4780, %v4718
    %v4782 = vadd.f32 %v4781, %v4719
    %v4783 = vadd.f32 %v4782, %v4720
    %v4784 = vadd.f32 %v4783, %v4721
    %v4785 = vadd.f32 %v4784, %v4722
    %v4786 = vadd.f32 %v4785, %v4723
    %v4787 = vadd.f32 %v4786, %v4724
    %v4788 = vadd.f32 %v4787, %v4725
    %v4789 = vadd.f32 %v4788, %v4726
    %v4790 = vadd.f32 %v4789, %v4727
    %v4791 = vadd.f32 %v4790, %v4728
    %v4792 = vadd.f32 %v4791, %v4729
    %v4793 = vadd.f32 %v4792, %v4730
    %v4794 = vadd.f32 %v4793, %v4731
    %v4795 = vadd.f32 %v4794, %v4732
    %v4796 = vadd.f32 %v4795, %v4733
    %v4797 = vadd.f32 %v4796, %v4734
    %v4798 = vadd.f32 %v4797, %v4735
    %v4799 = vadd.f32 %v4798, %v4736
    %v4800 = vadd.f32 %v4799, %v4737
    %v4801 = vadd.f32 %v4800, %v4738
    %v4802 = vadd.f32 %v4801, %v4739
    %v4803 = vadd.f32 %v4802, %v4740
    %v4804 = vadd.f32 %v4803, %v4741
    %v4805 = vadd.f32 %v4804, %v4742
    %v4806 = vadd.f32 %v4805, %v4743
    %v4807 = vadd.f32 %v4806, %v4744
    %v4808 = vadd.f32 %v4807, %v4745
    %v4809 = vadd.f32 %v4808, %v4746
    %v4810 = vrot.slane %v4809, 4
    %v4811 = vadd.f32 %v4809, %v4810
    %v4812 = vrot.slane %v4811, 2
    %v4813 = vadd.f32 %v4811, %v4812
    %v4814 = vrot.slane %v4813, 1
    %v4815 = vadd.f32 %v4813, %v4814
    %v4816 = vmul.f32 %v4815, 0.001953125
    %v4817 = vadd.f32 %v4816, 1e-05
    %v4818 = vrsqrt.pop %v4817
    %v4819 = vmul.f32 %v4818, %v4817
    %v4820 = vmul.f32 %v4819, %v4818
    %v4821 = vmul.f32 0.5, %v4820
    %v4822 = vsub.f32 1.5, %v4821
    %v4823 = vmul.f32 %v4818, %v4822
    %vm4824 = vweird.f32 %v4817
    %vm4825 = vweird.f32 %v4818
    %vm4826 = vmor %vm4824, %vm4825
    %v4827 = vsel %vm4826, %v4818, %v4823
    %v4828 = vmul.f32 %v4619, %v4827
    %v4829 = vmul.f32 %v4620, %v4827
    %v4830 = vmul.f32 %v4621, %v4827
    %v4831 = vmul.f32 %v4622, %v4827
    %v4832 = vmul.f32 %v4623, %v4827
    %v4833 = vmul.f32 %v4624, %v4827
    %v4834 = vmul.f32 %v4625, %v4827
    %v4835 = vmul.f32 %v4626, %v4827
    %v4836 = vmul.f32 %v4627, %v4827
    %v4837 = vmul.f32 %v4628, %v4827
    %v4838 = vmul.f32 %v4629, %v4827
    %v4839 = vmul.f32 %v4630, %v4827
    %v4840 = vmul.f32 %v4631, %v4827
    %v4841 = vmul.f32 %v4632, %v4827
    %v4842 = vmul.f32 %v4633, %v4827
    %v4843 = vmul.f32 %v4634, %v4827
    %v4844 = vmul.f32 %v4635, %v4827
    %v4845 = vmul.f32 %v4636, %v4827
    %v4846 = vmul.f32 %v4637, %v4827
    %v4847 = vmul.f32 %v4638, %v4827
    %v4848 = vmul.f32 %v4639, %v4827
    %v4849 = vmul.f32 %v4640, %v4827
    %v4850 = vmul.f32 %v4641, %v4827
    %v4851 = vmul.f32 %v4642, %v4827
    %v4852 = vmul.f32 %v4643, %v4827
    %v4853 = vmul.f32 %v4644, %v4827
    %v4854 = vmul.f32 %v4645, %v4827
    %v4855 = vmul.f32 %v4646, %v4827
    %v4856 = vmul.f32 %v4647, %v4827
    %v4857 = vmul.f32 %v4648, %v4827
    %v4858 = vmul.f32 %v4649, %v4827
    %v4859 = vmul.f32 %v4650, %v4827
    %v4860 = vmul.f32 %v4651, %v4827
    %v4861 = vmul.f32 %v4652, %v4827
    %v4862 = vmul.f32 %v4653, %v4827
    %v4863 = vmul.f32 %v4654, %v4827
    %v4864 = vmul.f32 %v4655, %v4827
    %v4865 = vmul.f32 %v4656, %v4827
    %v4866 = vmul.f32 %v4657, %v4827
    %v4867 = vmul.f32 %v4658, %v4827
    %v4868 = vmul.f32 %v4659, %v4827
    %v4869 = vmul.f32 %v4660, %v4827
    %v4870 = vmul.f32 %v4661, %v4827
    %v4871 = vmul.f32 %v4662, %v4827
    %v4872 = vmul.f32 %v4663, %v4827
    %v4873 = vmul.f32 %v4664, %v4827
    %v4874 = vmul.f32 %v4665, %v4827
    %v4875 = vmul.f32 %v4666, %v4827
    %v4876 = vmul.f32 %v4667, %v4827
    %v4877 = vmul.f32 %v4668, %v4827
    %v4878 = vmul.f32 %v4669, %v4827
    %v4879 = vmul.f32 %v4670, %v4827
    %v4880 = vmul.f32 %v4671, %v4827
    %v4881 = vmul.f32 %v4672, %v4827
    %v4882 = vmul.f32 %v4673, %v4827
    %v4883 = vmul.f32 %v4674, %v4827
    %v4884 = vmul.f32 %v4675, %v4827
    %v4885 = vmul.f32 %v4676, %v4827
    %v4886 = vmul.f32 %v4677, %v4827
    %v4887 = vmul.f32 %v4678, %v4827
    %v4888 = vmul.f32 %v4679, %v4827
    %v4889 = vmul.f32 %v4680, %v4827
    %v4890 = vmul.f32 %v4681, %v4827
    %v4891 = vmul.f32 %v4682, %v4827
    %v4893 = vperm.slane %v4547, 0
    %v4895 = vmul.f32 %v4828, %v4893
    %v4896 = vmul.f32 %v4829, %v4893
    %v4897 = vmul.f32 %v4830, %v4893
    %v4898 = vmul.f32 %v4831, %v4893
    %v4899 = vmul.f32 %v4832, %v4893
    %v4900 = vmul.f32 %v4833, %v4893
    %v4901 = vmul.f32 %v4834, %v4893
    %v4902 = vmul.f32 %v4835, %v4893
    %v4903 = vmul.f32 %v4836, %v4893
    %v4904 = vmul.f32 %v4837, %v4893
    %v4905 = vmul.f32 %v4838, %v4893
    %v4906 = vmul.f32 %v4839, %v4893
    %v4907 = vmul.f32 %v4840, %v4893
    %v4908 = vmul.f32 %v4841, %v4893
    %v4909 = vmul.f32 %v4842, %v4893
    %v4910 = vmul.f32 %v4843, %v4893
    %v4911 = vmul.f32 %v4844, %v4893
    %v4912 = vmul.f32 %v4845, %v4893
    %v4913 = vmul.f32 %v4846, %v4893
    %v4914 = vmul.f32 %v4847, %v4893
    %v4915 = vmul.f32 %v4848, %v4893
    %v4916 = vmul.f32 %v4849, %v4893
    %v4917 = vmul.f32 %v4850, %v4893
    %v4918 = vmul.f32 %v4851, %v4893
    %v4919 = vmul.f32 %v4852, %v4893
    %v4920 = vmul.f32 %v4853, %v4893
    %v4921 = vmul.f32 %v4854, %v4893
    %v4922 = vmul.f32 %v4855, %v4893
    %v4923 = vmul.f32 %v4856, %v4893
    %v4924 = vmul.f32 %v4857, %v4893
    %v4925 = vmul.f32 %v4858, %v4893
    %v4926 = vmul.f32 %v4859, %v4893
    %v4927 = vmul.f32 %v4860, %v4893
    %v4928 = vmul.f32 %v4861, %v4893
    %v4929 = vmul.f32 %v4862, %v4893
    %v4930 = vmul.f32 %v4863, %v4893
    %v4931 = vmul.f32 %v4864, %v4893
    %v4932 = vmul.f32 %v4865, %v4893
    %v4933 = vmul.f32 %v4866, %v4893
    %v4934 = vmul.f32 %v4867, %v4893
    %v4935 = vmul.f32 %v4868, %v4893
    %v4936 = vmul.f32 %v4869, %v4893
    %v4937 = vmul.f32 %v4870, %v4893
    %v4938 = vmul.f32 %v4871, %v4893
    %v4939 = vmul.f32 %v4872, %v4893
    %v4940 = vmul.f32 %v4873, %v4893
    %v4941 = vmul.f32 %v4874, %v4893
    %v4942 = vmul.f32 %v4875, %v4893
    %v4943 = vmul.f32 %v4876, %v4893
    %v4944 = vmul.f32 %v4877, %v4893
    %v4945 = vmul.f32 %v4878, %v4893
    %v4946 = vmul.f32 %v4879, %v4893
    %v4947 = vmul.f32 %v4880, %v4893
    %v4948 = vmul.f32 %v4881, %v4893
    %v4949 = vmul.f32 %v4882, %v4893
    %v4950 = vmul.f32 %v4883, %v4893
    %v4951 = vmul.f32 %v4884, %v4893
    %v4952 = vmul.f32 %v4885, %v4893
    %v4953 = vmul.f32 %v4886, %v4893
    %v4954 = vmul.f32 %v4887, %v4893
    %v4955 = vmul.f32 %v4888, %v4893
    %v4956 = vmul.f32 %v4889, %v4893
    %v4957 = vmul.f32 %v4890, %v4893
    %v4958 = vmul.f32 %v4891, %v4893
    %v4960 = vperm.slane %v4548, 0
    %v4962 = vadd.f32 %v4895, %v4960
    %v4963 = vadd.f32 %v4896, %v4960
    %v4964 = vadd.f32 %v4897, %v4960
    %v4965 = vadd.f32 %v4898, %v4960
    %v4966 = vadd.f32 %v4899, %v4960
    %v4967 = vadd.f32 %v4900, %v4960
    %v4968 = vadd.f32 %v4901, %v4960
    %v4969 = vadd.f32 %v4902, %v4960
    %v4970 = vadd.f32 %v4903, %v4960
    %v4971 = vadd.f32 %v4904, %v4960
    %v4972 = vadd.f32 %v4905, %v4960
    %v4973 = vadd.f32 %v4906, %v4960
    %v4974 = vadd.f32 %v4907, %v4960
    %v4975 = vadd.f32 %v4908, %v4960
    %v4976 = vadd.f32 %v4909, %v4960
    %v4977 = vadd.f32 %v4910, %v4960
    %v4978 = vadd.f32 %v4911, %v4960
    %v4979 = vadd.f32 %v4912, %v4960
    %v4980 = vadd.f32 %v4913, %v4960
    %v4981 = vadd.f32 %v4914, %v4960
    %v4982 = vadd.f32 %v4915, %v4960
    %v4983 = vadd.f32 %v4916, %v4960
    %v4984 = vadd.f32 %v4917, %v4960
    %v4985 = vadd.f32 %v4918, %v4960
    %v4986 = vadd.f32 %v4919, %v4960
    %v4987 = vadd.f32 %v4920, %v4960
    %v4988 = vadd.f32 %v4921, %v4960
    %v4989 = vadd.f32 %v4922, %v4960
    %v4990 = vadd.f32 %v4923, %v4960
    %v4991 = vadd.f32 %v4924, %v4960
    %v4992 = vadd.f32 %v4925, %v4960
    %v4993 = vadd.f32 %v4926, %v4960
    %v4994 = vadd.f32 %v4927, %v4960
    %v4995 = vadd.f32 %v4928, %v4960
    %v4996 = vadd.f32 %v4929, %v4960
    %v4997 = vadd.f32 %v4930, %v4960
    %v4998 = vadd.f32 %v4931, %v4960
    %v4999 = vadd.f32 %v4932, %v4960
    %v5000 = vadd.f32 %v4933, %v4960
    %v5001 = vadd.f32 %v4934, %v4960
    %v5002 = vadd.f32 %v4935, %v4960
    %v5003 = vadd.f32 %v4936, %v4960
    %v5004 = vadd.f32 %v4937, %v4960
    %v5005 = vadd.f32 %v4938, %v4960
    %v5006 = vadd.f32 %v4939, %v4960
    %v5007 = vadd.f32 %v4940, %v4960
    %v5008 = vadd.f32 %v4941, %v4960
    %v5009 = vadd.f32 %v4942, %v4960
    %v5010 = vadd.f32 %v4943, %v4960
    %v5011 = vadd.f32 %v4944, %v4960
    %v5012 = vadd.f32 %v4945, %v4960
    %v5013 = vadd.f32 %v4946, %v4960
    %v5014 = vadd.f32 %v4947, %v4960
    %v5015 = vadd.f32 %v4948, %v4960
    %v5016 = vadd.f32 %v4949, %v4960
    %v5017 = vadd.f32 %v4950, %v4960
    %v5018 = vadd.f32 %v4951, %v4960
    %v5019 = vadd.f32 %v4952, %v4960
    %v5020 = vadd.f32 %v4953, %v4960
    %v5021 = vadd.f32 %v4954, %v4960
    %v5022 = vadd.f32 %v4955, %v4960
    %v5023 = vadd.f32 %v4956, %v4960
    %v5024 = vadd.f32 %v4957, %v4960
    %v5025 = vadd.f32 %v4958, %v4960
    %v5026 = vmax.f32 %v4962, 0.0
    %v5027 = vmax.f32 %v4963, 0.0
    %v5028 = vmax.f32 %v4964, 0.0
    %v5029 = vmax.f32 %v4965, 0.0
    %v5030 = vmax.f32 %v4966, 0.0
    %v5031 = vmax.f32 %v4967, 0.0
    %v5032 = vmax.f32 %v4968, 0.0
    %v5033 = vmax.f32 %v4969, 0.0
    %v5034 = vmax.f32 %v4970, 0.0
    %v5035 = vmax.f32 %v4971, 0.0
    %v5036 = vmax.f32 %v4972, 0.0
    %v5037 = vmax.f32 %v4973, 0.0
    %v5038 = vmax.f32 %v4974, 0.0
    %v5039 = vmax.f32 %v4975, 0.0
    %v5040 = vmax.f32 %v4976, 0.0
    %v5041 = vmax.f32 %v4977, 0.0
    %v5042 = vmax.f32 %v4978, 0.0
    %v5043 = vmax.f32 %v4979, 0.0
    %v5044 = vmax.f32 %v4980, 0.0
    %v5045 = vmax.f32 %v4981, 0.0
    %v5046 = vmax.f32 %v4982, 0.0
    %v5047 = vmax.f32 %v4983, 0.0
    %v5048 = vmax.f32 %v4984, 0.0
    %v5049 = vmax.f32 %v4985, 0.0
    %v5050 = vmax.f32 %v4986, 0.0
    %v5051 = vmax.f32 %v4987, 0.0
    %v5052 = vmax.f32 %v4988, 0.0
    %v5053 = vmax.f32 %v4989, 0.0
    %v5054 = vmax.f32 %v4990, 0.0
    %v5055 = vmax.f32 %v4991, 0.0
    %v5056 = vmax.f32 %v4992, 0.0
    %v5057 = vmax.f32 %v4993, 0.0
    %v5058 = vmax.f32 %v4994, 0.0
    %v5059 = vmax.f32 %v4995, 0.0
    %v5060 = vmax.f32 %v4996, 0.0
    %v5061 = vmax.f32 %v4997, 0.0
    %v5062 = vmax.f32 %v4998, 0.0
    %v5063 = vmax.f32 %v4999, 0.0
    %v5064 = vmax.f32 %v5000, 0.0
    %v5065 = vmax.f32 %v5001, 0.0
    %v5066 = vmax.f32 %v5002, 0.0
    %v5067 = vmax.f32 %v5003, 0.0
    %v5068 = vmax.f32 %v5004, 0.0
    %v5069 = vmax.f32 %v5005, 0.0
    %v5070 = vmax.f32 %v5006, 0.0
    %v5071 = vmax.f32 %v5007, 0.0
    %v5072 = vmax.f32 %v5008, 0.0
    %v5073 = vmax.f32 %v5009, 0.0
    %v5074 = vmax.f32 %v5010, 0.0
    %v5075 = vmax.f32 %v5011, 0.0
    %v5076 = vmax.f32 %v5012, 0.0
    %v5077 = vmax.f32 %v5013, 0.0
    %v5078 = vmax.f32 %v5014, 0.0
    %v5079 = vmax.f32 %v5015, 0.0
    %v5080 = vmax.f32 %v5016, 0.0
    %v5081 = vmax.f32 %v5017, 0.0
    %v5082 = vmax.f32 %v5018, 0.0
    %v5083 = vmax.f32 %v5019, 0.0
    %v5084 = vmax.f32 %v5020, 0.0
    %v5085 = vmax.f32 %v5021, 0.0
    %v5086 = vmax.f32 %v5022, 0.0
    %v5087 = vmax.f32 %v5023, 0.0
    %v5088 = vmax.f32 %v5024, 0.0
    %v5089 = vmax.f32 %v5025, 0.0
    %5090 = vst [vmem:[#allocation2] sm:$0xf] 0
    %5091 = vst [vmem:[#allocation2 + $0x4] sm:$0xf] 0
    %5092 = vst [vmem:[#allocation2 + $0x8] sm:$0xf] 0
    %5093 = vst [vmem:[#allocation2 + $0xc] sm:$0xf] 0
    %5094 = vst [vmem:[#allocation2 + $0x10] sm:$0xf] 0
    %5095 = vst [vmem:[#allocation2 + $0x14] sm:$0xf] 0
    %5096 = vst [vmem:[#allocation2 + $0x18] sm:$0xf] 0
    %5097 = vst [vmem:[#allocation2 + $0x1c] sm:$0xf] 0
    %5098 = vst [vmem:[#allocation2 + $0x20] sm:$0xf] 0
    %5099 = vst [vmem:[#allocation2 + $0x24] sm:$0xf] 0
    %5100 = vst [vmem:[#allocation2 + $0x28] sm:$0xf] 0
    %5101 = vst [vmem:[#allocation2 + $0x2c] sm:$0xf] 0
    %5102 = vst [vmem:[#allocation2 + $0x30] sm:$0xf] 0
    %5103 = vst [vmem:[#allocation2 + $0x34] sm:$0xf] 0
    %5104 = vst [vmem:[#allocation2 + $0x38] sm:$0xf] 0
    %5105 = vst [vmem:[#allocation2 + $0x3c] sm:$0xf] 0
    %5106 = vst [vmem:[#allocation2 + $0x40] sm:$0xf] 0
    %5107 = vst [vmem:[#allocation2 + $0x44] sm:$0xf] 0
    %5108 = vst [vmem:[#allocation2 + $0x48] sm:$0xf] 0
    %5109 = vst [vmem:[#allocation2 + $0x4c] sm:$0xf] 0
    %5110 = vst [vmem:[#allocation2 + $0x50] sm:$0xf] 0
    %5111 = vst [vmem:[#allocation2 + $0x54] sm:$0xf] 0
    %5112 = vst [vmem:[#allocation2 + $0x58] sm:$0xf] 0
    %5113 = vst [vmem:[#allocation2 + $0x5c] sm:$0xf] 0
    %5114 = vst [vmem:[#allocation2 + $0x60] sm:$0xf] 0
    %5115 = vst [vmem:[#allocation2 + $0x64] sm:$0xf] 0
    %5116 = vst [vmem:[#allocation2 + $0x68] sm:$0xf] 0
    %5117 = vst [vmem:[#allocation2 + $0x6c] sm:$0xf] 0
    %5118 = vst [vmem:[#allocation2 + $0x70] sm:$0xf] 0
    %5119 = vst [vmem:[#allocation2 + $0x74] sm:$0xf] 0
    %5120 = vst [vmem:[#allocation2 + $0x78] sm:$0xf] 0
    %5121 = vst [vmem:[#allocation2 + $0x7c] sm:$0xf] 0
    %5122 = vst [vmem:[#allocation2 + $0x80] sm:$0xf] 0
    %5123 = vst [vmem:[#allocation2 + $0x84] sm:$0xf] 0
    %5124 = vst [vmem:[#allocation2 + $0x88] sm:$0xf] 0
    %5125 = vst [vmem:[#allocation2 + $0x8c] sm:$0xf] 0
    %5126 = vst [vmem:[#allocation2 + $0x90] sm:$0xf] 0
    %5127 = vst [vmem:[#allocation2 + $0x94] sm:$0xf] 0
    %5128 = vst [vmem:[#allocation2 + $0x98] sm:$0xf] 0
    %5129 = vst [vmem:[#allocation2 + $0x9c] sm:$0xf] 0
    %5130 = vst [vmem:[#allocation2 + $0xa0] sm:$0xf] 0
    %5131 = vst [vmem:[#allocation2 + $0xa4] sm:$0xf] 0
    %5132 = vst [vmem:[#allocation2 + $0xa8] sm:$0xf] 0
    %5133 = vst [vmem:[#allocation2 + $0xac] sm:$0xf] 0
    %5134 = vst [vmem:[#allocation2 + $0xb0] sm:$0xf] 0
    %5135 = vst [vmem:[#allocation2 + $0xb4] sm:$0xf] 0
    %5136 = vst [vmem:[#allocation2 + $0xb8] sm:$0xf] 0
    %5137 = vst [vmem:[#allocation2 + $0xbc] sm:$0xf] 0
    %5138 = vst [vmem:[#allocation2 + $0xc0] sm:$0xf] 0
    %5139 = vst [vmem:[#allocation2 + $0xc4] sm:$0xf] 0
    %5140 = vst [vmem:[#allocation2 + $0xc8] sm:$0xf] 0
    %5141 = vst [vmem:[#allocation2 + $0xcc] sm:$0xf] 0
    %5142 = vst [vmem:[#allocation2 + $0xd0] sm:$0xf] 0
    %5143 = vst [vmem:[#allocation2 + $0xd4] sm:$0xf] 0
    %5144 = vst [vmem:[#allocation2 + $0xd8] sm:$0xf] 0
    %5145 = vst [vmem:[#allocation2 + $0xdc] sm:$0xf] 0
    %5146 = vst [vmem:[#allocation2 + $0xe0] sm:$0xf] 0
    %5147 = vst [vmem:[#allocation2 + $0xe4] sm:$0xf] 0
    %5148 = vst [vmem:[#allocation2 + $0xe8] sm:$0xf] 0
    %5149 = vst [vmem:[#allocation2 + $0xec] sm:$0xf] 0
    %5150 = vst [vmem:[#allocation2 + $0xf0] sm:$0xf] 0
    %5151 = vst [vmem:[#allocation2 + $0xf4] sm:$0xf] 0
    %5152 = vst [vmem:[#allocation2 + $0xf8] sm:$0xf] 0
    %5153 = vst [vmem:[#allocation2 + $0xfc] sm:$0xf] 0
    %5154 = vst [vmem:[#allocation2 + $0x100] sm:$0xf] 0
    %5155 = vst [vmem:[#allocation2 + $0x104] sm:$0xf] 0
    %5156 = vst [vmem:[#allocation2 + $0x108] sm:$0xf] 0
    %5157 = vst [vmem:[#allocation2 + $0x10c] sm:$0xf] 0
    %5158 = vst [vmem:[#allocation2 + $0x110] sm:$0xf] 0
    %5159 = vst [vmem:[#allocation2 + $0x114] sm:$0xf] 0
    %5160 = vst [vmem:[#allocation2 + $0x118] sm:$0xf] 0
    %5161 = vst [vmem:[#allocation2 + $0x11c] sm:$0xf] 0
    %5162 = vst [vmem:[#allocation2 + $0x120] sm:$0xf] 0
    %5163 = vst [vmem:[#allocation2 + $0x124] sm:$0xf] 0
    %5164 = vst [vmem:[#allocation2 + $0x128] sm:$0xf] 0
    %5165 = vst [vmem:[#allocation2 + $0x12c] sm:$0xf] 0
    %5166 = vst [vmem:[#allocation2 + $0x130] sm:$0xf] 0
    %5167 = vst [vmem:[#allocation2 + $0x134] sm:$0xf] 0
    %5168 = vst [vmem:[#allocation2 + $0x138] sm:$0xf] 0
    %5169 = vst [vmem:[#allocation2 + $0x13c] sm:$0xf] 0
    %5170 = vst [vmem:[#allocation2 + $0x140] sm:$0xf] 0
    %5171 = vst [vmem:[#allocation2 + $0x144] sm:$0xf] 0
    %5172 = vst [vmem:[#allocation2 + $0x148] sm:$0xf] 0
    %5173 = vst [vmem:[#allocation2 + $0x14c] sm:$0xf] 0
    %5174 = vst [vmem:[#allocation2 + $0x150] sm:$0xf] 0
    %5175 = vst [vmem:[#allocation2 + $0x154] sm:$0xf] 0
    %5176 = vst [vmem:[#allocation2 + $0x158] sm:$0xf] 0
    %5177 = vst [vmem:[#allocation2 + $0x15c] sm:$0xf] 0
    %5178 = vst [vmem:[#allocation2 + $0x160] sm:$0xf] 0
    %5179 = vst [vmem:[#allocation2 + $0x164] sm:$0xf] 0
    %5180 = vst [vmem:[#allocation2 + $0x168] sm:$0xf] 0
    %5181 = vst [vmem:[#allocation2 + $0x16c] sm:$0xf] 0
    %5182 = vst [vmem:[#allocation2 + $0x170] sm:$0xf] 0
    %5183 = vst [vmem:[#allocation2 + $0x174] sm:$0xf] 0
    %5184 = vst [vmem:[#allocation2 + $0x178] sm:$0xf] 0
    %5185 = vst [vmem:[#allocation2 + $0x17c] sm:$0xf] 0
    %5186 = vst [vmem:[#allocation2 + $0x180] sm:$0xf] 0
    %5187 = vst [vmem:[#allocation2 + $0x184] sm:$0xf] 0
    %5188 = vst [vmem:[#allocation2 + $0x188] sm:$0xf] 0
    %5189 = vst [vmem:[#allocation2 + $0x18c] sm:$0xf] 0
    %5190 = vst [vmem:[#allocation2 + $0x190] sm:$0xf] 0
    %5191 = vst [vmem:[#allocation2 + $0x194] sm:$0xf] 0
    %5192 = vst [vmem:[#allocation2 + $0x198] sm:$0xf] 0
    %5193 = vst [vmem:[#allocation2 + $0x19c] sm:$0xf] 0
    %5194 = vst [vmem:[#allocation2 + $0x1a0] sm:$0xf] 0
    %5195 = vst [vmem:[#allocation2 + $0x1a4] sm:$0xf] 0
    %5196 = vst [vmem:[#allocation2 + $0x1a8] sm:$0xf] 0
    %5197 = vst [vmem:[#allocation2 + $0x1ac] sm:$0xf] 0
    %5198 = vst [vmem:[#allocation2 + $0x1b0] sm:$0xf] 0
    %5199 = vst [vmem:[#allocation2 + $0x1b4] sm:$0xf] 0
    %5200 = vst [vmem:[#allocation2 + $0x1b8] sm:$0xf] 0
    %5201 = vst [vmem:[#allocation2 + $0x1bc] sm:$0xf] 0
    %5202 = vst [vmem:[#allocation2 + $0x1c0] sm:$0xf] 0
    %5203 = vst [vmem:[#allocation2 + $0x1c4] sm:$0xf] 0
    %5204 = vst [vmem:[#allocation2 + $0x1c8] sm:$0xf] 0
    %5205 = vst [vmem:[#allocation2 + $0x1cc] sm:$0xf] 0
    %5206 = vst [vmem:[#allocation2 + $0x1d0] sm:$0xf] 0
    %5207 = vst [vmem:[#allocation2 + $0x1d4] sm:$0xf] 0
    %5208 = vst [vmem:[#allocation2 + $0x1d8] sm:$0xf] 0
    %5209 = vst [vmem:[#allocation2 + $0x1dc] sm:$0xf] 0
    %5210 = vst [vmem:[#allocation2 + $0x1e0] sm:$0xf] 0
    %5211 = vst [vmem:[#allocation2 + $0x1e4] sm:$0xf] 0
    %5212 = vst [vmem:[#allocation2 + $0x1e8] sm:$0xf] 0
    %5213 = vst [vmem:[#allocation2 + $0x1ec] sm:$0xf] 0
    %5214 = vst [vmem:[#allocation2 + $0x1f0] sm:$0xf] 0
    %5215 = vst [vmem:[#allocation2 + $0x1f4] sm:$0xf] 0
    %5216 = vst [vmem:[#allocation2 + $0x1f8] sm:$0xf] 0
    %5217 = vst [vmem:[#allocation2 + $0x1fc] sm:$0xf] 0
    %5218 = vst [vmem:[#allocation2 + $0x200] sm:$0xf] 0
    %5219 = vst [vmem:[#allocation2 + $0x204] sm:$0xf] 0
    %5220 = vst [vmem:[#allocation2 + $0x208] sm:$0xf] 0
    %5221 = vst [vmem:[#allocation2 + $0x20c] sm:$0xf] 0
    %5222 = vst [vmem:[#allocation2 + $0x210] sm:$0xf] 0
    %5223 = vst [vmem:[#allocation2 + $0x214] sm:$0xf] 0
    %5224 = vst [vmem:[#allocation2 + $0x218] sm:$0xf] 0
    %5225 = vst [vmem:[#allocation2 + $0x21c] sm:$0xf] 0
    %5226 = vst [vmem:[#allocation2 + $0x220] sm:$0xf] 0
    %5227 = vst [vmem:[#allocation2 + $0x224] sm:$0xf] 0
    %5228 = vst [vmem:[#allocation2 + $0x228] sm:$0xf] 0
    %5229 = vst [vmem:[#allocation2 + $0x22c] sm:$0xf] 0
    %5230 = vst [vmem:[#allocation2 + $0x230] sm:$0xf] 0
    %5231 = vst [vmem:[#allocation2 + $0x234] sm:$0xf] 0
    %5232 = vst [vmem:[#allocation2 + $0x238] sm:$0xf] 0
    %5233 = vst [vmem:[#allocation2 + $0x23c] sm:$0xf] 0
    %v5234 = vpack.c.bf16 %v5026, %v5026
    %v5235 = vpack.c.bf16 %v5027, %v5027
    %v5236 = vpack.c.bf16 %v5028, %v5028
    %v5237 = vpack.c.bf16 %v5029, %v5029
    %v5238 = vpack.c.bf16 %v5030, %v5030
    %v5239 = vpack.c.bf16 %v5031, %v5031
    %v5240 = vpack.c.bf16 %v5032, %v5032
    %v5241 = vpack.c.bf16 %v5033, %v5033
    %v5242 = vpack.c.bf16 %v5034, %v5034
    %v5243 = vpack.c.bf16 %v5035, %v5035
    %v5244 = vpack.c.bf16 %v5036, %v5036
    %v5245 = vpack.c.bf16 %v5037, %v5037
    %v5246 = vpack.c.bf16 %v5038, %v5038
    %v5247 = vpack.c.bf16 %v5039, %v5039
    %v5248 = vpack.c.bf16 %v5040, %v5040
    %v5249 = vpack.c.bf16 %v5041, %v5041
    %v5250 = vpack.c.bf16 %v5042, %v5042
    %v5251 = vpack.c.bf16 %v5043, %v5043
    %v5252 = vpack.c.bf16 %v5044, %v5044
    %v5253 = vpack.c.bf16 %v5045, %v5045
    %v5254 = vpack.c.bf16 %v5046, %v5046
    %v5255 = vpack.c.bf16 %v5047, %v5047
    %v5256 = vpack.c.bf16 %v5048, %v5048
    %v5257 = vpack.c.bf16 %v5049, %v5049
    %v5258 = vpack.c.bf16 %v5050, %v5050
    %v5259 = vpack.c.bf16 %v5051, %v5051
    %v5260 = vpack.c.bf16 %v5052, %v5052
    %v5261 = vpack.c.bf16 %v5053, %v5053
    %v5262 = vpack.c.bf16 %v5054, %v5054
    %v5263 = vpack.c.bf16 %v5055, %v5055
    %v5264 = vpack.c.bf16 %v5056, %v5056
    %v5265 = vpack.c.bf16 %v5057, %v5057
    %v5266 = vpack.c.bf16 %v5058, %v5058
    %v5267 = vpack.c.bf16 %v5059, %v5059
    %v5268 = vpack.c.bf16 %v5060, %v5060
    %v5269 = vpack.c.bf16 %v5061, %v5061
    %v5270 = vpack.c.bf16 %v5062, %v5062
    %v5271 = vpack.c.bf16 %v5063, %v5063
    %v5272 = vpack.c.bf16 %v5064, %v5064
    %v5273 = vpack.c.bf16 %v5065, %v5065
    %v5274 = vpack.c.bf16 %v5066, %v5066
    %v5275 = vpack.c.bf16 %v5067, %v5067
    %v5276 = vpack.c.bf16 %v5068, %v5068
    %v5277 = vpack.c.bf16 %v5069, %v5069
    %v5278 = vpack.c.bf16 %v5070, %v5070
    %v5279 = vpack.c.bf16 %v5071, %v5071
    %v5280 = vpack.c.bf16 %v5072, %v5072
    %v5281 = vpack.c.bf16 %v5073, %v5073
    %v5282 = vpack.c.bf16 %v5074, %v5074
    %v5283 = vpack.c.bf16 %v5075, %v5075
    %v5284 = vpack.c.bf16 %v5076, %v5076
    %v5285 = vpack.c.bf16 %v5077, %v5077
    %v5286 = vpack.c.bf16 %v5078, %v5078
    %v5287 = vpack.c.bf16 %v5079, %v5079
    %v5288 = vpack.c.bf16 %v5080, %v5080
    %v5289 = vpack.c.bf16 %v5081, %v5081
    %v5290 = vpack.c.bf16 %v5082, %v5082
    %v5291 = vpack.c.bf16 %v5083, %v5083
    %v5292 = vpack.c.bf16 %v5084, %v5084
    %v5293 = vpack.c.bf16 %v5085, %v5085
    %v5294 = vpack.c.bf16 %v5086, %v5086
    %v5295 = vpack.c.bf16 %v5087, %v5087
    %v5296 = vpack.c.bf16 %v5088, %v5088
    %v5297 = vpack.c.bf16 %v5089, %v5089
    %s5298 = scalar_lea.vmem [#allocation2], 16
    %5299 = vst [vmem:[%s5298 + $0x4] sm:$0xf] %v5234
    %5300 = vst [vmem:[%s5298 + $0x8] sm:$0xf] %v5235
    %5301 = vst [vmem:[%s5298 + $0x14] sm:$0xf] %v5236
    %5302 = vst [vmem:[%s5298 + $0x18] sm:$0xf] %v5237
    %5303 = vst [vmem:[%s5298 + $0x24] sm:$0xf] %v5238
    %5304 = vst [vmem:[%s5298 + $0x28] sm:$0xf] %v5239
    %5305 = vst [vmem:[%s5298 + $0x34] sm:$0xf] %v5240
    %5306 = vst [vmem:[%s5298 + $0x38] sm:$0xf] %v5241
    %5307 = vst [vmem:[%s5298 + $0x44] sm:$0xf] %v5242
    %5308 = vst [vmem:[%s5298 + $0x48] sm:$0xf] %v5243
    %5309 = vst [vmem:[%s5298 + $0x54] sm:$0xf] %v5244
    %5310 = vst [vmem:[%s5298 + $0x58] sm:$0xf] %v5245
    %5311 = vst [vmem:[%s5298 + $0x64] sm:$0xf] %v5246
    %5312 = vst [vmem:[%s5298 + $0x68] sm:$0xf] %v5247
    %5313 = vst [vmem:[%s5298 + $0x74] sm:$0xf] %v5248
    %5314 = vst [vmem:[%s5298 + $0x78] sm:$0xf] %v5249
    %5315 = vst [vmem:[%s5298 + $0x84] sm:$0xf] %v5250
    %5316 = vst [vmem:[%s5298 + $0x88] sm:$0xf] %v5251
    %5317 = vst [vmem:[%s5298 + $0x94] sm:$0xf] %v5252
    %5318 = vst [vmem:[%s5298 + $0x98] sm:$0xf] %v5253
    %5319 = vst [vmem:[%s5298 + $0xa4] sm:$0xf] %v5254
    %5320 = vst [vmem:[%s5298 + $0xa8] sm:$0xf] %v5255
    %5321 = vst [vmem:[%s5298 + $0xb4] sm:$0xf] %v5256
    %5322 = vst [vmem:[%s5298 + $0xb8] sm:$0xf] %v5257
    %5323 = vst [vmem:[%s5298 + $0xc4] sm:$0xf] %v5258
    %5324 = vst [vmem:[%s5298 + $0xc8] sm:$0xf] %v5259
    %5325 = vst [vmem:[%s5298 + $0xd4] sm:$0xf] %v5260
    %5326 = vst [vmem:[%s5298 + $0xd8] sm:$0xf] %v5261
    %5327 = vst [vmem:[%s5298 + $0xe4] sm:$0xf] %v5262
    %5328 = vst [vmem:[%s5298 + $0xe8] sm:$0xf] %v5263
    %5329 = vst [vmem:[%s5298 + $0xf4] sm:$0xf] %v5264
    %5330 = vst [vmem:[%s5298 + $0xf8] sm:$0xf] %v5265
    %5331 = vst [vmem:[%s5298 + $0x124] sm:$0xf] %v5266
    %5332 = vst [vmem:[%s5298 + $0x128] sm:$0xf] %v5267
    %5333 = vst [vmem:[%s5298 + $0x134] sm:$0xf] %v5268
    %5334 = vst [vmem:[%s5298 + $0x138] sm:$0xf] %v5269
    %5335 = vst [vmem:[%s5298 + $0x144] sm:$0xf] %v5270
    %5336 = vst [vmem:[%s5298 + $0x148] sm:$0xf] %v5271
    %5337 = vst [vmem:[%s5298 + $0x154] sm:$0xf] %v5272
    %5338 = vst [vmem:[%s5298 + $0x158] sm:$0xf] %v5273
    %5339 = vst [vmem:[%s5298 + $0x164] sm:$0xf] %v5274
    %5340 = vst [vmem:[%s5298 + $0x168] sm:$0xf] %v5275
    %5341 = vst [vmem:[%s5298 + $0x174] sm:$0xf] %v5276
    %5342 = vst [vmem:[%s5298 + $0x178] sm:$0xf] %v5277
    %5343 = vst [vmem:[%s5298 + $0x184] sm:$0xf] %v5278
    %5344 = vst [vmem:[%s5298 + $0x188] sm:$0xf] %v5279
    %5345 = vst [vmem:[%s5298 + $0x194] sm:$0xf] %v5280
    %5346 = vst [vmem:[%s5298 + $0x198] sm:$0xf] %v5281
    %5347 = vst [vmem:[%s5298 + $0x1a4] sm:$0xf] %v5282
    %5348 = vst [vmem:[%s5298 + $0x1a8] sm:$0xf] %v5283
    %5349 = vst [vmem:[%s5298 + $0x1b4] sm:$0xf] %v5284
    %5350 = vst [vmem:[%s5298 + $0x1b8] sm:$0xf] %v5285
    %5351 = vst [vmem:[%s5298 + $0x1c4] sm:$0xf] %v5286
    %5352 = vst [vmem:[%s5298 + $0x1c8] sm:$0xf] %v5287
    %5353 = vst [vmem:[%s5298 + $0x1d4] sm:$0xf] %v5288
    %5354 = vst [vmem:[%s5298 + $0x1d8] sm:$0xf] %v5289
    %5355 = vst [vmem:[%s5298 + $0x1e4] sm:$0xf] %v5290
    %5356 = vst [vmem:[%s5298 + $0x1e8] sm:$0xf] %v5291
    %5357 = vst [vmem:[%s5298 + $0x1f4] sm:$0xf] %v5292
    %5358 = vst [vmem:[%s5298 + $0x1f8] sm:$0xf] %v5293
    %5359 = vst [vmem:[%s5298 + $0x204] sm:$0xf] %v5294
    %5360 = vst [vmem:[%s5298 + $0x208] sm:$0xf] %v5295
    %5361 = vst [vmem:[%s5298 + $0x214] sm:$0xf] %v5296
    %5362 = vst [vmem:[%s5298 + $0x218] sm:$0xf] %v5297
    %v5363 = vld [vmem:[#allocation2] sm:$0x8]
    %v5364 = vld [vmem:[#allocation2 + $0x4] sm:$0xf]
    %v5365 = vld [vmem:[#allocation2 + $0x8] sm:$0xf]
    %v5366 = vld [vmem:[#allocation2 + $0x10] sm:$0x8]
    %v5367 = vld [vmem:[#allocation2 + $0x14] sm:$0xf]
    %v5368 = vld [vmem:[#allocation2 + $0x18] sm:$0xf]
    %v5369 = vld [vmem:[#allocation2 + $0x20] sm:$0x8]
    %v5370 = vld [vmem:[#allocation2 + $0x24] sm:$0xf]
    %v5371 = vld [vmem:[#allocation2 + $0x28] sm:$0xf]
    %v5372 = vld [vmem:[#allocation2 + $0x30] sm:$0x8]
    %v5373 = vld [vmem:[#allocation2 + $0x34] sm:$0xf]
    %v5374 = vld [vmem:[#allocation2 + $0x38] sm:$0xf]
    %v5375 = vld [vmem:[#allocation2 + $0x40] sm:$0x8]
    %v5376 = vld [vmem:[#allocation2 + $0x44] sm:$0xf]
    %v5377 = vld [vmem:[#allocation2 + $0x48] sm:$0xf]
    %v5378 = vld [vmem:[#allocation2 + $0x50] sm:$0x8]
    %v5379 = vld [vmem:[#allocation2 + $0x54] sm:$0xf]
    %v5380 = vld [vmem:[#allocation2 + $0x58] sm:$0xf]
    %v5381 = vld [vmem:[#allocation2 + $0x60] sm:$0x8]
    %v5382 = vld [vmem:[#allocation2 + $0x64] sm:$0xf]
    %v5383 = vld [vmem:[#allocation2 + $0x68] sm:$0xf]
    %v5384 = vld [vmem:[#allocation2 + $0x70] sm:$0x8]
    %v5385 = vld [vmem:[#allocation2 + $0x74] sm:$0xf]
    %v5386 = vld [vmem:[#allocation2 + $0x78] sm:$0xf]
    %v5387 = vld [vmem:[#allocation2 + $0x80] sm:$0x8]
    %v5388 = vld [vmem:[#allocation2 + $0x84] sm:$0xf]
    %v5389 = vld [vmem:[#allocation2 + $0x88] sm:$0xf]
    %v5390 = vld [vmem:[#allocation2 + $0x90] sm:$0x8]
    %v5391 = vld [vmem:[#allocation2 + $0x94] sm:$0xf]
    %v5392 = vld [vmem:[#allocation2 + $0x98] sm:$0xf]
    %v5393 = vld [vmem:[#allocation2 + $0xa0] sm:$0x8]
    %v5394 = vld [vmem:[#allocation2 + $0xa4] sm:$0xf]
    %v5395 = vld [vmem:[#allocation2 + $0xa8] sm:$0xf]
    %v5396 = vld [vmem:[#allocation2 + $0xb0] sm:$0x8]
    %v5397 = vld [vmem:[#allocation2 + $0xb4] sm:$0xf]
    %v5398 = vld [vmem:[#allocation2 + $0xb8] sm:$0xf]
    %v5399 = vld [vmem:[#allocation2 + $0xc0] sm:$0x8]
    %v5400 = vld [vmem:[#allocation2 + $0xc4] sm:$0xf]
    %v5401 = vld [vmem:[#allocation2 + $0xc8] sm:$0xf]
    %v5402 = vld [vmem:[#allocation2 + $0xd0] sm:$0x8]
    %v5403 = vld [vmem:[#allocation2 + $0xd4] sm:$0xf]
    %v5404 = vld [vmem:[#allocation2 + $0xd8] sm:$0xf]
    %v5405 = vld [vmem:[#allocation2 + $0xe0] sm:$0x8]
    %v5406 = vld [vmem:[#allocation2 + $0xe4] sm:$0xf]
    %v5407 = vld [vmem:[#allocation2 + $0xe8] sm:$0xf]
    %v5408 = vld [vmem:[#allocation2 + $0xf0] sm:$0x8]
    %v5409 = vld [vmem:[#allocation2 + $0xf4] sm:$0xf]
    %v5410 = vld [vmem:[#allocation2 + $0xf8] sm:$0xf]
    %v5411 = vld [vmem:[#allocation2 + $0x100] sm:$0x8]
    %v5412 = vld [vmem:[#allocation2 + $0x104] sm:$0xf]
    %v5413 = vld [vmem:[#allocation2 + $0x108] sm:$0xf]
    %v5414 = vld [vmem:[#allocation2 + $0x110] sm:$0x8]
    %v5415 = vld [vmem:[#allocation2 + $0x114] sm:$0xf]
    %v5416 = vld [vmem:[#allocation2 + $0x118] sm:$0xf]
    %v5417 = vld [vmem:[#allocation2 + $0x120] sm:$0x8]
    %v5418 = vld [vmem:[#allocation2 + $0x124] sm:$0xf]
    %v5419 = vld [vmem:[#allocation2 + $0x128] sm:$0xf]
    %v5420 = vld [vmem:[#allocation2 + $0x130] sm:$0x8]
    %v5421 = vld [vmem:[#allocation2 + $0x134] sm:$0xf]
    %v5422 = vld [vmem:[#allocation2 + $0x138] sm:$0xf]
    %v5423 = vld [vmem:[#allocation2 + $0x140] sm:$0x8]
    %v5424 = vld [vmem:[#allocation2 + $0x144] sm:$0xf]
    %v5425 = vld [vmem:[#allocation2 + $0x148] sm:$0xf]
    %v5426 = vld [vmem:[#allocation2 + $0x150] sm:$0x8]
    %v5427 = vld [vmem:[#allocation2 + $0x154] sm:$0xf]
    %v5428 = vld [vmem:[#allocation2 + $0x158] sm:$0xf]
    %v5429 = vld [vmem:[#allocation2 + $0x160] sm:$0x8]
    %v5430 = vld [vmem:[#allocation2 + $0x164] sm:$0xf]
    %v5431 = vld [vmem:[#allocation2 + $0x168] sm:$0xf]
    %v5432 = vld [vmem:[#allocation2 + $0x170] sm:$0x8]
    %v5433 = vld [vmem:[#allocation2 + $0x174] sm:$0xf]
    %v5434 = vld [vmem:[#allocation2 + $0x178] sm:$0xf]
    %v5435 = vld [vmem:[#allocation2 + $0x180] sm:$0x8]
    %v5436 = vld [vmem:[#allocation2 + $0x184] sm:$0xf]
    %v5437 = vld [vmem:[#allocation2 + $0x188] sm:$0xf]
    %v5438 = vld [vmem:[#allocation2 + $0x190] sm:$0x8]
    %v5439 = vld [vmem:[#allocation2 + $0x194] sm:$0xf]
    %v5440 = vld [vmem:[#allocation2 + $0x198] sm:$0xf]
    %v5441 = vld [vmem:[#allocation2 + $0x1a0] sm:$0x8]
    %v5442 = vld [vmem:[#allocation2 + $0x1a4] sm:$0xf]
    %v5443 = vld [vmem:[#allocation2 + $0x1a8] sm:$0xf]
    %v5444 = vld [vmem:[#allocation2 + $0x1b0] sm:$0x8]
    %v5445 = vld [vmem:[#allocation2 + $0x1b4] sm:$0xf]
    %v5446 = vld [vmem:[#allocation2 + $0x1b8] sm:$0xf]
    %v5447 = vld [vmem:[#allocation2 + $0x1c0] sm:$0x8]
    %v5448 = vld [vmem:[#allocation2 + $0x1c4] sm:$0xf]
    %v5449 = vld [vmem:[#allocation2 + $0x1c8] sm:$0xf]
    %v5450 = vld [vmem:[#allocation2 + $0x1d0] sm:$0x8]
    %v5451 = vld [vmem:[#allocation2 + $0x1d4] sm:$0xf]
    %v5452 = vld [vmem:[#allocation2 + $0x1d8] sm:$0xf]
    %v5453 = vld [vmem:[#allocation2 + $0x1e0] sm:$0x8]
    %v5454 = vld [vmem:[#allocation2 + $0x1e4] sm:$0xf]
    %v5455 = vld [vmem:[#allocation2 + $0x1e8] sm:$0xf]
    %v5456 = vld [vmem:[#allocation2 + $0x1f0] sm:$0x8]
    %v5457 = vld [vmem:[#allocation2 + $0x1f4] sm:$0xf]
    %v5458 = vld [vmem:[#allocation2 + $0x1f8] sm:$0xf]
    %v5459 = vld [vmem:[#allocation2 + $0x200] sm:$0x8]
    %v5460 = vld [vmem:[#allocation2 + $0x204] sm:$0xf]
    %v5461 = vld [vmem:[#allocation2 + $0x208] sm:$0xf]
    %v5462 = vld [vmem:[#allocation2 + $0x210] sm:$0x8]
    %v5463 = vld [vmem:[#allocation2 + $0x214] sm:$0xf]
    %v5464 = vld [vmem:[#allocation2 + $0x218] sm:$0xf]
    %v5465 = vld [vmem:[#allocation2 + $0x220] sm:$0x8]
    %v5466 = vld [vmem:[#allocation2 + $0x224] sm:$0xf]
    %v5467 = vld [vmem:[#allocation2 + $0x228] sm:$0xf]
    %v5468 = vld [vmem:[#allocation2 + $0x230] sm:$0x8]
    %v5469 = vld [vmem:[#allocation2 + $0x234] sm:$0xf]
    %v5470 = vld [vmem:[#allocation2 + $0x238] sm:$0xf]
    %vm5471 = vsmask.f32 256
    %vm5472 = vsmask.f32 4368
    %vm5473 = vmor %vm5471, %vm5472
    %v5475 = vshrl.u32 %v5363, 16
    %v5477 = vrot.slane %v5475, 7
    %v5478 = vrot.slane %v5477, 4
    %v5480 = vshrl.u32 %v5364, 16
    %v5482 = vrot.slane %v5480, 7
    %v5483 = vshll.u32 %v5364, 16
    %v5485 = vor.u32 %v5482, %v5483
    %v5486 = vsel %vm5473, %v5478, %v5485
    %v5487 = vrot.slane %v5482, 4
    %v5489 = vshrl.u32 %v5365, 16
    %v5491 = vrot.slane %v5489, 7
    %v5492 = vshll.u32 %v5365, 16
    %v5494 = vor.u32 %v5491, %v5492
    %v5495 = vsel %vm5473, %v5487, %v5494
    %v5497 = vshrl.u32 %v5366, 16
    %v5499 = vrot.slane %v5497, 7
    %v5500 = vrot.slane %v5499, 4
    %v5502 = vshrl.u32 %v5367, 16
    %v5504 = vrot.slane %v5502, 7
    %v5505 = vshll.u32 %v5367, 16
    %v5507 = vor.u32 %v5504, %v5505
    %v5508 = vsel %vm5473, %v5500, %v5507
    %v5509 = vrot.slane %v5504, 4
    %v5511 = vshrl.u32 %v5368, 16
    %v5513 = vrot.slane %v5511, 7
    %v5514 = vshll.u32 %v5368, 16
    %v5516 = vor.u32 %v5513, %v5514
    %v5517 = vsel %vm5473, %v5509, %v5516
    %v5519 = vshrl.u32 %v5369, 16
    %v5521 = vrot.slane %v5519, 7
    %v5522 = vrot.slane %v5521, 4
    %v5524 = vshrl.u32 %v5370, 16
    %v5526 = vrot.slane %v5524, 7
    %v5527 = vshll.u32 %v5370, 16
    %v5529 = vor.u32 %v5526, %v5527
    %v5530 = vsel %vm5473, %v5522, %v5529
    %v5531 = vrot.slane %v5526, 4
    %v5533 = vshrl.u32 %v5371, 16
    %v5535 = vrot.slane %v5533, 7
    %v5536 = vshll.u32 %v5371, 16
    %v5538 = vor.u32 %v5535, %v5536
    %v5539 = vsel %vm5473, %v5531, %v5538
    %v5541 = vshrl.u32 %v5372, 16
    %v5543 = vrot.slane %v5541, 7
    %v5544 = vrot.slane %v5543, 4
    %v5546 = vshrl.u32 %v5373, 16
    %v5548 = vrot.slane %v5546, 7
    %v5549 = vshll.u32 %v5373, 16
    %v5551 = vor.u32 %v5548, %v5549
    %v5552 = vsel %vm5473, %v5544, %v5551
    %v5553 = vrot.slane %v5548, 4
    %v5555 = vshrl.u32 %v5374, 16
    %v5557 = vrot.slane %v5555, 7
    %v5558 = vshll.u32 %v5374, 16
    %v5560 = vor.u32 %v5557, %v5558
    %v5561 = vsel %vm5473, %v5553, %v5560
    %v5563 = vshrl.u32 %v5375, 16
    %v5565 = vrot.slane %v5563, 7
    %v5566 = vrot.slane %v5565, 4
    %v5568 = vshrl.u32 %v5376, 16
    %v5570 = vrot.slane %v5568, 7
    %v5571 = vshll.u32 %v5376, 16
    %v5573 = vor.u32 %v5570, %v5571
    %v5574 = vsel %vm5473, %v5566, %v5573
    %v5575 = vrot.slane %v5570, 4
    %v5577 = vshrl.u32 %v5377, 16
    %v5579 = vrot.slane %v5577, 7
    %v5580 = vshll.u32 %v5377, 16
    %v5582 = vor.u32 %v5579, %v5580
    %v5583 = vsel %vm5473, %v5575, %v5582
    %v5585 = vshrl.u32 %v5378, 16
    %v5587 = vrot.slane %v5585, 7
    %v5588 = vrot.slane %v5587, 4
    %v5590 = vshrl.u32 %v5379, 16
    %v5592 = vrot.slane %v5590, 7
    %v5593 = vshll.u32 %v5379, 16
    %v5595 = vor.u32 %v5592, %v5593
    %v5596 = vsel %vm5473, %v5588, %v5595
    %v5597 = vrot.slane %v5592, 4
    %v5599 = vshrl.u32 %v5380, 16
    %v5601 = vrot.slane %v5599, 7
    %v5602 = vshll.u32 %v5380, 16
    %v5604 = vor.u32 %v5601, %v5602
    %v5605 = vsel %vm5473, %v5597, %v5604
    %v5607 = vshrl.u32 %v5381, 16
    %v5609 = vrot.slane %v5607, 7
    %v5610 = vrot.slane %v5609, 4
    %v5612 = vshrl.u32 %v5382, 16
    %v5614 = vrot.slane %v5612, 7
    %v5615 = vshll.u32 %v5382, 16
    %v5617 = vor.u32 %v5614, %v5615
    %v5618 = vsel %vm5473, %v5610, %v5617
    %v5619 = vrot.slane %v5614, 4
    %v5621 = vshrl.u32 %v5383, 16
    %v5623 = vrot.slane %v5621, 7
    %v5624 = vshll.u32 %v5383, 16
    %v5626 = vor.u32 %v5623, %v5624
    %v5627 = vsel %vm5473, %v5619, %v5626
    %v5629 = vshrl.u32 %v5384, 16
    %v5631 = vrot.slane %v5629, 7
    %v5632 = vrot.slane %v5631, 4
    %v5634 = vshrl.u32 %v5385, 16
    %v5636 = vrot.slane %v5634, 7
    %v5637 = vshll.u32 %v5385, 16
    %v5639 = vor.u32 %v5636, %v5637
    %v5640 = vsel %vm5473, %v5632, %v5639
    %v5641 = vrot.slane %v5636, 4
    %v5643 = vshrl.u32 %v5386, 16
    %v5645 = vrot.slane %v5643, 7
    %v5646 = vshll.u32 %v5386, 16
    %v5648 = vor.u32 %v5645, %v5646
    %v5649 = vsel %vm5473, %v5641, %v5648
    %v5651 = vshrl.u32 %v5387, 16
    %v5653 = vrot.slane %v5651, 7
    %v5654 = vrot.slane %v5653, 4
    %v5656 = vshrl.u32 %v5388, 16
    %v5658 = vrot.slane %v5656, 7
    %v5659 = vshll.u32 %v5388, 16
    %v5661 = vor.u32 %v5658, %v5659
    %v5662 = vsel %vm5473, %v5654, %v5661
    %v5663 = vrot.slane %v5658, 4
    %v5665 = vshrl.u32 %v5389, 16
    %v5667 = vrot.slane %v5665, 7
    %v5668 = vshll.u32 %v5389, 16
    %v5670 = vor.u32 %v5667, %v5668
    %v5671 = vsel %vm5473, %v5663, %v5670
    %v5673 = vshrl.u32 %v5390, 16
    %v5675 = vrot.slane %v5673, 7
    %v5676 = vrot.slane %v5675, 4
    %v5678 = vshrl.u32 %v5391, 16
    %v5680 = vrot.slane %v5678, 7
    %v5681 = vshll.u32 %v5391, 16
    %v5683 = vor.u32 %v5680, %v5681
    %v5684 = vsel %vm5473, %v5676, %v5683
    %v5685 = vrot.slane %v5680, 4
    %v5687 = vshrl.u32 %v5392, 16
    %v5689 = vrot.slane %v5687, 7
    %v5690 = vshll.u32 %v5392, 16
    %v5692 = vor.u32 %v5689, %v5690
    %v5693 = vsel %vm5473, %v5685, %v5692
    %v5695 = vshrl.u32 %v5393, 16
    %v5697 = vrot.slane %v5695, 7
    %v5698 = vrot.slane %v5697, 4
    %v5700 = vshrl.u32 %v5394, 16
    %v5702 = vrot.slane %v5700, 7
    %v5703 = vshll.u32 %v5394, 16
    %v5705 = vor.u32 %v5702, %v5703
    %v5706 = vsel %vm5473, %v5698, %v5705
    %v5707 = vrot.slane %v5702, 4
    %v5709 = vshrl.u32 %v5395, 16
    %v5711 = vrot.slane %v5709, 7
    %v5712 = vshll.u32 %v5395, 16
    %v5714 = vor.u32 %v5711, %v5712
    %v5715 = vsel %vm5473, %v5707, %v5714
    %v5717 = vshrl.u32 %v5396, 16
    %v5719 = vrot.slane %v5717, 7
    %v5720 = vrot.slane %v5719, 4
    %v5722 = vshrl.u32 %v5397, 16
    %v5724 = vrot.slane %v5722, 7
    %v5725 = vshll.u32 %v5397, 16
    %v5727 = vor.u32 %v5724, %v5725
    %v5728 = vsel %vm5473, %v5720, %v5727
    %v5729 = vrot.slane %v5724, 4
    %v5731 = vshrl.u32 %v5398, 16
    %v5733 = vrot.slane %v5731, 7
    %v5734 = vshll.u32 %v5398, 16
    %v5736 = vor.u32 %v5733, %v5734
    %v5737 = vsel %vm5473, %v5729, %v5736
    %v5739 = vshrl.u32 %v5399, 16
    %v5741 = vrot.slane %v5739, 7
    %v5742 = vrot.slane %v5741, 4
    %v5744 = vshrl.u32 %v5400, 16
    %v5746 = vrot.slane %v5744, 7
    %v5747 = vshll.u32 %v5400, 16
    %v5749 = vor.u32 %v5746, %v5747
    %v5750 = vsel %vm5473, %v5742, %v5749
    %v5751 = vrot.slane %v5746, 4
    %v5753 = vshrl.u32 %v5401, 16
    %v5755 = vrot.slane %v5753, 7
    %v5756 = vshll.u32 %v5401, 16
    %v5758 = vor.u32 %v5755, %v5756
    %v5759 = vsel %vm5473, %v5751, %v5758
    %v5761 = vshrl.u32 %v5402, 16
    %v5763 = vrot.slane %v5761, 7
    %v5764 = vrot.slane %v5763, 4
    %v5766 = vshrl.u32 %v5403, 16
    %v5768 = vrot.slane %v5766, 7
    %v5769 = vshll.u32 %v5403, 16
    %v5771 = vor.u32 %v5768, %v5769
    %v5772 = vsel %vm5473, %v5764, %v5771
    %v5773 = vrot.slane %v5768, 4
    %v5775 = vshrl.u32 %v5404, 16
    %v5777 = vrot.slane %v5775, 7
    %v5778 = vshll.u32 %v5404, 16
    %v5780 = vor.u32 %v5777, %v5778
    %v5781 = vsel %vm5473, %v5773, %v5780
    %v5783 = vshrl.u32 %v5405, 16
    %v5785 = vrot.slane %v5783, 7
    %v5786 = vrot.slane %v5785, 4
    %v5788 = vshrl.u32 %v5406, 16
    %v5790 = vrot.slane %v5788, 7
    %v5791 = vshll.u32 %v5406, 16
    %v5793 = vor.u32 %v5790, %v5791
    %v5794 = vsel %vm5473, %v5786, %v5793
    %v5795 = vrot.slane %v5790, 4
    %v5797 = vshrl.u32 %v5407, 16
    %v5799 = vrot.slane %v5797, 7
    %v5800 = vshll.u32 %v5407, 16
    %v5802 = vor.u32 %v5799, %v5800
    %v5803 = vsel %vm5473, %v5795, %v5802
    %v5805 = vshrl.u32 %v5408, 16
    %v5807 = vrot.slane %v5805, 7
    %v5808 = vrot.slane %v5807, 4
    %v5810 = vshrl.u32 %v5409, 16
    %v5812 = vrot.slane %v5810, 7
    %v5813 = vshll.u32 %v5409, 16
    %v5815 = vor.u32 %v5812, %v5813
    %v5816 = vsel %vm5473, %v5808, %v5815
    %v5817 = vrot.slane %v5812, 4
    %v5819 = vshrl.u32 %v5410, 16
    %v5821 = vrot.slane %v5819, 7
    %v5822 = vshll.u32 %v5410, 16
    %v5824 = vor.u32 %v5821, %v5822
    %v5825 = vsel %vm5473, %v5817, %v5824
    %v5827 = vshrl.u32 %v5417, 16
    %v5829 = vrot.slane %v5827, 7
    %v5830 = vrot.slane %v5829, 4
    %v5832 = vshrl.u32 %v5418, 16
    %v5834 = vrot.slane %v5832, 7
    %v5835 = vshll.u32 %v5418, 16
    %v5837 = vor.u32 %v5834, %v5835
    %v5838 = vsel %vm5473, %v5830, %v5837
    %v5839 = vrot.slane %v5834, 4
    %v5841 = vshrl.u32 %v5419, 16
    %v5843 = vrot.slane %v5841, 7
    %v5844 = vshll.u32 %v5419, 16
    %v5846 = vor.u32 %v5843, %v5844
    %v5847 = vsel %vm5473, %v5839, %v5846
    %v5849 = vshrl.u32 %v5420, 16
    %v5851 = vrot.slane %v5849, 7
    %v5852 = vrot.slane %v5851, 4
    %v5854 = vshrl.u32 %v5421, 16
    %v5856 = vrot.slane %v5854, 7
    %v5857 = vshll.u32 %v5421, 16
    %v5859 = vor.u32 %v5856, %v5857
    %v5860 = vsel %vm5473, %v5852, %v5859
    %v5861 = vrot.slane %v5856, 4
    %v5863 = vshrl.u32 %v5422, 16
    %v5865 = vrot.slane %v5863, 7
    %v5866 = vshll.u32 %v5422, 16
    %v5868 = vor.u32 %v5865, %v5866
    %v5869 = vsel %vm5473, %v5861, %v5868
    %v5871 = vshrl.u32 %v5423, 16
    %v5873 = vrot.slane %v5871, 7
    %v5874 = vrot.slane %v5873, 4
    %v5876 = vshrl.u32 %v5424, 16
    %v5878 = vrot.slane %v5876, 7
    %v5879 = vshll.u32 %v5424, 16
    %v5881 = vor.u32 %v5878, %v5879
    %v5882 = vsel %vm5473, %v5874, %v5881
    %v5883 = vrot.slane %v5878, 4
    %v5885 = vshrl.u32 %v5425, 16
    %v5887 = vrot.slane %v5885, 7
    %v5888 = vshll.u32 %v5425, 16
    %v5890 = vor.u32 %v5887, %v5888
    %v5891 = vsel %vm5473, %v5883, %v5890
    %v5893 = vshrl.u32 %v5426, 16
    %v5895 = vrot.slane %v5893, 7
    %v5896 = vrot.slane %v5895, 4
    %v5898 = vshrl.u32 %v5427, 16
    %v5900 = vrot.slane %v5898, 7
    %v5901 = vshll.u32 %v5427, 16
    %v5903 = vor.u32 %v5900, %v5901
    %v5904 = vsel %vm5473, %v5896, %v5903
    %v5905 = vrot.slane %v5900, 4
    %v5907 = vshrl.u32 %v5428, 16
    %v5909 = vrot.slane %v5907, 7
    %v5910 = vshll.u32 %v5428, 16
    %v5912 = vor.u32 %v5909, %v5910
    %v5913 = vsel %vm5473, %v5905, %v5912
    %v5915 = vshrl.u32 %v5429, 16
    %v5917 = vrot.slane %v5915, 7
    %v5918 = vrot.slane %v5917, 4
    %v5920 = vshrl.u32 %v5430, 16
    %v5922 = vrot.slane %v5920, 7
    %v5923 = vshll.u32 %v5430, 16
    %v5925 = vor.u32 %v5922, %v5923
    %v5926 = vsel %vm5473, %v5918, %v5925
    %v5927 = vrot.slane %v5922, 4
    %v5929 = vshrl.u32 %v5431, 16
    %v5931 = vrot.slane %v5929, 7
    %v5932 = vshll.u32 %v5431, 16
    %v5934 = vor.u32 %v5931, %v5932
    %v5935 = vsel %vm5473, %v5927, %v5934
    %v5937 = vshrl.u32 %v5432, 16
    %v5939 = vrot.slane %v5937, 7
    %v5940 = vrot.slane %v5939, 4
    %v5942 = vshrl.u32 %v5433, 16
    %v5944 = vrot.slane %v5942, 7
    %v5945 = vshll.u32 %v5433, 16
    %v5947 = vor.u32 %v5944, %v5945
    %v5948 = vsel %vm5473, %v5940, %v5947
    %v5949 = vrot.slane %v5944, 4
    %v5951 = vshrl.u32 %v5434, 16
    %v5953 = vrot.slane %v5951, 7
    %v5954 = vshll.u32 %v5434, 16
    %v5956 = vor.u32 %v5953, %v5954
    %v5957 = vsel %vm5473, %v5949, %v5956
    %v5959 = vshrl.u32 %v5435, 16
    %v5961 = vrot.slane %v5959, 7
    %v5962 = vrot.slane %v5961, 4
    %v5964 = vshrl.u32 %v5436, 16
    %v5966 = vrot.slane %v5964, 7
    %v5967 = vshll.u32 %v5436, 16
    %v5969 = vor.u32 %v5966, %v5967
    %v5970 = vsel %vm5473, %v5962, %v5969
    %v5971 = vrot.slane %v5966, 4
    %v5973 = vshrl.u32 %v5437, 16
    %v5975 = vrot.slane %v5973, 7
    %v5976 = vshll.u32 %v5437, 16
    %v5978 = vor.u32 %v5975, %v5976
    %v5979 = vsel %vm5473, %v5971, %v5978
    %v5981 = vshrl.u32 %v5438, 16
    %v5983 = vrot.slane %v5981, 7
    %v5984 = vrot.slane %v5983, 4
    %v5986 = vshrl.u32 %v5439, 16
    %v5988 = vrot.slane %v5986, 7
    %v5989 = vshll.u32 %v5439, 16
    %v5991 = vor.u32 %v5988, %v5989
    %v5992 = vsel %vm5473, %v5984, %v5991
    %v5993 = vrot.slane %v5988, 4
    %v5995 = vshrl.u32 %v5440, 16
    %v5997 = vrot.slane %v5995, 7
    %v5998 = vshll.u32 %v5440, 16
    %v6000 = vor.u32 %v5997, %v5998
    %v6001 = vsel %vm5473, %v5993, %v6000
    %v6003 = vshrl.u32 %v5441, 16
    %v6005 = vrot.slane %v6003, 7
    %v6006 = vrot.slane %v6005, 4
    %v6008 = vshrl.u32 %v5442, 16
    %v6010 = vrot.slane %v6008, 7
    %v6011 = vshll.u32 %v5442, 16
    %v6013 = vor.u32 %v6010, %v6011
    %v6014 = vsel %vm5473, %v6006, %v6013
    %v6015 = vrot.slane %v6010, 4
    %v6017 = vshrl.u32 %v5443, 16
    %v6019 = vrot.slane %v6017, 7
    %v6020 = vshll.u32 %v5443, 16
    %v6022 = vor.u32 %v6019, %v6020
    %v6023 = vsel %vm5473, %v6015, %v6022
    %v6025 = vshrl.u32 %v5444, 16
    %v6027 = vrot.slane %v6025, 7
    %v6028 = vrot.slane %v6027, 4
    %v6030 = vshrl.u32 %v5445, 16
    %v6032 = vrot.slane %v6030, 7
    %v6033 = vshll.u32 %v5445, 16
    %v6035 = vor.u32 %v6032, %v6033
    %v6036 = vsel %vm5473, %v6028, %v6035
    %v6037 = vrot.slane %v6032, 4
    %v6039 = vshrl.u32 %v5446, 16
    %v6041 = vrot.slane %v6039, 7
    %v6042 = vshll.u32 %v5446, 16
    %v6044 = vor.u32 %v6041, %v6042
    %v6045 = vsel %vm5473, %v6037, %v6044
    %v6047 = vshrl.u32 %v5447, 16
    %v6049 = vrot.slane %v6047, 7
    %v6050 = vrot.slane %v6049, 4
    %v6052 = vshrl.u32 %v5448, 16
    %v6054 = vrot.slane %v6052, 7
    %v6055 = vshll.u32 %v5448, 16
    %v6057 = vor.u32 %v6054, %v6055
    %v6058 = vsel %vm5473, %v6050, %v6057
    %v6059 = vrot.slane %v6054, 4
    %v6061 = vshrl.u32 %v5449, 16
    %v6063 = vrot.slane %v6061, 7
    %v6064 = vshll.u32 %v5449, 16
    %v6066 = vor.u32 %v6063, %v6064
    %v6067 = vsel %vm5473, %v6059, %v6066
    %v6069 = vshrl.u32 %v5450, 16
    %v6071 = vrot.slane %v6069, 7
    %v6072 = vrot.slane %v6071, 4
    %v6074 = vshrl.u32 %v5451, 16
    %v6076 = vrot.slane %v6074, 7
    %v6077 = vshll.u32 %v5451, 16
    %v6079 = vor.u32 %v6076, %v6077
    %v6080 = vsel %vm5473, %v6072, %v6079
    %v6081 = vrot.slane %v6076, 4
    %v6083 = vshrl.u32 %v5452, 16
    %v6085 = vrot.slane %v6083, 7
    %v6086 = vshll.u32 %v5452, 16
    %v6088 = vor.u32 %v6085, %v6086
    %v6089 = vsel %vm5473, %v6081, %v6088
    %v6091 = vshrl.u32 %v5453, 16
    %v6093 = vrot.slane %v6091, 7
    %v6094 = vrot.slane %v6093, 4
    %v6096 = vshrl.u32 %v5454, 16
    %v6098 = vrot.slane %v6096, 7
    %v6099 = vshll.u32 %v5454, 16
    %v6101 = vor.u32 %v6098, %v6099
    %v6102 = vsel %vm5473, %v6094, %v6101
    %v6103 = vrot.slane %v6098, 4
    %v6105 = vshrl.u32 %v5455, 16
    %v6107 = vrot.slane %v6105, 7
    %v6108 = vshll.u32 %v5455, 16
    %v6110 = vor.u32 %v6107, %v6108
    %v6111 = vsel %vm5473, %v6103, %v6110
    %v6113 = vshrl.u32 %v5456, 16
    %v6115 = vrot.slane %v6113, 7
    %v6116 = vrot.slane %v6115, 4
    %v6118 = vshrl.u32 %v5457, 16
    %v6120 = vrot.slane %v6118, 7
    %v6121 = vshll.u32 %v5457, 16
    %v6123 = vor.u32 %v6120, %v6121
    %v6124 = vsel %vm5473, %v6116, %v6123
    %v6125 = vrot.slane %v6120, 4
    %v6127 = vshrl.u32 %v5458, 16
    %v6129 = vrot.slane %v6127, 7
    %v6130 = vshll.u32 %v5458, 16
    %v6132 = vor.u32 %v6129, %v6130
    %v6133 = vsel %vm5473, %v6125, %v6132
    %v6135 = vshrl.u32 %v5459, 16
    %v6137 = vrot.slane %v6135, 7
    %v6138 = vrot.slane %v6137, 4
    %v6140 = vshrl.u32 %v5460, 16
    %v6142 = vrot.slane %v6140, 7
    %v6143 = vshll.u32 %v5460, 16
    %v6145 = vor.u32 %v6142, %v6143
    %v6146 = vsel %vm5473, %v6138, %v6145
    %v6147 = vrot.slane %v6142, 4
    %v6149 = vshrl.u32 %v5461, 16
    %v6151 = vrot.slane %v6149, 7
    %v6152 = vshll.u32 %v5461, 16
    %v6154 = vor.u32 %v6151, %v6152
    %v6155 = vsel %vm5473, %v6147, %v6154
    %v6157 = vshrl.u32 %v5462, 16
    %v6159 = vrot.slane %v6157, 7
    %v6160 = vrot.slane %v6159, 4
    %v6162 = vshrl.u32 %v5463, 16
    %v6164 = vrot.slane %v6162, 7
    %v6165 = vshll.u32 %v5463, 16
    %v6167 = vor.u32 %v6164, %v6165
    %v6168 = vsel %vm5473, %v6160, %v6167
    %v6169 = vrot.slane %v6164, 4
    %v6171 = vshrl.u32 %v5464, 16
    %v6173 = vrot.slane %v6171, 7
    %v6174 = vshll.u32 %v5464, 16
    %v6176 = vor.u32 %v6173, %v6174
    %v6177 = vsel %vm5473, %v6169, %v6176
    %v6178 = vld [vmem:[#allocation3] sm:$0xf]
    %v6179 = vld [vmem:[#allocation3 + $0x4] sm:$0xf]
    %v6180 = vld [vmem:[#allocation3 + $0x8] sm:$0xf]
    %v6181 = vld [vmem:[#allocation3 + $0xc] sm:$0xf]
    %v6182 = vld [vmem:[#allocation3 + $0x10] sm:$0xf]
    %v6183 = vld [vmem:[#allocation3 + $0x14] sm:$0xf]
    %v6184 = vld [vmem:[#allocation3 + $0x18] sm:$0xf]
    %v6185 = vld [vmem:[#allocation3 + $0x1c] sm:$0xf]
    %v6186 = vld [vmem:[#allocation3 + $0x20] sm:$0xf]
    %v6187 = vld [vmem:[#allocation3 + $0x24] sm:$0xf]
    %v6188 = vld [vmem:[#allocation3 + $0x28] sm:$0xf]
    %v6189 = vld [vmem:[#allocation3 + $0x2c] sm:$0xf]
    %v6190 = vld [vmem:[#allocation3 + $0x30] sm:$0xf]
    %v6191 = vld [vmem:[#allocation3 + $0x34] sm:$0xf]
    %v6192 = vld [vmem:[#allocation3 + $0x38] sm:$0xf]
    %v6193 = vld [vmem:[#allocation3 + $0x3c] sm:$0xf]
    %v6195 = vshrl.u32 %v5411, 16
    %v6197 = vrot.slane %v6195, 7
    %v6198 = vrot.slane %v6197, 4
    %v6200 = vshrl.u32 %v5412, 16
    %v6202 = vrot.slane %v6200, 7
    %v6203 = vshll.u32 %v5412, 16
    %v6205 = vor.u32 %v6202, %v6203
    %v6206 = vsel %vm5473, %v6198, %v6205
    %v6207 = vrot.slane %v6202, 4
    %v6209 = vshrl.u32 %v5413, 16
    %v6211 = vrot.slane %v6209, 7
    %v6212 = vshll.u32 %v5413, 16
    %v6214 = vor.u32 %v6211, %v6212
    %v6215 = vsel %vm5473, %v6207, %v6214
    %v6217 = vshrl.u32 %v5465, 16
    %v6219 = vrot.slane %v6217, 7
    %v6220 = vrot.slane %v6219, 4
    %v6222 = vshrl.u32 %v5466, 16
    %v6224 = vrot.slane %v6222, 7
    %v6225 = vshll.u32 %v5466, 16
    %v6227 = vor.u32 %v6224, %v6225
    %v6228 = vsel %vm5473, %v6220, %v6227
    %v6229 = vrot.slane %v6224, 4
    %v6231 = vshrl.u32 %v5467, 16
    %v6233 = vrot.slane %v6231, 7
    %v6234 = vshll.u32 %v5467, 16
    %v6236 = vor.u32 %v6233, %v6234
    %v6237 = vsel %vm5473, %v6229, %v6236
    %s6238 = scalar_lea.vmem [#allocation3], 192
    %v6239 = vld [vmem:[%s6238] sm:$0xf]
    %v6240 = vld [vmem:[%s6238 + $0x4] sm:$0xf]
    %v6241 = vld [vmem:[%s6238 + $0x8] sm:$0xf]
    %v6242 = vld [vmem:[%s6238 + $0xc] sm:$0xf]
    %v6243 = vld [vmem:[%s6238 + $0x10] sm:$0xf]
    %v6244 = vld [vmem:[%s6238 + $0x14] sm:$0xf]
    %v6245 = vld [vmem:[%s6238 + $0x18] sm:$0xf]
    %v6246 = vld [vmem:[%s6238 + $0x1c] sm:$0xf]
    %v6247 = vld [vmem:[%s6238 + $0x20] sm:$0xf]
    %v6248 = vld [vmem:[%s6238 + $0x24] sm:$0xf]
    %v6249 = vld [vmem:[%s6238 + $0x28] sm:$0xf]
    %v6250 = vld [vmem:[%s6238 + $0x2c] sm:$0xf]
    %v6251 = vld [vmem:[%s6238 + $0x30] sm:$0xf]
    %v6252 = vld [vmem:[%s6238 + $0x34] sm:$0xf]
    %v6253 = vld [vmem:[%s6238 + $0x38] sm:$0xf]
    %v6254 = vld [vmem:[%s6238 + $0x3c] sm:$0xf]
    %v6255 = vunpack.c.l.b16 %v5508
    %v6256 = vunpack.c.l.b16 %v5517
    %v6257 = vunpack.c.l.b16 %v5530
    %v6258 = vunpack.c.l.b16 %v5539
    %v6259 = vunpack.c.l.b16 %v5552
    %v6260 = vunpack.c.l.b16 %v5561
    %v6261 = vunpack.c.l.b16 %v5574
    %v6262 = vunpack.c.l.b16 %v5583
    %v6263 = vunpack.c.l.b16 %v5596
    %v6264 = vunpack.c.l.b16 %v5605
    %v6265 = vunpack.c.l.b16 %v5618
    %v6266 = vunpack.c.l.b16 %v5627
    %v6267 = vunpack.c.l.b16 %v5640
    %v6268 = vunpack.c.l.b16 %v5649
    %v6269 = vunpack.c.l.b16 %v5662
    %v6270 = vunpack.c.l.b16 %v5671
    %v6271 = vunpack.c.l.b16 %v5684
    %v6272 = vunpack.c.l.b16 %v5693
    %v6273 = vunpack.c.l.b16 %v5706
    %v6274 = vunpack.c.l.b16 %v5715
    %v6275 = vunpack.c.l.b16 %v5728
    %v6276 = vunpack.c.l.b16 %v5737
    %v6277 = vunpack.c.l.b16 %v5750
    %v6278 = vunpack.c.l.b16 %v5759
    %v6279 = vunpack.c.l.b16 %v5772
    %v6280 = vunpack.c.l.b16 %v5781
    %v6281 = vunpack.c.l.b16 %v5794
    %v6282 = vunpack.c.l.b16 %v5803
    %v6283 = vunpack.c.l.b16 %v5816
    %v6284 = vunpack.c.l.b16 %v5825
    %v6285 = vunpack.c.l.b16 %v6206
    %v6286 = vunpack.c.l.b16 %v6215
    %v6287 = vunpack.c.l.b16 %v5860
    %v6288 = vunpack.c.l.b16 %v5869
    %v6289 = vunpack.c.l.b16 %v5882
    %v6290 = vunpack.c.l.b16 %v5891
    %v6291 = vunpack.c.l.b16 %v5904
    %v6292 = vunpack.c.l.b16 %v5913
    %v6293 = vunpack.c.l.b16 %v5926
    %v6294 = vunpack.c.l.b16 %v5935
    %v6295 = vunpack.c.l.b16 %v5948
    %v6296 = vunpack.c.l.b16 %v5957
    %v6297 = vunpack.c.l.b16 %v5970
    %v6298 = vunpack.c.l.b16 %v5979
    %v6299 = vunpack.c.l.b16 %v5992
    %v6300 = vunpack.c.l.b16 %v6001
    %v6301 = vunpack.c.l.b16 %v6014
    %v6302 = vunpack.c.l.b16 %v6023
    %v6303 = vunpack.c.l.b16 %v6036
    %v6304 = vunpack.c.l.b16 %v6045
    %v6305 = vunpack.c.l.b16 %v6058
    %v6306 = vunpack.c.l.b16 %v6067
    %v6307 = vunpack.c.l.b16 %v6080
    %v6308 = vunpack.c.l.b16 %v6089
    %v6309 = vunpack.c.l.b16 %v6102
    %v6310 = vunpack.c.l.b16 %v6111
    %v6311 = vunpack.c.l.b16 %v6124
    %v6312 = vunpack.c.l.b16 %v6133
    %v6313 = vunpack.c.l.b16 %v6146
    %v6314 = vunpack.c.l.b16 %v6155
    %v6315 = vunpack.c.l.b16 %v6168
    %v6316 = vunpack.c.l.b16 %v6177
    %v6317 = vunpack.c.l.b16 %v6228
    %v6318 = vunpack.c.l.b16 %v6237
    %v6319 = vpack.c.b16 %v6256, %v6255
    %v6320 = vpack.c.b16 %v6258, %v6257
    %v6321 = vpack.c.b16 %v6260, %v6259
    %v6322 = vpack.c.b16 %v6262, %v6261
    %v6323 = vpack.c.b16 %v6264, %v6263
    %v6324 = vpack.c.b16 %v6266, %v6265
    %v6325 = vpack.c.b16 %v6268, %v6267
    %v6326 = vpack.c.b16 %v6270, %v6269
    %v6327 = vpack.c.b16 %v6272, %v6271
    %v6328 = vpack.c.b16 %v6274, %v6273
    %v6329 = vpack.c.b16 %v6276, %v6275
    %v6330 = vpack.c.b16 %v6278, %v6277
    %v6331 = vpack.c.b16 %v6280, %v6279
    %v6332 = vpack.c.b16 %v6282, %v6281
    %v6333 = vpack.c.b16 %v6284, %v6283
    %v6334 = vpack.c.b16 %v6286, %v6285
    %v6335 = vpack.c.b16 %v6288, %v6287
    %v6336 = vpack.c.b16 %v6290, %v6289
    %v6337 = vpack.c.b16 %v6292, %v6291
    %v6338 = vpack.c.b16 %v6294, %v6293
    %v6339 = vpack.c.b16 %v6296, %v6295
    %v6340 = vpack.c.b16 %v6298, %v6297
    %v6341 = vpack.c.b16 %v6300, %v6299
    %v6342 = vpack.c.b16 %v6302, %v6301
    %v6343 = vpack.c.b16 %v6304, %v6303
    %v6344 = vpack.c.b16 %v6306, %v6305
    %v6345 = vpack.c.b16 %v6308, %v6307
    %v6346 = vpack.c.b16 %v6310, %v6309
    %v6347 = vpack.c.b16 %v6312, %v6311
    %v6348 = vpack.c.b16 %v6314, %v6313
    %v6349 = vpack.c.b16 %v6316, %v6315
    %v6350 = vpack.c.b16 %v6318, %v6317
    %v6399 = vunpack.c.l.b16 %v6239
    %v6400 = vunpack.c.l.b16 %v6240
    %v6401 = vunpack.c.l.b16 %v6241
    %v6402 = vunpack.c.l.b16 %v6242
    %v6403 = vunpack.c.l.b16 %v6243
    %v6404 = vunpack.c.l.b16 %v6244
    %v6405 = vunpack.c.l.b16 %v6245
    %v6406 = vunpack.c.l.b16 %v6246
    %v6407 = vunpack.c.l.b16 %v6247
    %v6408 = vunpack.c.l.b16 %v6248
    %v6409 = vunpack.c.l.b16 %v6249
    %v6410 = vunpack.c.l.b16 %v6250
    %v6411 = vunpack.c.l.b16 %v6251
    %v6412 = vunpack.c.l.b16 %v6252
    %v6413 = vunpack.c.l.b16 %v6253
    %v6414 = vunpack.c.l.b16 %v6254
    %v6415 = vpack.c.b16 %v6400, %v6399
    %v6416 = vpack.c.b16 %v6402, %v6401
    %v6417 = vpack.c.b16 %v6404, %v6403
    %v6418 = vpack.c.b16 %v6406, %v6405
    %v6419 = vpack.c.b16 %v6408, %v6407
    %v6420 = vpack.c.b16 %v6410, %v6409
    %v6421 = vpack.c.b16 %v6412, %v6411
    %v6422 = vpack.c.b16 %v6414, %v6413
    %6431 = vmatpush.bf16.msra.mxu0 %v6422
    %6432 = vmatpush.bf16.msra.mxu0 %v6421
    %6433 = vmatpush.bf16.msra.mxu0 %v6420
    %6434 = vmatpush.bf16.msra.mxu0 %v6419
    %6435 = vmatpush.bf16.msra.mxu0 %v6418
    %6436 = vmatpush.bf16.msra.mxu0 %v6417
    %6437 = vmatpush.bf16.msra.mxu0 %v6416
    %6438 = vmatpush.bf16.msra.mxu0 %v6415
    %6439 = vmatmul.bf16.gmra.mxu0 %v6319
    %v6440 = vpop.f32.mrf.mxu0
    %v6441 = vadd.f32 0.0, %v6440
    %v6442 = vpop.f32.mrf.mxu0
    %v6443 = vadd.f32 0.0, %v6442
    %6444 = vmatmul.bf16.gmra.mxu0 %v6320
    %v6445 = vpop.f32.mrf.mxu0
    %v6446 = vadd.f32 0.0, %v6445
    %v6447 = vpop.f32.mrf.mxu0
    %v6448 = vadd.f32 0.0, %v6447
    %6449 = vmatmul.bf16.gmra.mxu0 %v6321
    %v6450 = vpop.f32.mrf.mxu0
    %v6451 = vadd.f32 0.0, %v6450
    %v6452 = vpop.f32.mrf.mxu0
    %v6453 = vadd.f32 0.0, %v6452
    %6454 = vmatmul.bf16.gmra.mxu0 %v6322
    %v6455 = vpop.f32.mrf.mxu0
    %v6456 = vadd.f32 0.0, %v6455
    %v6457 = vpop.f32.mrf.mxu0
    %v6458 = vadd.f32 0.0, %v6457
    %6459 = vmatmul.bf16.gmra.mxu0 %v6323
    %v6460 = vpop.f32.mrf.mxu0
    %v6461 = vadd.f32 0.0, %v6460
    %v6462 = vpop.f32.mrf.mxu0
    %v6463 = vadd.f32 0.0, %v6462
    %6464 = vmatmul.bf16.gmra.mxu0 %v6324
    %v6465 = vpop.f32.mrf.mxu0
    %v6466 = vadd.f32 0.0, %v6465
    %v6467 = vpop.f32.mrf.mxu0
    %v6468 = vadd.f32 0.0, %v6467
    %6469 = vmatmul.bf16.gmra.mxu0 %v6325
    %v6470 = vpop.f32.mrf.mxu0
    %v6471 = vadd.f32 0.0, %v6470
    %v6472 = vpop.f32.mrf.mxu0
    %v6473 = vadd.f32 0.0, %v6472
    %6474 = vmatmul.bf16.gmra.mxu0 %v6326
    %v6475 = vpop.f32.mrf.mxu0
    %v6476 = vadd.f32 0.0, %v6475
    %v6477 = vpop.f32.mrf.mxu0
    %v6478 = vadd.f32 0.0, %v6477
    %6479 = vmatmul.bf16.gmra.mxu0 %v6327
    %v6480 = vpop.f32.mrf.mxu0
    %v6481 = vadd.f32 0.0, %v6480
    %v6482 = vpop.f32.mrf.mxu0
    %v6483 = vadd.f32 0.0, %v6482
    %6484 = vmatmul.bf16.gmra.mxu0 %v6328
    %v6485 = vpop.f32.mrf.mxu0
    %v6486 = vadd.f32 0.0, %v6485
    %v6487 = vpop.f32.mrf.mxu0
    %v6488 = vadd.f32 0.0, %v6487
    %6489 = vmatmul.bf16.gmra.mxu0 %v6329
    %v6490 = vpop.f32.mrf.mxu0
    %v6491 = vadd.f32 0.0, %v6490
    %v6492 = vpop.f32.mrf.mxu0
    %v6493 = vadd.f32 0.0, %v6492
    %6494 = vmatmul.bf16.gmra.mxu0 %v6330
    %v6495 = vpop.f32.mrf.mxu0
    %v6496 = vadd.f32 0.0, %v6495
    %v6497 = vpop.f32.mrf.mxu0
    %v6498 = vadd.f32 0.0, %v6497
    %6499 = vmatmul.bf16.gmra.mxu0 %v6331
    %v6500 = vpop.f32.mrf.mxu0
    %v6501 = vadd.f32 0.0, %v6500
    %v6502 = vpop.f32.mrf.mxu0
    %v6503 = vadd.f32 0.0, %v6502
    %6504 = vmatmul.bf16.gmra.mxu0 %v6332
    %v6505 = vpop.f32.mrf.mxu0
    %v6506 = vadd.f32 0.0, %v6505
    %v6507 = vpop.f32.mrf.mxu0
    %v6508 = vadd.f32 0.0, %v6507
    %6509 = vmatmul.bf16.gmra.mxu0 %v6333
    %v6510 = vpop.f32.mrf.mxu0
    %v6511 = vadd.f32 0.0, %v6510
    %v6512 = vpop.f32.mrf.mxu0
    %v6513 = vadd.f32 0.0, %v6512
    %6514 = vmatmul.bf16.gmra.mxu0 %v6334
    %v6515 = vpop.f32.mrf.mxu0
    %v6516 = vadd.f32 0.0, %v6515
    %v6517 = vpop.f32.mrf.mxu0
    %v6518 = vadd.f32 0.0, %v6517
    %6519 = vmatmul.bf16.gmra.mxu0 %v6335
    %v6520 = vpop.f32.mrf.mxu0
    %v6521 = vadd.f32 0.0, %v6520
    %v6522 = vpop.f32.mrf.mxu0
    %v6523 = vadd.f32 0.0, %v6522
    %6524 = vmatmul.bf16.gmra.mxu0 %v6336
    %v6525 = vpop.f32.mrf.mxu0
    %v6526 = vadd.f32 0.0, %v6525
    %v6527 = vpop.f32.mrf.mxu0
    %v6528 = vadd.f32 0.0, %v6527
    %6529 = vmatmul.bf16.gmra.mxu0 %v6337
    %v6530 = vpop.f32.mrf.mxu0
    %v6531 = vadd.f32 0.0, %v6530
    %v6532 = vpop.f32.mrf.mxu0
    %v6533 = vadd.f32 0.0, %v6532
    %6534 = vmatmul.bf16.gmra.mxu0 %v6338
    %v6535 = vpop.f32.mrf.mxu0
    %v6536 = vadd.f32 0.0, %v6535
    %v6537 = vpop.f32.mrf.mxu0
    %v6538 = vadd.f32 0.0, %v6537
    %6539 = vmatmul.bf16.gmra.mxu0 %v6339
    %v6540 = vpop.f32.mrf.mxu0
    %v6541 = vadd.f32 0.0, %v6540
    %v6542 = vpop.f32.mrf.mxu0
    %v6543 = vadd.f32 0.0, %v6542
    %6544 = vmatmul.bf16.gmra.mxu0 %v6340
    %v6545 = vpop.f32.mrf.mxu0
    %v6546 = vadd.f32 0.0, %v6545
    %v6547 = vpop.f32.mrf.mxu0
    %v6548 = vadd.f32 0.0, %v6547
    %6549 = vmatmul.bf16.gmra.mxu0 %v6341
    %v6550 = vpop.f32.mrf.mxu0
    %v6551 = vadd.f32 0.0, %v6550
    %v6552 = vpop.f32.mrf.mxu0
    %v6553 = vadd.f32 0.0, %v6552
    %6554 = vmatmul.bf16.gmra.mxu0 %v6342
    %v6555 = vpop.f32.mrf.mxu0
    %v6556 = vadd.f32 0.0, %v6555
    %v6557 = vpop.f32.mrf.mxu0
    %v6558 = vadd.f32 0.0, %v6557
    %6559 = vmatmul.bf16.gmra.mxu0 %v6343
    %v6560 = vpop.f32.mrf.mxu0
    %v6561 = vadd.f32 0.0, %v6560
    %v6562 = vpop.f32.mrf.mxu0
    %v6563 = vadd.f32 0.0, %v6562
    %6564 = vmatmul.bf16.gmra.mxu0 %v6344
    %v6565 = vpop.f32.mrf.mxu0
    %v6566 = vadd.f32 0.0, %v6565
    %v6567 = vpop.f32.mrf.mxu0
    %v6568 = vadd.f32 0.0, %v6567
    %6569 = vmatmul.bf16.gmra.mxu0 %v6345
    %v6570 = vpop.f32.mrf.mxu0
    %v6571 = vadd.f32 0.0, %v6570
    %v6572 = vpop.f32.mrf.mxu0
    %v6573 = vadd.f32 0.0, %v6572
    %6574 = vmatmul.bf16.gmra.mxu0 %v6346
    %v6575 = vpop.f32.mrf.mxu0
    %v6576 = vadd.f32 0.0, %v6575
    %v6577 = vpop.f32.mrf.mxu0
    %v6578 = vadd.f32 0.0, %v6577
    %6579 = vmatmul.bf16.gmra.mxu0 %v6347
    %v6580 = vpop.f32.mrf.mxu0
    %v6581 = vadd.f32 0.0, %v6580
    %v6582 = vpop.f32.mrf.mxu0
    %v6583 = vadd.f32 0.0, %v6582
    %6584 = vmatmul.bf16.gmra.mxu0 %v6348
    %v6585 = vpop.f32.mrf.mxu0
    %v6586 = vadd.f32 0.0, %v6585
    %v6587 = vpop.f32.mrf.mxu0
    %v6588 = vadd.f32 0.0, %v6587
    %6589 = vmatmul.bf16.gmra.mxu0 %v6349
    %v6590 = vpop.f32.mrf.mxu0
    %v6591 = vadd.f32 0.0, %v6590
    %v6592 = vpop.f32.mrf.mxu0
    %v6593 = vadd.f32 0.0, %v6592
    %6594 = vmatmul.bf16.gmra.mxu0 %v6350
    %v6595 = vpop.f32.mrf.mxu0
    %v6596 = vadd.f32 0.0, %v6595
    %v6597 = vpop.f32.mrf.mxu0
    %v6598 = vadd.f32 0.0, %v6597
    %6599 = vdwg.mxu0
    %v6600 = vunpack.c.l.b16 %v5486
    %v6601 = vunpack.c.l.b16 %v5495
    %v6602 = vunpack.c.l.b16 %v5838
    %v6603 = vunpack.c.l.b16 %v5847
    %v6604 = vpack.c.b16 %v6601, %v6600
    %v6605 = vpack.c.b16 %v6603, %v6602
    %v6624 = vunpack.c.l.b16 %v6178
    %v6625 = vunpack.c.l.b16 %v6179
    %v6626 = vunpack.c.l.b16 %v6180
    %v6627 = vunpack.c.l.b16 %v6181
    %v6628 = vunpack.c.l.b16 %v6182
    %v6629 = vunpack.c.l.b16 %v6183
    %v6630 = vunpack.c.l.b16 %v6184
    %v6631 = vunpack.c.l.b16 %v6185
    %v6632 = vunpack.c.l.b16 %v6186
    %v6633 = vunpack.c.l.b16 %v6187
    %v6634 = vunpack.c.l.b16 %v6188
    %v6635 = vunpack.c.l.b16 %v6189
    %v6636 = vunpack.c.l.b16 %v6190
    %v6637 = vunpack.c.l.b16 %v6191
    %v6638 = vunpack.c.l.b16 %v6192
    %v6639 = vunpack.c.l.b16 %v6193
    %v6640 = vpack.c.b16 %v6625, %v6624
    %v6641 = vpack.c.b16 %v6627, %v6626
    %v6642 = vpack.c.b16 %v6629, %v6628
    %v6643 = vpack.c.b16 %v6631, %v6630
    %v6644 = vpack.c.b16 %v6633, %v6632
    %v6645 = vpack.c.b16 %v6635, %v6634
    %v6646 = vpack.c.b16 %v6637, %v6636
    %v6647 = vpack.c.b16 %v6639, %v6638
    %6656 = vmatpush.bf16.msra.mxu0 %v6647
    %6657 = vmatpush.bf16.msra.mxu0 %v6646
    %6658 = vmatpush.bf16.msra.mxu0 %v6645
    %6659 = vmatpush.bf16.msra.mxu0 %v6644
    %6660 = vmatpush.bf16.msra.mxu0 %v6643
    %6661 = vmatpush.bf16.msra.mxu0 %v6642
    %6662 = vmatpush.bf16.msra.mxu0 %v6641
    %6663 = vmatpush.bf16.msra.mxu0 %v6640
    %6664 = vmatmul.bf16.gmra.mxu0 %v6604
    %v6665 = vpop.f32.mrf.mxu0
    %v6666 = vadd.f32 %v6441, %v6665
    %v6667 = vpop.f32.mrf.mxu0
    %v6668 = vadd.f32 %v6443, %v6667
    %6669 = vmatmul.bf16.gmra.mxu0 %v6319
    %v6670 = vpop.f32.mrf.mxu0
    %v6671 = vadd.f32 %v6446, %v6670
    %v6672 = vpop.f32.mrf.mxu0
    %v6673 = vadd.f32 %v6448, %v6672
    %6674 = vmatmul.bf16.gmra.mxu0 %v6320
    %v6675 = vpop.f32.mrf.mxu0
    %v6676 = vadd.f32 %v6451, %v6675
    %v6677 = vpop.f32.mrf.mxu0
    %v6678 = vadd.f32 %v6453, %v6677
    %6679 = vmatmul.bf16.gmra.mxu0 %v6321
    %v6680 = vpop.f32.mrf.mxu0
    %v6681 = vadd.f32 %v6456, %v6680
    %v6682 = vpop.f32.mrf.mxu0
    %v6683 = vadd.f32 %v6458, %v6682
    %6684 = vmatmul.bf16.gmra.mxu0 %v6322
    %v6685 = vpop.f32.mrf.mxu0
    %v6686 = vadd.f32 %v6461, %v6685
    %v6687 = vpop.f32.mrf.mxu0
    %v6688 = vadd.f32 %v6463, %v6687
    %6689 = vmatmul.bf16.gmra.mxu0 %v6323
    %v6690 = vpop.f32.mrf.mxu0
    %v6691 = vadd.f32 %v6466, %v6690
    %v6692 = vpop.f32.mrf.mxu0
    %v6693 = vadd.f32 %v6468, %v6692
    %6694 = vmatmul.bf16.gmra.mxu0 %v6324
    %v6695 = vpop.f32.mrf.mxu0
    %v6696 = vadd.f32 %v6471, %v6695
    %v6697 = vpop.f32.mrf.mxu0
    %v6698 = vadd.f32 %v6473, %v6697
    %6699 = vmatmul.bf16.gmra.mxu0 %v6325
    %v6700 = vpop.f32.mrf.mxu0
    %v6701 = vadd.f32 %v6476, %v6700
    %v6702 = vpop.f32.mrf.mxu0
    %v6703 = vadd.f32 %v6478, %v6702
    %6704 = vmatmul.bf16.gmra.mxu0 %v6326
    %v6705 = vpop.f32.mrf.mxu0
    %v6706 = vadd.f32 %v6481, %v6705
    %v6707 = vpop.f32.mrf.mxu0
    %v6708 = vadd.f32 %v6483, %v6707
    %6709 = vmatmul.bf16.gmra.mxu0 %v6327
    %v6710 = vpop.f32.mrf.mxu0
    %v6711 = vadd.f32 %v6486, %v6710
    %v6712 = vpop.f32.mrf.mxu0
    %v6713 = vadd.f32 %v6488, %v6712
    %6714 = vmatmul.bf16.gmra.mxu0 %v6328
    %v6715 = vpop.f32.mrf.mxu0
    %v6716 = vadd.f32 %v6491, %v6715
    %v6717 = vpop.f32.mrf.mxu0
    %v6718 = vadd.f32 %v6493, %v6717
    %6719 = vmatmul.bf16.gmra.mxu0 %v6329
    %v6720 = vpop.f32.mrf.mxu0
    %v6721 = vadd.f32 %v6496, %v6720
    %v6722 = vpop.f32.mrf.mxu0
    %v6723 = vadd.f32 %v6498, %v6722
    %6724 = vmatmul.bf16.gmra.mxu0 %v6330
    %v6725 = vpop.f32.mrf.mxu0
    %v6726 = vadd.f32 %v6501, %v6725
    %v6727 = vpop.f32.mrf.mxu0
    %v6728 = vadd.f32 %v6503, %v6727
    %6729 = vmatmul.bf16.gmra.mxu0 %v6331
    %v6730 = vpop.f32.mrf.mxu0
    %v6731 = vadd.f32 %v6506, %v6730
    %v6732 = vpop.f32.mrf.mxu0
    %v6733 = vadd.f32 %v6508, %v6732
    %6734 = vmatmul.bf16.gmra.mxu0 %v6332
    %v6735 = vpop.f32.mrf.mxu0
    %v6736 = vadd.f32 %v6511, %v6735
    %v6737 = vpop.f32.mrf.mxu0
    %v6738 = vadd.f32 %v6513, %v6737
    %6739 = vmatmul.bf16.gmra.mxu0 %v6333
    %v6740 = vpop.f32.mrf.mxu0
    %v6741 = vadd.f32 %v6516, %v6740
    %v6742 = vpop.f32.mrf.mxu0
    %v6743 = vadd.f32 %v6518, %v6742
    %6744 = vmatmul.bf16.gmra.mxu0 %v6605
    %v6745 = vpop.f32.mrf.mxu0
    %v6746 = vadd.f32 %v6521, %v6745
    %v6747 = vpop.f32.mrf.mxu0
    %v6748 = vadd.f32 %v6523, %v6747
    %6749 = vmatmul.bf16.gmra.mxu0 %v6335
    %v6750 = vpop.f32.mrf.mxu0
    %v6751 = vadd.f32 %v6526, %v6750
    %v6752 = vpop.f32.mrf.mxu0
    %v6753 = vadd.f32 %v6528, %v6752
    %6754 = vmatmul.bf16.gmra.mxu0 %v6336
    %v6755 = vpop.f32.mrf.mxu0
    %v6756 = vadd.f32 %v6531, %v6755
    %v6757 = vpop.f32.mrf.mxu0
    %v6758 = vadd.f32 %v6533, %v6757
    %6759 = vmatmul.bf16.gmra.mxu0 %v6337
    %v6760 = vpop.f32.mrf.mxu0
    %v6761 = vadd.f32 %v6536, %v6760
    %v6762 = vpop.f32.mrf.mxu0
    %v6763 = vadd.f32 %v6538, %v6762
    %6764 = vmatmul.bf16.gmra.mxu0 %v6338
    %v6765 = vpop.f32.mrf.mxu0
    %v6766 = vadd.f32 %v6541, %v6765
    %v6767 = vpop.f32.mrf.mxu0
    %v6768 = vadd.f32 %v6543, %v6767
    %6769 = vmatmul.bf16.gmra.mxu0 %v6339
    %v6770 = vpop.f32.mrf.mxu0
    %v6771 = vadd.f32 %v6546, %v6770
    %v6772 = vpop.f32.mrf.mxu0
    %v6773 = vadd.f32 %v6548, %v6772
    %6774 = vmatmul.bf16.gmra.mxu0 %v6340
    %v6775 = vpop.f32.mrf.mxu0
    %v6776 = vadd.f32 %v6551, %v6775
    %v6777 = vpop.f32.mrf.mxu0
    %v6778 = vadd.f32 %v6553, %v6777
    %6779 = vmatmul.bf16.gmra.mxu0 %v6341
    %v6780 = vpop.f32.mrf.mxu0
    %v6781 = vadd.f32 %v6556, %v6780
    %v6782 = vpop.f32.mrf.mxu0
    %v6783 = vadd.f32 %v6558, %v6782
    %6784 = vmatmul.bf16.gmra.mxu0 %v6342
    %v6785 = vpop.f32.mrf.mxu0
    %v6786 = vadd.f32 %v6561, %v6785
    %v6787 = vpop.f32.mrf.mxu0
    %v6788 = vadd.f32 %v6563, %v6787
    %6789 = vmatmul.bf16.gmra.mxu0 %v6343
    %v6790 = vpop.f32.mrf.mxu0
    %v6791 = vadd.f32 %v6566, %v6790
    %v6792 = vpop.f32.mrf.mxu0
    %v6793 = vadd.f32 %v6568, %v6792
    %6794 = vmatmul.bf16.gmra.mxu0 %v6344
    %v6795 = vpop.f32.mrf.mxu0
    %v6796 = vadd.f32 %v6571, %v6795
    %v6797 = vpop.f32.mrf.mxu0
    %v6798 = vadd.f32 %v6573, %v6797
    %6799 = vmatmul.bf16.gmra.mxu0 %v6345
    %v6800 = vpop.f32.mrf.mxu0
    %v6801 = vadd.f32 %v6576, %v6800
    %v6802 = vpop.f32.mrf.mxu0
    %v6803 = vadd.f32 %v6578, %v6802
    %6804 = vmatmul.bf16.gmra.mxu0 %v6346
    %v6805 = vpop.f32.mrf.mxu0
    %v6806 = vadd.f32 %v6581, %v6805
    %v6807 = vpop.f32.mrf.mxu0
    %v6808 = vadd.f32 %v6583, %v6807
    %6809 = vmatmul.bf16.gmra.mxu0 %v6347
    %v6810 = vpop.f32.mrf.mxu0
    %v6811 = vadd.f32 %v6586, %v6810
    %v6812 = vpop.f32.mrf.mxu0
    %v6813 = vadd.f32 %v6588, %v6812
    %6814 = vmatmul.bf16.gmra.mxu0 %v6348
    %v6815 = vpop.f32.mrf.mxu0
    %v6816 = vadd.f32 %v6591, %v6815
    %v6817 = vpop.f32.mrf.mxu0
    %v6818 = vadd.f32 %v6593, %v6817
    %6819 = vmatmul.bf16.gmra.mxu0 %v6349
    %v6820 = vpop.f32.mrf.mxu0
    %v6821 = vadd.f32 %v6596, %v6820
    %v6822 = vpop.f32.mrf.mxu0
    %v6823 = vadd.f32 %v6598, %v6822
    %6824 = vdwg.mxu0
    %v6826 = vshrl.u32 %v5414, 16
    %v6828 = vrot.slane %v6826, 7
    %v6829 = vrot.slane %v6828, 4
    %v6831 = vshrl.u32 %v5415, 16
    %v6833 = vrot.slane %v6831, 7
    %v6834 = vshll.u32 %v5415, 16
    %v6836 = vor.u32 %v6833, %v6834
    %v6837 = vsel %vm5473, %v6829, %v6836
    %v6838 = vrot.slane %v6833, 4
    %v6840 = vshrl.u32 %v5416, 16
    %v6842 = vrot.slane %v6840, 7
    %v6843 = vshll.u32 %v5416, 16
    %v6845 = vor.u32 %v6842, %v6843
    %v6846 = vsel %vm5473, %v6838, %v6845
    %v6848 = vshrl.u32 %v5468, 16
    %v6850 = vrot.slane %v6848, 7
    %v6851 = vrot.slane %v6850, 4
    %v6853 = vshrl.u32 %v5469, 16
    %v6855 = vrot.slane %v6853, 7
    %v6856 = vshll.u32 %v5469, 16
    %v6858 = vor.u32 %v6855, %v6856
    %v6859 = vsel %vm5473, %v6851, %v6858
    %v6860 = vrot.slane %v6855, 4
    %v6862 = vshrl.u32 %v5470, 16
    %v6864 = vrot.slane %v6862, 7
    %v6865 = vshll.u32 %v5470, 16
    %v6867 = vor.u32 %v6864, %v6865
    %v6868 = vsel %vm5473, %v6860, %v6867
    %s6869 = scalar_lea.vmem [#allocation3], 384
    %v6870 = vld [vmem:[%s6869] sm:$0xf]
    %v6871 = vld [vmem:[%s6869 + $0x4] sm:$0xf]
    %v6872 = vld [vmem:[%s6869 + $0x8] sm:$0xf]
    %v6873 = vld [vmem:[%s6869 + $0xc] sm:$0xf]
    %v6874 = vld [vmem:[%s6869 + $0x10] sm:$0xf]
    %v6875 = vld [vmem:[%s6869 + $0x14] sm:$0xf]
    %v6876 = vld [vmem:[%s6869 + $0x18] sm:$0xf]
    %v6877 = vld [vmem:[%s6869 + $0x1c] sm:$0xf]
    %v6878 = vld [vmem:[%s6869 + $0x20] sm:$0xf]
    %v6879 = vld [vmem:[%s6869 + $0x24] sm:$0xf]
    %v6880 = vld [vmem:[%s6869 + $0x28] sm:$0xf]
    %v6881 = vld [vmem:[%s6869 + $0x2c] sm:$0xf]
    %v6882 = vld [vmem:[%s6869 + $0x30] sm:$0xf]
    %v6883 = vld [vmem:[%s6869 + $0x34] sm:$0xf]
    %v6884 = vld [vmem:[%s6869 + $0x38] sm:$0xf]
    %v6885 = vld [vmem:[%s6869 + $0x3c] sm:$0xf]
    %v6886 = vunpack.c.l.b16 %v6837
    %v6887 = vunpack.c.l.b16 %v6846
    %v6888 = vunpack.c.l.b16 %v6859
    %v6889 = vunpack.c.l.b16 %v6868
    %v6890 = vpack.c.b16 %v6887, %v6886
    %v6891 = vpack.c.b16 %v6889, %v6888
    %v6910 = vunpack.c.l.b16 %v6870
    %v6911 = vunpack.c.l.b16 %v6871
    %v6912 = vunpack.c.l.b16 %v6872
    %v6913 = vunpack.c.l.b16 %v6873
    %v6914 = vunpack.c.l.b16 %v6874
    %v6915 = vunpack.c.l.b16 %v6875
    %v6916 = vunpack.c.l.b16 %v6876
    %v6917 = vunpack.c.l.b16 %v6877
    %v6918 = vunpack.c.l.b16 %v6878
    %v6919 = vunpack.c.l.b16 %v6879
    %v6920 = vunpack.c.l.b16 %v6880
    %v6921 = vunpack.c.l.b16 %v6881
    %v6922 = vunpack.c.l.b16 %v6882
    %v6923 = vunpack.c.l.b16 %v6883
    %v6924 = vunpack.c.l.b16 %v6884
    %v6925 = vunpack.c.l.b16 %v6885
    %v6926 = vpack.c.b16 %v6911, %v6910
    %v6927 = vpack.c.b16 %v6913, %v6912
    %v6928 = vpack.c.b16 %v6915, %v6914
    %v6929 = vpack.c.b16 %v6917, %v6916
    %v6930 = vpack.c.b16 %v6919, %v6918
    %v6931 = vpack.c.b16 %v6921, %v6920
    %v6932 = vpack.c.b16 %v6923, %v6922
    %v6933 = vpack.c.b16 %v6925, %v6924
    %6942 = vmatpush.bf16.msra.mxu0 %v6933
    %6943 = vmatpush.bf16.msra.mxu0 %v6932
    %6944 = vmatpush.bf16.msra.mxu0 %v6931
    %6945 = vmatpush.bf16.msra.mxu0 %v6930
    %6946 = vmatpush.bf16.msra.mxu0 %v6929
    %6947 = vmatpush.bf16.msra.mxu0 %v6928
    %6948 = vmatpush.bf16.msra.mxu0 %v6927
    %6949 = vmatpush.bf16.msra.mxu0 %v6926
    %6950 = vmatmul.bf16.gmra.mxu0 %v6320
    %v6951 = vpop.f32.mrf.mxu0
    %v6952 = vadd.f32 0.0, %v6951
    %v6953 = vpop.f32.mrf.mxu0
    %v6954 = vadd.f32 0.0, %v6953
    %6955 = vmatmul.bf16.gmra.mxu0 %v6321
    %v6956 = vpop.f32.mrf.mxu0
    %v6957 = vadd.f32 0.0, %v6956
    %v6958 = vpop.f32.mrf.mxu0
    %v6959 = vadd.f32 0.0, %v6958
    %6960 = vmatmul.bf16.gmra.mxu0 %v6322
    %v6961 = vpop.f32.mrf.mxu0
    %v6962 = vadd.f32 0.0, %v6961
    %v6963 = vpop.f32.mrf.mxu0
    %v6964 = vadd.f32 0.0, %v6963
    %6965 = vmatmul.bf16.gmra.mxu0 %v6323
    %v6966 = vpop.f32.mrf.mxu0
    %v6967 = vadd.f32 0.0, %v6966
    %v6968 = vpop.f32.mrf.mxu0
    %v6969 = vadd.f32 0.0, %v6968
    %6970 = vmatmul.bf16.gmra.mxu0 %v6324
    %v6971 = vpop.f32.mrf.mxu0
    %v6972 = vadd.f32 0.0, %v6971
    %v6973 = vpop.f32.mrf.mxu0
    %v6974 = vadd.f32 0.0, %v6973
    %6975 = vmatmul.bf16.gmra.mxu0 %v6325
    %v6976 = vpop.f32.mrf.mxu0
    %v6977 = vadd.f32 0.0, %v6976
    %v6978 = vpop.f32.mrf.mxu0
    %v6979 = vadd.f32 0.0, %v6978
    %6980 = vmatmul.bf16.gmra.mxu0 %v6326
    %v6981 = vpop.f32.mrf.mxu0
    %v6982 = vadd.f32 0.0, %v6981
    %v6983 = vpop.f32.mrf.mxu0
    %v6984 = vadd.f32 0.0, %v6983
    %6985 = vmatmul.bf16.gmra.mxu0 %v6327
    %v6986 = vpop.f32.mrf.mxu0
    %v6987 = vadd.f32 0.0, %v6986
    %v6988 = vpop.f32.mrf.mxu0
    %v6989 = vadd.f32 0.0, %v6988
    %6990 = vmatmul.bf16.gmra.mxu0 %v6328
    %v6991 = vpop.f32.mrf.mxu0
    %v6992 = vadd.f32 0.0, %v6991
    %v6993 = vpop.f32.mrf.mxu0
    %v6994 = vadd.f32 0.0, %v6993
    %6995 = vmatmul.bf16.gmra.mxu0 %v6329
    %v6996 = vpop.f32.mrf.mxu0
    %v6997 = vadd.f32 0.0, %v6996
    %v6998 = vpop.f32.mrf.mxu0
    %v6999 = vadd.f32 0.0, %v6998
    %7000 = vmatmul.bf16.gmra.mxu0 %v6330
    %v7001 = vpop.f32.mrf.mxu0
    %v7002 = vadd.f32 0.0, %v7001
    %v7003 = vpop.f32.mrf.mxu0
    %v7004 = vadd.f32 0.0, %v7003
    %7005 = vmatmul.bf16.gmra.mxu0 %v6331
    %v7006 = vpop.f32.mrf.mxu0
    %v7007 = vadd.f32 0.0, %v7006
    %v7008 = vpop.f32.mrf.mxu0
    %v7009 = vadd.f32 0.0, %v7008
    %7010 = vmatmul.bf16.gmra.mxu0 %v6332
    %v7011 = vpop.f32.mrf.mxu0
    %v7012 = vadd.f32 0.0, %v7011
    %v7013 = vpop.f32.mrf.mxu0
    %v7014 = vadd.f32 0.0, %v7013
    %7015 = vmatmul.bf16.gmra.mxu0 %v6333
    %v7016 = vpop.f32.mrf.mxu0
    %v7017 = vadd.f32 0.0, %v7016
    %v7018 = vpop.f32.mrf.mxu0
    %v7019 = vadd.f32 0.0, %v7018
    %7020 = vmatmul.bf16.gmra.mxu0 %v6334
    %v7021 = vpop.f32.mrf.mxu0
    %v7022 = vadd.f32 0.0, %v7021
    %v7023 = vpop.f32.mrf.mxu0
    %v7024 = vadd.f32 0.0, %v7023
    %7025 = vmatmul.bf16.gmra.mxu0 %v6890
    %v7026 = vpop.f32.mrf.mxu0
    %v7027 = vadd.f32 0.0, %v7026
    %v7028 = vpop.f32.mrf.mxu0
    %v7029 = vadd.f32 0.0, %v7028
    %7030 = vmatmul.bf16.gmra.mxu0 %v6336
    %v7031 = vpop.f32.mrf.mxu0
    %v7032 = vadd.f32 0.0, %v7031
    %v7033 = vpop.f32.mrf.mxu0
    %v7034 = vadd.f32 0.0, %v7033
    %7035 = vmatmul.bf16.gmra.mxu0 %v6337
    %v7036 = vpop.f32.mrf.mxu0
    %v7037 = vadd.f32 0.0, %v7036
    %v7038 = vpop.f32.mrf.mxu0
    %v7039 = vadd.f32 0.0, %v7038
    %7040 = vmatmul.bf16.gmra.mxu0 %v6338
    %v7041 = vpop.f32.mrf.mxu0
    %v7042 = vadd.f32 0.0, %v7041
    %v7043 = vpop.f32.mrf.mxu0
    %v7044 = vadd.f32 0.0, %v7043
    %7045 = vmatmul.bf16.gmra.mxu0 %v6339
    %v7046 = vpop.f32.mrf.mxu0
    %v7047 = vadd.f32 0.0, %v7046
    %v7048 = vpop.f32.mrf.mxu0
    %v7049 = vadd.f32 0.0, %v7048
    %7050 = vmatmul.bf16.gmra.mxu0 %v6340
    %v7051 = vpop.f32.mrf.mxu0
    %v7052 = vadd.f32 0.0, %v7051
    %v7053 = vpop.f32.mrf.mxu0
    %v7054 = vadd.f32 0.0, %v7053
    %7055 = vmatmul.bf16.gmra.mxu0 %v6341
    %v7056 = vpop.f32.mrf.mxu0
    %v7057 = vadd.f32 0.0, %v7056
    %v7058 = vpop.f32.mrf.mxu0
    %v7059 = vadd.f32 0.0, %v7058
    %7060 = vmatmul.bf16.gmra.mxu0 %v6342
    %v7061 = vpop.f32.mrf.mxu0
    %v7062 = vadd.f32 0.0, %v7061
    %v7063 = vpop.f32.mrf.mxu0
    %v7064 = vadd.f32 0.0, %v7063
    %7065 = vmatmul.bf16.gmra.mxu0 %v6343
    %v7066 = vpop.f32.mrf.mxu0
    %v7067 = vadd.f32 0.0, %v7066
    %v7068 = vpop.f32.mrf.mxu0
    %v7069 = vadd.f32 0.0, %v7068
    %7070 = vmatmul.bf16.gmra.mxu0 %v6344
    %v7071 = vpop.f32.mrf.mxu0
    %v7072 = vadd.f32 0.0, %v7071
    %v7073 = vpop.f32.mrf.mxu0
    %v7074 = vadd.f32 0.0, %v7073
    %7075 = vmatmul.bf16.gmra.mxu0 %v6345
    %v7076 = vpop.f32.mrf.mxu0
    %v7077 = vadd.f32 0.0, %v7076
    %v7078 = vpop.f32.mrf.mxu0
    %v7079 = vadd.f32 0.0, %v7078
    %7080 = vmatmul.bf16.gmra.mxu0 %v6346
    %v7081 = vpop.f32.mrf.mxu0
    %v7082 = vadd.f32 0.0, %v7081
    %v7083 = vpop.f32.mrf.mxu0
    %v7084 = vadd.f32 0.0, %v7083
    %7085 = vmatmul.bf16.gmra.mxu0 %v6347
    %v7086 = vpop.f32.mrf.mxu0
    %v7087 = vadd.f32 0.0, %v7086
    %v7088 = vpop.f32.mrf.mxu0
    %v7089 = vadd.f32 0.0, %v7088
    %7090 = vmatmul.bf16.gmra.mxu0 %v6348
    %v7091 = vpop.f32.mrf.mxu0
    %v7092 = vadd.f32 0.0, %v7091
    %v7093 = vpop.f32.mrf.mxu0
    %v7094 = vadd.f32 0.0, %v7093
    %7095 = vmatmul.bf16.gmra.mxu0 %v6349
    %v7096 = vpop.f32.mrf.mxu0
    %v7097 = vadd.f32 0.0, %v7096
    %v7098 = vpop.f32.mrf.mxu0
    %v7099 = vadd.f32 0.0, %v7098
    %7100 = vmatmul.bf16.gmra.mxu0 %v6350
    %v7101 = vpop.f32.mrf.mxu0
    %v7102 = vadd.f32 0.0, %v7101
    %v7103 = vpop.f32.mrf.mxu0
    %v7104 = vadd.f32 0.0, %v7103
    %7105 = vmatmul.bf16.gmra.mxu0 %v6891
    %v7106 = vpop.f32.mrf.mxu0
    %v7107 = vadd.f32 0.0, %v7106
    %v7108 = vpop.f32.mrf.mxu0
    %v7109 = vadd.f32 0.0, %v7108
    %7110 = vdwg.mxu0
    %v7111 = vadd.f32 %v6666, %v6952
    %v7112 = vadd.f32 %v6668, %v6954
    %v7113 = vadd.f32 %v6671, %v6957
    %v7114 = vadd.f32 %v6673, %v6959
    %v7115 = vadd.f32 %v6676, %v6962
    %v7116 = vadd.f32 %v6678, %v6964
    %v7117 = vadd.f32 %v6681, %v6967
    %v7118 = vadd.f32 %v6683, %v6969
    %v7119 = vadd.f32 %v6686, %v6972
    %v7120 = vadd.f32 %v6688, %v6974
    %v7121 = vadd.f32 %v6691, %v6977
    %v7122 = vadd.f32 %v6693, %v6979
    %v7123 = vadd.f32 %v6696, %v6982
    %v7124 = vadd.f32 %v6698, %v6984
    %v7125 = vadd.f32 %v6701, %v6987
    %v7126 = vadd.f32 %v6703, %v6989
    %v7127 = vadd.f32 %v6706, %v6992
    %v7128 = vadd.f32 %v6708, %v6994
    %v7129 = vadd.f32 %v6711, %v6997
    %v7130 = vadd.f32 %v6713, %v6999
    %v7131 = vadd.f32 %v6716, %v7002
    %v7132 = vadd.f32 %v6718, %v7004
    %v7133 = vadd.f32 %v6721, %v7007
    %v7134 = vadd.f32 %v6723, %v7009
    %v7135 = vadd.f32 %v6726, %v7012
    %v7136 = vadd.f32 %v6728, %v7014
    %v7137 = vadd.f32 %v6731, %v7017
    %v7138 = vadd.f32 %v6733, %v7019
    %v7139 = vadd.f32 %v6736, %v7022
    %v7140 = vadd.f32 %v6738, %v7024
    %v7141 = vadd.f32 %v6741, %v7027
    %v7142 = vadd.f32 %v6743, %v7029
    %v7143 = vadd.f32 %v6746, %v7032
    %v7144 = vadd.f32 %v6748, %v7034
    %v7145 = vadd.f32 %v6751, %v7037
    %v7146 = vadd.f32 %v6753, %v7039
    %v7147 = vadd.f32 %v6756, %v7042
    %v7148 = vadd.f32 %v6758, %v7044
    %v7149 = vadd.f32 %v6761, %v7047
    %v7150 = vadd.f32 %v6763, %v7049
    %v7151 = vadd.f32 %v6766, %v7052
    %v7152 = vadd.f32 %v6768, %v7054
    %v7153 = vadd.f32 %v6771, %v7057
    %v7154 = vadd.f32 %v6773, %v7059
    %v7155 = vadd.f32 %v6776, %v7062
    %v7156 = vadd.f32 %v6778, %v7064
    %v7157 = vadd.f32 %v6781, %v7067
    %v7158 = vadd.f32 %v6783, %v7069
    %v7159 = vadd.f32 %v6786, %v7072
    %v7160 = vadd.f32 %v6788, %v7074
    %v7161 = vadd.f32 %v6791, %v7077
    %v7162 = vadd.f32 %v6793, %v7079
    %v7163 = vadd.f32 %v6796, %v7082
    %v7164 = vadd.f32 %v6798, %v7084
    %v7165 = vadd.f32 %v6801, %v7087
    %v7166 = vadd.f32 %v6803, %v7089
    %v7167 = vadd.f32 %v6806, %v7092
    %v7168 = vadd.f32 %v6808, %v7094
    %v7169 = vadd.f32 %v6811, %v7097
    %v7170 = vadd.f32 %v6813, %v7099
    %v7171 = vadd.f32 %v6816, %v7102
    %v7172 = vadd.f32 %v6818, %v7104
    %v7173 = vadd.f32 %v6821, %v7107
    %v7174 = vadd.f32 %v6823, %v7109
    %s7175 = scalar_lea.vmem [#allocation3], 64
    %v7176 = vld [vmem:[%s7175] sm:$0xf]
    %v7177 = vld [vmem:[%s7175 + $0x4] sm:$0xf]
    %v7178 = vld [vmem:[%s7175 + $0x8] sm:$0xf]
    %v7179 = vld [vmem:[%s7175 + $0xc] sm:$0xf]
    %v7180 = vld [vmem:[%s7175 + $0x10] sm:$0xf]
    %v7181 = vld [vmem:[%s7175 + $0x14] sm:$0xf]
    %v7182 = vld [vmem:[%s7175 + $0x18] sm:$0xf]
    %v7183 = vld [vmem:[%s7175 + $0x1c] sm:$0xf]
    %v7184 = vld [vmem:[%s7175 + $0x20] sm:$0xf]
    %v7185 = vld [vmem:[%s7175 + $0x24] sm:$0xf]
    %v7186 = vld [vmem:[%s7175 + $0x28] sm:$0xf]
    %v7187 = vld [vmem:[%s7175 + $0x2c] sm:$0xf]
    %v7188 = vld [vmem:[%s7175 + $0x30] sm:$0xf]
    %v7189 = vld [vmem:[%s7175 + $0x34] sm:$0xf]
    %v7190 = vld [vmem:[%s7175 + $0x38] sm:$0xf]
    %v7191 = vld [vmem:[%s7175 + $0x3c] sm:$0xf]
    %v7256 = vunpack.c.l.b16 %v5364
    %v7257 = vunpack.c.l.b16 %v5365
    %v7258 = vunpack.c.l.b16 %v5367
    %v7259 = vunpack.c.l.b16 %v5368
    %v7260 = vunpack.c.l.b16 %v5370
    %v7261 = vunpack.c.l.b16 %v5371
    %v7262 = vunpack.c.l.b16 %v5373
    %v7263 = vunpack.c.l.b16 %v5374
    %v7264 = vunpack.c.l.b16 %v5376
    %v7265 = vunpack.c.l.b16 %v5377
    %v7266 = vunpack.c.l.b16 %v5379
    %v7267 = vunpack.c.l.b16 %v5380
    %v7268 = vunpack.c.l.b16 %v5382
    %v7269 = vunpack.c.l.b16 %v5383
    %v7270 = vunpack.c.l.b16 %v5385
    %v7271 = vunpack.c.l.b16 %v5386
    %v7272 = vunpack.c.l.b16 %v5388
    %v7273 = vunpack.c.l.b16 %v5389
    %v7274 = vunpack.c.l.b16 %v5391
    %v7275 = vunpack.c.l.b16 %v5392
    %v7276 = vunpack.c.l.b16 %v5394
    %v7277 = vunpack.c.l.b16 %v5395
    %v7278 = vunpack.c.l.b16 %v5397
    %v7279 = vunpack.c.l.b16 %v5398
    %v7280 = vunpack.c.l.b16 %v5400
    %v7281 = vunpack.c.l.b16 %v5401
    %v7282 = vunpack.c.l.b16 %v5403
    %v7283 = vunpack.c.l.b16 %v5404
    %v7284 = vunpack.c.l.b16 %v5406
    %v7285 = vunpack.c.l.b16 %v5407
    %v7286 = vunpack.c.l.b16 %v5409
    %v7287 = vunpack.c.l.b16 %v5410
    %v7288 = vunpack.c.l.b16 %v5418
    %v7289 = vunpack.c.l.b16 %v5419
    %v7290 = vunpack.c.l.b16 %v5421
    %v7291 = vunpack.c.l.b16 %v5422
    %v7292 = vunpack.c.l.b16 %v5424
    %v7293 = vunpack.c.l.b16 %v5425
    %v7294 = vunpack.c.l.b16 %v5427
    %v7295 = vunpack.c.l.b16 %v5428
    %v7296 = vunpack.c.l.b16 %v5430
    %v7297 = vunpack.c.l.b16 %v5431
    %v7298 = vunpack.c.l.b16 %v5433
    %v7299 = vunpack.c.l.b16 %v5434
    %v7300 = vunpack.c.l.b16 %v5436
    %v7301 = vunpack.c.l.b16 %v5437
    %v7302 = vunpack.c.l.b16 %v5439
    %v7303 = vunpack.c.l.b16 %v5440
    %v7304 = vunpack.c.l.b16 %v5442
    %v7305 = vunpack.c.l.b16 %v5443
    %v7306 = vunpack.c.l.b16 %v5445
    %v7307 = vunpack.c.l.b16 %v5446
    %v7308 = vunpack.c.l.b16 %v5448
    %v7309 = vunpack.c.l.b16 %v5449
    %v7310 = vunpack.c.l.b16 %v5451
    %v7311 = vunpack.c.l.b16 %v5452
    %v7312 = vunpack.c.l.b16 %v5454
    %v7313 = vunpack.c.l.b16 %v5455
    %v7314 = vunpack.c.l.b16 %v5457
    %v7315 = vunpack.c.l.b16 %v5458
    %v7316 = vunpack.c.l.b16 %v5460
    %v7317 = vunpack.c.l.b16 %v5461
    %v7318 = vunpack.c.l.b16 %v5463
    %v7319 = vunpack.c.l.b16 %v5464
    %v7320 = vpack.c.b16 %v7257, %v7256
    %v7321 = vpack.c.b16 %v7259, %v7258
    %v7322 = vpack.c.b16 %v7261, %v7260
    %v7323 = vpack.c.b16 %v7263, %v7262
    %v7324 = vpack.c.b16 %v7265, %v7264
    %v7325 = vpack.c.b16 %v7267, %v7266
    %v7326 = vpack.c.b16 %v7269, %v7268
    %v7327 = vpack.c.b16 %v7271, %v7270
    %v7328 = vpack.c.b16 %v7273, %v7272
    %v7329 = vpack.c.b16 %v7275, %v7274
    %v7330 = vpack.c.b16 %v7277, %v7276
    %v7331 = vpack.c.b16 %v7279, %v7278
    %v7332 = vpack.c.b16 %v7281, %v7280
    %v7333 = vpack.c.b16 %v7283, %v7282
    %v7334 = vpack.c.b16 %v7285, %v7284
    %v7335 = vpack.c.b16 %v7287, %v7286
    %v7336 = vpack.c.b16 %v7289, %v7288
    %v7337 = vpack.c.b16 %v7291, %v7290
    %v7338 = vpack.c.b16 %v7293, %v7292
    %v7339 = vpack.c.b16 %v7295, %v7294
    %v7340 = vpack.c.b16 %v7297, %v7296
    %v7341 = vpack.c.b16 %v7299, %v7298
    %v7342 = vpack.c.b16 %v7301, %v7300
    %v7343 = vpack.c.b16 %v7303, %v7302
    %v7344 = vpack.c.b16 %v7305, %v7304
    %v7345 = vpack.c.b16 %v7307, %v7306
    %v7346 = vpack.c.b16 %v7309, %v7308
    %v7347 = vpack.c.b16 %v7311, %v7310
    %v7348 = vpack.c.b16 %v7313, %v7312
    %v7349 = vpack.c.b16 %v7315, %v7314
    %v7350 = vpack.c.b16 %v7317, %v7316
    %v7351 = vpack.c.b16 %v7319, %v7318
    %v7400 = vunpack.c.l.b16 %v7176
    %v7401 = vunpack.c.l.b16 %v7177
    %v7402 = vunpack.c.l.b16 %v7178
    %v7403 = vunpack.c.l.b16 %v7179
    %v7404 = vunpack.c.l.b16 %v7180
    %v7405 = vunpack.c.l.b16 %v7181
    %v7406 = vunpack.c.l.b16 %v7182
    %v7407 = vunpack.c.l.b16 %v7183
    %v7408 = vunpack.c.l.b16 %v7184
    %v7409 = vunpack.c.l.b16 %v7185
    %v7410 = vunpack.c.l.b16 %v7186
    %v7411 = vunpack.c.l.b16 %v7187
    %v7412 = vunpack.c.l.b16 %v7188
    %v7413 = vunpack.c.l.b16 %v7189
    %v7414 = vunpack.c.l.b16 %v7190
    %v7415 = vunpack.c.l.b16 %v7191
    %v7416 = vpack.c.b16 %v7401, %v7400
    %v7417 = vpack.c.b16 %v7403, %v7402
    %v7418 = vpack.c.b16 %v7405, %v7404
    %v7419 = vpack.c.b16 %v7407, %v7406
    %v7420 = vpack.c.b16 %v7409, %v7408
    %v7421 = vpack.c.b16 %v7411, %v7410
    %v7422 = vpack.c.b16 %v7413, %v7412
    %v7423 = vpack.c.b16 %v7415, %v7414
    %7432 = vmatpush.bf16.msra.mxu0 %v7423
    %7433 = vmatpush.bf16.msra.mxu0 %v7422
    %7434 = vmatpush.bf16.msra.mxu0 %v7421
    %7435 = vmatpush.bf16.msra.mxu0 %v7420
    %7436 = vmatpush.bf16.msra.mxu0 %v7419
    %7437 = vmatpush.bf16.msra.mxu0 %v7418
    %7438 = vmatpush.bf16.msra.mxu0 %v7417
    %7439 = vmatpush.bf16.msra.mxu0 %v7416
    %7440 = vmatmul.bf16.gmra.mxu0 %v7320
    %v7441 = vpop.f32.mrf.mxu0
    %v7442 = vadd.f32 0.0, %v7441
    %v7443 = vpop.f32.mrf.mxu0
    %v7444 = vadd.f32 0.0, %v7443
    %7445 = vmatmul.bf16.gmra.mxu0 %v7321
    %v7446 = vpop.f32.mrf.mxu0
    %v7447 = vadd.f32 0.0, %v7446
    %v7448 = vpop.f32.mrf.mxu0
    %v7449 = vadd.f32 0.0, %v7448
    %7450 = vmatmul.bf16.gmra.mxu0 %v7322
    %v7451 = vpop.f32.mrf.mxu0
    %v7452 = vadd.f32 0.0, %v7451
    %v7453 = vpop.f32.mrf.mxu0
    %v7454 = vadd.f32 0.0, %v7453
    %7455 = vmatmul.bf16.gmra.mxu0 %v7323
    %v7456 = vpop.f32.mrf.mxu0
    %v7457 = vadd.f32 0.0, %v7456
    %v7458 = vpop.f32.mrf.mxu0
    %v7459 = vadd.f32 0.0, %v7458
    %7460 = vmatmul.bf16.gmra.mxu0 %v7324
    %v7461 = vpop.f32.mrf.mxu0
    %v7462 = vadd.f32 0.0, %v7461
    %v7463 = vpop.f32.mrf.mxu0
    %v7464 = vadd.f32 0.0, %v7463
    %7465 = vmatmul.bf16.gmra.mxu0 %v7325
    %v7466 = vpop.f32.mrf.mxu0
    %v7467 = vadd.f32 0.0, %v7466
    %v7468 = vpop.f32.mrf.mxu0
    %v7469 = vadd.f32 0.0, %v7468
    %7470 = vmatmul.bf16.gmra.mxu0 %v7326
    %v7471 = vpop.f32.mrf.mxu0
    %v7472 = vadd.f32 0.0, %v7471
    %v7473 = vpop.f32.mrf.mxu0
    %v7474 = vadd.f32 0.0, %v7473
    %7475 = vmatmul.bf16.gmra.mxu0 %v7327
    %v7476 = vpop.f32.mrf.mxu0
    %v7477 = vadd.f32 0.0, %v7476
    %v7478 = vpop.f32.mrf.mxu0
    %v7479 = vadd.f32 0.0, %v7478
    %7480 = vmatmul.bf16.gmra.mxu0 %v7328
    %v7481 = vpop.f32.mrf.mxu0
    %v7482 = vadd.f32 0.0, %v7481
    %v7483 = vpop.f32.mrf.mxu0
    %v7484 = vadd.f32 0.0, %v7483
    %7485 = vmatmul.bf16.gmra.mxu0 %v7329
    %v7486 = vpop.f32.mrf.mxu0
    %v7487 = vadd.f32 0.0, %v7486
    %v7488 = vpop.f32.mrf.mxu0
    %v7489 = vadd.f32 0.0, %v7488
    %7490 = vmatmul.bf16.gmra.mxu0 %v7330
    %v7491 = vpop.f32.mrf.mxu0
    %v7492 = vadd.f32 0.0, %v7491
    %v7493 = vpop.f32.mrf.mxu0
    %v7494 = vadd.f32 0.0, %v7493
    %7495 = vmatmul.bf16.gmra.mxu0 %v7331
    %v7496 = vpop.f32.mrf.mxu0
    %v7497 = vadd.f32 0.0, %v7496
    %v7498 = vpop.f32.mrf.mxu0
    %v7499 = vadd.f32 0.0, %v7498
    %7500 = vmatmul.bf16.gmra.mxu0 %v7332
    %v7501 = vpop.f32.mrf.mxu0
    %v7502 = vadd.f32 0.0, %v7501
    %v7503 = vpop.f32.mrf.mxu0
    %v7504 = vadd.f32 0.0, %v7503
    %7505 = vmatmul.bf16.gmra.mxu0 %v7333
    %v7506 = vpop.f32.mrf.mxu0
    %v7507 = vadd.f32 0.0, %v7506
    %v7508 = vpop.f32.mrf.mxu0
    %v7509 = vadd.f32 0.0, %v7508
    %7510 = vmatmul.bf16.gmra.mxu0 %v7334
    %v7511 = vpop.f32.mrf.mxu0
    %v7512 = vadd.f32 0.0, %v7511
    %v7513 = vpop.f32.mrf.mxu0
    %v7514 = vadd.f32 0.0, %v7513
    %7515 = vmatmul.bf16.gmra.mxu0 %v7335
    %v7516 = vpop.f32.mrf.mxu0
    %v7517 = vadd.f32 0.0, %v7516
    %v7518 = vpop.f32.mrf.mxu0
    %v7519 = vadd.f32 0.0, %v7518
    %7520 = vmatmul.bf16.gmra.mxu0 %v7336
    %v7521 = vpop.f32.mrf.mxu0
    %v7522 = vadd.f32 0.0, %v7521
    %v7523 = vpop.f32.mrf.mxu0
    %v7524 = vadd.f32 0.0, %v7523
    %7525 = vmatmul.bf16.gmra.mxu0 %v7337
    %v7526 = vpop.f32.mrf.mxu0
    %v7527 = vadd.f32 0.0, %v7526
    %v7528 = vpop.f32.mrf.mxu0
    %v7529 = vadd.f32 0.0, %v7528
    %7530 = vmatmul.bf16.gmra.mxu0 %v7338
    %v7531 = vpop.f32.mrf.mxu0
    %v7532 = vadd.f32 0.0, %v7531
    %v7533 = vpop.f32.mrf.mxu0
    %v7534 = vadd.f32 0.0, %v7533
    %7535 = vmatmul.bf16.gmra.mxu0 %v7339
    %v7536 = vpop.f32.mrf.mxu0
    %v7537 = vadd.f32 0.0, %v7536
    %v7538 = vpop.f32.mrf.mxu0
    %v7539 = vadd.f32 0.0, %v7538
    %7540 = vmatmul.bf16.gmra.mxu0 %v7340
    %v7541 = vpop.f32.mrf.mxu0
    %v7542 = vadd.f32 0.0, %v7541
    %v7543 = vpop.f32.mrf.mxu0
    %v7544 = vadd.f32 0.0, %v7543
    %7545 = vmatmul.bf16.gmra.mxu0 %v7341
    %v7546 = vpop.f32.mrf.mxu0
    %v7547 = vadd.f32 0.0, %v7546
    %v7548 = vpop.f32.mrf.mxu0
    %v7549 = vadd.f32 0.0, %v7548
    %7550 = vmatmul.bf16.gmra.mxu0 %v7342
    %v7551 = vpop.f32.mrf.mxu0
    %v7552 = vadd.f32 0.0, %v7551
    %v7553 = vpop.f32.mrf.mxu0
    %v7554 = vadd.f32 0.0, %v7553
    %7555 = vmatmul.bf16.gmra.mxu0 %v7343
    %v7556 = vpop.f32.mrf.mxu0
    %v7557 = vadd.f32 0.0, %v7556
    %v7558 = vpop.f32.mrf.mxu0
    %v7559 = vadd.f32 0.0, %v7558
    %7560 = vmatmul.bf16.gmra.mxu0 %v7344
    %v7561 = vpop.f32.mrf.mxu0
    %v7562 = vadd.f32 0.0, %v7561
    %v7563 = vpop.f32.mrf.mxu0
    %v7564 = vadd.f32 0.0, %v7563
    %7565 = vmatmul.bf16.gmra.mxu0 %v7345
    %v7566 = vpop.f32.mrf.mxu0
    %v7567 = vadd.f32 0.0, %v7566
    %v7568 = vpop.f32.mrf.mxu0
    %v7569 = vadd.f32 0.0, %v7568
    %7570 = vmatmul.bf16.gmra.mxu0 %v7346
    %v7571 = vpop.f32.mrf.mxu0
    %v7572 = vadd.f32 0.0, %v7571
    %v7573 = vpop.f32.mrf.mxu0
    %v7574 = vadd.f32 0.0, %v7573
    %7575 = vmatmul.bf16.gmra.mxu0 %v7347
    %v7576 = vpop.f32.mrf.mxu0
    %v7577 = vadd.f32 0.0, %v7576
    %v7578 = vpop.f32.mrf.mxu0
    %v7579 = vadd.f32 0.0, %v7578
    %7580 = vmatmul.bf16.gmra.mxu0 %v7348
    %v7581 = vpop.f32.mrf.mxu0
    %v7582 = vadd.f32 0.0, %v7581
    %v7583 = vpop.f32.mrf.mxu0
    %v7584 = vadd.f32 0.0, %v7583
    %7585 = vmatmul.bf16.gmra.mxu0 %v7349
    %v7586 = vpop.f32.mrf.mxu0
    %v7587 = vadd.f32 0.0, %v7586
    %v7588 = vpop.f32.mrf.mxu0
    %v7589 = vadd.f32 0.0, %v7588
    %7590 = vmatmul.bf16.gmra.mxu0 %v7350
    %v7591 = vpop.f32.mrf.mxu0
    %v7592 = vadd.f32 0.0, %v7591
    %v7593 = vpop.f32.mrf.mxu0
    %v7594 = vadd.f32 0.0, %v7593
    %7595 = vmatmul.bf16.gmra.mxu0 %v7351
    %v7596 = vpop.f32.mrf.mxu0
    %v7597 = vadd.f32 0.0, %v7596
    %v7598 = vpop.f32.mrf.mxu0
    %v7599 = vadd.f32 0.0, %v7598
    %7600 = vdwg.mxu0
    %v7601 = vadd.f32 %v7111, %v7442
    %v7602 = vadd.f32 %v7112, %v7444
    %v7603 = vadd.f32 %v7113, %v7447
    %v7604 = vadd.f32 %v7114, %v7449
    %v7605 = vadd.f32 %v7115, %v7452
    %v7606 = vadd.f32 %v7116, %v7454
    %v7607 = vadd.f32 %v7117, %v7457
    %v7608 = vadd.f32 %v7118, %v7459
    %v7609 = vadd.f32 %v7119, %v7462
    %v7610 = vadd.f32 %v7120, %v7464
    %v7611 = vadd.f32 %v7121, %v7467
    %v7612 = vadd.f32 %v7122, %v7469
    %v7613 = vadd.f32 %v7123, %v7472
    %v7614 = vadd.f32 %v7124, %v7474
    %v7615 = vadd.f32 %v7125, %v7477
    %v7616 = vadd.f32 %v7126, %v7479
    %v7617 = vadd.f32 %v7127, %v7482
    %v7618 = vadd.f32 %v7128, %v7484
    %v7619 = vadd.f32 %v7129, %v7487
    %v7620 = vadd.f32 %v7130, %v7489
    %v7621 = vadd.f32 %v7131, %v7492
    %v7622 = vadd.f32 %v7132, %v7494
    %v7623 = vadd.f32 %v7133, %v7497
    %v7624 = vadd.f32 %v7134, %v7499
    %v7625 = vadd.f32 %v7135, %v7502
    %v7626 = vadd.f32 %v7136, %v7504
    %v7627 = vadd.f32 %v7137, %v7507
    %v7628 = vadd.f32 %v7138, %v7509
    %v7629 = vadd.f32 %v7139, %v7512
    %v7630 = vadd.f32 %v7140, %v7514
    %v7631 = vadd.f32 %v7141, %v7517
    %v7632 = vadd.f32 %v7142, %v7519
    %v7633 = vadd.f32 %v7143, %v7522
    %v7634 = vadd.f32 %v7144, %v7524
    %v7635 = vadd.f32 %v7145, %v7527
    %v7636 = vadd.f32 %v7146, %v7529
    %v7637 = vadd.f32 %v7147, %v7532
    %v7638 = vadd.f32 %v7148, %v7534
    %v7639 = vadd.f32 %v7149, %v7537
    %v7640 = vadd.f32 %v7150, %v7539
    %v7641 = vadd.f32 %v7151, %v7542
    %v7642 = vadd.f32 %v7152, %v7544
    %v7643 = vadd.f32 %v7153, %v7547
    %v7644 = vadd.f32 %v7154, %v7549
    %v7645 = vadd.f32 %v7155, %v7552
    %v7646 = vadd.f32 %v7156, %v7554
    %v7647 = vadd.f32 %v7157, %v7557
    %v7648 = vadd.f32 %v7158, %v7559
    %v7649 = vadd.f32 %v7159, %v7562
    %v7650 = vadd.f32 %v7160, %v7564
    %v7651 = vadd.f32 %v7161, %v7567
    %v7652 = vadd.f32 %v7162, %v7569
    %v7653 = vadd.f32 %v7163, %v7572
    %v7654 = vadd.f32 %v7164, %v7574
    %v7655 = vadd.f32 %v7165, %v7577
    %v7656 = vadd.f32 %v7166, %v7579
    %v7657 = vadd.f32 %v7167, %v7582
    %v7658 = vadd.f32 %v7168, %v7584
    %v7659 = vadd.f32 %v7169, %v7587
    %v7660 = vadd.f32 %v7170, %v7589
    %v7661 = vadd.f32 %v7171, %v7592
    %v7662 = vadd.f32 %v7172, %v7594
    %v7663 = vadd.f32 %v7173, %v7597
    %v7664 = vadd.f32 %v7174, %v7599
    %s7665 = scalar_lea.vmem [#allocation3], 256
    %v7666 = vld [vmem:[%s7665] sm:$0xf]
    %v7667 = vld [vmem:[%s7665 + $0x4] sm:$0xf]
    %v7668 = vld [vmem:[%s7665 + $0x8] sm:$0xf]
    %v7669 = vld [vmem:[%s7665 + $0xc] sm:$0xf]
    %v7670 = vld [vmem:[%s7665 + $0x10] sm:$0xf]
    %v7671 = vld [vmem:[%s7665 + $0x14] sm:$0xf]
    %v7672 = vld [vmem:[%s7665 + $0x18] sm:$0xf]
    %v7673 = vld [vmem:[%s7665 + $0x1c] sm:$0xf]
    %v7674 = vld [vmem:[%s7665 + $0x20] sm:$0xf]
    %v7675 = vld [vmem:[%s7665 + $0x24] sm:$0xf]
    %v7676 = vld [vmem:[%s7665 + $0x28] sm:$0xf]
    %v7677 = vld [vmem:[%s7665 + $0x2c] sm:$0xf]
    %v7678 = vld [vmem:[%s7665 + $0x30] sm:$0xf]
    %v7679 = vld [vmem:[%s7665 + $0x34] sm:$0xf]
    %v7680 = vld [vmem:[%s7665 + $0x38] sm:$0xf]
    %v7681 = vld [vmem:[%s7665 + $0x3c] sm:$0xf]
    %v7686 = vunpack.c.l.b16 %v5412
    %v7687 = vunpack.c.l.b16 %v5413
    %v7688 = vunpack.c.l.b16 %v5466
    %v7689 = vunpack.c.l.b16 %v5467
    %v7690 = vpack.c.b16 %v7687, %v7686
    %v7691 = vpack.c.b16 %v7689, %v7688
    %v7710 = vunpack.c.l.b16 %v7666
    %v7711 = vunpack.c.l.b16 %v7667
    %v7712 = vunpack.c.l.b16 %v7668
    %v7713 = vunpack.c.l.b16 %v7669
    %v7714 = vunpack.c.l.b16 %v7670
    %v7715 = vunpack.c.l.b16 %v7671
    %v7716 = vunpack.c.l.b16 %v7672
    %v7717 = vunpack.c.l.b16 %v7673
    %v7718 = vunpack.c.l.b16 %v7674
    %v7719 = vunpack.c.l.b16 %v7675
    %v7720 = vunpack.c.l.b16 %v7676
    %v7721 = vunpack.c.l.b16 %v7677
    %v7722 = vunpack.c.l.b16 %v7678
    %v7723 = vunpack.c.l.b16 %v7679
    %v7724 = vunpack.c.l.b16 %v7680
    %v7725 = vunpack.c.l.b16 %v7681
    %v7726 = vpack.c.b16 %v7711, %v7710
    %v7727 = vpack.c.b16 %v7713, %v7712
    %v7728 = vpack.c.b16 %v7715, %v7714
    %v7729 = vpack.c.b16 %v7717, %v7716
    %v7730 = vpack.c.b16 %v7719, %v7718
    %v7731 = vpack.c.b16 %v7721, %v7720
    %v7732 = vpack.c.b16 %v7723, %v7722
    %v7733 = vpack.c.b16 %v7725, %v7724
    %7742 = vmatpush.bf16.msra.mxu0 %v7733
    %7743 = vmatpush.bf16.msra.mxu0 %v7732
    %7744 = vmatpush.bf16.msra.mxu0 %v7731
    %7745 = vmatpush.bf16.msra.mxu0 %v7730
    %7746 = vmatpush.bf16.msra.mxu0 %v7729
    %7747 = vmatpush.bf16.msra.mxu0 %v7728
    %7748 = vmatpush.bf16.msra.mxu0 %v7727
    %7749 = vmatpush.bf16.msra.mxu0 %v7726
    %7750 = vmatmul.bf16.gmra.mxu0 %v7321
    %v7751 = vpop.f32.mrf.mxu0
    %v7752 = vadd.f32 0.0, %v7751
    %v7753 = vpop.f32.mrf.mxu0
    %v7754 = vadd.f32 0.0, %v7753
    %7755 = vmatmul.bf16.gmra.mxu0 %v7322
    %v7756 = vpop.f32.mrf.mxu0
    %v7757 = vadd.f32 0.0, %v7756
    %v7758 = vpop.f32.mrf.mxu0
    %v7759 = vadd.f32 0.0, %v7758
    %7760 = vmatmul.bf16.gmra.mxu0 %v7323
    %v7761 = vpop.f32.mrf.mxu0
    %v7762 = vadd.f32 0.0, %v7761
    %v7763 = vpop.f32.mrf.mxu0
    %v7764 = vadd.f32 0.0, %v7763
    %7765 = vmatmul.bf16.gmra.mxu0 %v7324
    %v7766 = vpop.f32.mrf.mxu0
    %v7767 = vadd.f32 0.0, %v7766
    %v7768 = vpop.f32.mrf.mxu0
    %v7769 = vadd.f32 0.0, %v7768
    %7770 = vmatmul.bf16.gmra.mxu0 %v7325
    %v7771 = vpop.f32.mrf.mxu0
    %v7772 = vadd.f32 0.0, %v7771
    %v7773 = vpop.f32.mrf.mxu0
    %v7774 = vadd.f32 0.0, %v7773
    %7775 = vmatmul.bf16.gmra.mxu0 %v7326
    %v7776 = vpop.f32.mrf.mxu0
    %v7777 = vadd.f32 0.0, %v7776
    %v7778 = vpop.f32.mrf.mxu0
    %v7779 = vadd.f32 0.0, %v7778
    %7780 = vmatmul.bf16.gmra.mxu0 %v7327
    %v7781 = vpop.f32.mrf.mxu0
    %v7782 = vadd.f32 0.0, %v7781
    %v7783 = vpop.f32.mrf.mxu0
    %v7784 = vadd.f32 0.0, %v7783
    %7785 = vmatmul.bf16.gmra.mxu0 %v7328
    %v7786 = vpop.f32.mrf.mxu0
    %v7787 = vadd.f32 0.0, %v7786
    %v7788 = vpop.f32.mrf.mxu0
    %v7789 = vadd.f32 0.0, %v7788
    %7790 = vmatmul.bf16.gmra.mxu0 %v7329
    %v7791 = vpop.f32.mrf.mxu0
    %v7792 = vadd.f32 0.0, %v7791
    %v7793 = vpop.f32.mrf.mxu0
    %v7794 = vadd.f32 0.0, %v7793
    %7795 = vmatmul.bf16.gmra.mxu0 %v7330
    %v7796 = vpop.f32.mrf.mxu0
    %v7797 = vadd.f32 0.0, %v7796
    %v7798 = vpop.f32.mrf.mxu0
    %v7799 = vadd.f32 0.0, %v7798
    %7800 = vmatmul.bf16.gmra.mxu0 %v7331
    %v7801 = vpop.f32.mrf.mxu0
    %v7802 = vadd.f32 0.0, %v7801
    %v7803 = vpop.f32.mrf.mxu0
    %v7804 = vadd.f32 0.0, %v7803
    %7805 = vmatmul.bf16.gmra.mxu0 %v7332
    %v7806 = vpop.f32.mrf.mxu0
    %v7807 = vadd.f32 0.0, %v7806
    %v7808 = vpop.f32.mrf.mxu0
    %v7809 = vadd.f32 0.0, %v7808
    %7810 = vmatmul.bf16.gmra.mxu0 %v7333
    %v7811 = vpop.f32.mrf.mxu0
    %v7812 = vadd.f32 0.0, %v7811
    %v7813 = vpop.f32.mrf.mxu0
    %v7814 = vadd.f32 0.0, %v7813
    %7815 = vmatmul.bf16.gmra.mxu0 %v7334
    %v7816 = vpop.f32.mrf.mxu0
    %v7817 = vadd.f32 0.0, %v7816
    %v7818 = vpop.f32.mrf.mxu0
    %v7819 = vadd.f32 0.0, %v7818
    %7820 = vmatmul.bf16.gmra.mxu0 %v7335
    %v7821 = vpop.f32.mrf.mxu0
    %v7822 = vadd.f32 0.0, %v7821
    %v7823 = vpop.f32.mrf.mxu0
    %v7824 = vadd.f32 0.0, %v7823
    %7825 = vmatmul.bf16.gmra.mxu0 %v7690
    %v7826 = vpop.f32.mrf.mxu0
    %v7827 = vadd.f32 0.0, %v7826
    %v7828 = vpop.f32.mrf.mxu0
    %v7829 = vadd.f32 0.0, %v7828
    %7830 = vmatmul.bf16.gmra.mxu0 %v7337
    %v7831 = vpop.f32.mrf.mxu0
    %v7832 = vadd.f32 0.0, %v7831
    %v7833 = vpop.f32.mrf.mxu0
    %v7834 = vadd.f32 0.0, %v7833
    %7835 = vmatmul.bf16.gmra.mxu0 %v7338
    %v7836 = vpop.f32.mrf.mxu0
    %v7837 = vadd.f32 0.0, %v7836
    %v7838 = vpop.f32.mrf.mxu0
    %v7839 = vadd.f32 0.0, %v7838
    %7840 = vmatmul.bf16.gmra.mxu0 %v7339
    %v7841 = vpop.f32.mrf.mxu0
    %v7842 = vadd.f32 0.0, %v7841
    %v7843 = vpop.f32.mrf.mxu0
    %v7844 = vadd.f32 0.0, %v7843
    %7845 = vmatmul.bf16.gmra.mxu0 %v7340
    %v7846 = vpop.f32.mrf.mxu0
    %v7847 = vadd.f32 0.0, %v7846
    %v7848 = vpop.f32.mrf.mxu0
    %v7849 = vadd.f32 0.0, %v7848
    %7850 = vmatmul.bf16.gmra.mxu0 %v7341
    %v7851 = vpop.f32.mrf.mxu0
    %v7852 = vadd.f32 0.0, %v7851
    %v7853 = vpop.f32.mrf.mxu0
    %v7854 = vadd.f32 0.0, %v7853
    %7855 = vmatmul.bf16.gmra.mxu0 %v7342
    %v7856 = vpop.f32.mrf.mxu0
    %v7857 = vadd.f32 0.0, %v7856
    %v7858 = vpop.f32.mrf.mxu0
    %v7859 = vadd.f32 0.0, %v7858
    %7860 = vmatmul.bf16.gmra.mxu0 %v7343
    %v7861 = vpop.f32.mrf.mxu0
    %v7862 = vadd.f32 0.0, %v7861
    %v7863 = vpop.f32.mrf.mxu0
    %v7864 = vadd.f32 0.0, %v7863
    %7865 = vmatmul.bf16.gmra.mxu0 %v7344
    %v7866 = vpop.f32.mrf.mxu0
    %v7867 = vadd.f32 0.0, %v7866
    %v7868 = vpop.f32.mrf.mxu0
    %v7869 = vadd.f32 0.0, %v7868
    %7870 = vmatmul.bf16.gmra.mxu0 %v7345
    %v7871 = vpop.f32.mrf.mxu0
    %v7872 = vadd.f32 0.0, %v7871
    %v7873 = vpop.f32.mrf.mxu0
    %v7874 = vadd.f32 0.0, %v7873
    %7875 = vmatmul.bf16.gmra.mxu0 %v7346
    %v7876 = vpop.f32.mrf.mxu0
    %v7877 = vadd.f32 0.0, %v7876
    %v7878 = vpop.f32.mrf.mxu0
    %v7879 = vadd.f32 0.0, %v7878
    %7880 = vmatmul.bf16.gmra.mxu0 %v7347
    %v7881 = vpop.f32.mrf.mxu0
    %v7882 = vadd.f32 0.0, %v7881
    %v7883 = vpop.f32.mrf.mxu0
    %v7884 = vadd.f32 0.0, %v7883
    %7885 = vmatmul.bf16.gmra.mxu0 %v7348
    %v7886 = vpop.f32.mrf.mxu0
    %v7887 = vadd.f32 0.0, %v7886
    %v7888 = vpop.f32.mrf.mxu0
    %v7889 = vadd.f32 0.0, %v7888
    %7890 = vmatmul.bf16.gmra.mxu0 %v7349
    %v7891 = vpop.f32.mrf.mxu0
    %v7892 = vadd.f32 0.0, %v7891
    %v7893 = vpop.f32.mrf.mxu0
    %v7894 = vadd.f32 0.0, %v7893
    %7895 = vmatmul.bf16.gmra.mxu0 %v7350
    %v7896 = vpop.f32.mrf.mxu0
    %v7897 = vadd.f32 0.0, %v7896
    %v7898 = vpop.f32.mrf.mxu0
    %v7899 = vadd.f32 0.0, %v7898
    %7900 = vmatmul.bf16.gmra.mxu0 %v7351
    %v7901 = vpop.f32.mrf.mxu0
    %v7902 = vadd.f32 0.0, %v7901
    %v7903 = vpop.f32.mrf.mxu0
    %v7904 = vadd.f32 0.0, %v7903
    %7905 = vmatmul.bf16.gmra.mxu0 %v7691
    %v7906 = vpop.f32.mrf.mxu0
    %v7907 = vadd.f32 0.0, %v7906
    %v7908 = vpop.f32.mrf.mxu0
    %v7909 = vadd.f32 0.0, %v7908
    %7910 = vdwg.mxu0
    %v7911 = vadd.f32 %v7601, %v7752
    %v7912 = vadd.f32 %v7602, %v7754
    %v7913 = vadd.f32 %v7603, %v7757
    %v7914 = vadd.f32 %v7604, %v7759
    %v7915 = vadd.f32 %v7605, %v7762
    %v7916 = vadd.f32 %v7606, %v7764
    %v7917 = vadd.f32 %v7607, %v7767
    %v7918 = vadd.f32 %v7608, %v7769
    %v7919 = vadd.f32 %v7609, %v7772
    %v7920 = vadd.f32 %v7610, %v7774
    %v7921 = vadd.f32 %v7611, %v7777
    %v7922 = vadd.f32 %v7612, %v7779
    %v7923 = vadd.f32 %v7613, %v7782
    %v7924 = vadd.f32 %v7614, %v7784
    %v7925 = vadd.f32 %v7615, %v7787
    %v7926 = vadd.f32 %v7616, %v7789
    %v7927 = vadd.f32 %v7617, %v7792
    %v7928 = vadd.f32 %v7618, %v7794
    %v7929 = vadd.f32 %v7619, %v7797
    %v7930 = vadd.f32 %v7620, %v7799
    %v7931 = vadd.f32 %v7621, %v7802
    %v7932 = vadd.f32 %v7622, %v7804
    %v7933 = vadd.f32 %v7623, %v7807
    %v7934 = vadd.f32 %v7624, %v7809
    %v7935 = vadd.f32 %v7625, %v7812
    %v7936 = vadd.f32 %v7626, %v7814
    %v7937 = vadd.f32 %v7627, %v7817
    %v7938 = vadd.f32 %v7628, %v7819
    %v7939 = vadd.f32 %v7629, %v7822
    %v7940 = vadd.f32 %v7630, %v7824
    %v7941 = vadd.f32 %v7631, %v7827
    %v7942 = vadd.f32 %v7632, %v7829
    %v7943 = vadd.f32 %v7633, %v7832
    %v7944 = vadd.f32 %v7634, %v7834
    %v7945 = vadd.f32 %v7635, %v7837
    %v7946 = vadd.f32 %v7636, %v7839
    %v7947 = vadd.f32 %v7637, %v7842
    %v7948 = vadd.f32 %v7638, %v7844
    %v7949 = vadd.f32 %v7639, %v7847
    %v7950 = vadd.f32 %v7640, %v7849
    %v7951 = vadd.f32 %v7641, %v7852
    %v7952 = vadd.f32 %v7642, %v7854
    %v7953 = vadd.f32 %v7643, %v7857
    %v7954 = vadd.f32 %v7644, %v7859
    %v7955 = vadd.f32 %v7645, %v7862
    %v7956 = vadd.f32 %v7646, %v7864
    %v7957 = vadd.f32 %v7647, %v7867
    %v7958 = vadd.f32 %v7648, %v7869
    %v7959 = vadd.f32 %v7649, %v7872
    %v7960 = vadd.f32 %v7650, %v7874
    %v7961 = vadd.f32 %v7651, %v7877
    %v7962 = vadd.f32 %v7652, %v7879
    %v7963 = vadd.f32 %v7653, %v7882
    %v7964 = vadd.f32 %v7654, %v7884
    %v7965 = vadd.f32 %v7655, %v7887
    %v7966 = vadd.f32 %v7656, %v7889
    %v7967 = vadd.f32 %v7657, %v7892
    %v7968 = vadd.f32 %v7658, %v7894
    %v7969 = vadd.f32 %v7659, %v7897
    %v7970 = vadd.f32 %v7660, %v7899
    %v7971 = vadd.f32 %v7661, %v7902
    %v7972 = vadd.f32 %v7662, %v7904
    %v7973 = vadd.f32 %v7663, %v7907
    %v7974 = vadd.f32 %v7664, %v7909
    %s7975 = scalar_lea.vmem [#allocation3], 448
    %v7976 = vld [vmem:[%s7975] sm:$0xf]
    %v7977 = vld [vmem:[%s7975 + $0x4] sm:$0xf]
    %v7978 = vld [vmem:[%s7975 + $0x8] sm:$0xf]
    %v7979 = vld [vmem:[%s7975 + $0xc] sm:$0xf]
    %v7980 = vld [vmem:[%s7975 + $0x10] sm:$0xf]
    %v7981 = vld [vmem:[%s7975 + $0x14] sm:$0xf]
    %v7982 = vld [vmem:[%s7975 + $0x18] sm:$0xf]
    %v7983 = vld [vmem:[%s7975 + $0x1c] sm:$0xf]
    %v7984 = vld [vmem:[%s7975 + $0x20] sm:$0xf]
    %v7985 = vld [vmem:[%s7975 + $0x24] sm:$0xf]
    %v7986 = vld [vmem:[%s7975 + $0x28] sm:$0xf]
    %v7987 = vld [vmem:[%s7975 + $0x2c] sm:$0xf]
    %v7988 = vld [vmem:[%s7975 + $0x30] sm:$0xf]
    %v7989 = vld [vmem:[%s7975 + $0x34] sm:$0xf]
    %v7990 = vld [vmem:[%s7975 + $0x38] sm:$0xf]
    %v7991 = vld [vmem:[%s7975 + $0x3c] sm:$0xf]
    %v7996 = vunpack.c.l.b16 %v5415
    %v7997 = vunpack.c.l.b16 %v5416
    %v7998 = vunpack.c.l.b16 %v5469
    %v7999 = vunpack.c.l.b16 %v5470
    %v8000 = vpack.c.b16 %v7997, %v7996
    %v8001 = vpack.c.b16 %v7999, %v7998
    %v8020 = vunpack.c.l.b16 %v7976
    %v8021 = vunpack.c.l.b16 %v7977
    %v8022 = vunpack.c.l.b16 %v7978
    %v8023 = vunpack.c.l.b16 %v7979
    %v8024 = vunpack.c.l.b16 %v7980
    %v8025 = vunpack.c.l.b16 %v7981
    %v8026 = vunpack.c.l.b16 %v7982
    %v8027 = vunpack.c.l.b16 %v7983
    %v8028 = vunpack.c.l.b16 %v7984
    %v8029 = vunpack.c.l.b16 %v7985
    %v8030 = vunpack.c.l.b16 %v7986
    %v8031 = vunpack.c.l.b16 %v7987
    %v8032 = vunpack.c.l.b16 %v7988
    %v8033 = vunpack.c.l.b16 %v7989
    %v8034 = vunpack.c.l.b16 %v7990
    %v8035 = vunpack.c.l.b16 %v7991
    %v8036 = vpack.c.b16 %v8021, %v8020
    %v8037 = vpack.c.b16 %v8023, %v8022
    %v8038 = vpack.c.b16 %v8025, %v8024
    %v8039 = vpack.c.b16 %v8027, %v8026
    %v8040 = vpack.c.b16 %v8029, %v8028
    %v8041 = vpack.c.b16 %v8031, %v8030
    %v8042 = vpack.c.b16 %v8033, %v8032
    %v8043 = vpack.c.b16 %v8035, %v8034
    %8052 = vmatpush.bf16.msra.mxu0 %v8043
    %8053 = vmatpush.bf16.msra.mxu0 %v8042
    %8054 = vmatpush.bf16.msra.mxu0 %v8041
    %8055 = vmatpush.bf16.msra.mxu0 %v8040
    %8056 = vmatpush.bf16.msra.mxu0 %v8039
    %8057 = vmatpush.bf16.msra.mxu0 %v8038
    %8058 = vmatpush.bf16.msra.mxu0 %v8037
    %8059 = vmatpush.bf16.msra.mxu0 %v8036
    %8060 = vmatmul.bf16.gmra.mxu0 %v7322
    %v8061 = vpop.f32.mrf.mxu0
    %v8062 = vadd.f32 0.0, %v8061
    %v8063 = vpop.f32.mrf.mxu0
    %v8064 = vadd.f32 0.0, %v8063
    %8065 = vmatmul.bf16.gmra.mxu0 %v7323
    %v8066 = vpop.f32.mrf.mxu0
    %v8067 = vadd.f32 0.0, %v8066
    %v8068 = vpop.f32.mrf.mxu0
    %v8069 = vadd.f32 0.0, %v8068
    %8070 = vmatmul.bf16.gmra.mxu0 %v7324
    %v8071 = vpop.f32.mrf.mxu0
    %v8072 = vadd.f32 0.0, %v8071
    %v8073 = vpop.f32.mrf.mxu0
    %v8074 = vadd.f32 0.0, %v8073
    %8075 = vmatmul.bf16.gmra.mxu0 %v7325
    %v8076 = vpop.f32.mrf.mxu0
    %v8077 = vadd.f32 0.0, %v8076
    %v8078 = vpop.f32.mrf.mxu0
    %v8079 = vadd.f32 0.0, %v8078
    %8080 = vmatmul.bf16.gmra.mxu0 %v7326
    %v8081 = vpop.f32.mrf.mxu0
    %v8082 = vadd.f32 0.0, %v8081
    %v8083 = vpop.f32.mrf.mxu0
    %v8084 = vadd.f32 0.0, %v8083
    %8085 = vmatmul.bf16.gmra.mxu0 %v7327
    %v8086 = vpop.f32.mrf.mxu0
    %v8087 = vadd.f32 0.0, %v8086
    %v8088 = vpop.f32.mrf.mxu0
    %v8089 = vadd.f32 0.0, %v8088
    %8090 = vmatmul.bf16.gmra.mxu0 %v7328
    %v8091 = vpop.f32.mrf.mxu0
    %v8092 = vadd.f32 0.0, %v8091
    %v8093 = vpop.f32.mrf.mxu0
    %v8094 = vadd.f32 0.0, %v8093
    %8095 = vmatmul.bf16.gmra.mxu0 %v7329
    %v8096 = vpop.f32.mrf.mxu0
    %v8097 = vadd.f32 0.0, %v8096
    %v8098 = vpop.f32.mrf.mxu0
    %v8099 = vadd.f32 0.0, %v8098
    %8100 = vmatmul.bf16.gmra.mxu0 %v7330
    %v8101 = vpop.f32.mrf.mxu0
    %v8102 = vadd.f32 0.0, %v8101
    %v8103 = vpop.f32.mrf.mxu0
    %v8104 = vadd.f32 0.0, %v8103
    %8105 = vmatmul.bf16.gmra.mxu0 %v7331
    %v8106 = vpop.f32.mrf.mxu0
    %v8107 = vadd.f32 0.0, %v8106
    %v8108 = vpop.f32.mrf.mxu0
    %v8109 = vadd.f32 0.0, %v8108
    %8110 = vmatmul.bf16.gmra.mxu0 %v7332
    %v8111 = vpop.f32.mrf.mxu0
    %v8112 = vadd.f32 0.0, %v8111
    %v8113 = vpop.f32.mrf.mxu0
    %v8114 = vadd.f32 0.0, %v8113
    %8115 = vmatmul.bf16.gmra.mxu0 %v7333
    %v8116 = vpop.f32.mrf.mxu0
    %v8117 = vadd.f32 0.0, %v8116
    %v8118 = vpop.f32.mrf.mxu0
    %v8119 = vadd.f32 0.0, %v8118
    %8120 = vmatmul.bf16.gmra.mxu0 %v7334
    %v8121 = vpop.f32.mrf.mxu0
    %v8122 = vadd.f32 0.0, %v8121
    %v8123 = vpop.f32.mrf.mxu0
    %v8124 = vadd.f32 0.0, %v8123
    %8125 = vmatmul.bf16.gmra.mxu0 %v7335
    %v8126 = vpop.f32.mrf.mxu0
    %v8127 = vadd.f32 0.0, %v8126
    %v8128 = vpop.f32.mrf.mxu0
    %v8129 = vadd.f32 0.0, %v8128
    %8130 = vmatmul.bf16.gmra.mxu0 %v7690
    %v8131 = vpop.f32.mrf.mxu0
    %v8132 = vadd.f32 0.0, %v8131
    %v8133 = vpop.f32.mrf.mxu0
    %v8134 = vadd.f32 0.0, %v8133
    %8135 = vmatmul.bf16.gmra.mxu0 %v8000
    %v8136 = vpop.f32.mrf.mxu0
    %v8137 = vadd.f32 0.0, %v8136
    %v8138 = vpop.f32.mrf.mxu0
    %v8139 = vadd.f32 0.0, %v8138
    %8140 = vmatmul.bf16.gmra.mxu0 %v7338
    %v8141 = vpop.f32.mrf.mxu0
    %v8142 = vadd.f32 0.0, %v8141
    %v8143 = vpop.f32.mrf.mxu0
    %v8144 = vadd.f32 0.0, %v8143
    %8145 = vmatmul.bf16.gmra.mxu0 %v7339
    %v8146 = vpop.f32.mrf.mxu0
    %v8147 = vadd.f32 0.0, %v8146
    %v8148 = vpop.f32.mrf.mxu0
    %v8149 = vadd.f32 0.0, %v8148
    %8150 = vmatmul.bf16.gmra.mxu0 %v7340
    %v8151 = vpop.f32.mrf.mxu0
    %v8152 = vadd.f32 0.0, %v8151
    %v8153 = vpop.f32.mrf.mxu0
    %v8154 = vadd.f32 0.0, %v8153
    %8155 = vmatmul.bf16.gmra.mxu0 %v7341
    %v8156 = vpop.f32.mrf.mxu0
    %v8157 = vadd.f32 0.0, %v8156
    %v8158 = vpop.f32.mrf.mxu0
    %v8159 = vadd.f32 0.0, %v8158
    %8160 = vmatmul.bf16.gmra.mxu0 %v7342
    %v8161 = vpop.f32.mrf.mxu0
    %v8162 = vadd.f32 0.0, %v8161
    %v8163 = vpop.f32.mrf.mxu0
    %v8164 = vadd.f32 0.0, %v8163
    %8165 = vmatmul.bf16.gmra.mxu0 %v7343
    %v8166 = vpop.f32.mrf.mxu0
    %v8167 = vadd.f32 0.0, %v8166
    %v8168 = vpop.f32.mrf.mxu0
    %v8169 = vadd.f32 0.0, %v8168
    %8170 = vmatmul.bf16.gmra.mxu0 %v7344
    %v8171 = vpop.f32.mrf.mxu0
    %v8172 = vadd.f32 0.0, %v8171
    %v8173 = vpop.f32.mrf.mxu0
    %v8174 = vadd.f32 0.0, %v8173
    %8175 = vmatmul.bf16.gmra.mxu0 %v7345
    %v8176 = vpop.f32.mrf.mxu0
    %v8177 = vadd.f32 0.0, %v8176
    %v8178 = vpop.f32.mrf.mxu0
    %v8179 = vadd.f32 0.0, %v8178
    %8180 = vmatmul.bf16.gmra.mxu0 %v7346
    %v8181 = vpop.f32.mrf.mxu0
    %v8182 = vadd.f32 0.0, %v8181
    %v8183 = vpop.f32.mrf.mxu0
    %v8184 = vadd.f32 0.0, %v8183
    %8185 = vmatmul.bf16.gmra.mxu0 %v7347
    %v8186 = vpop.f32.mrf.mxu0
    %v8187 = vadd.f32 0.0, %v8186
    %v8188 = vpop.f32.mrf.mxu0
    %v8189 = vadd.f32 0.0, %v8188
    %8190 = vmatmul.bf16.gmra.mxu0 %v7348
    %v8191 = vpop.f32.mrf.mxu0
    %v8192 = vadd.f32 0.0, %v8191
    %v8193 = vpop.f32.mrf.mxu0
    %v8194 = vadd.f32 0.0, %v8193
    %8195 = vmatmul.bf16.gmra.mxu0 %v7349
    %v8196 = vpop.f32.mrf.mxu0
    %v8197 = vadd.f32 0.0, %v8196
    %v8198 = vpop.f32.mrf.mxu0
    %v8199 = vadd.f32 0.0, %v8198
    %8200 = vmatmul.bf16.gmra.mxu0 %v7350
    %v8201 = vpop.f32.mrf.mxu0
    %v8202 = vadd.f32 0.0, %v8201
    %v8203 = vpop.f32.mrf.mxu0
    %v8204 = vadd.f32 0.0, %v8203
    %8205 = vmatmul.bf16.gmra.mxu0 %v7351
    %v8206 = vpop.f32.mrf.mxu0
    %v8207 = vadd.f32 0.0, %v8206
    %v8208 = vpop.f32.mrf.mxu0
    %v8209 = vadd.f32 0.0, %v8208
    %8210 = vmatmul.bf16.gmra.mxu0 %v7691
    %v8211 = vpop.f32.mrf.mxu0
    %v8212 = vadd.f32 0.0, %v8211
    %v8213 = vpop.f32.mrf.mxu0
    %v8214 = vadd.f32 0.0, %v8213
    %8215 = vmatmul.bf16.gmra.mxu0 %v8001
    %v8216 = vpop.f32.mrf.mxu0
    %v8217 = vadd.f32 0.0, %v8216
    %v8218 = vpop.f32.mrf.mxu0
    %v8219 = vadd.f32 0.0, %v8218
    %8220 = vdwg.mxu0
    %v8221 = vadd.f32 %v7911, %v8062
    %v8222 = vadd.f32 %v7912, %v8064
    %v8223 = vadd.f32 %v7913, %v8067
    %v8224 = vadd.f32 %v7914, %v8069
    %v8225 = vadd.f32 %v7915, %v8072
    %v8226 = vadd.f32 %v7916, %v8074
    %v8227 = vadd.f32 %v7917, %v8077
    %v8228 = vadd.f32 %v7918, %v8079
    %v8229 = vadd.f32 %v7919, %v8082
    %v8230 = vadd.f32 %v7920, %v8084
    %v8231 = vadd.f32 %v7921, %v8087
    %v8232 = vadd.f32 %v7922, %v8089
    %v8233 = vadd.f32 %v7923, %v8092
    %v8234 = vadd.f32 %v7924, %v8094
    %v8235 = vadd.f32 %v7925, %v8097
    %v8236 = vadd.f32 %v7926, %v8099
    %v8237 = vadd.f32 %v7927, %v8102
    %v8238 = vadd.f32 %v7928, %v8104
    %v8239 = vadd.f32 %v7929, %v8107
    %v8240 = vadd.f32 %v7930, %v8109
    %v8241 = vadd.f32 %v7931, %v8112
    %v8242 = vadd.f32 %v7932, %v8114
    %v8243 = vadd.f32 %v7933, %v8117
    %v8244 = vadd.f32 %v7934, %v8119
    %v8245 = vadd.f32 %v7935, %v8122
    %v8246 = vadd.f32 %v7936, %v8124
    %v8247 = vadd.f32 %v7937, %v8127
    %v8248 = vadd.f32 %v7938, %v8129
    %v8249 = vadd.f32 %v7939, %v8132
    %v8250 = vadd.f32 %v7940, %v8134
    %v8251 = vadd.f32 %v7941, %v8137
    %v8252 = vadd.f32 %v7942, %v8139
    %v8253 = vadd.f32 %v7943, %v8142
    %v8254 = vadd.f32 %v7944, %v8144
    %v8255 = vadd.f32 %v7945, %v8147
    %v8256 = vadd.f32 %v7946, %v8149
    %v8257 = vadd.f32 %v7947, %v8152
    %v8258 = vadd.f32 %v7948, %v8154
    %v8259 = vadd.f32 %v7949, %v8157
    %v8260 = vadd.f32 %v7950, %v8159
    %v8261 = vadd.f32 %v7951, %v8162
    %v8262 = vadd.f32 %v7952, %v8164
    %v8263 = vadd.f32 %v7953, %v8167
    %v8264 = vadd.f32 %v7954, %v8169
    %v8265 = vadd.f32 %v7955, %v8172
    %v8266 = vadd.f32 %v7956, %v8174
    %v8267 = vadd.f32 %v7957, %v8177
    %v8268 = vadd.f32 %v7958, %v8179
    %v8269 = vadd.f32 %v7959, %v8182
    %v8270 = vadd.f32 %v7960, %v8184
    %v8271 = vadd.f32 %v7961, %v8187
    %v8272 = vadd.f32 %v7962, %v8189
    %v8273 = vadd.f32 %v7963, %v8192
    %v8274 = vadd.f32 %v7964, %v8194
    %v8275 = vadd.f32 %v7965, %v8197
    %v8276 = vadd.f32 %v7966, %v8199
    %v8277 = vadd.f32 %v7967, %v8202
    %v8278 = vadd.f32 %v7968, %v8204
    %v8279 = vadd.f32 %v7969, %v8207
    %v8280 = vadd.f32 %v7970, %v8209
    %v8281 = vadd.f32 %v7971, %v8212
    %v8282 = vadd.f32 %v7972, %v8214
    %v8283 = vadd.f32 %v7973, %v8217
    %v8284 = vadd.f32 %v7974, %v8219
    %v8285 = vld [vmem:[#allocation2 + $0x4] sm:$0xf]
    %v8286 = vld [vmem:[#allocation2 + $0x8] sm:$0xf]
    %v8287 = vld [vmem:[#allocation2 + $0xc] sm:$0x1]
    %v8288 = vld [vmem:[#allocation2 + $0x14] sm:$0xf]
    %v8289 = vld [vmem:[#allocation2 + $0x18] sm:$0xf]
    %v8290 = vld [vmem:[#allocation2 + $0x1c] sm:$0x1]
    %v8291 = vld [vmem:[#allocation2 + $0x24] sm:$0xf]
    %v8292 = vld [vmem:[#allocation2 + $0x28] sm:$0xf]
    %v8293 = vld [vmem:[#allocation2 + $0x2c] sm:$0x1]
    %v8294 = vld [vmem:[#allocation2 + $0x34] sm:$0xf]
    %v8295 = vld [vmem:[#allocation2 + $0x38] sm:$0xf]
    %v8296 = vld [vmem:[#allocation2 + $0x3c] sm:$0x1]
    %v8297 = vld [vmem:[#allocation2 + $0x44] sm:$0xf]
    %v8298 = vld [vmem:[#allocation2 + $0x48] sm:$0xf]
    %v8299 = vld [vmem:[#allocation2 + $0x4c] sm:$0x1]
    %v8300 = vld [vmem:[#allocation2 + $0x54] sm:$0xf]
    %v8301 = vld [vmem:[#allocation2 + $0x58] sm:$0xf]
    %v8302 = vld [vmem:[#allocation2 + $0x5c] sm:$0x1]
    %v8303 = vld [vmem:[#allocation2 + $0x64] sm:$0xf]
    %v8304 = vld [vmem:[#allocation2 + $0x68] sm:$0xf]
    %v8305 = vld [vmem:[#allocation2 + $0x6c] sm:$0x1]
    %v8306 = vld [vmem:[#allocation2 + $0x74] sm:$0xf]
    %v8307 = vld [vmem:[#allocation2 + $0x78] sm:$0xf]
    %v8308 = vld [vmem:[#allocation2 + $0x7c] sm:$0x1]
    %v8309 = vld [vmem:[#allocation2 + $0x84] sm:$0xf]
    %v8310 = vld [vmem:[#allocation2 + $0x88] sm:$0xf]
    %v8311 = vld [vmem:[#allocation2 + $0x8c] sm:$0x1]
    %v8312 = vld [vmem:[#allocation2 + $0x94] sm:$0xf]
    %v8313 = vld [vmem:[#allocation2 + $0x98] sm:$0xf]
    %v8314 = vld [vmem:[#allocation2 + $0x9c] sm:$0x1]
    %v8315 = vld [vmem:[#allocation2 + $0xa4] sm:$0xf]
    %v8316 = vld [vmem:[#allocation2 + $0xa8] sm:$0xf]
    %v8317 = vld [vmem:[#allocation2 + $0xac] sm:$0x1]
    %v8318 = vld [vmem:[#allocation2 + $0xb4] sm:$0xf]
    %v8319 = vld [vmem:[#allocation2 + $0xb8] sm:$0xf]
    %v8320 = vld [vmem:[#allocation2 + $0xbc] sm:$0x1]
    %v8321 = vld [vmem:[#allocation2 + $0xc4] sm:$0xf]
    %v8322 = vld [vmem:[#allocation2 + $0xc8] sm:$0xf]
    %v8323 = vld [vmem:[#allocation2 + $0xcc] sm:$0x1]
    %v8324 = vld [vmem:[#allocation2 + $0xd4] sm:$0xf]
    %v8325 = vld [vmem:[#allocation2 + $0xd8] sm:$0xf]
    %v8326 = vld [vmem:[#allocation2 + $0xdc] sm:$0x1]
    %v8327 = vld [vmem:[#allocation2 + $0xe4] sm:$0xf]
    %v8328 = vld [vmem:[#allocation2 + $0xe8] sm:$0xf]
    %v8329 = vld [vmem:[#allocation2 + $0xec] sm:$0x1]
    %v8330 = vld [vmem:[#allocation2 + $0xf4] sm:$0xf]
    %v8331 = vld [vmem:[#allocation2 + $0xf8] sm:$0xf]
    %v8332 = vld [vmem:[#allocation2 + $0xfc] sm:$0x1]
    %v8333 = vld [vmem:[#allocation2 + $0x104] sm:$0xf]
    %v8334 = vld [vmem:[#allocation2 + $0x108] sm:$0xf]
    %v8335 = vld [vmem:[#allocation2 + $0x10c] sm:$0x1]
    %v8336 = vld [vmem:[#allocation2 + $0x114] sm:$0xf]
    %v8337 = vld [vmem:[#allocation2 + $0x118] sm:$0xf]
    %v8338 = vld [vmem:[#allocation2 + $0x11c] sm:$0x1]
    %v8339 = vld [vmem:[#allocation2 + $0x124] sm:$0xf]
    %v8340 = vld [vmem:[#allocation2 + $0x128] sm:$0xf]
    %v8341 = vld [vmem:[#allocation2 + $0x12c] sm:$0x1]
    %v8342 = vld [vmem:[#allocation2 + $0x134] sm:$0xf]
    %v8343 = vld [vmem:[#allocation2 + $0x138] sm:$0xf]
    %v8344 = vld [vmem:[#allocation2 + $0x13c] sm:$0x1]
    %v8345 = vld [vmem:[#allocation2 + $0x144] sm:$0xf]
    %v8346 = vld [vmem:[#allocation2 + $0x148] sm:$0xf]
    %v8347 = vld [vmem:[#allocation2 + $0x14c] sm:$0x1]
    %v8348 = vld [vmem:[#allocation2 + $0x154] sm:$0xf]
    %v8349 = vld [vmem:[#allocation2 + $0x158] sm:$0xf]
    %v8350 = vld [vmem:[#allocation2 + $0x15c] sm:$0x1]
    %v8351 = vld [vmem:[#allocation2 + $0x164] sm:$0xf]
    %v8352 = vld [vmem:[#allocation2 + $0x168] sm:$0xf]
    %v8353 = vld [vmem:[#allocation2 + $0x16c] sm:$0x1]
    %v8354 = vld [vmem:[#allocation2 + $0x174] sm:$0xf]
    %v8355 = vld [vmem:[#allocation2 + $0x178] sm:$0xf]
    %v8356 = vld [vmem:[#allocation2 + $0x17c] sm:$0x1]
    %v8357 = vld [vmem:[#allocation2 + $0x184] sm:$0xf]
    %v8358 = vld [vmem:[#allocation2 + $0x188] sm:$0xf]
    %v8359 = vld [vmem:[#allocation2 + $0x18c] sm:$0x1]
    %v8360 = vld [vmem:[#allocation2 + $0x194] sm:$0xf]
    %v8361 = vld [vmem:[#allocation2 + $0x198] sm:$0xf]
    %v8362 = vld [vmem:[#allocation2 + $0x19c] sm:$0x1]
    %v8363 = vld [vmem:[#allocation2 + $0x1a4] sm:$0xf]
    %v8364 = vld [vmem:[#allocation2 + $0x1a8] sm:$0xf]
    %v8365 = vld [vmem:[#allocation2 + $0x1ac] sm:$0x1]
    %v8366 = vld [vmem:[#allocation2 + $0x1b4] sm:$0xf]
    %v8367 = vld [vmem:[#allocation2 + $0x1b8] sm:$0xf]
    %v8368 = vld [vmem:[#allocation2 + $0x1bc] sm:$0x1]
    %v8369 = vld [vmem:[#allocation2 + $0x1c4] sm:$0xf]
    %v8370 = vld [vmem:[#allocation2 + $0x1c8] sm:$0xf]
    %v8371 = vld [vmem:[#allocation2 + $0x1cc] sm:$0x1]
    %v8372 = vld [vmem:[#allocation2 + $0x1d4] sm:$0xf]
    %v8373 = vld [vmem:[#allocation2 + $0x1d8] sm:$0xf]
    %v8374 = vld [vmem:[#allocation2 + $0x1dc] sm:$0x1]
    %v8375 = vld [vmem:[#allocation2 + $0x1e4] sm:$0xf]
    %v8376 = vld [vmem:[#allocation2 + $0x1e8] sm:$0xf]
    %v8377 = vld [vmem:[#allocation2 + $0x1ec] sm:$0x1]
    %v8378 = vld [vmem:[#allocation2 + $0x1f4] sm:$0xf]
    %v8379 = vld [vmem:[#allocation2 + $0x1f8] sm:$0xf]
    %v8380 = vld [vmem:[#allocation2 + $0x1fc] sm:$0x1]
    %v8381 = vld [vmem:[#allocation2 + $0x204] sm:$0xf]
    %v8382 = vld [vmem:[#allocation2 + $0x208] sm:$0xf]
    %v8383 = vld [vmem:[#allocation2 + $0x20c] sm:$0x1]
    %v8384 = vld [vmem:[#allocation2 + $0x214] sm:$0xf]
    %v8385 = vld [vmem:[#allocation2 + $0x218] sm:$0xf]
    %v8386 = vld [vmem:[#allocation2 + $0x21c] sm:$0x1]
    %v8387 = vld [vmem:[#allocation2 + $0x224] sm:$0xf]
    %v8388 = vld [vmem:[#allocation2 + $0x228] sm:$0xf]
    %v8389 = vld [vmem:[#allocation2 + $0x22c] sm:$0x1]
    %v8390 = vld [vmem:[#allocation2 + $0x234] sm:$0xf]
    %v8391 = vld [vmem:[#allocation2 + $0x238] sm:$0xf]
    %v8392 = vld [vmem:[#allocation2 + $0x23c] sm:$0x1]
    %v8394 = vshrl.u32 %v8285, 16
    %v8396 = vrot.slane %v8394, 4
    %v8397 = vshll.u32 %v8285, 16
    %v8399 = vrot.slane %v8397, 5
    %v8400 = vor.u32 %v8396, %v8399
    %v8401 = vrot.slane %v8400, 4
    %v8403 = vshll.u32 %v8286, 16
    %v8405 = vrot.slane %v8403, 5
    %v8406 = vsel %vm1207, %v8401, %v8405
    %v8407 = vshrl.u32 %v8286, 16
    %v8409 = vrot.slane %v8407, 4
    %v8410 = vor.u32 %v8409, %v8405
    %v8411 = vrot.slane %v8410, 4
    %v8413 = vshll.u32 %v8287, 16
    %v8415 = vrot.slane %v8413, 5
    %v8416 = vsel %vm1207, %v8411, %v8415
    %v8418 = vshrl.u32 %v8288, 16
    %v8420 = vrot.slane %v8418, 4
    %v8421 = vshll.u32 %v8288, 16
    %v8423 = vrot.slane %v8421, 5
    %v8424 = vor.u32 %v8420, %v8423
    %v8425 = vrot.slane %v8424, 4
    %v8427 = vshll.u32 %v8289, 16
    %v8429 = vrot.slane %v8427, 5
    %v8430 = vsel %vm1207, %v8425, %v8429
    %v8431 = vshrl.u32 %v8289, 16
    %v8433 = vrot.slane %v8431, 4
    %v8434 = vor.u32 %v8433, %v8429
    %v8435 = vrot.slane %v8434, 4
    %v8437 = vshll.u32 %v8290, 16
    %v8439 = vrot.slane %v8437, 5
    %v8440 = vsel %vm1207, %v8435, %v8439
    %v8442 = vshrl.u32 %v8291, 16
    %v8444 = vrot.slane %v8442, 4
    %v8445 = vshll.u32 %v8291, 16
    %v8447 = vrot.slane %v8445, 5
    %v8448 = vor.u32 %v8444, %v8447
    %v8449 = vrot.slane %v8448, 4
    %v8451 = vshll.u32 %v8292, 16
    %v8453 = vrot.slane %v8451, 5
    %v8454 = vsel %vm1207, %v8449, %v8453
    %v8455 = vshrl.u32 %v8292, 16
    %v8457 = vrot.slane %v8455, 4
    %v8458 = vor.u32 %v8457, %v8453
    %v8459 = vrot.slane %v8458, 4
    %v8461 = vshll.u32 %v8293, 16
    %v8463 = vrot.slane %v8461, 5
    %v8464 = vsel %vm1207, %v8459, %v8463
    %v8466 = vshrl.u32 %v8294, 16
    %v8468 = vrot.slane %v8466, 4
    %v8469 = vshll.u32 %v8294, 16
    %v8471 = vrot.slane %v8469, 5
    %v8472 = vor.u32 %v8468, %v8471
    %v8473 = vrot.slane %v8472, 4
    %v8475 = vshll.u32 %v8295, 16
    %v8477 = vrot.slane %v8475, 5
    %v8478 = vsel %vm1207, %v8473, %v8477
    %v8479 = vshrl.u32 %v8295, 16
    %v8481 = vrot.slane %v8479, 4
    %v8482 = vor.u32 %v8481, %v8477
    %v8483 = vrot.slane %v8482, 4
    %v8485 = vshll.u32 %v8296, 16
    %v8487 = vrot.slane %v8485, 5
    %v8488 = vsel %vm1207, %v8483, %v8487
    %v8490 = vshrl.u32 %v8297, 16
    %v8492 = vrot.slane %v8490, 4
    %v8493 = vshll.u32 %v8297, 16
    %v8495 = vrot.slane %v8493, 5
    %v8496 = vor.u32 %v8492, %v8495
    %v8497 = vrot.slane %v8496, 4
    %v8499 = vshll.u32 %v8298, 16
    %v8501 = vrot.slane %v8499, 5
    %v8502 = vsel %vm1207, %v8497, %v8501
    %v8503 = vshrl.u32 %v8298, 16
    %v8505 = vrot.slane %v8503, 4
    %v8506 = vor.u32 %v8505, %v8501
    %v8507 = vrot.slane %v8506, 4
    %v8509 = vshll.u32 %v8299, 16
    %v8511 = vrot.slane %v8509, 5
    %v8512 = vsel %vm1207, %v8507, %v8511
    %v8514 = vshrl.u32 %v8300, 16
    %v8516 = vrot.slane %v8514, 4
    %v8517 = vshll.u32 %v8300, 16
    %v8519 = vrot.slane %v8517, 5
    %v8520 = vor.u32 %v8516, %v8519
    %v8521 = vrot.slane %v8520, 4
    %v8523 = vshll.u32 %v8301, 16
    %v8525 = vrot.slane %v8523, 5
    %v8526 = vsel %vm1207, %v8521, %v8525
    %v8527 = vshrl.u32 %v8301, 16
    %v8529 = vrot.slane %v8527, 4
    %v8530 = vor.u32 %v8529, %v8525
    %v8531 = vrot.slane %v8530, 4
    %v8533 = vshll.u32 %v8302, 16
    %v8535 = vrot.slane %v8533, 5
    %v8536 = vsel %vm1207, %v8531, %v8535
    %v8538 = vshrl.u32 %v8303, 16
    %v8540 = vrot.slane %v8538, 4
    %v8541 = vshll.u32 %v8303, 16
    %v8543 = vrot.slane %v8541, 5
    %v8544 = vor.u32 %v8540, %v8543
    %v8545 = vrot.slane %v8544, 4
    %v8547 = vshll.u32 %v8304, 16
    %v8549 = vrot.slane %v8547, 5
    %v8550 = vsel %vm1207, %v8545, %v8549
    %v8551 = vshrl.u32 %v8304, 16
    %v8553 = vrot.slane %v8551, 4
    %v8554 = vor.u32 %v8553, %v8549
    %v8555 = vrot.slane %v8554, 4
    %v8557 = vshll.u32 %v8305, 16
    %v8559 = vrot.slane %v8557, 5
    %v8560 = vsel %vm1207, %v8555, %v8559
    %v8562 = vshrl.u32 %v8306, 16
    %v8564 = vrot.slane %v8562, 4
    %v8565 = vshll.u32 %v8306, 16
    %v8567 = vrot.slane %v8565, 5
    %v8568 = vor.u32 %v8564, %v8567
    %v8569 = vrot.slane %v8568, 4
    %v8571 = vshll.u32 %v8307, 16
    %v8573 = vrot.slane %v8571, 5
    %v8574 = vsel %vm1207, %v8569, %v8573
    %v8575 = vshrl.u32 %v8307, 16
    %v8577 = vrot.slane %v8575, 4
    %v8578 = vor.u32 %v8577, %v8573
    %v8579 = vrot.slane %v8578, 4
    %v8581 = vshll.u32 %v8308, 16
    %v8583 = vrot.slane %v8581, 5
    %v8584 = vsel %vm1207, %v8579, %v8583
    %v8586 = vshrl.u32 %v8309, 16
    %v8588 = vrot.slane %v8586, 4
    %v8589 = vshll.u32 %v8309, 16
    %v8591 = vrot.slane %v8589, 5
    %v8592 = vor.u32 %v8588, %v8591
    %v8593 = vrot.slane %v8592, 4
    %v8595 = vshll.u32 %v8310, 16
    %v8597 = vrot.slane %v8595, 5
    %v8598 = vsel %vm1207, %v8593, %v8597
    %v8599 = vshrl.u32 %v8310, 16
    %v8601 = vrot.slane %v8599, 4
    %v8602 = vor.u32 %v8601, %v8597
    %v8603 = vrot.slane %v8602, 4
    %v8605 = vshll.u32 %v8311, 16
    %v8607 = vrot.slane %v8605, 5
    %v8608 = vsel %vm1207, %v8603, %v8607
    %v8610 = vshrl.u32 %v8312, 16
    %v8612 = vrot.slane %v8610, 4
    %v8613 = vshll.u32 %v8312, 16
    %v8615 = vrot.slane %v8613, 5
    %v8616 = vor.u32 %v8612, %v8615
    %v8617 = vrot.slane %v8616, 4
    %v8619 = vshll.u32 %v8313, 16
    %v8621 = vrot.slane %v8619, 5
    %v8622 = vsel %vm1207, %v8617, %v8621
    %v8623 = vshrl.u32 %v8313, 16
    %v8625 = vrot.slane %v8623, 4
    %v8626 = vor.u32 %v8625, %v8621
    %v8627 = vrot.slane %v8626, 4
    %v8629 = vshll.u32 %v8314, 16
    %v8631 = vrot.slane %v8629, 5
    %v8632 = vsel %vm1207, %v8627, %v8631
    %v8634 = vshrl.u32 %v8315, 16
    %v8636 = vrot.slane %v8634, 4
    %v8637 = vshll.u32 %v8315, 16
    %v8639 = vrot.slane %v8637, 5
    %v8640 = vor.u32 %v8636, %v8639
    %v8641 = vrot.slane %v8640, 4
    %v8643 = vshll.u32 %v8316, 16
    %v8645 = vrot.slane %v8643, 5
    %v8646 = vsel %vm1207, %v8641, %v8645
    %v8647 = vshrl.u32 %v8316, 16
    %v8649 = vrot.slane %v8647, 4
    %v8650 = vor.u32 %v8649, %v8645
    %v8651 = vrot.slane %v8650, 4
    %v8653 = vshll.u32 %v8317, 16
    %v8655 = vrot.slane %v8653, 5
    %v8656 = vsel %vm1207, %v8651, %v8655
    %v8658 = vshrl.u32 %v8318, 16
    %v8660 = vrot.slane %v8658, 4
    %v8661 = vshll.u32 %v8318, 16
    %v8663 = vrot.slane %v8661, 5
    %v8664 = vor.u32 %v8660, %v8663
    %v8665 = vrot.slane %v8664, 4
    %v8667 = vshll.u32 %v8319, 16
    %v8669 = vrot.slane %v8667, 5
    %v8670 = vsel %vm1207, %v8665, %v8669
    %v8671 = vshrl.u32 %v8319, 16
    %v8673 = vrot.slane %v8671, 4
    %v8674 = vor.u32 %v8673, %v8669
    %v8675 = vrot.slane %v8674, 4
    %v8677 = vshll.u32 %v8320, 16
    %v8679 = vrot.slane %v8677, 5
    %v8680 = vsel %vm1207, %v8675, %v8679
    %v8682 = vshrl.u32 %v8321, 16
    %v8684 = vrot.slane %v8682, 4
    %v8685 = vshll.u32 %v8321, 16
    %v8687 = vrot.slane %v8685, 5
    %v8688 = vor.u32 %v8684, %v8687
    %v8689 = vrot.slane %v8688, 4
    %v8691 = vshll.u32 %v8322, 16
    %v8693 = vrot.slane %v8691, 5
    %v8694 = vsel %vm1207, %v8689, %v8693
    %v8695 = vshrl.u32 %v8322, 16
    %v8697 = vrot.slane %v8695, 4
    %v8698 = vor.u32 %v8697, %v8693
    %v8699 = vrot.slane %v8698, 4
    %v8701 = vshll.u32 %v8323, 16
    %v8703 = vrot.slane %v8701, 5
    %v8704 = vsel %vm1207, %v8699, %v8703
    %v8706 = vshrl.u32 %v8324, 16
    %v8708 = vrot.slane %v8706, 4
    %v8709 = vshll.u32 %v8324, 16
    %v8711 = vrot.slane %v8709, 5
    %v8712 = vor.u32 %v8708, %v8711
    %v8713 = vrot.slane %v8712, 4
    %v8715 = vshll.u32 %v8325, 16
    %v8717 = vrot.slane %v8715, 5
    %v8718 = vsel %vm1207, %v8713, %v8717
    %v8719 = vshrl.u32 %v8325, 16
    %v8721 = vrot.slane %v8719, 4
    %v8722 = vor.u32 %v8721, %v8717
    %v8723 = vrot.slane %v8722, 4
    %v8725 = vshll.u32 %v8326, 16
    %v8727 = vrot.slane %v8725, 5
    %v8728 = vsel %vm1207, %v8723, %v8727
    %v8730 = vshrl.u32 %v8327, 16
    %v8732 = vrot.slane %v8730, 4
    %v8733 = vshll.u32 %v8327, 16
    %v8735 = vrot.slane %v8733, 5
    %v8736 = vor.u32 %v8732, %v8735
    %v8737 = vrot.slane %v8736, 4
    %v8739 = vshll.u32 %v8328, 16
    %v8741 = vrot.slane %v8739, 5
    %v8742 = vsel %vm1207, %v8737, %v8741
    %v8743 = vshrl.u32 %v8328, 16
    %v8745 = vrot.slane %v8743, 4
    %v8746 = vor.u32 %v8745, %v8741
    %v8747 = vrot.slane %v8746, 4
    %v8749 = vshll.u32 %v8329, 16
    %v8751 = vrot.slane %v8749, 5
    %v8752 = vsel %vm1207, %v8747, %v8751
    %v8754 = vshrl.u32 %v8330, 16
    %v8756 = vrot.slane %v8754, 4
    %v8757 = vshll.u32 %v8330, 16
    %v8759 = vrot.slane %v8757, 5
    %v8760 = vor.u32 %v8756, %v8759
    %v8761 = vrot.slane %v8760, 4
    %v8763 = vshll.u32 %v8331, 16
    %v8765 = vrot.slane %v8763, 5
    %v8766 = vsel %vm1207, %v8761, %v8765
    %v8767 = vshrl.u32 %v8331, 16
    %v8769 = vrot.slane %v8767, 4
    %v8770 = vor.u32 %v8769, %v8765
    %v8771 = vrot.slane %v8770, 4
    %v8773 = vshll.u32 %v8332, 16
    %v8775 = vrot.slane %v8773, 5
    %v8776 = vsel %vm1207, %v8771, %v8775
    %v8778 = vshrl.u32 %v8339, 16
    %v8780 = vrot.slane %v8778, 4
    %v8781 = vshll.u32 %v8339, 16
    %v8783 = vrot.slane %v8781, 5
    %v8784 = vor.u32 %v8780, %v8783
    %v8785 = vrot.slane %v8784, 4
    %v8787 = vshll.u32 %v8340, 16
    %v8789 = vrot.slane %v8787, 5
    %v8790 = vsel %vm1207, %v8785, %v8789
    %v8791 = vshrl.u32 %v8340, 16
    %v8793 = vrot.slane %v8791, 4
    %v8794 = vor.u32 %v8793, %v8789
    %v8795 = vrot.slane %v8794, 4
    %v8797 = vshll.u32 %v8341, 16
    %v8799 = vrot.slane %v8797, 5
    %v8800 = vsel %vm1207, %v8795, %v8799
    %v8802 = vshrl.u32 %v8342, 16
    %v8804 = vrot.slane %v8802, 4
    %v8805 = vshll.u32 %v8342, 16
    %v8807 = vrot.slane %v8805, 5
    %v8808 = vor.u32 %v8804, %v8807
    %v8809 = vrot.slane %v8808, 4
    %v8811 = vshll.u32 %v8343, 16
    %v8813 = vrot.slane %v8811, 5
    %v8814 = vsel %vm1207, %v8809, %v8813
    %v8815 = vshrl.u32 %v8343, 16
    %v8817 = vrot.slane %v8815, 4
    %v8818 = vor.u32 %v8817, %v8813
    %v8819 = vrot.slane %v8818, 4
    %v8821 = vshll.u32 %v8344, 16
    %v8823 = vrot.slane %v8821, 5
    %v8824 = vsel %vm1207, %v8819, %v8823
    %v8826 = vshrl.u32 %v8345, 16
    %v8828 = vrot.slane %v8826, 4
    %v8829 = vshll.u32 %v8345, 16
    %v8831 = vrot.slane %v8829, 5
    %v8832 = vor.u32 %v8828, %v8831
    %v8833 = vrot.slane %v8832, 4
    %v8835 = vshll.u32 %v8346, 16
    %v8837 = vrot.slane %v8835, 5
    %v8838 = vsel %vm1207, %v8833, %v8837
    %v8839 = vshrl.u32 %v8346, 16
    %v8841 = vrot.slane %v8839, 4
    %v8842 = vor.u32 %v8841, %v8837
    %v8843 = vrot.slane %v8842, 4
    %v8845 = vshll.u32 %v8347, 16
    %v8847 = vrot.slane %v8845, 5
    %v8848 = vsel %vm1207, %v8843, %v8847
    %v8850 = vshrl.u32 %v8348, 16
    %v8852 = vrot.slane %v8850, 4
    %v8853 = vshll.u32 %v8348, 16
    %v8855 = vrot.slane %v8853, 5
    %v8856 = vor.u32 %v8852, %v8855
    %v8857 = vrot.slane %v8856, 4
    %v8859 = vshll.u32 %v8349, 16
    %v8861 = vrot.slane %v8859, 5
    %v8862 = vsel %vm1207, %v8857, %v8861
    %v8863 = vshrl.u32 %v8349, 16
    %v8865 = vrot.slane %v8863, 4
    %v8866 = vor.u32 %v8865, %v8861
    %v8867 = vrot.slane %v8866, 4
    %v8869 = vshll.u32 %v8350, 16
    %v8871 = vrot.slane %v8869, 5
    %v8872 = vsel %vm1207, %v8867, %v8871
    %v8874 = vshrl.u32 %v8351, 16
    %v8876 = vrot.slane %v8874, 4
    %v8877 = vshll.u32 %v8351, 16
    %v8879 = vrot.slane %v8877, 5
    %v8880 = vor.u32 %v8876, %v8879
    %v8881 = vrot.slane %v8880, 4
    %v8883 = vshll.u32 %v8352, 16
    %v8885 = vrot.slane %v8883, 5
    %v8886 = vsel %vm1207, %v8881, %v8885
    %v8887 = vshrl.u32 %v8352, 16
    %v8889 = vrot.slane %v8887, 4
    %v8890 = vor.u32 %v8889, %v8885
    %v8891 = vrot.slane %v8890, 4
    %v8893 = vshll.u32 %v8353, 16
    %v8895 = vrot.slane %v8893, 5
    %v8896 = vsel %vm1207, %v8891, %v8895
    %v8898 = vshrl.u32 %v8354, 16
    %v8900 = vrot.slane %v8898, 4
    %v8901 = vshll.u32 %v8354, 16
    %v8903 = vrot.slane %v8901, 5
    %v8904 = vor.u32 %v8900, %v8903
    %v8905 = vrot.slane %v8904, 4
    %v8907 = vshll.u32 %v8355, 16
    %v8909 = vrot.slane %v8907, 5
    %v8910 = vsel %vm1207, %v8905, %v8909
    %v8911 = vshrl.u32 %v8355, 16
    %v8913 = vrot.slane %v8911, 4
    %v8914 = vor.u32 %v8913, %v8909
    %v8915 = vrot.slane %v8914, 4
    %v8917 = vshll.u32 %v8356, 16
    %v8919 = vrot.slane %v8917, 5
    %v8920 = vsel %vm1207, %v8915, %v8919
    %v8922 = vshrl.u32 %v8357, 16
    %v8924 = vrot.slane %v8922, 4
    %v8925 = vshll.u32 %v8357, 16
    %v8927 = vrot.slane %v8925, 5
    %v8928 = vor.u32 %v8924, %v8927
    %v8929 = vrot.slane %v8928, 4
    %v8931 = vshll.u32 %v8358, 16
    %v8933 = vrot.slane %v8931, 5
    %v8934 = vsel %vm1207, %v8929, %v8933
    %v8935 = vshrl.u32 %v8358, 16
    %v8937 = vrot.slane %v8935, 4
    %v8938 = vor.u32 %v8937, %v8933
    %v8939 = vrot.slane %v8938, 4
    %v8941 = vshll.u32 %v8359, 16
    %v8943 = vrot.slane %v8941, 5
    %v8944 = vsel %vm1207, %v8939, %v8943
    %v8946 = vshrl.u32 %v8360, 16
    %v8948 = vrot.slane %v8946, 4
    %v8949 = vshll.u32 %v8360, 16
    %v8951 = vrot.slane %v8949, 5
    %v8952 = vor.u32 %v8948, %v8951
    %v8953 = vrot.slane %v8952, 4
    %v8955 = vshll.u32 %v8361, 16
    %v8957 = vrot.slane %v8955, 5
    %v8958 = vsel %vm1207, %v8953, %v8957
    %v8959 = vshrl.u32 %v8361, 16
    %v8961 = vrot.slane %v8959, 4
    %v8962 = vor.u32 %v8961, %v8957
    %v8963 = vrot.slane %v8962, 4
    %v8965 = vshll.u32 %v8362, 16
    %v8967 = vrot.slane %v8965, 5
    %v8968 = vsel %vm1207, %v8963, %v8967
    %v8970 = vshrl.u32 %v8363, 16
    %v8972 = vrot.slane %v8970, 4
    %v8973 = vshll.u32 %v8363, 16
    %v8975 = vrot.slane %v8973, 5
    %v8976 = vor.u32 %v8972, %v8975
    %v8977 = vrot.slane %v8976, 4
    %v8979 = vshll.u32 %v8364, 16
    %v8981 = vrot.slane %v8979, 5
    %v8982 = vsel %vm1207, %v8977, %v8981
    %v8983 = vshrl.u32 %v8364, 16
    %v8985 = vrot.slane %v8983, 4
    %v8986 = vor.u32 %v8985, %v8981
    %v8987 = vrot.slane %v8986, 4
    %v8989 = vshll.u32 %v8365, 16
    %v8991 = vrot.slane %v8989, 5
    %v8992 = vsel %vm1207, %v8987, %v8991
    %v8994 = vshrl.u32 %v8366, 16
    %v8996 = vrot.slane %v8994, 4
    %v8997 = vshll.u32 %v8366, 16
    %v8999 = vrot.slane %v8997, 5
    %v9000 = vor.u32 %v8996, %v8999
    %v9001 = vrot.slane %v9000, 4
    %v9003 = vshll.u32 %v8367, 16
    %v9005 = vrot.slane %v9003, 5
    %v9006 = vsel %vm1207, %v9001, %v9005
    %v9007 = vshrl.u32 %v8367, 16
    %v9009 = vrot.slane %v9007, 4
    %v9010 = vor.u32 %v9009, %v9005
    %v9011 = vrot.slane %v9010, 4
    %v9013 = vshll.u32 %v8368, 16
    %v9015 = vrot.slane %v9013, 5
    %v9016 = vsel %vm1207, %v9011, %v9015
    %v9018 = vshrl.u32 %v8369, 16
    %v9020 = vrot.slane %v9018, 4
    %v9021 = vshll.u32 %v8369, 16
    %v9023 = vrot.slane %v9021, 5
    %v9024 = vor.u32 %v9020, %v9023
    %v9025 = vrot.slane %v9024, 4
    %v9027 = vshll.u32 %v8370, 16
    %v9029 = vrot.slane %v9027, 5
    %v9030 = vsel %vm1207, %v9025, %v9029
    %v9031 = vshrl.u32 %v8370, 16
    %v9033 = vrot.slane %v9031, 4
    %v9034 = vor.u32 %v9033, %v9029
    %v9035 = vrot.slane %v9034, 4
    %v9037 = vshll.u32 %v8371, 16
    %v9039 = vrot.slane %v9037, 5
    %v9040 = vsel %vm1207, %v9035, %v9039
    %v9042 = vshrl.u32 %v8372, 16
    %v9044 = vrot.slane %v9042, 4
    %v9045 = vshll.u32 %v8372, 16
    %v9047 = vrot.slane %v9045, 5
    %v9048 = vor.u32 %v9044, %v9047
    %v9049 = vrot.slane %v9048, 4
    %v9051 = vshll.u32 %v8373, 16
    %v9053 = vrot.slane %v9051, 5
    %v9054 = vsel %vm1207, %v9049, %v9053
    %v9055 = vshrl.u32 %v8373, 16
    %v9057 = vrot.slane %v9055, 4
    %v9058 = vor.u32 %v9057, %v9053
    %v9059 = vrot.slane %v9058, 4
    %v9061 = vshll.u32 %v8374, 16
    %v9063 = vrot.slane %v9061, 5
    %v9064 = vsel %vm1207, %v9059, %v9063
    %v9066 = vshrl.u32 %v8375, 16
    %v9068 = vrot.slane %v9066, 4
    %v9069 = vshll.u32 %v8375, 16
    %v9071 = vrot.slane %v9069, 5
    %v9072 = vor.u32 %v9068, %v9071
    %v9073 = vrot.slane %v9072, 4
    %v9075 = vshll.u32 %v8376, 16
    %v9077 = vrot.slane %v9075, 5
    %v9078 = vsel %vm1207, %v9073, %v9077
    %v9079 = vshrl.u32 %v8376, 16
    %v9081 = vrot.slane %v9079, 4
    %v9082 = vor.u32 %v9081, %v9077
    %v9083 = vrot.slane %v9082, 4
    %v9085 = vshll.u32 %v8377, 16
    %v9087 = vrot.slane %v9085, 5
    %v9088 = vsel %vm1207, %v9083, %v9087
    %v9090 = vshrl.u32 %v8378, 16
    %v9092 = vrot.slane %v9090, 4
    %v9093 = vshll.u32 %v8378, 16
    %v9095 = vrot.slane %v9093, 5
    %v9096 = vor.u32 %v9092, %v9095
    %v9097 = vrot.slane %v9096, 4
    %v9099 = vshll.u32 %v8379, 16
    %v9101 = vrot.slane %v9099, 5
    %v9102 = vsel %vm1207, %v9097, %v9101
    %v9103 = vshrl.u32 %v8379, 16
    %v9105 = vrot.slane %v9103, 4
    %v9106 = vor.u32 %v9105, %v9101
    %v9107 = vrot.slane %v9106, 4
    %v9109 = vshll.u32 %v8380, 16
    %v9111 = vrot.slane %v9109, 5
    %v9112 = vsel %vm1207, %v9107, %v9111
    %v9114 = vshrl.u32 %v8381, 16
    %v9116 = vrot.slane %v9114, 4
    %v9117 = vshll.u32 %v8381, 16
    %v9119 = vrot.slane %v9117, 5
    %v9120 = vor.u32 %v9116, %v9119
    %v9121 = vrot.slane %v9120, 4
    %v9123 = vshll.u32 %v8382, 16
    %v9125 = vrot.slane %v9123, 5
    %v9126 = vsel %vm1207, %v9121, %v9125
    %v9127 = vshrl.u32 %v8382, 16
    %v9129 = vrot.slane %v9127, 4
    %v9130 = vor.u32 %v9129, %v9125
    %v9131 = vrot.slane %v9130, 4
    %v9133 = vshll.u32 %v8383, 16
    %v9135 = vrot.slane %v9133, 5
    %v9136 = vsel %vm1207, %v9131, %v9135
    %v9138 = vshrl.u32 %v8384, 16
    %v9140 = vrot.slane %v9138, 4
    %v9141 = vshll.u32 %v8384, 16
    %v9143 = vrot.slane %v9141, 5
    %v9144 = vor.u32 %v9140, %v9143
    %v9145 = vrot.slane %v9144, 4
    %v9147 = vshll.u32 %v8385, 16
    %v9149 = vrot.slane %v9147, 5
    %v9150 = vsel %vm1207, %v9145, %v9149
    %v9151 = vshrl.u32 %v8385, 16
    %v9153 = vrot.slane %v9151, 4
    %v9154 = vor.u32 %v9153, %v9149
    %v9155 = vrot.slane %v9154, 4
    %v9157 = vshll.u32 %v8386, 16
    %v9159 = vrot.slane %v9157, 5
    %v9160 = vsel %vm1207, %v9155, %v9159
    %s9161 = scalar_lea.vmem [#allocation3], 128
    %v9162 = vld [vmem:[%s9161] sm:$0xf]
    %v9163 = vld [vmem:[%s9161 + $0x4] sm:$0xf]
    %v9164 = vld [vmem:[%s9161 + $0x8] sm:$0xf]
    %v9165 = vld [vmem:[%s9161 + $0xc] sm:$0xf]
    %v9166 = vld [vmem:[%s9161 + $0x10] sm:$0xf]
    %v9167 = vld [vmem:[%s9161 + $0x14] sm:$0xf]
    %v9168 = vld [vmem:[%s9161 + $0x18] sm:$0xf]
    %v9169 = vld [vmem:[%s9161 + $0x1c] sm:$0xf]
    %v9170 = vld [vmem:[%s9161 + $0x20] sm:$0xf]
    %v9171 = vld [vmem:[%s9161 + $0x24] sm:$0xf]
    %v9172 = vld [vmem:[%s9161 + $0x28] sm:$0xf]
    %v9173 = vld [vmem:[%s9161 + $0x2c] sm:$0xf]
    %v9174 = vld [vmem:[%s9161 + $0x30] sm:$0xf]
    %v9175 = vld [vmem:[%s9161 + $0x34] sm:$0xf]
    %v9176 = vld [vmem:[%s9161 + $0x38] sm:$0xf]
    %v9177 = vld [vmem:[%s9161 + $0x3c] sm:$0xf]
    %v9178 = vunpack.c.l.b16 %v8406
    %v9179 = vunpack.c.l.b16 %v8416
    %v9180 = vunpack.c.l.b16 %v8430
    %v9181 = vunpack.c.l.b16 %v8440
    %v9182 = vunpack.c.l.b16 %v8454
    %v9183 = vunpack.c.l.b16 %v8464
    %v9184 = vunpack.c.l.b16 %v8478
    %v9185 = vunpack.c.l.b16 %v8488
    %v9186 = vunpack.c.l.b16 %v8502
    %v9187 = vunpack.c.l.b16 %v8512
    %v9188 = vunpack.c.l.b16 %v8526
    %v9189 = vunpack.c.l.b16 %v8536
    %v9190 = vunpack.c.l.b16 %v8550
    %v9191 = vunpack.c.l.b16 %v8560
    %v9192 = vunpack.c.l.b16 %v8574
    %v9193 = vunpack.c.l.b16 %v8584
    %v9194 = vunpack.c.l.b16 %v8598
    %v9195 = vunpack.c.l.b16 %v8608
    %v9196 = vunpack.c.l.b16 %v8622
    %v9197 = vunpack.c.l.b16 %v8632
    %v9198 = vunpack.c.l.b16 %v8646
    %v9199 = vunpack.c.l.b16 %v8656
    %v9200 = vunpack.c.l.b16 %v8670
    %v9201 = vunpack.c.l.b16 %v8680
    %v9202 = vunpack.c.l.b16 %v8694
    %v9203 = vunpack.c.l.b16 %v8704
    %v9204 = vunpack.c.l.b16 %v8718
    %v9205 = vunpack.c.l.b16 %v8728
    %v9206 = vunpack.c.l.b16 %v8742
    %v9207 = vunpack.c.l.b16 %v8752
    %v9208 = vunpack.c.l.b16 %v8766
    %v9209 = vunpack.c.l.b16 %v8776
    %v9210 = vunpack.c.l.b16 %v8790
    %v9211 = vunpack.c.l.b16 %v8800
    %v9212 = vunpack.c.l.b16 %v8814
    %v9213 = vunpack.c.l.b16 %v8824
    %v9214 = vunpack.c.l.b16 %v8838
    %v9215 = vunpack.c.l.b16 %v8848
    %v9216 = vunpack.c.l.b16 %v8862
    %v9217 = vunpack.c.l.b16 %v8872
    %v9218 = vunpack.c.l.b16 %v8886
    %v9219 = vunpack.c.l.b16 %v8896
    %v9220 = vunpack.c.l.b16 %v8910
    %v9221 = vunpack.c.l.b16 %v8920
    %v9222 = vunpack.c.l.b16 %v8934
    %v9223 = vunpack.c.l.b16 %v8944
    %v9224 = vunpack.c.l.b16 %v8958
    %v9225 = vunpack.c.l.b16 %v8968
    %v9226 = vunpack.c.l.b16 %v8982
    %v9227 = vunpack.c.l.b16 %v8992
    %v9228 = vunpack.c.l.b16 %v9006
    %v9229 = vunpack.c.l.b16 %v9016
    %v9230 = vunpack.c.l.b16 %v9030
    %v9231 = vunpack.c.l.b16 %v9040
    %v9232 = vunpack.c.l.b16 %v9054
    %v9233 = vunpack.c.l.b16 %v9064
    %v9234 = vunpack.c.l.b16 %v9078
    %v9235 = vunpack.c.l.b16 %v9088
    %v9236 = vunpack.c.l.b16 %v9102
    %v9237 = vunpack.c.l.b16 %v9112
    %v9238 = vunpack.c.l.b16 %v9126
    %v9239 = vunpack.c.l.b16 %v9136
    %v9240 = vunpack.c.l.b16 %v9150
    %v9241 = vunpack.c.l.b16 %v9160
    %v9242 = vpack.c.b16 %v9179, %v9178
    %v9243 = vpack.c.b16 %v9181, %v9180
    %v9244 = vpack.c.b16 %v9183, %v9182
    %v9245 = vpack.c.b16 %v9185, %v9184
    %v9246 = vpack.c.b16 %v9187, %v9186
    %v9247 = vpack.c.b16 %v9189, %v9188
    %v9248 = vpack.c.b16 %v9191, %v9190
    %v9249 = vpack.c.b16 %v9193, %v9192
    %v9250 = vpack.c.b16 %v9195, %v9194
    %v9251 = vpack.c.b16 %v9197, %v9196
    %v9252 = vpack.c.b16 %v9199, %v9198
    %v9253 = vpack.c.b16 %v9201, %v9200
    %v9254 = vpack.c.b16 %v9203, %v9202
    %v9255 = vpack.c.b16 %v9205, %v9204
    %v9256 = vpack.c.b16 %v9207, %v9206
    %v9257 = vpack.c.b16 %v9209, %v9208
    %v9258 = vpack.c.b16 %v9211, %v9210
    %v9259 = vpack.c.b16 %v9213, %v9212
    %v9260 = vpack.c.b16 %v9215, %v9214
    %v9261 = vpack.c.b16 %v9217, %v9216
    %v9262 = vpack.c.b16 %v9219, %v9218
    %v9263 = vpack.c.b16 %v9221, %v9220
    %v9264 = vpack.c.b16 %v9223, %v9222
    %v9265 = vpack.c.b16 %v9225, %v9224
    %v9266 = vpack.c.b16 %v9227, %v9226
    %v9267 = vpack.c.b16 %v9229, %v9228
    %v9268 = vpack.c.b16 %v9231, %v9230
    %v9269 = vpack.c.b16 %v9233, %v9232
    %v9270 = vpack.c.b16 %v9235, %v9234
    %v9271 = vpack.c.b16 %v9237, %v9236
    %v9272 = vpack.c.b16 %v9239, %v9238
    %v9273 = vpack.c.b16 %v9241, %v9240
    %v9322 = vunpack.c.l.b16 %v9162
    %v9323 = vunpack.c.l.b16 %v9163
    %v9324 = vunpack.c.l.b16 %v9164
    %v9325 = vunpack.c.l.b16 %v9165
    %v9326 = vunpack.c.l.b16 %v9166
    %v9327 = vunpack.c.l.b16 %v9167
    %v9328 = vunpack.c.l.b16 %v9168
    %v9329 = vunpack.c.l.b16 %v9169
    %v9330 = vunpack.c.l.b16 %v9170
    %v9331 = vunpack.c.l.b16 %v9171
    %v9332 = vunpack.c.l.b16 %v9172
    %v9333 = vunpack.c.l.b16 %v9173
    %v9334 = vunpack.c.l.b16 %v9174
    %v9335 = vunpack.c.l.b16 %v9175
    %v9336 = vunpack.c.l.b16 %v9176
    %v9337 = vunpack.c.l.b16 %v9177
    %v9338 = vpack.c.b16 %v9323, %v9322
    %v9339 = vpack.c.b16 %v9325, %v9324
    %v9340 = vpack.c.b16 %v9327, %v9326
    %v9341 = vpack.c.b16 %v9329, %v9328
    %v9342 = vpack.c.b16 %v9331, %v9330
    %v9343 = vpack.c.b16 %v9333, %v9332
    %v9344 = vpack.c.b16 %v9335, %v9334
    %v9345 = vpack.c.b16 %v9337, %v9336
    %9354 = vmatpush.bf16.msra.mxu0 %v9345
    %9355 = vmatpush.bf16.msra.mxu0 %v9344
    %9356 = vmatpush.bf16.msra.mxu0 %v9343
    %9357 = vmatpush.bf16.msra.mxu0 %v9342
    %9358 = vmatpush.bf16.msra.mxu0 %v9341
    %9359 = vmatpush.bf16.msra.mxu0 %v9340
    %9360 = vmatpush.bf16.msra.mxu0 %v9339
    %9361 = vmatpush.bf16.msra.mxu0 %v9338
    %9362 = vmatmul.bf16.gmra.mxu0 %v9242
    %v9363 = vpop.f32.mrf.mxu0
    %v9364 = vadd.f32 0.0, %v9363
    %v9365 = vpop.f32.mrf.mxu0
    %v9366 = vadd.f32 0.0, %v9365
    %9367 = vmatmul.bf16.gmra.mxu0 %v9243
    %v9368 = vpop.f32.mrf.mxu0
    %v9369 = vadd.f32 0.0, %v9368
    %v9370 = vpop.f32.mrf.mxu0
    %v9371 = vadd.f32 0.0, %v9370
    %9372 = vmatmul.bf16.gmra.mxu0 %v9244
    %v9373 = vpop.f32.mrf.mxu0
    %v9374 = vadd.f32 0.0, %v9373
    %v9375 = vpop.f32.mrf.mxu0
    %v9376 = vadd.f32 0.0, %v9375
    %9377 = vmatmul.bf16.gmra.mxu0 %v9245
    %v9378 = vpop.f32.mrf.mxu0
    %v9379 = vadd.f32 0.0, %v9378
    %v9380 = vpop.f32.mrf.mxu0
    %v9381 = vadd.f32 0.0, %v9380
    %9382 = vmatmul.bf16.gmra.mxu0 %v9246
    %v9383 = vpop.f32.mrf.mxu0
    %v9384 = vadd.f32 0.0, %v9383
    %v9385 = vpop.f32.mrf.mxu0
    %v9386 = vadd.f32 0.0, %v9385
    %9387 = vmatmul.bf16.gmra.mxu0 %v9247
    %v9388 = vpop.f32.mrf.mxu0
    %v9389 = vadd.f32 0.0, %v9388
    %v9390 = vpop.f32.mrf.mxu0
    %v9391 = vadd.f32 0.0, %v9390
    %9392 = vmatmul.bf16.gmra.mxu0 %v9248
    %v9393 = vpop.f32.mrf.mxu0
    %v9394 = vadd.f32 0.0, %v9393
    %v9395 = vpop.f32.mrf.mxu0
    %v9396 = vadd.f32 0.0, %v9395
    %9397 = vmatmul.bf16.gmra.mxu0 %v9249
    %v9398 = vpop.f32.mrf.mxu0
    %v9399 = vadd.f32 0.0, %v9398
    %v9400 = vpop.f32.mrf.mxu0
    %v9401 = vadd.f32 0.0, %v9400
    %9402 = vmatmul.bf16.gmra.mxu0 %v9250
    %v9403 = vpop.f32.mrf.mxu0
    %v9404 = vadd.f32 0.0, %v9403
    %v9405 = vpop.f32.mrf.mxu0
    %v9406 = vadd.f32 0.0, %v9405
    %9407 = vmatmul.bf16.gmra.mxu0 %v9251
    %v9408 = vpop.f32.mrf.mxu0
    %v9409 = vadd.f32 0.0, %v9408
    %v9410 = vpop.f32.mrf.mxu0
    %v9411 = vadd.f32 0.0, %v9410
    %9412 = vmatmul.bf16.gmra.mxu0 %v9252
    %v9413 = vpop.f32.mrf.mxu0
    %v9414 = vadd.f32 0.0, %v9413
    %v9415 = vpop.f32.mrf.mxu0
    %v9416 = vadd.f32 0.0, %v9415
    %9417 = vmatmul.bf16.gmra.mxu0 %v9253
    %v9418 = vpop.f32.mrf.mxu0
    %v9419 = vadd.f32 0.0, %v9418
    %v9420 = vpop.f32.mrf.mxu0
    %v9421 = vadd.f32 0.0, %v9420
    %9422 = vmatmul.bf16.gmra.mxu0 %v9254
    %v9423 = vpop.f32.mrf.mxu0
    %v9424 = vadd.f32 0.0, %v9423
    %v9425 = vpop.f32.mrf.mxu0
    %v9426 = vadd.f32 0.0, %v9425
    %9427 = vmatmul.bf16.gmra.mxu0 %v9255
    %v9428 = vpop.f32.mrf.mxu0
    %v9429 = vadd.f32 0.0, %v9428
    %v9430 = vpop.f32.mrf.mxu0
    %v9431 = vadd.f32 0.0, %v9430
    %9432 = vmatmul.bf16.gmra.mxu0 %v9256
    %v9433 = vpop.f32.mrf.mxu0
    %v9434 = vadd.f32 0.0, %v9433
    %v9435 = vpop.f32.mrf.mxu0
    %v9436 = vadd.f32 0.0, %v9435
    %9437 = vmatmul.bf16.gmra.mxu0 %v9257
    %v9438 = vpop.f32.mrf.mxu0
    %v9439 = vadd.f32 0.0, %v9438
    %v9440 = vpop.f32.mrf.mxu0
    %v9441 = vadd.f32 0.0, %v9440
    %9442 = vmatmul.bf16.gmra.mxu0 %v9258
    %v9443 = vpop.f32.mrf.mxu0
    %v9444 = vadd.f32 0.0, %v9443
    %v9445 = vpop.f32.mrf.mxu0
    %v9446 = vadd.f32 0.0, %v9445
    %9447 = vmatmul.bf16.gmra.mxu0 %v9259
    %v9448 = vpop.f32.mrf.mxu0
    %v9449 = vadd.f32 0.0, %v9448
    %v9450 = vpop.f32.mrf.mxu0
    %v9451 = vadd.f32 0.0, %v9450
    %9452 = vmatmul.bf16.gmra.mxu0 %v9260
    %v9453 = vpop.f32.mrf.mxu0
    %v9454 = vadd.f32 0.0, %v9453
    %v9455 = vpop.f32.mrf.mxu0
    %v9456 = vadd.f32 0.0, %v9455
    %9457 = vmatmul.bf16.gmra.mxu0 %v9261
    %v9458 = vpop.f32.mrf.mxu0
    %v9459 = vadd.f32 0.0, %v9458
    %v9460 = vpop.f32.mrf.mxu0
    %v9461 = vadd.f32 0.0, %v9460
    %9462 = vmatmul.bf16.gmra.mxu0 %v9262
    %v9463 = vpop.f32.mrf.mxu0
    %v9464 = vadd.f32 0.0, %v9463
    %v9465 = vpop.f32.mrf.mxu0
    %v9466 = vadd.f32 0.0, %v9465
    %9467 = vmatmul.bf16.gmra.mxu0 %v9263
    %v9468 = vpop.f32.mrf.mxu0
    %v9469 = vadd.f32 0.0, %v9468
    %v9470 = vpop.f32.mrf.mxu0
    %v9471 = vadd.f32 0.0, %v9470
    %9472 = vmatmul.bf16.gmra.mxu0 %v9264
    %v9473 = vpop.f32.mrf.mxu0
    %v9474 = vadd.f32 0.0, %v9473
    %v9475 = vpop.f32.mrf.mxu0
    %v9476 = vadd.f32 0.0, %v9475
    %9477 = vmatmul.bf16.gmra.mxu0 %v9265
    %v9478 = vpop.f32.mrf.mxu0
    %v9479 = vadd.f32 0.0, %v9478
    %v9480 = vpop.f32.mrf.mxu0
    %v9481 = vadd.f32 0.0, %v9480
    %9482 = vmatmul.bf16.gmra.mxu0 %v9266
    %v9483 = vpop.f32.mrf.mxu0
    %v9484 = vadd.f32 0.0, %v9483
    %v9485 = vpop.f32.mrf.mxu0
    %v9486 = vadd.f32 0.0, %v9485
    %9487 = vmatmul.bf16.gmra.mxu0 %v9267
    %v9488 = vpop.f32.mrf.mxu0
    %v9489 = vadd.f32 0.0, %v9488
    %v9490 = vpop.f32.mrf.mxu0
    %v9491 = vadd.f32 0.0, %v9490
    %9492 = vmatmul.bf16.gmra.mxu0 %v9268
    %v9493 = vpop.f32.mrf.mxu0
    %v9494 = vadd.f32 0.0, %v9493
    %v9495 = vpop.f32.mrf.mxu0
    %v9496 = vadd.f32 0.0, %v9495
    %9497 = vmatmul.bf16.gmra.mxu0 %v9269
    %v9498 = vpop.f32.mrf.mxu0
    %v9499 = vadd.f32 0.0, %v9498
    %v9500 = vpop.f32.mrf.mxu0
    %v9501 = vadd.f32 0.0, %v9500
    %9502 = vmatmul.bf16.gmra.mxu0 %v9270
    %v9503 = vpop.f32.mrf.mxu0
    %v9504 = vadd.f32 0.0, %v9503
    %v9505 = vpop.f32.mrf.mxu0
    %v9506 = vadd.f32 0.0, %v9505
    %9507 = vmatmul.bf16.gmra.mxu0 %v9271
    %v9508 = vpop.f32.mrf.mxu0
    %v9509 = vadd.f32 0.0, %v9508
    %v9510 = vpop.f32.mrf.mxu0
    %v9511 = vadd.f32 0.0, %v9510
    %9512 = vmatmul.bf16.gmra.mxu0 %v9272
    %v9513 = vpop.f32.mrf.mxu0
    %v9514 = vadd.f32 0.0, %v9513
    %v9515 = vpop.f32.mrf.mxu0
    %v9516 = vadd.f32 0.0, %v9515
    %9517 = vmatmul.bf16.gmra.mxu0 %v9273
    %v9518 = vpop.f32.mrf.mxu0
    %v9519 = vadd.f32 0.0, %v9518
    %v9520 = vpop.f32.mrf.mxu0
    %v9521 = vadd.f32 0.0, %v9520
    %9522 = vdwg.mxu0
    %v9523 = vadd.f32 %v8221, %v9364
    %v9524 = vadd.f32 %v8222, %v9366
    %v9525 = vadd.f32 %v8223, %v9369
    %v9526 = vadd.f32 %v8224, %v9371
    %v9527 = vadd.f32 %v8225, %v9374
    %v9528 = vadd.f32 %v8226, %v9376
    %v9529 = vadd.f32 %v8227, %v9379
    %v9530 = vadd.f32 %v8228, %v9381
    %v9531 = vadd.f32 %v8229, %v9384
    %v9532 = vadd.f32 %v8230, %v9386
    %v9533 = vadd.f32 %v8231, %v9389
    %v9534 = vadd.f32 %v8232, %v9391
    %v9535 = vadd.f32 %v8233, %v9394
    %v9536 = vadd.f32 %v8234, %v9396
    %v9537 = vadd.f32 %v8235, %v9399
    %v9538 = vadd.f32 %v8236, %v9401
    %v9539 = vadd.f32 %v8237, %v9404
    %v9540 = vadd.f32 %v8238, %v9406
    %v9541 = vadd.f32 %v8239, %v9409
    %v9542 = vadd.f32 %v8240, %v9411
    %v9543 = vadd.f32 %v8241, %v9414
    %v9544 = vadd.f32 %v8242, %v9416
    %v9545 = vadd.f32 %v8243, %v9419
    %v9546 = vadd.f32 %v8244, %v9421
    %v9547 = vadd.f32 %v8245, %v9424
    %v9548 = vadd.f32 %v8246, %v9426
    %v9549 = vadd.f32 %v8247, %v9429
    %v9550 = vadd.f32 %v8248, %v9431
    %v9551 = vadd.f32 %v8249, %v9434
    %v9552 = vadd.f32 %v8250, %v9436
    %v9553 = vadd.f32 %v8251, %v9439
    %v9554 = vadd.f32 %v8252, %v9441
    %v9555 = vadd.f32 %v8253, %v9444
    %v9556 = vadd.f32 %v8254, %v9446
    %v9557 = vadd.f32 %v8255, %v9449
    %v9558 = vadd.f32 %v8256, %v9451
    %v9559 = vadd.f32 %v8257, %v9454
    %v9560 = vadd.f32 %v8258, %v9456
    %v9561 = vadd.f32 %v8259, %v9459
    %v9562 = vadd.f32 %v8260, %v9461
    %v9563 = vadd.f32 %v8261, %v9464
    %v9564 = vadd.f32 %v8262, %v9466
    %v9565 = vadd.f32 %v8263, %v9469
    %v9566 = vadd.f32 %v8264, %v9471
    %v9567 = vadd.f32 %v8265, %v9474
    %v9568 = vadd.f32 %v8266, %v9476
    %v9569 = vadd.f32 %v8267, %v9479
    %v9570 = vadd.f32 %v8268, %v9481
    %v9571 = vadd.f32 %v8269, %v9484
    %v9572 = vadd.f32 %v8270, %v9486
    %v9573 = vadd.f32 %v8271, %v9489
    %v9574 = vadd.f32 %v8272, %v9491
    %v9575 = vadd.f32 %v8273, %v9494
    %v9576 = vadd.f32 %v8274, %v9496
    %v9577 = vadd.f32 %v8275, %v9499
    %v9578 = vadd.f32 %v8276, %v9501
    %v9579 = vadd.f32 %v8277, %v9504
    %v9580 = vadd.f32 %v8278, %v9506
    %v9581 = vadd.f32 %v8279, %v9509
    %v9582 = vadd.f32 %v8280, %v9511
    %v9583 = vadd.f32 %v8281, %v9514
    %v9584 = vadd.f32 %v8282, %v9516
    %v9585 = vadd.f32 %v8283, %v9519
    %v9586 = vadd.f32 %v8284, %v9521
    %v9588 = vshrl.u32 %v8333, 16
    %v9590 = vrot.slane %v9588, 4
    %v9591 = vshll.u32 %v8333, 16
    %v9593 = vrot.slane %v9591, 5
    %v9594 = vor.u32 %v9590, %v9593
    %v9595 = vrot.slane %v9594, 4
    %v9597 = vshll.u32 %v8334, 16
    %v9599 = vrot.slane %v9597, 5
    %v9600 = vsel %vm1207, %v9595, %v9599
    %v9601 = vshrl.u32 %v8334, 16
    %v9603 = vrot.slane %v9601, 4
    %v9604 = vor.u32 %v9603, %v9599
    %v9605 = vrot.slane %v9604, 4
    %v9607 = vshll.u32 %v8335, 16
    %v9609 = vrot.slane %v9607, 5
    %v9610 = vsel %vm1207, %v9605, %v9609
    %v9612 = vshrl.u32 %v8387, 16
    %v9614 = vrot.slane %v9612, 4
    %v9615 = vshll.u32 %v8387, 16
    %v9617 = vrot.slane %v9615, 5
    %v9618 = vor.u32 %v9614, %v9617
    %v9619 = vrot.slane %v9618, 4
    %v9621 = vshll.u32 %v8388, 16
    %v9623 = vrot.slane %v9621, 5
    %v9624 = vsel %vm1207, %v9619, %v9623
    %v9625 = vshrl.u32 %v8388, 16
    %v9627 = vrot.slane %v9625, 4
    %v9628 = vor.u32 %v9627, %v9623
    %v9629 = vrot.slane %v9628, 4
    %v9631 = vshll.u32 %v8389, 16
    %v9633 = vrot.slane %v9631, 5
    %v9634 = vsel %vm1207, %v9629, %v9633
    %s9635 = scalar_lea.vmem [#allocation3], 320
    %v9636 = vld [vmem:[%s9635] sm:$0xf]
    %v9637 = vld [vmem:[%s9635 + $0x4] sm:$0xf]
    %v9638 = vld [vmem:[%s9635 + $0x8] sm:$0xf]
    %v9639 = vld [vmem:[%s9635 + $0xc] sm:$0xf]
    %v9640 = vld [vmem:[%s9635 + $0x10] sm:$0xf]
    %v9641 = vld [vmem:[%s9635 + $0x14] sm:$0xf]
    %v9642 = vld [vmem:[%s9635 + $0x18] sm:$0xf]
    %v9643 = vld [vmem:[%s9635 + $0x1c] sm:$0xf]
    %v9644 = vld [vmem:[%s9635 + $0x20] sm:$0xf]
    %v9645 = vld [vmem:[%s9635 + $0x24] sm:$0xf]
    %v9646 = vld [vmem:[%s9635 + $0x28] sm:$0xf]
    %v9647 = vld [vmem:[%s9635 + $0x2c] sm:$0xf]
    %v9648 = vld [vmem:[%s9635 + $0x30] sm:$0xf]
    %v9649 = vld [vmem:[%s9635 + $0x34] sm:$0xf]
    %v9650 = vld [vmem:[%s9635 + $0x38] sm:$0xf]
    %v9651 = vld [vmem:[%s9635 + $0x3c] sm:$0xf]
    %v9652 = vunpack.c.l.b16 %v9600
    %v9653 = vunpack.c.l.b16 %v9610
    %v9654 = vunpack.c.l.b16 %v9624
    %v9655 = vunpack.c.l.b16 %v9634
    %v9656 = vpack.c.b16 %v9653, %v9652
    %v9657 = vpack.c.b16 %v9655, %v9654
    %v9676 = vunpack.c.l.b16 %v9636
    %v9677 = vunpack.c.l.b16 %v9637
    %v9678 = vunpack.c.l.b16 %v9638
    %v9679 = vunpack.c.l.b16 %v9639
    %v9680 = vunpack.c.l.b16 %v9640
    %v9681 = vunpack.c.l.b16 %v9641
    %v9682 = vunpack.c.l.b16 %v9642
    %v9683 = vunpack.c.l.b16 %v9643
    %v9684 = vunpack.c.l.b16 %v9644
    %v9685 = vunpack.c.l.b16 %v9645
    %v9686 = vunpack.c.l.b16 %v9646
    %v9687 = vunpack.c.l.b16 %v9647
    %v9688 = vunpack.c.l.b16 %v9648
    %v9689 = vunpack.c.l.b16 %v9649
    %v9690 = vunpack.c.l.b16 %v9650
    %v9691 = vunpack.c.l.b16 %v9651
    %v9692 = vpack.c.b16 %v9677, %v9676
    %v9693 = vpack.c.b16 %v9679, %v9678
    %v9694 = vpack.c.b16 %v9681, %v9680
    %v9695 = vpack.c.b16 %v9683, %v9682
    %v9696 = vpack.c.b16 %v9685, %v9684
    %v9697 = vpack.c.b16 %v9687, %v9686
    %v9698 = vpack.c.b16 %v9689, %v9688
    %v9699 = vpack.c.b16 %v9691, %v9690
    %9708 = vmatpush.bf16.msra.mxu0 %v9699
    %9709 = vmatpush.bf16.msra.mxu0 %v9698
    %9710 = vmatpush.bf16.msra.mxu0 %v9697
    %9711 = vmatpush.bf16.msra.mxu0 %v9696
    %9712 = vmatpush.bf16.msra.mxu0 %v9695
    %9713 = vmatpush.bf16.msra.mxu0 %v9694
    %9714 = vmatpush.bf16.msra.mxu0 %v9693
    %9715 = vmatpush.bf16.msra.mxu0 %v9692
    %9716 = vmatmul.bf16.gmra.mxu0 %v9243
    %v9717 = vpop.f32.mrf.mxu0
    %v9718 = vadd.f32 0.0, %v9717
    %v9719 = vpop.f32.mrf.mxu0
    %v9720 = vadd.f32 0.0, %v9719
    %9721 = vmatmul.bf16.gmra.mxu0 %v9244
    %v9722 = vpop.f32.mrf.mxu0
    %v9723 = vadd.f32 0.0, %v9722
    %v9724 = vpop.f32.mrf.mxu0
    %v9725 = vadd.f32 0.0, %v9724
    %9726 = vmatmul.bf16.gmra.mxu0 %v9245
    %v9727 = vpop.f32.mrf.mxu0
    %v9728 = vadd.f32 0.0, %v9727
    %v9729 = vpop.f32.mrf.mxu0
    %v9730 = vadd.f32 0.0, %v9729
    %9731 = vmatmul.bf16.gmra.mxu0 %v9246
    %v9732 = vpop.f32.mrf.mxu0
    %v9733 = vadd.f32 0.0, %v9732
    %v9734 = vpop.f32.mrf.mxu0
    %v9735 = vadd.f32 0.0, %v9734
    %9736 = vmatmul.bf16.gmra.mxu0 %v9247
    %v9737 = vpop.f32.mrf.mxu0
    %v9738 = vadd.f32 0.0, %v9737
    %v9739 = vpop.f32.mrf.mxu0
    %v9740 = vadd.f32 0.0, %v9739
    %9741 = vmatmul.bf16.gmra.mxu0 %v9248
    %v9742 = vpop.f32.mrf.mxu0
    %v9743 = vadd.f32 0.0, %v9742
    %v9744 = vpop.f32.mrf.mxu0
    %v9745 = vadd.f32 0.0, %v9744
    %9746 = vmatmul.bf16.gmra.mxu0 %v9249
    %v9747 = vpop.f32.mrf.mxu0
    %v9748 = vadd.f32 0.0, %v9747
    %v9749 = vpop.f32.mrf.mxu0
    %v9750 = vadd.f32 0.0, %v9749
    %9751 = vmatmul.bf16.gmra.mxu0 %v9250
    %v9752 = vpop.f32.mrf.mxu0
    %v9753 = vadd.f32 0.0, %v9752
    %v9754 = vpop.f32.mrf.mxu0
    %v9755 = vadd.f32 0.0, %v9754
    %9756 = vmatmul.bf16.gmra.mxu0 %v9251
    %v9757 = vpop.f32.mrf.mxu0
    %v9758 = vadd.f32 0.0, %v9757
    %v9759 = vpop.f32.mrf.mxu0
    %v9760 = vadd.f32 0.0, %v9759
    %9761 = vmatmul.bf16.gmra.mxu0 %v9252
    %v9762 = vpop.f32.mrf.mxu0
    %v9763 = vadd.f32 0.0, %v9762
    %v9764 = vpop.f32.mrf.mxu0
    %v9765 = vadd.f32 0.0, %v9764
    %9766 = vmatmul.bf16.gmra.mxu0 %v9253
    %v9767 = vpop.f32.mrf.mxu0
    %v9768 = vadd.f32 0.0, %v9767
    %v9769 = vpop.f32.mrf.mxu0
    %v9770 = vadd.f32 0.0, %v9769
    %9771 = vmatmul.bf16.gmra.mxu0 %v9254
    %v9772 = vpop.f32.mrf.mxu0
    %v9773 = vadd.f32 0.0, %v9772
    %v9774 = vpop.f32.mrf.mxu0
    %v9775 = vadd.f32 0.0, %v9774
    %9776 = vmatmul.bf16.gmra.mxu0 %v9255
    %v9777 = vpop.f32.mrf.mxu0
    %v9778 = vadd.f32 0.0, %v9777
    %v9779 = vpop.f32.mrf.mxu0
    %v9780 = vadd.f32 0.0, %v9779
    %9781 = vmatmul.bf16.gmra.mxu0 %v9256
    %v9782 = vpop.f32.mrf.mxu0
    %v9783 = vadd.f32 0.0, %v9782
    %v9784 = vpop.f32.mrf.mxu0
    %v9785 = vadd.f32 0.0, %v9784
    %9786 = vmatmul.bf16.gmra.mxu0 %v9257
    %v9787 = vpop.f32.mrf.mxu0
    %v9788 = vadd.f32 0.0, %v9787
    %v9789 = vpop.f32.mrf.mxu0
    %v9790 = vadd.f32 0.0, %v9789
    %9791 = vmatmul.bf16.gmra.mxu0 %v9656
    %v9792 = vpop.f32.mrf.mxu0
    %v9793 = vadd.f32 0.0, %v9792
    %v9794 = vpop.f32.mrf.mxu0
    %v9795 = vadd.f32 0.0, %v9794
    %9796 = vmatmul.bf16.gmra.mxu0 %v9259
    %v9797 = vpop.f32.mrf.mxu0
    %v9798 = vadd.f32 0.0, %v9797
    %v9799 = vpop.f32.mrf.mxu0
    %v9800 = vadd.f32 0.0, %v9799
    %9801 = vmatmul.bf16.gmra.mxu0 %v9260
    %v9802 = vpop.f32.mrf.mxu0
    %v9803 = vadd.f32 0.0, %v9802
    %v9804 = vpop.f32.mrf.mxu0
    %v9805 = vadd.f32 0.0, %v9804
    %9806 = vmatmul.bf16.gmra.mxu0 %v9261
    %v9807 = vpop.f32.mrf.mxu0
    %v9808 = vadd.f32 0.0, %v9807
    %v9809 = vpop.f32.mrf.mxu0
    %v9810 = vadd.f32 0.0, %v9809
    %9811 = vmatmul.bf16.gmra.mxu0 %v9262
    %v9812 = vpop.f32.mrf.mxu0
    %v9813 = vadd.f32 0.0, %v9812
    %v9814 = vpop.f32.mrf.mxu0
    %v9815 = vadd.f32 0.0, %v9814
    %9816 = vmatmul.bf16.gmra.mxu0 %v9263
    %v9817 = vpop.f32.mrf.mxu0
    %v9818 = vadd.f32 0.0, %v9817
    %v9819 = vpop.f32.mrf.mxu0
    %v9820 = vadd.f32 0.0, %v9819
    %9821 = vmatmul.bf16.gmra.mxu0 %v9264
    %v9822 = vpop.f32.mrf.mxu0
    %v9823 = vadd.f32 0.0, %v9822
    %v9824 = vpop.f32.mrf.mxu0
    %v9825 = vadd.f32 0.0, %v9824
    %9826 = vmatmul.bf16.gmra.mxu0 %v9265
    %v9827 = vpop.f32.mrf.mxu0
    %v9828 = vadd.f32 0.0, %v9827
    %v9829 = vpop.f32.mrf.mxu0
    %v9830 = vadd.f32 0.0, %v9829
    %9831 = vmatmul.bf16.gmra.mxu0 %v9266
    %v9832 = vpop.f32.mrf.mxu0
    %v9833 = vadd.f32 0.0, %v9832
    %v9834 = vpop.f32.mrf.mxu0
    %v9835 = vadd.f32 0.0, %v9834
    %9836 = vmatmul.bf16.gmra.mxu0 %v9267
    %v9837 = vpop.f32.mrf.mxu0
    %v9838 = vadd.f32 0.0, %v9837
    %v9839 = vpop.f32.mrf.mxu0
    %v9840 = vadd.f32 0.0, %v9839
    %9841 = vmatmul.bf16.gmra.mxu0 %v9268
    %v9842 = vpop.f32.mrf.mxu0
    %v9843 = vadd.f32 0.0, %v9842
    %v9844 = vpop.f32.mrf.mxu0
    %v9845 = vadd.f32 0.0, %v9844
    %9846 = vmatmul.bf16.gmra.mxu0 %v9269
    %v9847 = vpop.f32.mrf.mxu0
    %v9848 = vadd.f32 0.0, %v9847
    %v9849 = vpop.f32.mrf.mxu0
    %v9850 = vadd.f32 0.0, %v9849
    %9851 = vmatmul.bf16.gmra.mxu0 %v9270
    %v9852 = vpop.f32.mrf.mxu0
    %v9853 = vadd.f32 0.0, %v9852
    %v9854 = vpop.f32.mrf.mxu0
    %v9855 = vadd.f32 0.0, %v9854
    %9856 = vmatmul.bf16.gmra.mxu0 %v9271
    %v9857 = vpop.f32.mrf.mxu0
    %v9858 = vadd.f32 0.0, %v9857
    %v9859 = vpop.f32.mrf.mxu0
    %v9860 = vadd.f32 0.0, %v9859
    %9861 = vmatmul.bf16.gmra.mxu0 %v9272
    %v9862 = vpop.f32.mrf.mxu0
    %v9863 = vadd.f32 0.0, %v9862
    %v9864 = vpop.f32.mrf.mxu0
    %v9865 = vadd.f32 0.0, %v9864
    %9866 = vmatmul.bf16.gmra.mxu0 %v9273
    %v9867 = vpop.f32.mrf.mxu0
    %v9868 = vadd.f32 0.0, %v9867
    %v9869 = vpop.f32.mrf.mxu0
    %v9870 = vadd.f32 0.0, %v9869
    %9871 = vmatmul.bf16.gmra.mxu0 %v9657
    %v9872 = vpop.f32.mrf.mxu0
    %v9873 = vadd.f32 0.0, %v9872
    %v9874 = vpop.f32.mrf.mxu0
    %v9875 = vadd.f32 0.0, %v9874
    %9876 = vdwg.mxu0
    %v9877 = vadd.f32 %v9523, %v9718
    %v9878 = vadd.f32 %v9524, %v9720
    %v9879 = vadd.f32 %v9525, %v9723
    %v9880 = vadd.f32 %v9526, %v9725
    %v9881 = vadd.f32 %v9527, %v9728
    %v9882 = vadd.f32 %v9528, %v9730
    %v9883 = vadd.f32 %v9529, %v9733
    %v9884 = vadd.f32 %v9530, %v9735
    %v9885 = vadd.f32 %v9531, %v9738
    %v9886 = vadd.f32 %v9532, %v9740
    %v9887 = vadd.f32 %v9533, %v9743
    %v9888 = vadd.f32 %v9534, %v9745
    %v9889 = vadd.f32 %v9535, %v9748
    %v9890 = vadd.f32 %v9536, %v9750
    %v9891 = vadd.f32 %v9537, %v9753
    %v9892 = vadd.f32 %v9538, %v9755
    %v9893 = vadd.f32 %v9539, %v9758
    %v9894 = vadd.f32 %v9540, %v9760
    %v9895 = vadd.f32 %v9541, %v9763
    %v9896 = vadd.f32 %v9542, %v9765
    %v9897 = vadd.f32 %v9543, %v9768
    %v9898 = vadd.f32 %v9544, %v9770
    %v9899 = vadd.f32 %v9545, %v9773
    %v9900 = vadd.f32 %v9546, %v9775
    %v9901 = vadd.f32 %v9547, %v9778
    %v9902 = vadd.f32 %v9548, %v9780
    %v9903 = vadd.f32 %v9549, %v9783
    %v9904 = vadd.f32 %v9550, %v9785
    %v9905 = vadd.f32 %v9551, %v9788
    %v9906 = vadd.f32 %v9552, %v9790
    %v9907 = vadd.f32 %v9553, %v9793
    %v9908 = vadd.f32 %v9554, %v9795
    %v9909 = vadd.f32 %v9555, %v9798
    %v9910 = vadd.f32 %v9556, %v9800
    %v9911 = vadd.f32 %v9557, %v9803
    %v9912 = vadd.f32 %v9558, %v9805
    %v9913 = vadd.f32 %v9559, %v9808
    %v9914 = vadd.f32 %v9560, %v9810
    %v9915 = vadd.f32 %v9561, %v9813
    %v9916 = vadd.f32 %v9562, %v9815
    %v9917 = vadd.f32 %v9563, %v9818
    %v9918 = vadd.f32 %v9564, %v9820
    %v9919 = vadd.f32 %v9565, %v9823
    %v9920 = vadd.f32 %v9566, %v9825
    %v9921 = vadd.f32 %v9567, %v9828
    %v9922 = vadd.f32 %v9568, %v9830
    %v9923 = vadd.f32 %v9569, %v9833
    %v9924 = vadd.f32 %v9570, %v9835
    %v9925 = vadd.f32 %v9571, %v9838
    %v9926 = vadd.f32 %v9572, %v9840
    %v9927 = vadd.f32 %v9573, %v9843
    %v9928 = vadd.f32 %v9574, %v9845
    %v9929 = vadd.f32 %v9575, %v9848
    %v9930 = vadd.f32 %v9576, %v9850
    %v9931 = vadd.f32 %v9577, %v9853
    %v9932 = vadd.f32 %v9578, %v9855
    %v9933 = vadd.f32 %v9579, %v9858
    %v9934 = vadd.f32 %v9580, %v9860
    %v9935 = vadd.f32 %v9581, %v9863
    %v9936 = vadd.f32 %v9582, %v9865
    %v9937 = vadd.f32 %v9583, %v9868
    %v9938 = vadd.f32 %v9584, %v9870
    %v9939 = vadd.f32 %v9585, %v9873
    %v9940 = vadd.f32 %v9586, %v9875
    %v9942 = vshrl.u32 %v8336, 16
    %v9944 = vrot.slane %v9942, 4
    %v9945 = vshll.u32 %v8336, 16
    %v9947 = vrot.slane %v9945, 5
    %v9948 = vor.u32 %v9944, %v9947
    %v9949 = vrot.slane %v9948, 4
    %v9951 = vshll.u32 %v8337, 16
    %v9953 = vrot.slane %v9951, 5
    %v9954 = vsel %vm1207, %v9949, %v9953
    %v9955 = vshrl.u32 %v8337, 16
    %v9957 = vrot.slane %v9955, 4
    %v9958 = vor.u32 %v9957, %v9953
    %v9959 = vrot.slane %v9958, 4
    %v9961 = vshll.u32 %v8338, 16
    %v9963 = vrot.slane %v9961, 5
    %v9964 = vsel %vm1207, %v9959, %v9963
    %v9966 = vshrl.u32 %v8390, 16
    %v9968 = vrot.slane %v9966, 4
    %v9969 = vshll.u32 %v8390, 16
    %v9971 = vrot.slane %v9969, 5
    %v9972 = vor.u32 %v9968, %v9971
    %v9973 = vrot.slane %v9972, 4
    %v9975 = vshll.u32 %v8391, 16
    %v9977 = vrot.slane %v9975, 5
    %v9978 = vsel %vm1207, %v9973, %v9977
    %v9979 = vshrl.u32 %v8391, 16
    %v9981 = vrot.slane %v9979, 4
    %v9982 = vor.u32 %v9981, %v9977
    %v9983 = vrot.slane %v9982, 4
    %v9985 = vshll.u32 %v8392, 16
    %v9987 = vrot.slane %v9985, 5
    %v9988 = vsel %vm1207, %v9983, %v9987
    %s9989 = scalar_lea.vmem [#allocation3], 512
    %v9990 = vld [vmem:[%s9989] sm:$0xf]
    %v9991 = vld [vmem:[%s9989 + $0x4] sm:$0xf]
    %v9992 = vld [vmem:[%s9989 + $0x8] sm:$0xf]
    %v9993 = vld [vmem:[%s9989 + $0xc] sm:$0xf]
    %v9994 = vld [vmem:[%s9989 + $0x10] sm:$0xf]
    %v9995 = vld [vmem:[%s9989 + $0x14] sm:$0xf]
    %v9996 = vld [vmem:[%s9989 + $0x18] sm:$0xf]
    %v9997 = vld [vmem:[%s9989 + $0x1c] sm:$0xf]
    %v9998 = vld [vmem:[%s9989 + $0x20] sm:$0xf]
    %v9999 = vld [vmem:[%s9989 + $0x24] sm:$0xf]
    %v10000 = vld [vmem:[%s9989 + $0x28] sm:$0xf]
    %v10001 = vld [vmem:[%s9989 + $0x2c] sm:$0xf]
    %v10002 = vld [vmem:[%s9989 + $0x30] sm:$0xf]
    %v10003 = vld [vmem:[%s9989 + $0x34] sm:$0xf]
    %v10004 = vld [vmem:[%s9989 + $0x38] sm:$0xf]
    %v10005 = vld [vmem:[%s9989 + $0x3c] sm:$0xf]
    %v10006 = vunpack.c.l.b16 %v9954
    %v10007 = vunpack.c.l.b16 %v9964
    %v10008 = vunpack.c.l.b16 %v9978
    %v10009 = vunpack.c.l.b16 %v9988
    %v10010 = vpack.c.b16 %v10007, %v10006
    %v10011 = vpack.c.b16 %v10009, %v10008
    %v10030 = vunpack.c.l.b16 %v9990
    %v10031 = vunpack.c.l.b16 %v9991
    %v10032 = vunpack.c.l.b16 %v9992
    %v10033 = vunpack.c.l.b16 %v9993
    %v10034 = vunpack.c.l.b16 %v9994
    %v10035 = vunpack.c.l.b16 %v9995
    %v10036 = vunpack.c.l.b16 %v9996
    %v10037 = vunpack.c.l.b16 %v9997
    %v10038 = vunpack.c.l.b16 %v9998
    %v10039 = vunpack.c.l.b16 %v9999
    %v10040 = vunpack.c.l.b16 %v10000
    %v10041 = vunpack.c.l.b16 %v10001
    %v10042 = vunpack.c.l.b16 %v10002
    %v10043 = vunpack.c.l.b16 %v10003
    %v10044 = vunpack.c.l.b16 %v10004
    %v10045 = vunpack.c.l.b16 %v10005
    %v10046 = vpack.c.b16 %v10031, %v10030
    %v10047 = vpack.c.b16 %v10033, %v10032
    %v10048 = vpack.c.b16 %v10035, %v10034
    %v10049 = vpack.c.b16 %v10037, %v10036
    %v10050 = vpack.c.b16 %v10039, %v10038
    %v10051 = vpack.c.b16 %v10041, %v10040
    %v10052 = vpack.c.b16 %v10043, %v10042
    %v10053 = vpack.c.b16 %v10045, %v10044
    %10062 = vmatpush.bf16.msra.mxu0 %v10053
    %10063 = vmatpush.bf16.msra.mxu0 %v10052
    %10064 = vmatpush.bf16.msra.mxu0 %v10051
    %10065 = vmatpush.bf16.msra.mxu0 %v10050
    %10066 = vmatpush.bf16.msra.mxu0 %v10049
    %10067 = vmatpush.bf16.msra.mxu0 %v10048
    %10068 = vmatpush.bf16.msra.mxu0 %v10047
    %10069 = vmatpush.bf16.msra.mxu0 %v10046
    %10070 = vmatmul.bf16.gmra.mxu0 %v9244
    %v10071 = vpop.f32.mrf.mxu0
    %v10072 = vadd.f32 0.0, %v10071
    %v10073 = vpop.f32.mrf.mxu0
    %v10074 = vadd.f32 0.0, %v10073
    %10075 = vmatmul.bf16.gmra.mxu0 %v9245
    %v10076 = vpop.f32.mrf.mxu0
    %v10077 = vadd.f32 0.0, %v10076
    %v10078 = vpop.f32.mrf.mxu0
    %v10079 = vadd.f32 0.0, %v10078
    %10080 = vmatmul.bf16.gmra.mxu0 %v9246
    %v10081 = vpop.f32.mrf.mxu0
    %v10082 = vadd.f32 0.0, %v10081
    %v10083 = vpop.f32.mrf.mxu0
    %v10084 = vadd.f32 0.0, %v10083
    %10085 = vmatmul.bf16.gmra.mxu0 %v9247
    %v10086 = vpop.f32.mrf.mxu0
    %v10087 = vadd.f32 0.0, %v10086
    %v10088 = vpop.f32.mrf.mxu0
    %v10089 = vadd.f32 0.0, %v10088
    %10090 = vmatmul.bf16.gmra.mxu0 %v9248
    %v10091 = vpop.f32.mrf.mxu0
    %v10092 = vadd.f32 0.0, %v10091
    %v10093 = vpop.f32.mrf.mxu0
    %v10094 = vadd.f32 0.0, %v10093
    %10095 = vmatmul.bf16.gmra.mxu0 %v9249
    %v10096 = vpop.f32.mrf.mxu0
    %v10097 = vadd.f32 0.0, %v10096
    %v10098 = vpop.f32.mrf.mxu0
    %v10099 = vadd.f32 0.0, %v10098
    %10100 = vmatmul.bf16.gmra.mxu0 %v9250
    %v10101 = vpop.f32.mrf.mxu0
    %v10102 = vadd.f32 0.0, %v10101
    %v10103 = vpop.f32.mrf.mxu0
    %v10104 = vadd.f32 0.0, %v10103
    %10105 = vmatmul.bf16.gmra.mxu0 %v9251
    %v10106 = vpop.f32.mrf.mxu0
    %v10107 = vadd.f32 0.0, %v10106
    %v10108 = vpop.f32.mrf.mxu0
    %v10109 = vadd.f32 0.0, %v10108
    %10110 = vmatmul.bf16.gmra.mxu0 %v9252
    %v10111 = vpop.f32.mrf.mxu0
    %v10112 = vadd.f32 0.0, %v10111
    %v10113 = vpop.f32.mrf.mxu0
    %v10114 = vadd.f32 0.0, %v10113
    %10115 = vmatmul.bf16.gmra.mxu0 %v9253
    %v10116 = vpop.f32.mrf.mxu0
    %v10117 = vadd.f32 0.0, %v10116
    %v10118 = vpop.f32.mrf.mxu0
    %v10119 = vadd.f32 0.0, %v10118
    %10120 = vmatmul.bf16.gmra.mxu0 %v9254
    %v10121 = vpop.f32.mrf.mxu0
    %v10122 = vadd.f32 0.0, %v10121
    %v10123 = vpop.f32.mrf.mxu0
    %v10124 = vadd.f32 0.0, %v10123
    %10125 = vmatmul.bf16.gmra.mxu0 %v9255
    %v10126 = vpop.f32.mrf.mxu0
    %v10127 = vadd.f32 0.0, %v10126
    %v10128 = vpop.f32.mrf.mxu0
    %v10129 = vadd.f32 0.0, %v10128
    %10130 = vmatmul.bf16.gmra.mxu0 %v9256
    %v10131 = vpop.f32.mrf.mxu0
    %v10132 = vadd.f32 0.0, %v10131
    %v10133 = vpop.f32.mrf.mxu0
    %v10134 = vadd.f32 0.0, %v10133
    %10135 = vmatmul.bf16.gmra.mxu0 %v9257
    %v10136 = vpop.f32.mrf.mxu0
    %v10137 = vadd.f32 0.0, %v10136
    %v10138 = vpop.f32.mrf.mxu0
    %v10139 = vadd.f32 0.0, %v10138
    %10140 = vmatmul.bf16.gmra.mxu0 %v9656
    %v10141 = vpop.f32.mrf.mxu0
    %v10142 = vadd.f32 0.0, %v10141
    %v10143 = vpop.f32.mrf.mxu0
    %v10144 = vadd.f32 0.0, %v10143
    %10145 = vmatmul.bf16.gmra.mxu0 %v10010
    %v10146 = vpop.f32.mrf.mxu0
    %v10147 = vadd.f32 0.0, %v10146
    %v10148 = vpop.f32.mrf.mxu0
    %v10149 = vadd.f32 0.0, %v10148
    %10150 = vmatmul.bf16.gmra.mxu0 %v9260
    %v10151 = vpop.f32.mrf.mxu0
    %v10152 = vadd.f32 0.0, %v10151
    %v10153 = vpop.f32.mrf.mxu0
    %v10154 = vadd.f32 0.0, %v10153
    %10155 = vmatmul.bf16.gmra.mxu0 %v9261
    %v10156 = vpop.f32.mrf.mxu0
    %v10157 = vadd.f32 0.0, %v10156
    %v10158 = vpop.f32.mrf.mxu0
    %v10159 = vadd.f32 0.0, %v10158
    %10160 = vmatmul.bf16.gmra.mxu0 %v9262
    %v10161 = vpop.f32.mrf.mxu0
    %v10162 = vadd.f32 0.0, %v10161
    %v10163 = vpop.f32.mrf.mxu0
    %v10164 = vadd.f32 0.0, %v10163
    %10165 = vmatmul.bf16.gmra.mxu0 %v9263
    %v10166 = vpop.f32.mrf.mxu0
    %v10167 = vadd.f32 0.0, %v10166
    %v10168 = vpop.f32.mrf.mxu0
    %v10169 = vadd.f32 0.0, %v10168
    %10170 = vmatmul.bf16.gmra.mxu0 %v9264
    %v10171 = vpop.f32.mrf.mxu0
    %v10172 = vadd.f32 0.0, %v10171
    %v10173 = vpop.f32.mrf.mxu0
    %v10174 = vadd.f32 0.0, %v10173
    %10175 = vmatmul.bf16.gmra.mxu0 %v9265
    %v10176 = vpop.f32.mrf.mxu0
    %v10177 = vadd.f32 0.0, %v10176
    %v10178 = vpop.f32.mrf.mxu0
    %v10179 = vadd.f32 0.0, %v10178
    %10180 = vmatmul.bf16.gmra.mxu0 %v9266
    %v10181 = vpop.f32.mrf.mxu0
    %v10182 = vadd.f32 0.0, %v10181
    %v10183 = vpop.f32.mrf.mxu0
    %v10184 = vadd.f32 0.0, %v10183
    %10185 = vmatmul.bf16.gmra.mxu0 %v9267
    %v10186 = vpop.f32.mrf.mxu0
    %v10187 = vadd.f32 0.0, %v10186
    %v10188 = vpop.f32.mrf.mxu0
    %v10189 = vadd.f32 0.0, %v10188
    %10190 = vmatmul.bf16.gmra.mxu0 %v9268
    %v10191 = vpop.f32.mrf.mxu0
    %v10192 = vadd.f32 0.0, %v10191
    %v10193 = vpop.f32.mrf.mxu0
    %v10194 = vadd.f32 0.0, %v10193
    %10195 = vmatmul.bf16.gmra.mxu0 %v9269
    %v10196 = vpop.f32.mrf.mxu0
    %v10197 = vadd.f32 0.0, %v10196
    %v10198 = vpop.f32.mrf.mxu0
    %v10199 = vadd.f32 0.0, %v10198
    %10200 = vmatmul.bf16.gmra.mxu0 %v9270
    %v10201 = vpop.f32.mrf.mxu0
    %v10202 = vadd.f32 0.0, %v10201
    %v10203 = vpop.f32.mrf.mxu0
    %v10204 = vadd.f32 0.0, %v10203
    %10205 = vmatmul.bf16.gmra.mxu0 %v9271
    %v10206 = vpop.f32.mrf.mxu0
    %v10207 = vadd.f32 0.0, %v10206
    %v10208 = vpop.f32.mrf.mxu0
    %v10209 = vadd.f32 0.0, %v10208
    %10210 = vmatmul.bf16.gmra.mxu0 %v9272
    %v10211 = vpop.f32.mrf.mxu0
    %v10212 = vadd.f32 0.0, %v10211
    %v10213 = vpop.f32.mrf.mxu0
    %v10214 = vadd.f32 0.0, %v10213
    %10215 = vmatmul.bf16.gmra.mxu0 %v9273
    %v10216 = vpop.f32.mrf.mxu0
    %v10217 = vadd.f32 0.0, %v10216
    %v10218 = vpop.f32.mrf.mxu0
    %v10219 = vadd.f32 0.0, %v10218
    %10220 = vmatmul.bf16.gmra.mxu0 %v9657
    %v10221 = vpop.f32.mrf.mxu0
    %v10222 = vadd.f32 0.0, %v10221
    %v10223 = vpop.f32.mrf.mxu0
    %v10224 = vadd.f32 0.0, %v10223
    %10225 = vmatmul.bf16.gmra.mxu0 %v10011
    %v10226 = vpop.f32.mrf.mxu0
    %v10227 = vadd.f32 0.0, %v10226
    %v10228 = vpop.f32.mrf.mxu0
    %v10229 = vadd.f32 0.0, %v10228
    %10230 = vdwg.mxu0
    %v10231 = vadd.f32 %v9877, %v10072
    %v10232 = vadd.f32 %v9878, %v10074
    %v10233 = vadd.f32 %v9879, %v10077
    %v10234 = vadd.f32 %v9880, %v10079
    %v10235 = vadd.f32 %v9881, %v10082
    %v10236 = vadd.f32 %v9882, %v10084
    %v10237 = vadd.f32 %v9883, %v10087
    %v10238 = vadd.f32 %v9884, %v10089
    %v10239 = vadd.f32 %v9885, %v10092
    %v10240 = vadd.f32 %v9886, %v10094
    %v10241 = vadd.f32 %v9887, %v10097
    %v10242 = vadd.f32 %v9888, %v10099
    %v10243 = vadd.f32 %v9889, %v10102
    %v10244 = vadd.f32 %v9890, %v10104
    %v10245 = vadd.f32 %v9891, %v10107
    %v10246 = vadd.f32 %v9892, %v10109
    %v10247 = vadd.f32 %v9893, %v10112
    %v10248 = vadd.f32 %v9894, %v10114
    %v10249 = vadd.f32 %v9895, %v10117
    %v10250 = vadd.f32 %v9896, %v10119
    %v10251 = vadd.f32 %v9897, %v10122
    %v10252 = vadd.f32 %v9898, %v10124
    %v10253 = vadd.f32 %v9899, %v10127
    %v10254 = vadd.f32 %v9900, %v10129
    %v10255 = vadd.f32 %v9901, %v10132
    %v10256 = vadd.f32 %v9902, %v10134
    %v10257 = vadd.f32 %v9903, %v10137
    %v10258 = vadd.f32 %v9904, %v10139
    %v10259 = vadd.f32 %v9905, %v10142
    %v10260 = vadd.f32 %v9906, %v10144
    %v10261 = vadd.f32 %v9907, %v10147
    %v10262 = vadd.f32 %v9908, %v10149
    %v10263 = vadd.f32 %v9909, %v10152
    %v10264 = vadd.f32 %v9910, %v10154
    %v10265 = vadd.f32 %v9911, %v10157
    %v10266 = vadd.f32 %v9912, %v10159
    %v10267 = vadd.f32 %v9913, %v10162
    %v10268 = vadd.f32 %v9914, %v10164
    %v10269 = vadd.f32 %v9915, %v10167
    %v10270 = vadd.f32 %v9916, %v10169
    %v10271 = vadd.f32 %v9917, %v10172
    %v10272 = vadd.f32 %v9918, %v10174
    %v10273 = vadd.f32 %v9919, %v10177
    %v10274 = vadd.f32 %v9920, %v10179
    %v10275 = vadd.f32 %v9921, %v10182
    %v10276 = vadd.f32 %v9922, %v10184
    %v10277 = vadd.f32 %v9923, %v10187
    %v10278 = vadd.f32 %v9924, %v10189
    %v10279 = vadd.f32 %v9925, %v10192
    %v10280 = vadd.f32 %v9926, %v10194
    %v10281 = vadd.f32 %v9927, %v10197
    %v10282 = vadd.f32 %v9928, %v10199
    %v10283 = vadd.f32 %v9929, %v10202
    %v10284 = vadd.f32 %v9930, %v10204
    %v10285 = vadd.f32 %v9931, %v10207
    %v10286 = vadd.f32 %v9932, %v10209
    %v10287 = vadd.f32 %v9933, %v10212
    %v10288 = vadd.f32 %v9934, %v10214
    %v10289 = vadd.f32 %v9935, %v10217
    %v10290 = vadd.f32 %v9936, %v10219
    %v10291 = vadd.f32 %v9937, %v10222
    %v10292 = vadd.f32 %v9938, %v10224
    %v10293 = vadd.f32 %v9939, %v10227
    %v10294 = vadd.f32 %v9940, %v10229
    %v10295 = vld [vmem:[%s5] sm:$0x1]
    %v10296 = vld [vmem:[%s6] sm:$0x1]
    %v10297 = vadd.f32 %v10231, %v10232
    %v10298 = vadd.f32 %v10297, %v10233
    %v10299 = vadd.f32 %v10298, %v10234
    %v10300 = vadd.f32 %v10299, %v10235
    %v10301 = vadd.f32 %v10300, %v10236
    %v10302 = vadd.f32 %v10301, %v10237
    %v10303 = vadd.f32 %v10302, %v10238
    %v10304 = vadd.f32 %v10303, %v10239
    %v10305 = vadd.f32 %v10304, %v10240
    %v10306 = vadd.f32 %v10305, %v10241
    %v10307 = vadd.f32 %v10306, %v10242
    %v10308 = vadd.f32 %v10307, %v10243
    %v10309 = vadd.f32 %v10308, %v10244
    %v10310 = vadd.f32 %v10309, %v10245
    %v10311 = vadd.f32 %v10310, %v10246
    %v10312 = vadd.f32 %v10311, %v10247
    %v10313 = vadd.f32 %v10312, %v10248
    %v10314 = vadd.f32 %v10313, %v10249
    %v10315 = vadd.f32 %v10314, %v10250
    %v10316 = vadd.f32 %v10315, %v10251
    %v10317 = vadd.f32 %v10316, %v10252
    %v10318 = vadd.f32 %v10317, %v10253
    %v10319 = vadd.f32 %v10318, %v10254
    %v10320 = vadd.f32 %v10319, %v10255
    %v10321 = vadd.f32 %v10320, %v10256
    %v10322 = vadd.f32 %v10321, %v10257
    %v10323 = vadd.f32 %v10322, %v10258
    %v10324 = vadd.f32 %v10323, %v10259
    %v10325 = vadd.f32 %v10324, %v10260
    %v10326 = vadd.f32 %v10325, %v10261
    %v10327 = vadd.f32 %v10326, %v10262
    %v10328 = vadd.f32 %v10327, %v10263
    %v10329 = vadd.f32 %v10328, %v10264
    %v10330 = vadd.f32 %v10329, %v10265
    %v10331 = vadd.f32 %v10330, %v10266
    %v10332 = vadd.f32 %v10331, %v10267
    %v10333 = vadd.f32 %v10332, %v10268
    %v10334 = vadd.f32 %v10333, %v10269
    %v10335 = vadd.f32 %v10334, %v10270
    %v10336 = vadd.f32 %v10335, %v10271
    %v10337 = vadd.f32 %v10336, %v10272
    %v10338 = vadd.f32 %v10337, %v10273
    %v10339 = vadd.f32 %v10338, %v10274
    %v10340 = vadd.f32 %v10339, %v10275
    %v10341 = vadd.f32 %v10340, %v10276
    %v10342 = vadd.f32 %v10341, %v10277
    %v10343 = vadd.f32 %v10342, %v10278
    %v10344 = vadd.f32 %v10343, %v10279
    %v10345 = vadd.f32 %v10344, %v10280
    %v10346 = vadd.f32 %v10345, %v10281
    %v10347 = vadd.f32 %v10346, %v10282
    %v10348 = vadd.f32 %v10347, %v10283
    %v10349 = vadd.f32 %v10348, %v10284
    %v10350 = vadd.f32 %v10349, %v10285
    %v10351 = vadd.f32 %v10350, %v10286
    %v10352 = vadd.f32 %v10351, %v10287
    %v10353 = vadd.f32 %v10352, %v10288
    %v10354 = vadd.f32 %v10353, %v10289
    %v10355 = vadd.f32 %v10354, %v10290
    %v10356 = vadd.f32 %v10355, %v10291
    %v10357 = vadd.f32 %v10356, %v10292
    %v10358 = vadd.f32 %v10357, %v10293
    %v10359 = vadd.f32 %v10358, %v10294
    %v10360 = vrot.slane %v10359, 4
    %v10361 = vadd.f32 %v10359, %v10360
    %v10362 = vrot.slane %v10361, 2
    %v10363 = vadd.f32 %v10361, %v10362
    %v10364 = vrot.slane %v10363, 1
    %v10365 = vadd.f32 %v10363, %v10364
    %v10366 = vmul.f32 %v10365, 0.001953125
    %v10367 = vsub.f32 %v10231, %v10366
    %v10368 = vsub.f32 %v10232, %v10366
    %v10369 = vsub.f32 %v10233, %v10366
    %v10370 = vsub.f32 %v10234, %v10366
    %v10371 = vsub.f32 %v10235, %v10366
    %v10372 = vsub.f32 %v10236, %v10366
    %v10373 = vsub.f32 %v10237, %v10366
    %v10374 = vsub.f32 %v10238, %v10366
    %v10375 = vsub.f32 %v10239, %v10366
    %v10376 = vsub.f32 %v10240, %v10366
    %v10377 = vsub.f32 %v10241, %v10366
    %v10378 = vsub.f32 %v10242, %v10366
    %v10379 = vsub.f32 %v10243, %v10366
    %v10380 = vsub.f32 %v10244, %v10366
    %v10381 = vsub.f32 %v10245, %v10366
    %v10382 = vsub.f32 %v10246, %v10366
    %v10383 = vsub.f32 %v10247, %v10366
    %v10384 = vsub.f32 %v10248, %v10366
    %v10385 = vsub.f32 %v10249, %v10366
    %v10386 = vsub.f32 %v10250, %v10366
    %v10387 = vsub.f32 %v10251, %v10366
    %v10388 = vsub.f32 %v10252, %v10366
    %v10389 = vsub.f32 %v10253, %v10366
    %v10390 = vsub.f32 %v10254, %v10366
    %v10391 = vsub.f32 %v10255, %v10366
    %v10392 = vsub.f32 %v10256, %v10366
    %v10393 = vsub.f32 %v10257, %v10366
    %v10394 = vsub.f32 %v10258, %v10366
    %v10395 = vsub.f32 %v10259, %v10366
    %v10396 = vsub.f32 %v10260, %v10366
    %v10397 = vsub.f32 %v10261, %v10366
    %v10398 = vsub.f32 %v10262, %v10366
    %v10399 = vsub.f32 %v10263, %v10366
    %v10400 = vsub.f32 %v10264, %v10366
    %v10401 = vsub.f32 %v10265, %v10366
    %v10402 = vsub.f32 %v10266, %v10366
    %v10403 = vsub.f32 %v10267, %v10366
    %v10404 = vsub.f32 %v10268, %v10366
    %v10405 = vsub.f32 %v10269, %v10366
    %v10406 = vsub.f32 %v10270, %v10366
    %v10407 = vsub.f32 %v10271, %v10366
    %v10408 = vsub.f32 %v10272, %v10366
    %v10409 = vsub.f32 %v10273, %v10366
    %v10410 = vsub.f32 %v10274, %v10366
    %v10411 = vsub.f32 %v10275, %v10366
    %v10412 = vsub.f32 %v10276, %v10366
    %v10413 = vsub.f32 %v10277, %v10366
    %v10414 = vsub.f32 %v10278, %v10366
    %v10415 = vsub.f32 %v10279, %v10366
    %v10416 = vsub.f32 %v10280, %v10366
    %v10417 = vsub.f32 %v10281, %v10366
    %v10418 = vsub.f32 %v10282, %v10366
    %v10419 = vsub.f32 %v10283, %v10366
    %v10420 = vsub.f32 %v10284, %v10366
    %v10421 = vsub.f32 %v10285, %v10366
    %v10422 = vsub.f32 %v10286, %v10366
    %v10423 = vsub.f32 %v10287, %v10366
    %v10424 = vsub.f32 %v10288, %v10366
    %v10425 = vsub.f32 %v10289, %v10366
    %v10426 = vsub.f32 %v10290, %v10366
    %v10427 = vsub.f32 %v10291, %v10366
    %v10428 = vsub.f32 %v10292, %v10366
    %v10429 = vsub.f32 %v10293, %v10366
    %v10430 = vsub.f32 %v10294, %v10366
    %v10431 = vmul.f32 %v10367, %v10367
    %v10432 = vmul.f32 %v10368, %v10368
    %v10433 = vmul.f32 %v10369, %v10369
    %v10434 = vmul.f32 %v10370, %v10370
    %v10435 = vmul.f32 %v10371, %v10371
    %v10436 = vmul.f32 %v10372, %v10372
    %v10437 = vmul.f32 %v10373, %v10373
    %v10438 = vmul.f32 %v10374, %v10374
    %v10439 = vmul.f32 %v10375, %v10375
    %v10440 = vmul.f32 %v10376, %v10376
    %v10441 = vmul.f32 %v10377, %v10377
    %v10442 = vmul.f32 %v10378, %v10378
    %v10443 = vmul.f32 %v10379, %v10379
    %v10444 = vmul.f32 %v10380, %v10380
    %v10445 = vmul.f32 %v10381, %v10381
    %v10446 = vmul.f32 %v10382, %v10382
    %v10447 = vmul.f32 %v10383, %v10383
    %v10448 = vmul.f32 %v10384, %v10384
    %v10449 = vmul.f32 %v10385, %v10385
    %v10450 = vmul.f32 %v10386, %v10386
    %v10451 = vmul.f32 %v10387, %v10387
    %v10452 = vmul.f32 %v10388, %v10388
    %v10453 = vmul.f32 %v10389, %v10389
    %v10454 = vmul.f32 %v10390, %v10390
    %v10455 = vmul.f32 %v10391, %v10391
    %v10456 = vmul.f32 %v10392, %v10392
    %v10457 = vmul.f32 %v10393, %v10393
    %v10458 = vmul.f32 %v10394, %v10394
    %v10459 = vmul.f32 %v10395, %v10395
    %v10460 = vmul.f32 %v10396, %v10396
    %v10461 = vmul.f32 %v10397, %v10397
    %v10462 = vmul.f32 %v10398, %v10398
    %v10463 = vmul.f32 %v10399, %v10399
    %v10464 = vmul.f32 %v10400, %v10400
    %v10465 = vmul.f32 %v10401, %v10401
    %v10466 = vmul.f32 %v10402, %v10402
    %v10467 = vmul.f32 %v10403, %v10403
    %v10468 = vmul.f32 %v10404, %v10404
    %v10469 = vmul.f32 %v10405, %v10405
    %v10470 = vmul.f32 %v10406, %v10406
    %v10471 = vmul.f32 %v10407, %v10407
    %v10472 = vmul.f32 %v10408, %v10408
    %v10473 = vmul.f32 %v10409, %v10409
    %v10474 = vmul.f32 %v10410, %v10410
    %v10475 = vmul.f32 %v10411, %v10411
    %v10476 = vmul.f32 %v10412, %v10412
    %v10477 = vmul.f32 %v10413, %v10413
    %v10478 = vmul.f32 %v10414, %v10414
    %v10479 = vmul.f32 %v10415, %v10415
    %v10480 = vmul.f32 %v10416, %v10416
    %v10481 = vmul.f32 %v10417, %v10417
    %v10482 = vmul.f32 %v10418, %v10418
    %v10483 = vmul.f32 %v10419, %v10419
    %v10484 = vmul.f32 %v10420, %v10420
    %v10485 = vmul.f32 %v10421, %v10421
    %v10486 = vmul.f32 %v10422, %v10422
    %v10487 = vmul.f32 %v10423, %v10423
    %v10488 = vmul.f32 %v10424, %v10424
    %v10489 = vmul.f32 %v10425, %v10425
    %v10490 = vmul.f32 %v10426, %v10426
    %v10491 = vmul.f32 %v10427, %v10427
    %v10492 = vmul.f32 %v10428, %v10428
    %v10493 = vmul.f32 %v10429, %v10429
    %v10494 = vmul.f32 %v10430, %v10430
    %v10495 = vadd.f32 %v10431, %v10432
    %v10496 = vadd.f32 %v10495, %v10433
    %v10497 = vadd.f32 %v10496, %v10434
    %v10498 = vadd.f32 %v10497, %v10435
    %v10499 = vadd.f32 %v10498, %v10436
    %v10500 = vadd.f32 %v10499, %v10437
    %v10501 = vadd.f32 %v10500, %v10438
    %v10502 = vadd.f32 %v10501, %v10439
    %v10503 = vadd.f32 %v10502, %v10440
    %v10504 = vadd.f32 %v10503, %v10441
    %v10505 = vadd.f32 %v10504, %v10442
    %v10506 = vadd.f32 %v10505, %v10443
    %v10507 = vadd.f32 %v10506, %v10444
    %v10508 = vadd.f32 %v10507, %v10445
    %v10509 = vadd.f32 %v10508, %v10446
    %v10510 = vadd.f32 %v10509, %v10447
    %v10511 = vadd.f32 %v10510, %v10448
    %v10512 = vadd.f32 %v10511, %v10449
    %v10513 = vadd.f32 %v10512, %v10450
    %v10514 = vadd.f32 %v10513, %v10451
    %v10515 = vadd.f32 %v10514, %v10452
    %v10516 = vadd.f32 %v10515, %v10453
    %v10517 = vadd.f32 %v10516, %v10454
    %v10518 = vadd.f32 %v10517, %v10455
    %v10519 = vadd.f32 %v10518, %v10456
    %v10520 = vadd.f32 %v10519, %v10457
    %v10521 = vadd.f32 %v10520, %v10458
    %v10522 = vadd.f32 %v10521, %v10459
    %v10523 = vadd.f32 %v10522, %v10460
    %v10524 = vadd.f32 %v10523, %v10461
    %v10525 = vadd.f32 %v10524, %v10462
    %v10526 = vadd.f32 %v10525, %v10463
    %v10527 = vadd.f32 %v10526, %v10464
    %v10528 = vadd.f32 %v10527, %v10465
    %v10529 = vadd.f32 %v10528, %v10466
    %v10530 = vadd.f32 %v10529, %v10467
    %v10531 = vadd.f32 %v10530, %v10468
    %v10532 = vadd.f32 %v10531, %v10469
    %v10533 = vadd.f32 %v10532, %v10470
    %v10534 = vadd.f32 %v10533, %v10471
    %v10535 = vadd.f32 %v10534, %v10472
    %v10536 = vadd.f32 %v10535, %v10473
    %v10537 = vadd.f32 %v10536, %v10474
    %v10538 = vadd.f32 %v10537, %v10475
    %v10539 = vadd.f32 %v10538, %v10476
    %v10540 = vadd.f32 %v10539, %v10477
    %v10541 = vadd.f32 %v10540, %v10478
    %v10542 = vadd.f32 %v10541, %v10479
    %v10543 = vadd.f32 %v10542, %v10480
    %v10544 = vadd.f32 %v10543, %v10481
    %v10545 = vadd.f32 %v10544, %v10482
    %v10546 = vadd.f32 %v10545, %v10483
    %v10547 = vadd.f32 %v10546, %v10484
    %v10548 = vadd.f32 %v10547, %v10485
    %v10549 = vadd.f32 %v10548, %v10486
    %v10550 = vadd.f32 %v10549, %v10487
    %v10551 = vadd.f32 %v10550, %v10488
    %v10552 = vadd.f32 %v10551, %v10489
    %v10553 = vadd.f32 %v10552, %v10490
    %v10554 = vadd.f32 %v10553, %v10491
    %v10555 = vadd.f32 %v10554, %v10492
    %v10556 = vadd.f32 %v10555, %v10493
    %v10557 = vadd.f32 %v10556, %v10494
    %v10558 = vrot.slane %v10557, 4
    %v10559 = vadd.f32 %v10557, %v10558
    %v10560 = vrot.slane %v10559, 2
    %v10561 = vadd.f32 %v10559, %v10560
    %v10562 = vrot.slane %v10561, 1
    %v10563 = vadd.f32 %v10561, %v10562
    %v10564 = vmul.f32 %v10563, 0.001953125
    %v10565 = vadd.f32 %v10564, 1e-05
    %v10566 = vrsqrt.pop %v10565
    %v10567 = vmul.f32 %v10566, %v10565
    %v10568 = vmul.f32 %v10567, %v10566
    %v10569 = vmul.f32 0.5, %v10568
    %v10570 = vsub.f32 1.5, %v10569
    %v10571 = vmul.f32 %v10566, %v10570
    %vm10572 = vweird.f32 %v10565
    %vm10573 = vweird.f32 %v10566
    %vm10574 = vmor %vm10572, %vm10573
    %v10575 = vsel %vm10574, %v10566, %v10571
    %v10576 = vmul.f32 %v10367, %v10575
    %v10577 = vmul.f32 %v10368, %v10575
    %v10578 = vmul.f32 %v10369, %v10575
    %v10579 = vmul.f32 %v10370, %v10575
    %v10580 = vmul.f32 %v10371, %v10575
    %v10581 = vmul.f32 %v10372, %v10575
    %v10582 = vmul.f32 %v10373, %v10575
    %v10583 = vmul.f32 %v10374, %v10575
    %v10584 = vmul.f32 %v10375, %v10575
    %v10585 = vmul.f32 %v10376, %v10575
    %v10586 = vmul.f32 %v10377, %v10575
    %v10587 = vmul.f32 %v10378, %v10575
    %v10588 = vmul.f32 %v10379, %v10575
    %v10589 = vmul.f32 %v10380, %v10575
    %v10590 = vmul.f32 %v10381, %v10575
    %v10591 = vmul.f32 %v10382, %v10575
    %v10592 = vmul.f32 %v10383, %v10575
    %v10593 = vmul.f32 %v10384, %v10575
    %v10594 = vmul.f32 %v10385, %v10575
    %v10595 = vmul.f32 %v10386, %v10575
    %v10596 = vmul.f32 %v10387, %v10575
    %v10597 = vmul.f32 %v10388, %v10575
    %v10598 = vmul.f32 %v10389, %v10575
    %v10599 = vmul.f32 %v10390, %v10575
    %v10600 = vmul.f32 %v10391, %v10575
    %v10601 = vmul.f32 %v10392, %v10575
    %v10602 = vmul.f32 %v10393, %v10575
    %v10603 = vmul.f32 %v10394, %v10575
    %v10604 = vmul.f32 %v10395, %v10575
    %v10605 = vmul.f32 %v10396, %v10575
    %v10606 = vmul.f32 %v10397, %v10575
    %v10607 = vmul.f32 %v10398, %v10575
    %v10608 = vmul.f32 %v10399, %v10575
    %v10609 = vmul.f32 %v10400, %v10575
    %v10610 = vmul.f32 %v10401, %v10575
    %v10611 = vmul.f32 %v10402, %v10575
    %v10612 = vmul.f32 %v10403, %v10575
    %v10613 = vmul.f32 %v10404, %v10575
    %v10614 = vmul.f32 %v10405, %v10575
    %v10615 = vmul.f32 %v10406, %v10575
    %v10616 = vmul.f32 %v10407, %v10575
    %v10617 = vmul.f32 %v10408, %v10575
    %v10618 = vmul.f32 %v10409, %v10575
    %v10619 = vmul.f32 %v10410, %v10575
    %v10620 = vmul.f32 %v10411, %v10575
    %v10621 = vmul.f32 %v10412, %v10575
    %v10622 = vmul.f32 %v10413, %v10575
    %v10623 = vmul.f32 %v10414, %v10575
    %v10624 = vmul.f32 %v10415, %v10575
    %v10625 = vmul.f32 %v10416, %v10575
    %v10626 = vmul.f32 %v10417, %v10575
    %v10627 = vmul.f32 %v10418, %v10575
    %v10628 = vmul.f32 %v10419, %v10575
    %v10629 = vmul.f32 %v10420, %v10575
    %v10630 = vmul.f32 %v10421, %v10575
    %v10631 = vmul.f32 %v10422, %v10575
    %v10632 = vmul.f32 %v10423, %v10575
    %v10633 = vmul.f32 %v10424, %v10575
    %v10634 = vmul.f32 %v10425, %v10575
    %v10635 = vmul.f32 %v10426, %v10575
    %v10636 = vmul.f32 %v10427, %v10575
    %v10637 = vmul.f32 %v10428, %v10575
    %v10638 = vmul.f32 %v10429, %v10575
    %v10639 = vmul.f32 %v10430, %v10575
    %v10641 = vperm.slane %v10295, 0
    %v10643 = vmul.f32 %v10576, %v10641
    %v10644 = vmul.f32 %v10577, %v10641
    %v10645 = vmul.f32 %v10578, %v10641
    %v10646 = vmul.f32 %v10579, %v10641
    %v10647 = vmul.f32 %v10580, %v10641
    %v10648 = vmul.f32 %v10581, %v10641
    %v10649 = vmul.f32 %v10582, %v10641
    %v10650 = vmul.f32 %v10583, %v10641
    %v10651 = vmul.f32 %v10584, %v10641
    %v10652 = vmul.f32 %v10585, %v10641
    %v10653 = vmul.f32 %v10586, %v10641
    %v10654 = vmul.f32 %v10587, %v10641
    %v10655 = vmul.f32 %v10588, %v10641
    %v10656 = vmul.f32 %v10589, %v10641
    %v10657 = vmul.f32 %v10590, %v10641
    %v10658 = vmul.f32 %v10591, %v10641
    %v10659 = vmul.f32 %v10592, %v10641
    %v10660 = vmul.f32 %v10593, %v10641
    %v10661 = vmul.f32 %v10594, %v10641
    %v10662 = vmul.f32 %v10595, %v10641
    %v10663 = vmul.f32 %v10596, %v10641
    %v10664 = vmul.f32 %v10597, %v10641
    %v10665 = vmul.f32 %v10598, %v10641
    %v10666 = vmul.f32 %v10599, %v10641
    %v10667 = vmul.f32 %v10600, %v10641
    %v10668 = vmul.f32 %v10601, %v10641
    %v10669 = vmul.f32 %v10602, %v10641
    %v10670 = vmul.f32 %v10603, %v10641
    %v10671 = vmul.f32 %v10604, %v10641
    %v10672 = vmul.f32 %v10605, %v10641
    %v10673 = vmul.f32 %v10606, %v10641
    %v10674 = vmul.f32 %v10607, %v10641
    %v10675 = vmul.f32 %v10608, %v10641
    %v10676 = vmul.f32 %v10609, %v10641
    %v10677 = vmul.f32 %v10610, %v10641
    %v10678 = vmul.f32 %v10611, %v10641
    %v10679 = vmul.f32 %v10612, %v10641
    %v10680 = vmul.f32 %v10613, %v10641
    %v10681 = vmul.f32 %v10614, %v10641
    %v10682 = vmul.f32 %v10615, %v10641
    %v10683 = vmul.f32 %v10616, %v10641
    %v10684 = vmul.f32 %v10617, %v10641
    %v10685 = vmul.f32 %v10618, %v10641
    %v10686 = vmul.f32 %v10619, %v10641
    %v10687 = vmul.f32 %v10620, %v10641
    %v10688 = vmul.f32 %v10621, %v10641
    %v10689 = vmul.f32 %v10622, %v10641
    %v10690 = vmul.f32 %v10623, %v10641
    %v10691 = vmul.f32 %v10624, %v10641
    %v10692 = vmul.f32 %v10625, %v10641
    %v10693 = vmul.f32 %v10626, %v10641
    %v10694 = vmul.f32 %v10627, %v10641
    %v10695 = vmul.f32 %v10628, %v10641
    %v10696 = vmul.f32 %v10629, %v10641
    %v10697 = vmul.f32 %v10630, %v10641
    %v10698 = vmul.f32 %v10631, %v10641
    %v10699 = vmul.f32 %v10632, %v10641
    %v10700 = vmul.f32 %v10633, %v10641
    %v10701 = vmul.f32 %v10634, %v10641
    %v10702 = vmul.f32 %v10635, %v10641
    %v10703 = vmul.f32 %v10636, %v10641
    %v10704 = vmul.f32 %v10637, %v10641
    %v10705 = vmul.f32 %v10638, %v10641
    %v10706 = vmul.f32 %v10639, %v10641
    %v10708 = vperm.slane %v10296, 0
    %v10710 = vadd.f32 %v10643, %v10708
    %v10711 = vadd.f32 %v10644, %v10708
    %v10712 = vadd.f32 %v10645, %v10708
    %v10713 = vadd.f32 %v10646, %v10708
    %v10714 = vadd.f32 %v10647, %v10708
    %v10715 = vadd.f32 %v10648, %v10708
    %v10716 = vadd.f32 %v10649, %v10708
    %v10717 = vadd.f32 %v10650, %v10708
    %v10718 = vadd.f32 %v10651, %v10708
    %v10719 = vadd.f32 %v10652, %v10708
    %v10720 = vadd.f32 %v10653, %v10708
    %v10721 = vadd.f32 %v10654, %v10708
    %v10722 = vadd.f32 %v10655, %v10708
    %v10723 = vadd.f32 %v10656, %v10708
    %v10724 = vadd.f32 %v10657, %v10708
    %v10725 = vadd.f32 %v10658, %v10708
    %v10726 = vadd.f32 %v10659, %v10708
    %v10727 = vadd.f32 %v10660, %v10708
    %v10728 = vadd.f32 %v10661, %v10708
    %v10729 = vadd.f32 %v10662, %v10708
    %v10730 = vadd.f32 %v10663, %v10708
    %v10731 = vadd.f32 %v10664, %v10708
    %v10732 = vadd.f32 %v10665, %v10708
    %v10733 = vadd.f32 %v10666, %v10708
    %v10734 = vadd.f32 %v10667, %v10708
    %v10735 = vadd.f32 %v10668, %v10708
    %v10736 = vadd.f32 %v10669, %v10708
    %v10737 = vadd.f32 %v10670, %v10708
    %v10738 = vadd.f32 %v10671, %v10708
    %v10739 = vadd.f32 %v10672, %v10708
    %v10740 = vadd.f32 %v10673, %v10708
    %v10741 = vadd.f32 %v10674, %v10708
    %v10742 = vadd.f32 %v10675, %v10708
    %v10743 = vadd.f32 %v10676, %v10708
    %v10744 = vadd.f32 %v10677, %v10708
    %v10745 = vadd.f32 %v10678, %v10708
    %v10746 = vadd.f32 %v10679, %v10708
    %v10747 = vadd.f32 %v10680, %v10708
    %v10748 = vadd.f32 %v10681, %v10708
    %v10749 = vadd.f32 %v10682, %v10708
    %v10750 = vadd.f32 %v10683, %v10708
    %v10751 = vadd.f32 %v10684, %v10708
    %v10752 = vadd.f32 %v10685, %v10708
    %v10753 = vadd.f32 %v10686, %v10708
    %v10754 = vadd.f32 %v10687, %v10708
    %v10755 = vadd.f32 %v10688, %v10708
    %v10756 = vadd.f32 %v10689, %v10708
    %v10757 = vadd.f32 %v10690, %v10708
    %v10758 = vadd.f32 %v10691, %v10708
    %v10759 = vadd.f32 %v10692, %v10708
    %v10760 = vadd.f32 %v10693, %v10708
    %v10761 = vadd.f32 %v10694, %v10708
    %v10762 = vadd.f32 %v10695, %v10708
    %v10763 = vadd.f32 %v10696, %v10708
    %v10764 = vadd.f32 %v10697, %v10708
    %v10765 = vadd.f32 %v10698, %v10708
    %v10766 = vadd.f32 %v10699, %v10708
    %v10767 = vadd.f32 %v10700, %v10708
    %v10768 = vadd.f32 %v10701, %v10708
    %v10769 = vadd.f32 %v10702, %v10708
    %v10770 = vadd.f32 %v10703, %v10708
    %v10771 = vadd.f32 %v10704, %v10708
    %v10772 = vadd.f32 %v10705, %v10708
    %v10773 = vadd.f32 %v10706, %v10708
    %s10774 = scalar_lea.vmem %s0, 12
    %v10775 = vld [vmem:[%s10774] sm:$0xf]
    %v10776 = vld [vmem:[%s10774 + $0x4] sm:$0xf]
    %v10777 = vld [vmem:[%s10774 + $0x8] sm:$0x1]
    %v10778 = vld [vmem:[%s10774 + $0xc] sm:$0xf]
    %v10779 = vld [vmem:[%s10774 + $0x10] sm:$0xf]
    %v10780 = vld [vmem:[%s10774 + $0x14] sm:$0x1]
    %v10781 = vld [vmem:[%s10774 + $0x18] sm:$0xf]
    %v10782 = vld [vmem:[%s10774 + $0x1c] sm:$0xf]
    %v10783 = vld [vmem:[%s10774 + $0x20] sm:$0x1]
    %v10784 = vld [vmem:[%s10774 + $0x24] sm:$0xf]
    %v10785 = vld [vmem:[%s10774 + $0x28] sm:$0xf]
    %v10786 = vld [vmem:[%s10774 + $0x2c] sm:$0x1]
    %v10787 = vld [vmem:[%s10774 + $0x30] sm:$0xf]
    %v10788 = vld [vmem:[%s10774 + $0x34] sm:$0xf]
    %v10789 = vld [vmem:[%s10774 + $0x38] sm:$0x1]
    %v10790 = vld [vmem:[%s10774 + $0x3c] sm:$0xf]
    %v10791 = vld [vmem:[%s10774 + $0x40] sm:$0xf]
    %v10792 = vld [vmem:[%s10774 + $0x44] sm:$0x1]
    %v10793 = vld [vmem:[%s10774 + $0x48] sm:$0xf]
    %v10794 = vld [vmem:[%s10774 + $0x4c] sm:$0xf]
    %v10795 = vld [vmem:[%s10774 + $0x50] sm:$0x1]
    %v10796 = vld [vmem:[%s10774 + $0x54] sm:$0xf]
    %v10797 = vld [vmem:[%s10774 + $0x58] sm:$0xf]
    %v10798 = vld [vmem:[%s10774 + $0x5c] sm:$0x1]
    %v10799 = vld [vmem:[%s10774 + $0x60] sm:$0xf]
    %v10800 = vld [vmem:[%s10774 + $0x64] sm:$0xf]
    %v10801 = vld [vmem:[%s10774 + $0x68] sm:$0x1]
    %v10802 = vld [vmem:[%s10774 + $0x6c] sm:$0xf]
    %v10803 = vld [vmem:[%s10774 + $0x70] sm:$0xf]
    %v10804 = vld [vmem:[%s10774 + $0x74] sm:$0x1]
    %v10805 = vld [vmem:[%s10774 + $0x78] sm:$0xf]
    %v10806 = vld [vmem:[%s10774 + $0x7c] sm:$0xf]
    %v10807 = vld [vmem:[%s10774 + $0x80] sm:$0x1]
    %v10808 = vld [vmem:[%s10774 + $0x84] sm:$0xf]
    %v10809 = vld [vmem:[%s10774 + $0x88] sm:$0xf]
    %v10810 = vld [vmem:[%s10774 + $0x8c] sm:$0x1]
    %v10811 = vld [vmem:[%s10774 + $0x90] sm:$0xf]
    %v10812 = vld [vmem:[%s10774 + $0x94] sm:$0xf]
    %v10813 = vld [vmem:[%s10774 + $0x98] sm:$0x1]
    %v10814 = vld [vmem:[%s10774 + $0x9c] sm:$0xf]
    %v10815 = vld [vmem:[%s10774 + $0xa0] sm:$0xf]
    %v10816 = vld [vmem:[%s10774 + $0xa4] sm:$0x1]
    %v10817 = vld [vmem:[%s10774 + $0xa8] sm:$0xf]
    %v10818 = vld [vmem:[%s10774 + $0xac] sm:$0xf]
    %v10819 = vld [vmem:[%s10774 + $0xb0] sm:$0x1]
    %v10820 = vld [vmem:[%s10774 + $0xb4] sm:$0xf]
    %v10821 = vld [vmem:[%s10774 + $0xb8] sm:$0xf]
    %v10822 = vld [vmem:[%s10774 + $0xbc] sm:$0x1]
    %v10823 = vld [vmem:[%s10774 + $0xd8] sm:$0xf]
    %v10824 = vld [vmem:[%s10774 + $0xdc] sm:$0xf]
    %v10825 = vld [vmem:[%s10774 + $0xe0] sm:$0x1]
    %v10826 = vld [vmem:[%s10774 + $0xe4] sm:$0xf]
    %v10827 = vld [vmem:[%s10774 + $0xe8] sm:$0xf]
    %v10828 = vld [vmem:[%s10774 + $0xec] sm:$0x1]
    %v10829 = vld [vmem:[%s10774 + $0xf0] sm:$0xf]
    %v10830 = vld [vmem:[%s10774 + $0xf4] sm:$0xf]
    %v10831 = vld [vmem:[%s10774 + $0xf8] sm:$0x1]
    %v10832 = vld [vmem:[%s10774 + $0xfc] sm:$0xf]
    %v10833 = vld [vmem:[%s10774 + $0x100] sm:$0xf]
    %v10834 = vld [vmem:[%s10774 + $0x104] sm:$0x1]
    %v10835 = vld [vmem:[%s10774 + $0x108] sm:$0xf]
    %v10836 = vld [vmem:[%s10774 + $0x10c] sm:$0xf]
    %v10837 = vld [vmem:[%s10774 + $0x110] sm:$0x1]
    %v10838 = vld [vmem:[%s10774 + $0x114] sm:$0xf]
    %v10839 = vld [vmem:[%s10774 + $0x118] sm:$0xf]
    %v10840 = vld [vmem:[%s10774 + $0x11c] sm:$0x1]
    %v10841 = vld [vmem:[%s10774 + $0x120] sm:$0xf]
    %v10842 = vld [vmem:[%s10774 + $0x124] sm:$0xf]
    %v10843 = vld [vmem:[%s10774 + $0x128] sm:$0x1]
    %v10844 = vld [vmem:[%s10774 + $0x12c] sm:$0xf]
    %v10845 = vld [vmem:[%s10774 + $0x130] sm:$0xf]
    %v10846 = vld [vmem:[%s10774 + $0x134] sm:$0x1]
    %v10847 = vld [vmem:[%s10774 + $0x138] sm:$0xf]
    %v10848 = vld [vmem:[%s10774 + $0x13c] sm:$0xf]
    %v10849 = vld [vmem:[%s10774 + $0x140] sm:$0x1]
    %v10850 = vld [vmem:[%s10774 + $0x144] sm:$0xf]
    %v10851 = vld [vmem:[%s10774 + $0x148] sm:$0xf]
    %v10852 = vld [vmem:[%s10774 + $0x14c] sm:$0x1]
    %v10853 = vld [vmem:[%s10774 + $0x150] sm:$0xf]
    %v10854 = vld [vmem:[%s10774 + $0x154] sm:$0xf]
    %v10855 = vld [vmem:[%s10774 + $0x158] sm:$0x1]
    %v10856 = vld [vmem:[%s10774 + $0x15c] sm:$0xf]
    %v10857 = vld [vmem:[%s10774 + $0x160] sm:$0xf]
    %v10858 = vld [vmem:[%s10774 + $0x164] sm:$0x1]
    %v10859 = vld [vmem:[%s10774 + $0x168] sm:$0xf]
    %v10860 = vld [vmem:[%s10774 + $0x16c] sm:$0xf]
    %v10861 = vld [vmem:[%s10774 + $0x170] sm:$0x1]
    %v10862 = vld [vmem:[%s10774 + $0x174] sm:$0xf]
    %v10863 = vld [vmem:[%s10774 + $0x178] sm:$0xf]
    %v10864 = vld [vmem:[%s10774 + $0x17c] sm:$0x1]
    %v10865 = vld [vmem:[%s10774 + $0x180] sm:$0xf]
    %v10866 = vld [vmem:[%s10774 + $0x184] sm:$0xf]
    %v10867 = vld [vmem:[%s10774 + $0x188] sm:$0x1]
    %v10868 = vld [vmem:[%s10774 + $0x18c] sm:$0xf]
    %v10869 = vld [vmem:[%s10774 + $0x190] sm:$0xf]
    %v10870 = vld [vmem:[%s10774 + $0x194] sm:$0x1]
    %v10872 = vshrl.u32 %v10775, 16
    %v10874 = vrot.slane %v10872, 4
    %v10875 = vshll.u32 %v10775, 16
    %v10877 = vrot.slane %v10875, 5
    %v10878 = vor.u32 %v10874, %v10877
    %v10879 = vrot.slane %v10878, 4
    %v10881 = vshll.u32 %v10776, 16
    %v10883 = vrot.slane %v10881, 5
    %v10884 = vsel %vm1207, %v10879, %v10883
    %v10885 = vshrl.u32 %v10776, 16
    %v10887 = vrot.slane %v10885, 4
    %v10888 = vor.u32 %v10887, %v10883
    %v10889 = vrot.slane %v10888, 4
    %v10891 = vshll.u32 %v10777, 16
    %v10893 = vrot.slane %v10891, 5
    %v10894 = vsel %vm1207, %v10889, %v10893
    %v10896 = vshrl.u32 %v10778, 16
    %v10898 = vrot.slane %v10896, 4
    %v10899 = vshll.u32 %v10778, 16
    %v10901 = vrot.slane %v10899, 5
    %v10902 = vor.u32 %v10898, %v10901
    %v10903 = vrot.slane %v10902, 4
    %v10905 = vshll.u32 %v10779, 16
    %v10907 = vrot.slane %v10905, 5
    %v10908 = vsel %vm1207, %v10903, %v10907
    %v10909 = vshrl.u32 %v10779, 16
    %v10911 = vrot.slane %v10909, 4
    %v10912 = vor.u32 %v10911, %v10907
    %v10913 = vrot.slane %v10912, 4
    %v10915 = vshll.u32 %v10780, 16
    %v10917 = vrot.slane %v10915, 5
    %v10918 = vsel %vm1207, %v10913, %v10917
    %v10920 = vshrl.u32 %v10781, 16
    %v10922 = vrot.slane %v10920, 4
    %v10923 = vshll.u32 %v10781, 16
    %v10925 = vrot.slane %v10923, 5
    %v10926 = vor.u32 %v10922, %v10925
    %v10927 = vrot.slane %v10926, 4
    %v10929 = vshll.u32 %v10782, 16
    %v10931 = vrot.slane %v10929, 5
    %v10932 = vsel %vm1207, %v10927, %v10931
    %v10933 = vshrl.u32 %v10782, 16
    %v10935 = vrot.slane %v10933, 4
    %v10936 = vor.u32 %v10935, %v10931
    %v10937 = vrot.slane %v10936, 4
    %v10939 = vshll.u32 %v10783, 16
    %v10941 = vrot.slane %v10939, 5
    %v10942 = vsel %vm1207, %v10937, %v10941
    %v10944 = vshrl.u32 %v10784, 16
    %v10946 = vrot.slane %v10944, 4
    %v10947 = vshll.u32 %v10784, 16
    %v10949 = vrot.slane %v10947, 5
    %v10950 = vor.u32 %v10946, %v10949
    %v10951 = vrot.slane %v10950, 4
    %v10953 = vshll.u32 %v10785, 16
    %v10955 = vrot.slane %v10953, 5
    %v10956 = vsel %vm1207, %v10951, %v10955
    %v10957 = vshrl.u32 %v10785, 16
    %v10959 = vrot.slane %v10957, 4
    %v10960 = vor.u32 %v10959, %v10955
    %v10961 = vrot.slane %v10960, 4
    %v10963 = vshll.u32 %v10786, 16
    %v10965 = vrot.slane %v10963, 5
    %v10966 = vsel %vm1207, %v10961, %v10965
    %v10968 = vshrl.u32 %v10787, 16
    %v10970 = vrot.slane %v10968, 4
    %v10971 = vshll.u32 %v10787, 16
    %v10973 = vrot.slane %v10971, 5
    %v10974 = vor.u32 %v10970, %v10973
    %v10975 = vrot.slane %v10974, 4
    %v10977 = vshll.u32 %v10788, 16
    %v10979 = vrot.slane %v10977, 5
    %v10980 = vsel %vm1207, %v10975, %v10979
    %v10981 = vshrl.u32 %v10788, 16
    %v10983 = vrot.slane %v10981, 4
    %v10984 = vor.u32 %v10983, %v10979
    %v10985 = vrot.slane %v10984, 4
    %v10987 = vshll.u32 %v10789, 16
    %v10989 = vrot.slane %v10987, 5
    %v10990 = vsel %vm1207, %v10985, %v10989
    %v10992 = vshrl.u32 %v10790, 16
    %v10994 = vrot.slane %v10992, 4
    %v10995 = vshll.u32 %v10790, 16
    %v10997 = vrot.slane %v10995, 5
    %v10998 = vor.u32 %v10994, %v10997
    %v10999 = vrot.slane %v10998, 4
    %v11001 = vshll.u32 %v10791, 16
    %v11003 = vrot.slane %v11001, 5
    %v11004 = vsel %vm1207, %v10999, %v11003
    %v11005 = vshrl.u32 %v10791, 16
    %v11007 = vrot.slane %v11005, 4
    %v11008 = vor.u32 %v11007, %v11003
    %v11009 = vrot.slane %v11008, 4
    %v11011 = vshll.u32 %v10792, 16
    %v11013 = vrot.slane %v11011, 5
    %v11014 = vsel %vm1207, %v11009, %v11013
    %v11016 = vshrl.u32 %v10793, 16
    %v11018 = vrot.slane %v11016, 4
    %v11019 = vshll.u32 %v10793, 16
    %v11021 = vrot.slane %v11019, 5
    %v11022 = vor.u32 %v11018, %v11021
    %v11023 = vrot.slane %v11022, 4
    %v11025 = vshll.u32 %v10794, 16
    %v11027 = vrot.slane %v11025, 5
    %v11028 = vsel %vm1207, %v11023, %v11027
    %v11029 = vshrl.u32 %v10794, 16
    %v11031 = vrot.slane %v11029, 4
    %v11032 = vor.u32 %v11031, %v11027
    %v11033 = vrot.slane %v11032, 4
    %v11035 = vshll.u32 %v10795, 16
    %v11037 = vrot.slane %v11035, 5
    %v11038 = vsel %vm1207, %v11033, %v11037
    %v11040 = vshrl.u32 %v10796, 16
    %v11042 = vrot.slane %v11040, 4
    %v11043 = vshll.u32 %v10796, 16
    %v11045 = vrot.slane %v11043, 5
    %v11046 = vor.u32 %v11042, %v11045
    %v11047 = vrot.slane %v11046, 4
    %v11049 = vshll.u32 %v10797, 16
    %v11051 = vrot.slane %v11049, 5
    %v11052 = vsel %vm1207, %v11047, %v11051
    %v11053 = vshrl.u32 %v10797, 16
    %v11055 = vrot.slane %v11053, 4
    %v11056 = vor.u32 %v11055, %v11051
    %v11057 = vrot.slane %v11056, 4
    %v11059 = vshll.u32 %v10798, 16
    %v11061 = vrot.slane %v11059, 5
    %v11062 = vsel %vm1207, %v11057, %v11061
    %v11064 = vshrl.u32 %v10799, 16
    %v11066 = vrot.slane %v11064, 4
    %v11067 = vshll.u32 %v10799, 16
    %v11069 = vrot.slane %v11067, 5
    %v11070 = vor.u32 %v11066, %v11069
    %v11071 = vrot.slane %v11070, 4
    %v11073 = vshll.u32 %v10800, 16
    %v11075 = vrot.slane %v11073, 5
    %v11076 = vsel %vm1207, %v11071, %v11075
    %v11077 = vshrl.u32 %v10800, 16
    %v11079 = vrot.slane %v11077, 4
    %v11080 = vor.u32 %v11079, %v11075
    %v11081 = vrot.slane %v11080, 4
    %v11083 = vshll.u32 %v10801, 16
    %v11085 = vrot.slane %v11083, 5
    %v11086 = vsel %vm1207, %v11081, %v11085
    %v11088 = vshrl.u32 %v10802, 16
    %v11090 = vrot.slane %v11088, 4
    %v11091 = vshll.u32 %v10802, 16
    %v11093 = vrot.slane %v11091, 5
    %v11094 = vor.u32 %v11090, %v11093
    %v11095 = vrot.slane %v11094, 4
    %v11097 = vshll.u32 %v10803, 16
    %v11099 = vrot.slane %v11097, 5
    %v11100 = vsel %vm1207, %v11095, %v11099
    %v11101 = vshrl.u32 %v10803, 16
    %v11103 = vrot.slane %v11101, 4
    %v11104 = vor.u32 %v11103, %v11099
    %v11105 = vrot.slane %v11104, 4
    %v11107 = vshll.u32 %v10804, 16
    %v11109 = vrot.slane %v11107, 5
    %v11110 = vsel %vm1207, %v11105, %v11109
    %v11112 = vshrl.u32 %v10805, 16
    %v11114 = vrot.slane %v11112, 4
    %v11115 = vshll.u32 %v10805, 16
    %v11117 = vrot.slane %v11115, 5
    %v11118 = vor.u32 %v11114, %v11117
    %v11119 = vrot.slane %v11118, 4
    %v11121 = vshll.u32 %v10806, 16
    %v11123 = vrot.slane %v11121, 5
    %v11124 = vsel %vm1207, %v11119, %v11123
    %v11125 = vshrl.u32 %v10806, 16
    %v11127 = vrot.slane %v11125, 4
    %v11128 = vor.u32 %v11127, %v11123
    %v11129 = vrot.slane %v11128, 4
    %v11131 = vshll.u32 %v10807, 16
    %v11133 = vrot.slane %v11131, 5
    %v11134 = vsel %vm1207, %v11129, %v11133
    %v11136 = vshrl.u32 %v10808, 16
    %v11138 = vrot.slane %v11136, 4
    %v11139 = vshll.u32 %v10808, 16
    %v11141 = vrot.slane %v11139, 5
    %v11142 = vor.u32 %v11138, %v11141
    %v11143 = vrot.slane %v11142, 4
    %v11145 = vshll.u32 %v10809, 16
    %v11147 = vrot.slane %v11145, 5
    %v11148 = vsel %vm1207, %v11143, %v11147
    %v11149 = vshrl.u32 %v10809, 16
    %v11151 = vrot.slane %v11149, 4
    %v11152 = vor.u32 %v11151, %v11147
    %v11153 = vrot.slane %v11152, 4
    %v11155 = vshll.u32 %v10810, 16
    %v11157 = vrot.slane %v11155, 5
    %v11158 = vsel %vm1207, %v11153, %v11157
    %v11160 = vshrl.u32 %v10811, 16
    %v11162 = vrot.slane %v11160, 4
    %v11163 = vshll.u32 %v10811, 16
    %v11165 = vrot.slane %v11163, 5
    %v11166 = vor.u32 %v11162, %v11165
    %v11167 = vrot.slane %v11166, 4
    %v11169 = vshll.u32 %v10812, 16
    %v11171 = vrot.slane %v11169, 5
    %v11172 = vsel %vm1207, %v11167, %v11171
    %v11173 = vshrl.u32 %v10812, 16
    %v11175 = vrot.slane %v11173, 4
    %v11176 = vor.u32 %v11175, %v11171
    %v11177 = vrot.slane %v11176, 4
    %v11179 = vshll.u32 %v10813, 16
    %v11181 = vrot.slane %v11179, 5
    %v11182 = vsel %vm1207, %v11177, %v11181
    %v11184 = vshrl.u32 %v10814, 16
    %v11186 = vrot.slane %v11184, 4
    %v11187 = vshll.u32 %v10814, 16
    %v11189 = vrot.slane %v11187, 5
    %v11190 = vor.u32 %v11186, %v11189
    %v11191 = vrot.slane %v11190, 4
    %v11193 = vshll.u32 %v10815, 16
    %v11195 = vrot.slane %v11193, 5
    %v11196 = vsel %vm1207, %v11191, %v11195
    %v11197 = vshrl.u32 %v10815, 16
    %v11199 = vrot.slane %v11197, 4
    %v11200 = vor.u32 %v11199, %v11195
    %v11201 = vrot.slane %v11200, 4
    %v11203 = vshll.u32 %v10816, 16
    %v11205 = vrot.slane %v11203, 5
    %v11206 = vsel %vm1207, %v11201, %v11205
    %v11208 = vshrl.u32 %v10817, 16
    %v11210 = vrot.slane %v11208, 4
    %v11211 = vshll.u32 %v10817, 16
    %v11213 = vrot.slane %v11211, 5
    %v11214 = vor.u32 %v11210, %v11213
    %v11215 = vrot.slane %v11214, 4
    %v11217 = vshll.u32 %v10818, 16
    %v11219 = vrot.slane %v11217, 5
    %v11220 = vsel %vm1207, %v11215, %v11219
    %v11221 = vshrl.u32 %v10818, 16
    %v11223 = vrot.slane %v11221, 4
    %v11224 = vor.u32 %v11223, %v11219
    %v11225 = vrot.slane %v11224, 4
    %v11227 = vshll.u32 %v10819, 16
    %v11229 = vrot.slane %v11227, 5
    %v11230 = vsel %vm1207, %v11225, %v11229
    %v11232 = vshrl.u32 %v10820, 16
    %v11234 = vrot.slane %v11232, 4
    %v11235 = vshll.u32 %v10820, 16
    %v11237 = vrot.slane %v11235, 5
    %v11238 = vor.u32 %v11234, %v11237
    %v11239 = vrot.slane %v11238, 4
    %v11241 = vshll.u32 %v10821, 16
    %v11243 = vrot.slane %v11241, 5
    %v11244 = vsel %vm1207, %v11239, %v11243
    %v11245 = vshrl.u32 %v10821, 16
    %v11247 = vrot.slane %v11245, 4
    %v11248 = vor.u32 %v11247, %v11243
    %v11249 = vrot.slane %v11248, 4
    %v11251 = vshll.u32 %v10822, 16
    %v11253 = vrot.slane %v11251, 5
    %v11254 = vsel %vm1207, %v11249, %v11253
    %v11256 = vshrl.u32 %v10823, 16
    %v11258 = vrot.slane %v11256, 4
    %v11259 = vshll.u32 %v10823, 16
    %v11261 = vrot.slane %v11259, 5
    %v11262 = vor.u32 %v11258, %v11261
    %v11263 = vrot.slane %v11262, 4
    %v11265 = vshll.u32 %v10824, 16
    %v11267 = vrot.slane %v11265, 5
    %v11268 = vsel %vm1207, %v11263, %v11267
    %v11269 = vshrl.u32 %v10824, 16
    %v11271 = vrot.slane %v11269, 4
    %v11272 = vor.u32 %v11271, %v11267
    %v11273 = vrot.slane %v11272, 4
    %v11275 = vshll.u32 %v10825, 16
    %v11277 = vrot.slane %v11275, 5
    %v11278 = vsel %vm1207, %v11273, %v11277
    %v11280 = vshrl.u32 %v10826, 16
    %v11282 = vrot.slane %v11280, 4
    %v11283 = vshll.u32 %v10826, 16
    %v11285 = vrot.slane %v11283, 5
    %v11286 = vor.u32 %v11282, %v11285
    %v11287 = vrot.slane %v11286, 4
    %v11289 = vshll.u32 %v10827, 16
    %v11291 = vrot.slane %v11289, 5
    %v11292 = vsel %vm1207, %v11287, %v11291
    %v11293 = vshrl.u32 %v10827, 16
    %v11295 = vrot.slane %v11293, 4
    %v11296 = vor.u32 %v11295, %v11291
    %v11297 = vrot.slane %v11296, 4
    %v11299 = vshll.u32 %v10828, 16
    %v11301 = vrot.slane %v11299, 5
    %v11302 = vsel %vm1207, %v11297, %v11301
    %v11304 = vshrl.u32 %v10829, 16
    %v11306 = vrot.slane %v11304, 4
    %v11307 = vshll.u32 %v10829, 16
    %v11309 = vrot.slane %v11307, 5
    %v11310 = vor.u32 %v11306, %v11309
    %v11311 = vrot.slane %v11310, 4
    %v11313 = vshll.u32 %v10830, 16
    %v11315 = vrot.slane %v11313, 5
    %v11316 = vsel %vm1207, %v11311, %v11315
    %v11317 = vshrl.u32 %v10830, 16
    %v11319 = vrot.slane %v11317, 4
    %v11320 = vor.u32 %v11319, %v11315
    %v11321 = vrot.slane %v11320, 4
    %v11323 = vshll.u32 %v10831, 16
    %v11325 = vrot.slane %v11323, 5
    %v11326 = vsel %vm1207, %v11321, %v11325
    %v11328 = vshrl.u32 %v10832, 16
    %v11330 = vrot.slane %v11328, 4
    %v11331 = vshll.u32 %v10832, 16
    %v11333 = vrot.slane %v11331, 5
    %v11334 = vor.u32 %v11330, %v11333
    %v11335 = vrot.slane %v11334, 4
    %v11337 = vshll.u32 %v10833, 16
    %v11339 = vrot.slane %v11337, 5
    %v11340 = vsel %vm1207, %v11335, %v11339
    %v11341 = vshrl.u32 %v10833, 16
    %v11343 = vrot.slane %v11341, 4
    %v11344 = vor.u32 %v11343, %v11339
    %v11345 = vrot.slane %v11344, 4
    %v11347 = vshll.u32 %v10834, 16
    %v11349 = vrot.slane %v11347, 5
    %v11350 = vsel %vm1207, %v11345, %v11349
    %v11352 = vshrl.u32 %v10835, 16
    %v11354 = vrot.slane %v11352, 4
    %v11355 = vshll.u32 %v10835, 16
    %v11357 = vrot.slane %v11355, 5
    %v11358 = vor.u32 %v11354, %v11357
    %v11359 = vrot.slane %v11358, 4
    %v11361 = vshll.u32 %v10836, 16
    %v11363 = vrot.slane %v11361, 5
    %v11364 = vsel %vm1207, %v11359, %v11363
    %v11365 = vshrl.u32 %v10836, 16
    %v11367 = vrot.slane %v11365, 4
    %v11368 = vor.u32 %v11367, %v11363
    %v11369 = vrot.slane %v11368, 4
    %v11371 = vshll.u32 %v10837, 16
    %v11373 = vrot.slane %v11371, 5
    %v11374 = vsel %vm1207, %v11369, %v11373
    %v11376 = vshrl.u32 %v10838, 16
    %v11378 = vrot.slane %v11376, 4
    %v11379 = vshll.u32 %v10838, 16
    %v11381 = vrot.slane %v11379, 5
    %v11382 = vor.u32 %v11378, %v11381
    %v11383 = vrot.slane %v11382, 4
    %v11385 = vshll.u32 %v10839, 16
    %v11387 = vrot.slane %v11385, 5
    %v11388 = vsel %vm1207, %v11383, %v11387
    %v11389 = vshrl.u32 %v10839, 16
    %v11391 = vrot.slane %v11389, 4
    %v11392 = vor.u32 %v11391, %v11387
    %v11393 = vrot.slane %v11392, 4
    %v11395 = vshll.u32 %v10840, 16
    %v11397 = vrot.slane %v11395, 5
    %v11398 = vsel %vm1207, %v11393, %v11397
    %v11400 = vshrl.u32 %v10841, 16
    %v11402 = vrot.slane %v11400, 4
    %v11403 = vshll.u32 %v10841, 16
    %v11405 = vrot.slane %v11403, 5
    %v11406 = vor.u32 %v11402, %v11405
    %v11407 = vrot.slane %v11406, 4
    %v11409 = vshll.u32 %v10842, 16
    %v11411 = vrot.slane %v11409, 5
    %v11412 = vsel %vm1207, %v11407, %v11411
    %v11413 = vshrl.u32 %v10842, 16
    %v11415 = vrot.slane %v11413, 4
    %v11416 = vor.u32 %v11415, %v11411
    %v11417 = vrot.slane %v11416, 4
    %v11419 = vshll.u32 %v10843, 16
    %v11421 = vrot.slane %v11419, 5
    %v11422 = vsel %vm1207, %v11417, %v11421
    %v11424 = vshrl.u32 %v10844, 16
    %v11426 = vrot.slane %v11424, 4
    %v11427 = vshll.u32 %v10844, 16
    %v11429 = vrot.slane %v11427, 5
    %v11430 = vor.u32 %v11426, %v11429
    %v11431 = vrot.slane %v11430, 4
    %v11433 = vshll.u32 %v10845, 16
    %v11435 = vrot.slane %v11433, 5
    %v11436 = vsel %vm1207, %v11431, %v11435
    %v11437 = vshrl.u32 %v10845, 16
    %v11439 = vrot.slane %v11437, 4
    %v11440 = vor.u32 %v11439, %v11435
    %v11441 = vrot.slane %v11440, 4
    %v11443 = vshll.u32 %v10846, 16
    %v11445 = vrot.slane %v11443, 5
    %v11446 = vsel %vm1207, %v11441, %v11445
    %v11448 = vshrl.u32 %v10847, 16
    %v11450 = vrot.slane %v11448, 4
    %v11451 = vshll.u32 %v10847, 16
    %v11453 = vrot.slane %v11451, 5
    %v11454 = vor.u32 %v11450, %v11453
    %v11455 = vrot.slane %v11454, 4
    %v11457 = vshll.u32 %v10848, 16
    %v11459 = vrot.slane %v11457, 5
    %v11460 = vsel %vm1207, %v11455, %v11459
    %v11461 = vshrl.u32 %v10848, 16
    %v11463 = vrot.slane %v11461, 4
    %v11464 = vor.u32 %v11463, %v11459
    %v11465 = vrot.slane %v11464, 4
    %v11467 = vshll.u32 %v10849, 16
    %v11469 = vrot.slane %v11467, 5
    %v11470 = vsel %vm1207, %v11465, %v11469
    %v11472 = vshrl.u32 %v10850, 16
    %v11474 = vrot.slane %v11472, 4
    %v11475 = vshll.u32 %v10850, 16
    %v11477 = vrot.slane %v11475, 5
    %v11478 = vor.u32 %v11474, %v11477
    %v11479 = vrot.slane %v11478, 4
    %v11481 = vshll.u32 %v10851, 16
    %v11483 = vrot.slane %v11481, 5
    %v11484 = vsel %vm1207, %v11479, %v11483
    %v11485 = vshrl.u32 %v10851, 16
    %v11487 = vrot.slane %v11485, 4
    %v11488 = vor.u32 %v11487, %v11483
    %v11489 = vrot.slane %v11488, 4
    %v11491 = vshll.u32 %v10852, 16
    %v11493 = vrot.slane %v11491, 5
    %v11494 = vsel %vm1207, %v11489, %v11493
    %v11496 = vshrl.u32 %v10853, 16
    %v11498 = vrot.slane %v11496, 4
    %v11499 = vshll.u32 %v10853, 16
    %v11501 = vrot.slane %v11499, 5
    %v11502 = vor.u32 %v11498, %v11501
    %v11503 = vrot.slane %v11502, 4
    %v11505 = vshll.u32 %v10854, 16
    %v11507 = vrot.slane %v11505, 5
    %v11508 = vsel %vm1207, %v11503, %v11507
    %v11509 = vshrl.u32 %v10854, 16
    %v11511 = vrot.slane %v11509, 4
    %v11512 = vor.u32 %v11511, %v11507
    %v11513 = vrot.slane %v11512, 4
    %v11515 = vshll.u32 %v10855, 16
    %v11517 = vrot.slane %v11515, 5
    %v11518 = vsel %vm1207, %v11513, %v11517
    %v11520 = vshrl.u32 %v10856, 16
    %v11522 = vrot.slane %v11520, 4
    %v11523 = vshll.u32 %v10856, 16
    %v11525 = vrot.slane %v11523, 5
    %v11526 = vor.u32 %v11522, %v11525
    %v11527 = vrot.slane %v11526, 4
    %v11529 = vshll.u32 %v10857, 16
    %v11531 = vrot.slane %v11529, 5
    %v11532 = vsel %vm1207, %v11527, %v11531
    %v11533 = vshrl.u32 %v10857, 16
    %v11535 = vrot.slane %v11533, 4
    %v11536 = vor.u32 %v11535, %v11531
    %v11537 = vrot.slane %v11536, 4
    %v11539 = vshll.u32 %v10858, 16
    %v11541 = vrot.slane %v11539, 5
    %v11542 = vsel %vm1207, %v11537, %v11541
    %v11544 = vshrl.u32 %v10859, 16
    %v11546 = vrot.slane %v11544, 4
    %v11547 = vshll.u32 %v10859, 16
    %v11549 = vrot.slane %v11547, 5
    %v11550 = vor.u32 %v11546, %v11549
    %v11551 = vrot.slane %v11550, 4
    %v11553 = vshll.u32 %v10860, 16
    %v11555 = vrot.slane %v11553, 5
    %v11556 = vsel %vm1207, %v11551, %v11555
    %v11557 = vshrl.u32 %v10860, 16
    %v11559 = vrot.slane %v11557, 4
    %v11560 = vor.u32 %v11559, %v11555
    %v11561 = vrot.slane %v11560, 4
    %v11563 = vshll.u32 %v10861, 16
    %v11565 = vrot.slane %v11563, 5
    %v11566 = vsel %vm1207, %v11561, %v11565
    %v11568 = vshrl.u32 %v10862, 16
    %v11570 = vrot.slane %v11568, 4
    %v11571 = vshll.u32 %v10862, 16
    %v11573 = vrot.slane %v11571, 5
    %v11574 = vor.u32 %v11570, %v11573
    %v11575 = vrot.slane %v11574, 4
    %v11577 = vshll.u32 %v10863, 16
    %v11579 = vrot.slane %v11577, 5
    %v11580 = vsel %vm1207, %v11575, %v11579
    %v11581 = vshrl.u32 %v10863, 16
    %v11583 = vrot.slane %v11581, 4
    %v11584 = vor.u32 %v11583, %v11579
    %v11585 = vrot.slane %v11584, 4
    %v11587 = vshll.u32 %v10864, 16
    %v11589 = vrot.slane %v11587, 5
    %v11590 = vsel %vm1207, %v11585, %v11589
    %v11592 = vshrl.u32 %v10865, 16
    %v11594 = vrot.slane %v11592, 4
    %v11595 = vshll.u32 %v10865, 16
    %v11597 = vrot.slane %v11595, 5
    %v11598 = vor.u32 %v11594, %v11597
    %v11599 = vrot.slane %v11598, 4
    %v11601 = vshll.u32 %v10866, 16
    %v11603 = vrot.slane %v11601, 5
    %v11604 = vsel %vm1207, %v11599, %v11603
    %v11605 = vshrl.u32 %v10866, 16
    %v11607 = vrot.slane %v11605, 4
    %v11608 = vor.u32 %v11607, %v11603
    %v11609 = vrot.slane %v11608, 4
    %v11611 = vshll.u32 %v10867, 16
    %v11613 = vrot.slane %v11611, 5
    %v11614 = vsel %vm1207, %v11609, %v11613
    %v11616 = vshrl.u32 %v10868, 16
    %v11618 = vrot.slane %v11616, 4
    %v11619 = vshll.u32 %v10868, 16
    %v11621 = vrot.slane %v11619, 5
    %v11622 = vor.u32 %v11618, %v11621
    %v11623 = vrot.slane %v11622, 4
    %v11625 = vshll.u32 %v10869, 16
    %v11627 = vrot.slane %v11625, 5
    %v11628 = vsel %vm1207, %v11623, %v11627
    %v11629 = vshrl.u32 %v10869, 16
    %v11631 = vrot.slane %v11629, 4
    %v11632 = vor.u32 %v11631, %v11627
    %v11633 = vrot.slane %v11632, 4
    %v11635 = vshll.u32 %v10870, 16
    %v11637 = vrot.slane %v11635, 5
    %v11638 = vsel %vm1207, %v11633, %v11637
    %v11703 = vunpack.c.l.bf16 %v10884
    %v11704 = vunpack.c.l.bf16 %v10894
    %v11705 = vunpack.c.l.bf16 %v10908
    %v11706 = vunpack.c.l.bf16 %v10918
    %v11707 = vunpack.c.l.bf16 %v10932
    %v11708 = vunpack.c.l.bf16 %v10942
    %v11709 = vunpack.c.l.bf16 %v10956
    %v11710 = vunpack.c.l.bf16 %v10966
    %v11711 = vunpack.c.l.bf16 %v10980
    %v11712 = vunpack.c.l.bf16 %v10990
    %v11713 = vunpack.c.l.bf16 %v11004
    %v11714 = vunpack.c.l.bf16 %v11014
    %v11715 = vunpack.c.l.bf16 %v11028
    %v11716 = vunpack.c.l.bf16 %v11038
    %v11717 = vunpack.c.l.bf16 %v11052
    %v11718 = vunpack.c.l.bf16 %v11062
    %v11719 = vunpack.c.l.bf16 %v11076
    %v11720 = vunpack.c.l.bf16 %v11086
    %v11721 = vunpack.c.l.bf16 %v11100
    %v11722 = vunpack.c.l.bf16 %v11110
    %v11723 = vunpack.c.l.bf16 %v11124
    %v11724 = vunpack.c.l.bf16 %v11134
    %v11725 = vunpack.c.l.bf16 %v11148
    %v11726 = vunpack.c.l.bf16 %v11158
    %v11727 = vunpack.c.l.bf16 %v11172
    %v11728 = vunpack.c.l.bf16 %v11182
    %v11729 = vunpack.c.l.bf16 %v11196
    %v11730 = vunpack.c.l.bf16 %v11206
    %v11731 = vunpack.c.l.bf16 %v11220
    %v11732 = vunpack.c.l.bf16 %v11230
    %v11733 = vunpack.c.l.bf16 %v11244
    %v11734 = vunpack.c.l.bf16 %v11254
    %v11735 = vunpack.c.l.bf16 %v11268
    %v11736 = vunpack.c.l.bf16 %v11278
    %v11737 = vunpack.c.l.bf16 %v11292
    %v11738 = vunpack.c.l.bf16 %v11302
    %v11739 = vunpack.c.l.bf16 %v11316
    %v11740 = vunpack.c.l.bf16 %v11326
    %v11741 = vunpack.c.l.bf16 %v11340
    %v11742 = vunpack.c.l.bf16 %v11350
    %v11743 = vunpack.c.l.bf16 %v11364
    %v11744 = vunpack.c.l.bf16 %v11374
    %v11745 = vunpack.c.l.bf16 %v11388
    %v11746 = vunpack.c.l.bf16 %v11398
    %v11747 = vunpack.c.l.bf16 %v11412
    %v11748 = vunpack.c.l.bf16 %v11422
    %v11749 = vunpack.c.l.bf16 %v11436
    %v11750 = vunpack.c.l.bf16 %v11446
    %v11751 = vunpack.c.l.bf16 %v11460
    %v11752 = vunpack.c.l.bf16 %v11470
    %v11753 = vunpack.c.l.bf16 %v11484
    %v11754 = vunpack.c.l.bf16 %v11494
    %v11755 = vunpack.c.l.bf16 %v11508
    %v11756 = vunpack.c.l.bf16 %v11518
    %v11757 = vunpack.c.l.bf16 %v11532
    %v11758 = vunpack.c.l.bf16 %v11542
    %v11759 = vunpack.c.l.bf16 %v11556
    %v11760 = vunpack.c.l.bf16 %v11566
    %v11761 = vunpack.c.l.bf16 %v11580
    %v11762 = vunpack.c.l.bf16 %v11590
    %v11763 = vunpack.c.l.bf16 %v11604
    %v11764 = vunpack.c.l.bf16 %v11614
    %v11765 = vunpack.c.l.bf16 %v11628
    %v11766 = vunpack.c.l.bf16 %v11638
    %v11767 = vadd.f32 %v10710, %v11703
    %v11768 = vadd.f32 %v10711, %v11704
    %v11769 = vadd.f32 %v10712, %v11705
    %v11770 = vadd.f32 %v10713, %v11706
    %v11771 = vadd.f32 %v10714, %v11707
    %v11772 = vadd.f32 %v10715, %v11708
    %v11773 = vadd.f32 %v10716, %v11709
    %v11774 = vadd.f32 %v10717, %v11710
    %v11775 = vadd.f32 %v10718, %v11711
    %v11776 = vadd.f32 %v10719, %v11712
    %v11777 = vadd.f32 %v10720, %v11713
    %v11778 = vadd.f32 %v10721, %v11714
    %v11779 = vadd.f32 %v10722, %v11715
    %v11780 = vadd.f32 %v10723, %v11716
    %v11781 = vadd.f32 %v10724, %v11717
    %v11782 = vadd.f32 %v10725, %v11718
    %v11783 = vadd.f32 %v10726, %v11719
    %v11784 = vadd.f32 %v10727, %v11720
    %v11785 = vadd.f32 %v10728, %v11721
    %v11786 = vadd.f32 %v10729, %v11722
    %v11787 = vadd.f32 %v10730, %v11723
    %v11788 = vadd.f32 %v10731, %v11724
    %v11789 = vadd.f32 %v10732, %v11725
    %v11790 = vadd.f32 %v10733, %v11726
    %v11791 = vadd.f32 %v10734, %v11727
    %v11792 = vadd.f32 %v10735, %v11728
    %v11793 = vadd.f32 %v10736, %v11729
    %v11794 = vadd.f32 %v10737, %v11730
    %v11795 = vadd.f32 %v10738, %v11731
    %v11796 = vadd.f32 %v10739, %v11732
    %v11797 = vadd.f32 %v10740, %v11733
    %v11798 = vadd.f32 %v10741, %v11734
    %v11799 = vadd.f32 %v10742, %v11735
    %v11800 = vadd.f32 %v10743, %v11736
    %v11801 = vadd.f32 %v10744, %v11737
    %v11802 = vadd.f32 %v10745, %v11738
    %v11803 = vadd.f32 %v10746, %v11739
    %v11804 = vadd.f32 %v10747, %v11740
    %v11805 = vadd.f32 %v10748, %v11741
    %v11806 = vadd.f32 %v10749, %v11742
    %v11807 = vadd.f32 %v10750, %v11743
    %v11808 = vadd.f32 %v10751, %v11744
    %v11809 = vadd.f32 %v10752, %v11745
    %v11810 = vadd.f32 %v10753, %v11746
    %v11811 = vadd.f32 %v10754, %v11747
    %v11812 = vadd.f32 %v10755, %v11748
    %v11813 = vadd.f32 %v10756, %v11749
    %v11814 = vadd.f32 %v10757, %v11750
    %v11815 = vadd.f32 %v10758, %v11751
    %v11816 = vadd.f32 %v10759, %v11752
    %v11817 = vadd.f32 %v10760, %v11753
    %v11818 = vadd.f32 %v10761, %v11754
    %v11819 = vadd.f32 %v10762, %v11755
    %v11820 = vadd.f32 %v10763, %v11756
    %v11821 = vadd.f32 %v10764, %v11757
    %v11822 = vadd.f32 %v10765, %v11758
    %v11823 = vadd.f32 %v10766, %v11759
    %v11824 = vadd.f32 %v10767, %v11760
    %v11825 = vadd.f32 %v10768, %v11761
    %v11826 = vadd.f32 %v10769, %v11762
    %v11827 = vadd.f32 %v10770, %v11763
    %v11828 = vadd.f32 %v10771, %v11764
    %v11829 = vadd.f32 %v10772, %v11765
    %v11830 = vadd.f32 %v10773, %v11766
    %v11831 = vmax.f32 %v11767, 0.0
    %v11832 = vmax.f32 %v11768, 0.0
    %v11833 = vmax.f32 %v11769, 0.0
    %v11834 = vmax.f32 %v11770, 0.0
    %v11835 = vmax.f32 %v11771, 0.0
    %v11836 = vmax.f32 %v11772, 0.0
    %v11837 = vmax.f32 %v11773, 0.0
    %v11838 = vmax.f32 %v11774, 0.0
    %v11839 = vmax.f32 %v11775, 0.0
    %v11840 = vmax.f32 %v11776, 0.0
    %v11841 = vmax.f32 %v11777, 0.0
    %v11842 = vmax.f32 %v11778, 0.0
    %v11843 = vmax.f32 %v11779, 0.0
    %v11844 = vmax.f32 %v11780, 0.0
    %v11845 = vmax.f32 %v11781, 0.0
    %v11846 = vmax.f32 %v11782, 0.0
    %v11847 = vmax.f32 %v11783, 0.0
    %v11848 = vmax.f32 %v11784, 0.0
    %v11849 = vmax.f32 %v11785, 0.0
    %v11850 = vmax.f32 %v11786, 0.0
    %v11851 = vmax.f32 %v11787, 0.0
    %v11852 = vmax.f32 %v11788, 0.0
    %v11853 = vmax.f32 %v11789, 0.0
    %v11854 = vmax.f32 %v11790, 0.0
    %v11855 = vmax.f32 %v11791, 0.0
    %v11856 = vmax.f32 %v11792, 0.0
    %v11857 = vmax.f32 %v11793, 0.0
    %v11858 = vmax.f32 %v11794, 0.0
    %v11859 = vmax.f32 %v11795, 0.0
    %v11860 = vmax.f32 %v11796, 0.0
    %v11861 = vmax.f32 %v11797, 0.0
    %v11862 = vmax.f32 %v11798, 0.0
    %v11863 = vmax.f32 %v11799, 0.0
    %v11864 = vmax.f32 %v11800, 0.0
    %v11865 = vmax.f32 %v11801, 0.0
    %v11866 = vmax.f32 %v11802, 0.0
    %v11867 = vmax.f32 %v11803, 0.0
    %v11868 = vmax.f32 %v11804, 0.0
    %v11869 = vmax.f32 %v11805, 0.0
    %v11870 = vmax.f32 %v11806, 0.0
    %v11871 = vmax.f32 %v11807, 0.0
    %v11872 = vmax.f32 %v11808, 0.0
    %v11873 = vmax.f32 %v11809, 0.0
    %v11874 = vmax.f32 %v11810, 0.0
    %v11875 = vmax.f32 %v11811, 0.0
    %v11876 = vmax.f32 %v11812, 0.0
    %v11877 = vmax.f32 %v11813, 0.0
    %v11878 = vmax.f32 %v11814, 0.0
    %v11879 = vmax.f32 %v11815, 0.0
    %v11880 = vmax.f32 %v11816, 0.0
    %v11881 = vmax.f32 %v11817, 0.0
    %v11882 = vmax.f32 %v11818, 0.0
    %v11883 = vmax.f32 %v11819, 0.0
    %v11884 = vmax.f32 %v11820, 0.0
    %v11885 = vmax.f32 %v11821, 0.0
    %v11886 = vmax.f32 %v11822, 0.0
    %v11887 = vmax.f32 %v11823, 0.0
    %v11888 = vmax.f32 %v11824, 0.0
    %v11889 = vmax.f32 %v11825, 0.0
    %v11890 = vmax.f32 %v11826, 0.0
    %v11891 = vmax.f32 %v11827, 0.0
    %v11892 = vmax.f32 %v11828, 0.0
    %v11893 = vmax.f32 %v11829, 0.0
    %v11894 = vmax.f32 %v11830, 0.0
    %11895 = vst [vmem:[#allocation6] sm:$0xff] %v11831
    %11896 = vst [vmem:[#allocation6 + $0x8] sm:$0xff] %v11832
    %11897 = vst [vmem:[#allocation6 + $0x10] sm:$0xff] %v11833
    %11898 = vst [vmem:[#allocation6 + $0x18] sm:$0xff] %v11834
    %11899 = vst [vmem:[#allocation6 + $0x20] sm:$0xff] %v11835
    %11900 = vst [vmem:[#allocation6 + $0x28] sm:$0xff] %v11836
    %11901 = vst [vmem:[#allocation6 + $0x30] sm:$0xff] %v11837
    %11902 = vst [vmem:[#allocation6 + $0x38] sm:$0xff] %v11838
    %11903 = vst [vmem:[#allocation6 + $0x40] sm:$0xff] %v11839
    %11904 = vst [vmem:[#allocation6 + $0x48] sm:$0xff] %v11840
    %11905 = vst [vmem:[#allocation6 + $0x50] sm:$0xff] %v11841
    %11906 = vst [vmem:[#allocation6 + $0x58] sm:$0xff] %v11842
    %11907 = vst [vmem:[#allocation6 + $0x60] sm:$0xff] %v11843
    %11908 = vst [vmem:[#allocation6 + $0x68] sm:$0xff] %v11844
    %11909 = vst [vmem:[#allocation6 + $0x70] sm:$0xff] %v11845
    %11910 = vst [vmem:[#allocation6 + $0x78] sm:$0xff] %v11846
    %11911 = vst [vmem:[#allocation6 + $0x80] sm:$0xff] %v11847
    %11912 = vst [vmem:[#allocation6 + $0x88] sm:$0xff] %v11848
    %11913 = vst [vmem:[#allocation6 + $0x90] sm:$0xff] %v11849
    %11914 = vst [vmem:[#allocation6 + $0x98] sm:$0xff] %v11850
    %11915 = vst [vmem:[#allocation6 + $0xa0] sm:$0xff] %v11851
    %11916 = vst [vmem:[#allocation6 + $0xa8] sm:$0xff] %v11852
    %11917 = vst [vmem:[#allocation6 + $0xb0] sm:$0xff] %v11853
    %11918 = vst [vmem:[#allocation6 + $0xb8] sm:$0xff] %v11854
    %11919 = vst [vmem:[#allocation6 + $0xc0] sm:$0xff] %v11855
    %11920 = vst [vmem:[#allocation6 + $0xc8] sm:$0xff] %v11856
    %11921 = vst [vmem:[#allocation6 + $0xd0] sm:$0xff] %v11857
    %11922 = vst [vmem:[#allocation6 + $0xd8] sm:$0xff] %v11858
    %11923 = vst [vmem:[#allocation6 + $0xe0] sm:$0xff] %v11859
    %11924 = vst [vmem:[#allocation6 + $0xe8] sm:$0xff] %v11860
    %11925 = vst [vmem:[#allocation6 + $0xf0] sm:$0xff] %v11861
    %11926 = vst [vmem:[#allocation6 + $0xf8] sm:$0xff] %v11862
    %11927 = vst [vmem:[#allocation6 + $0x100] sm:$0xff] %v11863
    %11928 = vst [vmem:[#allocation6 + $0x108] sm:$0xff] %v11864
    %11929 = vst [vmem:[#allocation6 + $0x110] sm:$0xff] %v11865
    %11930 = vst [vmem:[#allocation6 + $0x118] sm:$0xff] %v11866
    %11931 = vst [vmem:[#allocation6 + $0x120] sm:$0xff] %v11867
    %11932 = vst [vmem:[#allocation6 + $0x128] sm:$0xff] %v11868
    %11933 = vst [vmem:[#allocation6 + $0x130] sm:$0xff] %v11869
    %11934 = vst [vmem:[#allocation6 + $0x138] sm:$0xff] %v11870
    %11935 = vst [vmem:[#allocation6 + $0x140] sm:$0xff] %v11871
    %11936 = vst [vmem:[#allocation6 + $0x148] sm:$0xff] %v11872
    %11937 = vst [vmem:[#allocation6 + $0x150] sm:$0xff] %v11873
    %11938 = vst [vmem:[#allocation6 + $0x158] sm:$0xff] %v11874
    %11939 = vst [vmem:[#allocation6 + $0x160] sm:$0xff] %v11875
    %11940 = vst [vmem:[#allocation6 + $0x168] sm:$0xff] %v11876
    %11941 = vst [vmem:[#allocation6 + $0x170] sm:$0xff] %v11877
    %11942 = vst [vmem:[#allocation6 + $0x178] sm:$0xff] %v11878
    %11943 = vst [vmem:[#allocation6 + $0x180] sm:$0xff] %v11879
    %11944 = vst [vmem:[#allocation6 + $0x188] sm:$0xff] %v11880
    %11945 = vst [vmem:[#allocation6 + $0x190] sm:$0xff] %v11881
    %11946 = vst [vmem:[#allocation6 + $0x198] sm:$0xff] %v11882
    %11947 = vst [vmem:[#allocation6 + $0x1a0] sm:$0xff] %v11883
    %11948 = vst [vmem:[#allocation6 + $0x1a8] sm:$0xff] %v11884
    %11949 = vst [vmem:[#allocation6 + $0x1b0] sm:$0xff] %v11885
    %11950 = vst [vmem:[#allocation6 + $0x1b8] sm:$0xff] %v11886
    %11951 = vst [vmem:[#allocation6 + $0x1c0] sm:$0xff] %v11887
    %11952 = vst [vmem:[#allocation6 + $0x1c8] sm:$0xff] %v11888
    %11953 = vst [vmem:[#allocation6 + $0x1d0] sm:$0xff] %v11889
    %11954 = vst [vmem:[#allocation6 + $0x1d8] sm:$0xff] %v11890
    %11955 = vst [vmem:[#allocation6 + $0x1e0] sm:$0xff] %v11891
    %11956 = vst [vmem:[#allocation6 + $0x1e8] sm:$0xff] %v11892
    %11957 = vst [vmem:[#allocation6 + $0x1f0] sm:$0xff] %v11893
    %11958 = vst [vmem:[#allocation6 + $0x1f8] sm:$0xff] %v11894
    // Predicated region
    $region34: #{tpu_custom_call.1} parent=1 // pred_check
      _
    $region35: #{tpu_custom_call.1} parent=1 // pred_check_branch
      %11960 = sbr.rel (0) target = $region37
    $region36: #{tpu_custom_call.1} parent=1 // pred_region
      %11962 = vsyncadd [#allocation5], 0
      %s11963 = sshll.u32 [#allocation6], 4
      %s11964 = int_to_ptr.vmem [resolvable:$true] %s11963
      %s11965 = sshll.u32 %s7, 4
      %s11966 = int_to_ptr.hbm [resolvable:$true] %s11965
      %11971 = dma.vmem_to_hbm [thread:$0]  %s11964, 8192, %s11966, [#allocation5], 128, 128, 8
    $region37: #{tpu_custom_call.1} parent=1 // pred_fallthru
      _
    // Predicated region
    $region38: #{tpu_custom_call.1} parent=1 // pred_check
      _
    $region39: #{tpu_custom_call.1} parent=1 // pred_check_branch
      %11973 = sbr.rel (0) target = $region41
    $region40: #{tpu_custom_call.1} parent=1 // pred_region
      %11975 = dma.done [#allocation5], 8192
    $region41: #{tpu_custom_call.1} parent=1 // pred_fallthru
      _
    %11976 = vsyncpa [#allocation4], 1
    %11977 = vsyncpa [#allocation5], 1

</llo_original>
